<compile_context>
chip_gen: v6e
topology: v6e:2x2x1
jax: 0.10.0
libtpu: 0.0.40
codegen_flags: <defaults>
</compile_context>

<pallas_src>
import math
import jax
import jax.numpy as jnp
from jax import lax
from jax.experimental import pallas as pl
from jax.experimental.pallas import tpu as pltpu

N_HEAD = 8
NEG_INF = -1e9


# ----------------------------- in-kernel helpers ----------------------------

def _layernorm(x, g, b, eps):
    mu = jnp.mean(x, axis=-1, keepdims=True)
    var = jnp.mean((x - mu) ** 2, axis=-1, keepdims=True)
    return (x - mu) * lax.rsqrt(var + eps) * g + b


def _mha(q_bf, k_bf, v_bf, bias_ref, wo_ref, attn_ref, ctx_scr, bs, Lq, Lkv):
    """Multi-head attention over all batch elements (batch folded into rows).

    q_bf: (bs*Lq, D) bf16 (1/sqrt(dk) already folded into the query weights)
    k_bf, v_bf: (bs*Lkv, D) bf16
    bias_ref: (bs, Lq or 1, Lkv) f32 additive mask bias (0 keep / -1e9 masked)
    wo_ref:   (1, D, D) bf16 output projection
    attn_ref: (1, bs, Lq, H*Lkv) bf16 output block (lane-dense prob slab)
    ctx_scr:  (bs*Lq, D) f32 VMEM scratch for the re-packed head contexts
    Returns (bs*Lq, D) f32 attention output (before residual / LayerNorm).
    """
    D = q_bf.shape[-1]
    dk = D // N_HEAD
    dn = (((1,), (1,)), ((), ()))            # contract last axes -> q @ k^T, no transpose
    for b in range(bs):                      # static, unrolled over batch
        qr, kr = b * Lq, b * Lkv
        bias = bias_ref[b]                   # (Lq or 1, Lkv); broadcasts over queries
        for h in range(N_HEAD):              # static, unrolled over heads
            lo = h * dk
            s = lax.dot_general(q_bf[qr:qr + Lq, lo:lo + dk],
                                k_bf[kr:kr + Lkv, lo:lo + dk], dn,
                                preferred_element_type=jnp.float32) + bias
            s = s - jnp.max(s, axis=-1, keepdims=True)
            e = jnp.exp(s)
            p = e * pl.reciprocal(jnp.sum(e, axis=-1, keepdims=True), approx=True)
            pb = p.astype(jnp.bfloat16)
            attn_ref[0, b, :, h * Lkv:(h + 1) * Lkv] = pb     # lane-dense slab write
            ctx_scr[qr:qr + Lq, lo:lo + dk] = jnp.dot(
                pb, v_bf[kr:kr + Lkv, lo:lo + dk],
                preferred_element_type=jnp.float32)
    # single K=D output projection over all batches (M = bs*Lq)
    return jnp.dot(ctx_scr[...].astype(jnp.bfloat16), wo_ref[0],
                   preferred_element_type=jnp.float32)


# ----------------------------- fused stack kernel ---------------------------

def decoder_stack_kernel(dec_ref, enc_ref, sbias_ref, cbias_ref,
                         wqkv_s_ref, wo_s_ref, ln1g_ref, ln1b_ref,
                         wq_c_ref, wkv_c_ref, wo_c_ref, ln2g_ref, ln2b_ref,
                         w1_ref, fb1_ref, w2_ref, fb2_ref, ln3g_ref, ln3b_ref,
                         out_ref, sattn_ref, cattn_ref, h_scr, ctx_scr):
    layer = pl.program_id(0)

    @pl.when(layer == 0)
    def _():
        h_scr[...] = dec_ref[...]            # load initial decoder queries once

    x = h_scr[...]                           # (bs*Lq, D) f32, VMEM-resident carry
    D = x.shape[-1]
    bs, Lq = sbias_ref.shape[0], sbias_ref.shape[1]
    Lk = cbias_ref.shape[-1]

    # ---- masked multi-head self-attention (fused QKV, scale pre-folded) ----
    qkv = jnp.dot(x.astype(jnp.bfloat16), wqkv_s_ref[0],
                  preferred_element_type=jnp.float32)          # (bs*Lq, 3D)
    qkv_bf = qkv.astype(jnp.bfloat16)        # cast once; slice bf16 below
    sa = _mha(qkv_bf[:, :D], qkv_bf[:, D:2 * D], qkv_bf[:, 2 * D:],
              sbias_ref, wo_s_ref, sattn_ref, ctx_scr, bs, Lq, Lq)
    h1 = _layernorm(sa + x, ln1g_ref[0], ln1b_ref[0], 1e-6)

    # ---- multi-head cross-attention over (bf16) encoder memory -------------
    qc = jnp.dot(h1.astype(jnp.bfloat16), wq_c_ref[0],
                 preferred_element_type=jnp.float32)           # (bs*Lq, D)
    kv = jnp.dot(enc_ref[...], wkv_c_ref[0],
                 preferred_element_type=jnp.float32)           # (bs*Lk, 2D)
    kv_bf = kv.astype(jnp.bfloat16)
    ca = _mha(qc.astype(jnp.bfloat16), kv_bf[:, :D], kv_bf[:, D:],
              cbias_ref, wo_c_ref, cattn_ref, ctx_scr, bs, Lq, Lk)
    h2 = _layernorm(ca + h1, ln2g_ref[0], ln2b_ref[0], 1e-6)

    # ---- position-wise FFN ---------------------------------------------------
    f = jnp.dot(h2.astype(jnp.bfloat16), w1_ref[0],
                preferred_element_type=jnp.float32) + fb1_ref[0]
    f = jnp.maximum(f, 0.0)
    f = jnp.dot(f.astype(jnp.bfloat16), w2_ref[0],
                preferred_element_type=jnp.float32) + fb2_ref[0]
    h3 = _layernorm(f + h2, ln3g_ref[0], ln3b_ref[0], 1e-6)

    h_scr[...] = h3                          # carry to next layer in VMEM

    @pl.when(layer == pl.num_programs(0) - 1)
    def _():
        out_ref[...] = h3                    # single store; one HBM writeback at grid end


# ----------------------------- host-side helpers ----------------------------

def _interp_mask(padding_mask, w, h, d):
    """F.interpolate(mode='nearest') of a (bs, W0, H0, D0) mask to (w, h, d),
    flattened to (bs, w*h*d).  Plain JAX gather (not a Pallas kernel)."""
    pm = padding_mask.astype(jnp.float32)
    bs, W0, H0, D0 = pm.shape
    iw = (jnp.arange(w) * W0) // w
    ih = (jnp.arange(h) * H0) // h
    idd = (jnp.arange(d) * D0) // d
    return pm[:, iw][:, :, ih][:, :, :, idd].reshape(bs, w * h * d)


def decoder_forward(dec_in, enc_output, decoder_self_mask, padding_mask, layer_params):
    """Forward pass of Decoder (eval mode)."""
    bs, c, w, h, d = enc_output.shape
    D = c
    Lq = dec_in.shape[1]
    Lk = w * h * d
    L = len(layer_params)
    H = N_HEAD
    dk = D // H
    DI = layer_params[0]["f_w1"].shape[1]
    scale = 1.0 / math.sqrt(dk)

    # enc_output.view(bs, c, -1).permute(0, 2, 1), batch folded into rows, bf16.
    enc_flat = jnp.transpose(enc_output.reshape(bs, c, Lk), (0, 2, 1))
    enc2d = enc_flat.reshape(bs * Lk, D).astype(jnp.bfloat16)
    dec2d = dec_in.reshape(bs * Lq, D).astype(jnp.float32)

    # masks as additive biases (0 keep / -1e9 masked); cross bias kept (bs,1,Lk).
    em = _interp_mask(padding_mask, w, h, d)                       # (bs, Lk) in {0,1}
    cbias = ((em - 1.0) * 1e9)[:, None, :].astype(jnp.float32)     # (bs, 1, Lk)
    sbias = ((decoder_self_mask.astype(jnp.float32) - 1.0) * 1e9)  # (bs, Lq, Lq)

    # Pack per-layer weights: stack over layers, fuse QKV / KV, fold the
    # 1/sqrt(dk) scale into the query weights, cast matmul weights to bf16.
    def stk(fn, dtype=jnp.float32):
        return jnp.stack([fn(lp) for lp in layer_params], axis=0).astype(dtype)

    bf16 = jnp.bfloat16
    wqkv_s = stk(lambda lp: jnp.concatenate(
        [lp["s_wq"] * scale, lp["s_wk"], lp["s_wv"]], axis=1), bf16)   # (L, D, 3D)
    wo_s  = stk(lambda lp: lp["s_wo"], bf16)                            # (L, D, D)
    ln1g  = stk(lambda lp: lp["s_g"].reshape(1, D))
    ln1b  = stk(lambda lp: lp["s_b"].reshape(1, D))
    wq_c  = stk(lambda lp: lp["c_wq"] * scale, bf16)                    # (L, D, D)
    wkv_c = stk(lambda lp: jnp.concatenate([lp["c_wk"], lp["c_wv"]], axis=1), bf16)
    wo_c  = stk(lambda lp: lp["c_wo"], bf16)
    ln2g  = stk(lambda lp: lp["c_g"].reshape(1, D))
    ln2b  = stk(lambda lp: lp["c_b"].reshape(1, D))
    w1    = stk(lambda lp: lp["f_w1"], bf16)                            # (L, D, DI)
    fb1   = stk(lambda lp: lp["f_b1"].reshape(1, DI))
    w2    = stk(lambda lp: lp["f_w2"], bf16)                            # (L, DI, D)
    fb2   = stk(lambda lp: lp["f_b2"].reshape(1, D))
    ln3g  = stk(lambda lp: lp["f_g"].reshape(1, D))
    ln3b  = stk(lambda lp: lp["f_b"].reshape(1, D))

    full2 = lambda l: (0, 0)
    full3 = lambda l: (0, 0, 0)
    layer3 = lambda l: (l, 0, 0)
    attn4 = lambda l: (l, 0, 0, 0)

    out2d, sattn, cattn = pl.pallas_call(
        decoder_stack_kernel,
        out_shape=(jax.ShapeDtypeStruct((bs * Lq, D), jnp.float32),
                   jax.ShapeDtypeStruct((L, bs, Lq, H * Lq), jnp.bfloat16),
                   jax.ShapeDtypeStruct((L, bs, Lq, H * Lk), jnp.bfloat16)),
        grid=(L,),                           # layer-only grid: weights stream once
        in_specs=[
            pl.BlockSpec((bs * Lq, D), full2),      # decoder queries (batch folded)
            pl.BlockSpec((bs * Lk, D), full2),      # flattened encoder memory (bf16)
            pl.BlockSpec((bs, Lq, Lq), full3),      # self-attn additive bias
            pl.BlockSpec((bs, 1, Lk), full3),       # cross-attn additive bias
            pl.BlockSpec((1, D, 3 * D), layer3),    # fused Wqkv (self)
            pl.BlockSpec((1, D, D), layer3),        # Wo (self)
            pl.BlockSpec((1, 1, D), layer3),        # LN1 gamma
            pl.BlockSpec((1, 1, D), layer3),        # LN1 beta
            pl.BlockSpec((1, D, D), layer3),        # Wq (cross)
            pl.BlockSpec((1, D, 2 * D), layer3),    # fused Wkv (cross)
            pl.BlockSpec((1, D, D), layer3),        # Wo (cross)
            pl.BlockSpec((1, 1, D), layer3),        # LN2 gamma
            pl.BlockSpec((1, 1, D), layer3),        # LN2 beta
            pl.BlockSpec((1, D, DI), layer3),       # FFN W1
            pl.BlockSpec((1, 1, DI), layer3),       # FFN b1
            pl.BlockSpec((1, DI, D), layer3),       # FFN W2
            pl.BlockSpec((1, 1, D), layer3),        # FFN b2
            pl.BlockSpec((1, 1, D), layer3),        # LN3 gamma
            pl.BlockSpec((1, 1, D), layer3),        # LN3 beta
        ],
        out_specs=(pl.BlockSpec((bs * Lq, D), full2),
                   pl.BlockSpec((1, bs, Lq, H * Lq), attn4),
                   pl.BlockSpec((1, bs, Lq, H * Lk), attn4)),
        scratch_shapes=[pltpu.VMEM((bs * Lq, D), jnp.float32),   # layer carry
                        pltpu.VMEM((bs * Lq, D), jnp.float32)],  # head-context assembly
        compiler_params=pltpu.CompilerParams(
            dimension_semantics=("arbitrary",)),
    )(dec2d, enc2d, sbias, cbias,
      wqkv_s, wo_s, ln1g, ln1b,
      wq_c, wkv_c, wo_c, ln2g, ln2b,
      w1, fb1, w2, fb2, ln3g, ln3b)

    out = out2d.reshape(bs, Lq, D)
    # lane-dense slabs -> (L, bs, H, Lq, Lkv)
    sattn = jnp.transpose(sattn.reshape(L, bs, Lq, H, Lq), (0, 1, 3, 2, 4)).astype(jnp.float32)
    cattn = jnp.transpose(cattn.reshape(L, bs, Lq, H, Lk), (0, 1, 3, 2, 4)).astype(jnp.float32)
    slf_list = [sattn[i] for i in range(L)]
    crs_list = [cattn[i] for i in range(L)]
    return out, slf_list, crs_list


# ----------------------------- params ----------------------------------------

def init_params(key, n_layers, d_model, d_inner):
    layers = []
    for _ in range(n_layers):
        key, *ks = jax.random.split(key, 13)
        r = lambda k, shp: 0.05 * jax.random.normal(k, shp, jnp.float32)
        layers.append(dict(
            s_wq=r(ks[0], (d_model, d_model)), s_wk=r(ks[1], (d_model, d_model)),
            s_wv=r(ks[2], (d_model, d_model)), s_wo=r(ks[3], (d_model, d_model)),
            s_g=jnp.ones((d_model,), jnp.float32), s_b=jnp.zeros((d_model,), jnp.float32),
            c_wq=r(ks[4], (d_model, d_model)), c_wk=r(ks[5], (d_model, d_model)),
            c_wv=r(ks[6], (d_model, d_model)), c_wo=r(ks[7], (d_model, d_model)),
            c_g=jnp.ones((d_model,), jnp.float32), c_b=jnp.zeros((d_model,), jnp.float32),
            f_w1=r(ks[8], (d_model, d_inner)), f_b1=r(ks[9], (d_inner,)),
            f_w2=r(ks[10], (d_inner, d_model)), f_b2=r(ks[11], (d_model,)),
            f_g=jnp.ones((d_model,), jnp.float32), f_b=jnp.zeros((d_model,), jnp.float32),
        ))
    return layers


# ----------------------------- pure-JAX reference ----------------------------

def _ref_ln(x, g, b, eps):
    mu = jnp.mean(x, -1, keepdims=True)
    var = jnp.mean((x - mu) ** 2, -1, keepdims=True)
    return (x - mu) * lax.rsqrt(var + eps) * g + b


def ref_forward(dec_in, enc_output, decoder_self_mask, padding_mask, layer_params):
    bs, c, w, h, d = enc_output.shape
    D = c
    Lq = dec_in.shape[1]
    Lk = w * h * d
    H = N_HEAD
    dk = D // H
    enc = jnp.transpose(enc_output.reshape(bs, c, Lk), (0, 2, 1))
    em = _interp_mask(padding_mask, w, h, d)
    cmask = jnp.broadcast_to(em[:, None, :], (bs, Lq, Lk))
    smask = decoder_self_mask.astype(jnp.float32)

    def mha(q_in, kv_in, wq, wk, wv, wo, g, b, mask):
        lq, lk = q_in.shape[1], kv_in.shape[1]
        q = (q_in @ wq).reshape(bs, lq, H, dk).transpose(0, 2, 1, 3)
        k = (kv_in @ wk).reshape(bs, lk, H, dk).transpose(0, 2, 1, 3)
        v = (kv_in @ wv).reshape(bs, lk, H, dk).transpose(0, 2, 1, 3)
        s = jnp.einsum("bhqd,bhkd->bhqk", q, k) / math.sqrt(dk)
        s = jnp.where(mask[:, None] == 0.0, NEG_INF, s)
        p = jax.nn.softmax(s, axis=-1)
        ctx = jnp.einsum("bhqk,bhkd->bhqd", p, v).transpose(0, 2, 1, 3).reshape(bs, lq, D)
        return _ref_ln(ctx @ wo + q_in, g, b, 1e-6), p

    hcur = dec_in
    slf_list, crs_list = [], []
    for lp in layer_params:
        hcur, ps = mha(hcur, hcur, lp["s_wq"], lp["s_wk"], lp["s_wv"], lp["s_wo"],
                       lp["s_g"], lp["s_b"], smask)
        slf_list.append(ps)
        hcur, pc = mha(hcur, enc, lp["c_wq"], lp["c_wk"], lp["c_wv"], lp["c_wo"],
                       lp["c_g"], lp["c_b"], cmask)
        crs_list.append(pc)
        f = jnp.maximum(hcur @ lp["f_w1"] + lp["f_b1"], 0.0) @ lp["f_w2"] + lp["f_b2"]
        hcur = _ref_ln(f + hcur, lp["f_g"], lp["f_b"], 1e-6)
    return hcur, slf_list, crs_list


# ----------------------------- main ------------------------------------------

if __name__ == "__main__":
    bs, class_num, d_model, d_inner, n_layers = 2, 8, 32, 64, 2
    w, h, d = 2, 2, 4                         # encoder spatial dims -> Lk = 16
    key = jax.random.PRNGKey(0)
    kd, ke, km, kp, kw = jax.random.split(key, 5)

    dec_in = jax.random.normal(kd, (bs, class_num, d_model), jnp.float32)
    enc_out = jax.random.normal(ke, (bs, d_model, w, h, d), jnp.float32)
    decoder_self_mask = (jax.random.uniform(km, (bs, class_num, class_num)) < 0.8
                         ).astype(jnp.float32)
    padding_mask = jax.random.uniform(kp, (bs, 4, 4, 8)) < 0.7   # different resolution

    layer_params = init_params(kw, n_layers, d_model, d_inner)

    out, slf_attns, enc_attns = decoder_forward(
        dec_in, enc_out, decoder_self_mask, padding_mask, layer_params)
    out = jax.block_until_ready(out)
    slf_attns = [jax.block_until_ready(a) for a in slf_attns]
    enc_attns = [jax.block_until_ready(a) for a in enc_attns]

    ref_out, ref_slf, ref_enc = ref_forward(
        dec_in, enc_out, decoder_self_mask, padding_mask, layer_params)

    assert out.shape == (bs, class_num, d_model)
    assert jnp.allclose(out, ref_out, rtol=2e-2, atol=2e-2), "decoder output mismatch"
    for a, ra in zip(slf_attns, ref_slf):
        assert a.shape == (bs, N_HEAD, class_num, class_num)
        assert jnp.allclose(a, ra, rtol=2e-2, atol=2e-2), "self-attn mismatch"
    for a, ra in zip(enc_attns, ref_enc):
        assert a.shape == (bs, N_HEAD, class_num, w * h * d)
        assert jnp.allclose(a, ra, rtol=2e-2, atol=2e-2), "dec-enc attn mismatch"

    print("KERNEL_OK")
</pallas_src>

<mosaic_0001>
module attributes {stable_mosaic.version = 11 : i64} {
  func.func @decoder_stack_kernel(%arg0: i32, %arg1: memref<16x32xf32, #tpu.memory_space<vmem>>, %arg2: memref<32x32xbf16, #tpu.memory_space<vmem>>, %arg3: memref<2x8x8xf32, #tpu.memory_space<vmem>>, %arg4: memref<2x1x16xf32, #tpu.memory_space<vmem>>, %arg5: memref<1x32x96xbf16, #tpu.memory_space<vmem>>, %arg6: memref<1x32x32xbf16, #tpu.memory_space<vmem>>, %arg7: memref<1x1x32xf32, #tpu.memory_space<vmem>>, %arg8: memref<1x1x32xf32, #tpu.memory_space<vmem>>, %arg9: memref<1x32x32xbf16, #tpu.memory_space<vmem>>, %arg10: memref<1x32x64xbf16, #tpu.memory_space<vmem>>, %arg11: memref<1x32x32xbf16, #tpu.memory_space<vmem>>, %arg12: memref<1x1x32xf32, #tpu.memory_space<vmem>>, %arg13: memref<1x1x32xf32, #tpu.memory_space<vmem>>, %arg14: memref<1x32x64xbf16, #tpu.memory_space<vmem>>, %arg15: memref<1x1x64xf32, #tpu.memory_space<vmem>>, %arg16: memref<1x64x32xbf16, #tpu.memory_space<vmem>>, %arg17: memref<1x1x32xf32, #tpu.memory_space<vmem>>, %arg18: memref<1x1x32xf32, #tpu.memory_space<vmem>>, %arg19: memref<1x1x32xf32, #tpu.memory_space<vmem>>, %arg20: memref<16x32xf32, #tpu.memory_space<vmem>>, %arg21: memref<1x2x8x64xbf16, #tpu.memory_space<vmem>>, %arg22: memref<1x2x8x128xbf16, #tpu.memory_space<vmem>>, %arg23: memref<16x32xf32, #tpu.memory_space<vmem>>, %arg24: memref<16x32xf32, #tpu.memory_space<vmem>>) attributes {dimension_semantics = [#tpu.dimension_semantics<arbitrary>], iteration_bounds = array<i64: 2>, scalar_prefetch = 0 : i64, scratch_operands = 2 : i64, tpu.core_type = #tpu.core_type<tc>, window_params = [{pipeline_mode = #tpu.pipeline_mode<synchronous>, transform_indices = @transform_0, window_bounds = array<i64: 16, 32>}, {pipeline_mode = #tpu.pipeline_mode<synchronous>, transform_indices = @transform_1, window_bounds = array<i64: 32, 32>}, {pipeline_mode = #tpu.pipeline_mode<synchronous>, transform_indices = @transform_2, window_bounds = array<i64: 2, 8, 8>}, {pipeline_mode = #tpu.pipeline_mode<synchronous>, transform_indices = @transform_3, window_bounds = array<i64: 2, 1, 16>}, {transform_indices = @transform_4, window_bounds = array<i64: 1, 32, 96>}, {transform_indices = @transform_5, window_bounds = array<i64: 1, 32, 32>}, {transform_indices = @transform_6, window_bounds = array<i64: 1, 1, 32>}, {transform_indices = @transform_7, window_bounds = array<i64: 1, 1, 32>}, {transform_indices = @transform_8, window_bounds = array<i64: 1, 32, 32>}, {transform_indices = @transform_9, window_bounds = array<i64: 1, 32, 64>}, {transform_indices = @transform_10, window_bounds = array<i64: 1, 32, 32>}, {transform_indices = @transform_11, window_bounds = array<i64: 1, 1, 32>}, {transform_indices = @transform_12, window_bounds = array<i64: 1, 1, 32>}, {transform_indices = @transform_13, window_bounds = array<i64: 1, 32, 64>}, {transform_indices = @transform_14, window_bounds = array<i64: 1, 1, 64>}, {transform_indices = @transform_15, window_bounds = array<i64: 1, 64, 32>}, {transform_indices = @transform_16, window_bounds = array<i64: 1, 1, 32>}, {transform_indices = @transform_17, window_bounds = array<i64: 1, 1, 32>}, {transform_indices = @transform_18, window_bounds = array<i64: 1, 1, 32>}, {pipeline_mode = #tpu.pipeline_mode<synchronous>, transform_indices = @transform_19, window_bounds = array<i64: 16, 32>}, {transform_indices = @transform_20, window_bounds = array<i64: 1, 2, 8, 64>}, {transform_indices = @transform_21, window_bounds = array<i64: 1, 2, 8, 128>}]} {
    %c0_i32 = arith.constant 0 : i32
    %0 = arith.cmpi eq, %arg0, %c0_i32 : i32
    %1 = arith.extui %0 : i1 to i32
    %c0_i32_0 = arith.constant 0 : i32
    %2 = arith.cmpi ne, %1, %c0_i32_0 : i32
    scf.if %2 {
      %c0_394 = arith.constant 0 : index
      %c0_395 = arith.constant 0 : index
      %833 = vector.load %arg1[%c0_394, %c0_395] : memref<16x32xf32, #tpu.memory_space<vmem>>, vector<16x32xf32>
      %c0_396 = arith.constant 0 : index
      %c0_397 = arith.constant 0 : index
      %834 = vector.load %arg23[%c0_396, %c0_397] : memref<16x32xf32, #tpu.memory_space<vmem>>, vector<16x32xf32>
      tpu.vector_store %arg23[%c0_396, %c0_397], %833 {strides = array<i32>} : memref<16x32xf32, #tpu.memory_space<vmem>>, vector<16x32xf32>,
    } else {
    }
    %c0 = arith.constant 0 : index
    %c0_1 = arith.constant 0 : index
    %3 = vector.load %arg23[%c0, %c0_1] : memref<16x32xf32, #tpu.memory_space<vmem>>, vector<16x32xf32>
    %4 = arith.truncf %3 : vector<16x32xf32> to vector<16x32xbf16>
    %c0_2 = arith.constant 0 : index
    %c0_3 = arith.constant 0 : index
    %c0_4 = arith.constant 0 : index
    %5 = vector.load %arg5[%c0_2, %c0_3, %c0_4] : memref<1x32x96xbf16, #tpu.memory_space<vmem>>, vector<1x32x96xbf16>
    %6 = vector.shape_cast %5 : vector<1x32x96xbf16> to vector<32x96xbf16>
    %cst = arith.constant dense<0.000000e+00> : vector<16x96xf32>
    %7 = tpu.matmul %4, %6, %cst {dimension_numbers = #tpu.dot_dimension_numbers<[1], [0], [0], [1], [0, 0, 1, 1], [], []>} : vector<16x32xbf16>, vector<32x96xbf16>, vector<16x96xf32> -> vector<16x96xf32>
    %8 = arith.truncf %7 : vector<16x96xf32> to vector<16x96xbf16>
    %9 = vector.extract_strided_slice %8 {offsets = [0, 0], sizes = [16, 32], strides = [1, 1]} : vector<16x96xbf16> to vector<16x32xbf16>
    %10 = vector.extract_strided_slice %8 {offsets = [0, 32], sizes = [16, 32], strides = [1, 1]} : vector<16x96xbf16> to vector<16x32xbf16>
    %11 = vector.extract_strided_slice %8 {offsets = [0, 64], sizes = [16, 32], strides = [1, 1]} : vector<16x96xbf16> to vector<16x32xbf16>
    %c0_5 = arith.constant 0 : index
    %c0_6 = arith.constant 0 : index
    %c0_7 = arith.constant 0 : index
    %12 = vector.load %arg3[%c0_5, %c0_6, %c0_7] : memref<2x8x8xf32, #tpu.memory_space<vmem>>, vector<1x8x8xf32>
    %13 = vector.shape_cast %12 : vector<1x8x8xf32> to vector<8x8xf32>
    %14 = vector.extract_strided_slice %9 {offsets = [0, 0], sizes = [8, 4], strides = [1, 1]} : vector<16x32xbf16> to vector<8x4xbf16>
    %15 = vector.extract_strided_slice %10 {offsets = [0, 0], sizes = [8, 4], strides = [1, 1]} : vector<16x32xbf16> to vector<8x4xbf16>
    %cst_8 = arith.constant dense<0.000000e+00> : vector<8x8xf32>
    %16 = tpu.matmul %14, %15, %cst_8 {dimension_numbers = #tpu.dot_dimension_numbers<[1], [1], [0], [0], [0, 0, 1, 0], [], []>} : vector<8x4xbf16>, vector<8x4xbf16>, vector<8x8xf32> -> vector<8x8xf32>
    %17 = arith.addf %16, %13 : vector<8x8xf32>
    %cst_9 = arith.constant dense<0xFF800000> : vector<8xf32>
    %18 = vector.multi_reduction <maximumf>, %17, %cst_9 [1] : vector<8x8xf32> to vector<8xf32>
    %19 = vector.shape_cast %18 : vector<8xf32> to vector<8x1xf32>
    %20 = vector.broadcast %19 : vector<8x1xf32> to vector<8x8xf32>
    %21 = arith.subf %17, %20 : vector<8x8xf32>
    %22 = math.exp %21 : vector<8x8xf32>
    %cst_10 = arith.constant dense<0.000000e+00> : vector<8xf32>
    %23 = vector.multi_reduction <add>, %22, %cst_10 [1] : vector<8x8xf32> to vector<8xf32>
    %24 = vector.shape_cast %23 : vector<8xf32> to vector<8x1xf32>
    %25 = tpu.reciprocal %24 {approx = true} : vector<8x1xf32> -> vector<8x1xf32>
    %26 = vector.broadcast %25 : vector<8x1xf32> to vector<8x8xf32>
    %27 = arith.mulf %22, %26 : vector<8x8xf32>
    %28 = arith.truncf %27 : vector<8x8xf32> to vector<8x8xbf16>
    %c0_11 = arith.constant 0 : index
    %c0_12 = arith.constant 0 : index
    %c0_13 = arith.constant 0 : index
    %c0_14 = arith.constant 0 : index
    %29 = vector.load %arg21[%c0_11, %c0_12, %c0_13, %c0_14] : memref<1x2x8x64xbf16, #tpu.memory_space<vmem>>, vector<1x1x8x8xbf16>
    %30 = vector.shape_cast %29 : vector<1x1x8x8xbf16> to vector<8x8xbf16>
    %31 = vector.shape_cast %28 : vector<8x8xbf16> to vector<1x1x8x8xbf16>
    tpu.vector_store %arg21[%c0_11, %c0_12, %c0_13, %c0_14], %31 {strides = array<i32>} : memref<1x2x8x64xbf16, #tpu.memory_space<vmem>>, vector<1x1x8x8xbf16>,
    %32 = vector.extract_strided_slice %11 {offsets = [0, 0], sizes = [8, 4], strides = [1, 1]} : vector<16x32xbf16> to vector<8x4xbf16>
    %cst_15 = arith.constant dense<0.000000e+00> : vector<8x4xf32>
    %33 = tpu.matmul %28, %32, %cst_15 {dimension_numbers = #tpu.dot_dimension_numbers<[1], [0], [0], [1], [0, 0, 1, 1], [], []>} : vector<8x8xbf16>, vector<8x4xbf16>, vector<8x4xf32> -> vector<8x4xf32>
    %c0_16 = arith.constant 0 : index
    %c0_17 = arith.constant 0 : index
    %34 = vector.load %arg24[%c0_16, %c0_17] : memref<16x32xf32, #tpu.memory_space<vmem>>, vector<8x4xf32>
    tpu.vector_store %arg24[%c0_16, %c0_17], %33 {strides = array<i32>} : memref<16x32xf32, #tpu.memory_space<vmem>>, vector<8x4xf32>,
    %35 = vector.extract_strided_slice %9 {offsets = [0, 4], sizes = [8, 4], strides = [1, 1]} : vector<16x32xbf16> to vector<8x4xbf16>
    %36 = vector.extract_strided_slice %10 {offsets = [0, 4], sizes = [8, 4], strides = [1, 1]} : vector<16x32xbf16> to vector<8x4xbf16>
    %cst_18 = arith.constant dense<0.000000e+00> : vector<8x8xf32>
    %37 = tpu.matmul %35, %36, %cst_18 {dimension_numbers = #tpu.dot_dimension_numbers<[1], [1], [0], [0], [0, 0, 1, 0], [], []>} : vector<8x4xbf16>, vector<8x4xbf16>, vector<8x8xf32> -> vector<8x8xf32>
    %38 = arith.addf %37, %13 : vector<8x8xf32>
    %cst_19 = arith.constant dense<0xFF800000> : vector<8xf32>
    %39 = vector.multi_reduction <maximumf>, %38, %cst_19 [1] : vector<8x8xf32> to vector<8xf32>
    %40 = vector.shape_cast %39 : vector<8xf32> to vector<8x1xf32>
    %41 = vector.broadcast %40 : vector<8x1xf32> to vector<8x8xf32>
    %42 = arith.subf %38, %41 : vector<8x8xf32>
    %43 = math.exp %42 : vector<8x8xf32>
    %cst_20 = arith.constant dense<0.000000e+00> : vector<8xf32>
    %44 = vector.multi_reduction <add>, %43, %cst_20 [1] : vector<8x8xf32> to vector<8xf32>
    %45 = vector.shape_cast %44 : vector<8xf32> to vector<8x1xf32>
    %46 = tpu.reciprocal %45 {approx = true} : vector<8x1xf32> -> vector<8x1xf32>
    %47 = vector.broadcast %46 : vector<8x1xf32> to vector<8x8xf32>
    %48 = arith.mulf %43, %47 : vector<8x8xf32>
    %49 = arith.truncf %48 : vector<8x8xf32> to vector<8x8xbf16>
    %c0_21 = arith.constant 0 : index
    %c0_22 = arith.constant 0 : index
    %c0_23 = arith.constant 0 : index
    %c8 = arith.constant 8 : index
    %50 = vector.load %arg21[%c0_21, %c0_22, %c0_23, %c8] : memref<1x2x8x64xbf16, #tpu.memory_space<vmem>>, vector<1x1x8x8xbf16>
    %51 = vector.shape_cast %50 : vector<1x1x8x8xbf16> to vector<8x8xbf16>
    %52 = vector.shape_cast %49 : vector<8x8xbf16> to vector<1x1x8x8xbf16>
    tpu.vector_store %arg21[%c0_21, %c0_22, %c0_23, %c8], %52 {strides = array<i32>} : memref<1x2x8x64xbf16, #tpu.memory_space<vmem>>, vector<1x1x8x8xbf16>,
    %53 = vector.extract_strided_slice %11 {offsets = [0, 4], sizes = [8, 4], strides = [1, 1]} : vector<16x32xbf16> to vector<8x4xbf16>
    %cst_24 = arith.constant dense<0.000000e+00> : vector<8x4xf32>
    %54 = tpu.matmul %49, %53, %cst_24 {dimension_numbers = #tpu.dot_dimension_numbers<[1], [0], [0], [1], [0, 0, 1, 1], [], []>} : vector<8x8xbf16>, vector<8x4xbf16>, vector<8x4xf32> -> vector<8x4xf32>
    %c0_25 = arith.constant 0 : index
    %c4 = arith.constant 4 : index
    %55 = vector.load %arg24[%c0_25, %c4] : memref<16x32xf32, #tpu.memory_space<vmem>>, vector<8x4xf32>
    tpu.vector_store %arg24[%c0_25, %c4], %54 {strides = array<i32>} : memref<16x32xf32, #tpu.memory_space<vmem>>, vector<8x4xf32>,
    %56 = vector.extract_strided_slice %9 {offsets = [0, 8], sizes = [8, 4], strides = [1, 1]} : vector<16x32xbf16> to vector<8x4xbf16>
    %57 = vector.extract_strided_slice %10 {offsets = [0, 8], sizes = [8, 4], strides = [1, 1]} : vector<16x32xbf16> to vector<8x4xbf16>
    %cst_26 = arith.constant dense<0.000000e+00> : vector<8x8xf32>
    %58 = tpu.matmul %56, %57, %cst_26 {dimension_numbers = #tpu.dot_dimension_numbers<[1], [1], [0], [0], [0, 0, 1, 0], [], []>} : vector<8x4xbf16>, vector<8x4xbf16>, vector<8x8xf32> -> vector<8x8xf32>
    %59 = arith.addf %58, %13 : vector<8x8xf32>
    %cst_27 = arith.constant dense<0xFF800000> : vector<8xf32>
    %60 = vector.multi_reduction <maximumf>, %59, %cst_27 [1] : vector<8x8xf32> to vector<8xf32>
    %61 = vector.shape_cast %60 : vector<8xf32> to vector<8x1xf32>
    %62 = vector.broadcast %61 : vector<8x1xf32> to vector<8x8xf32>
    %63 = arith.subf %59, %62 : vector<8x8xf32>
    %64 = math.exp %63 : vector<8x8xf32>
    %cst_28 = arith.constant dense<0.000000e+00> : vector<8xf32>
    %65 = vector.multi_reduction <add>, %64, %cst_28 [1] : vector<8x8xf32> to vector<8xf32>
    %66 = vector.shape_cast %65 : vector<8xf32> to vector<8x1xf32>
    %67 = tpu.reciprocal %66 {approx = true} : vector<8x1xf32> -> vector<8x1xf32>
    %68 = vector.broadcast %67 : vector<8x1xf32> to vector<8x8xf32>
    %69 = arith.mulf %64, %68 : vector<8x8xf32>
    %70 = arith.truncf %69 : vector<8x8xf32> to vector<8x8xbf16>
    %c0_29 = arith.constant 0 : index
    %c0_30 = arith.constant 0 : index
    %c0_31 = arith.constant 0 : index
    %c16 = arith.constant 16 : index
    %71 = vector.load %arg21[%c0_29, %c0_30, %c0_31, %c16] : memref<1x2x8x64xbf16, #tpu.memory_space<vmem>>, vector<1x1x8x8xbf16>
    %72 = vector.shape_cast %71 : vector<1x1x8x8xbf16> to vector<8x8xbf16>
    %73 = vector.shape_cast %70 : vector<8x8xbf16> to vector<1x1x8x8xbf16>
    tpu.vector_store %arg21[%c0_29, %c0_30, %c0_31, %c16], %73 {strides = array<i32>} : memref<1x2x8x64xbf16, #tpu.memory_space<vmem>>, vector<1x1x8x8xbf16>,
    %74 = vector.extract_strided_slice %11 {offsets = [0, 8], sizes = [8, 4], strides = [1, 1]} : vector<16x32xbf16> to vector<8x4xbf16>
    %cst_32 = arith.constant dense<0.000000e+00> : vector<8x4xf32>
    %75 = tpu.matmul %70, %74, %cst_32 {dimension_numbers = #tpu.dot_dimension_numbers<[1], [0], [0], [1], [0, 0, 1, 1], [], []>} : vector<8x8xbf16>, vector<8x4xbf16>, vector<8x4xf32> -> vector<8x4xf32>
    %c0_33 = arith.constant 0 : index
    %c8_34 = arith.constant 8 : index
    %76 = vector.load %arg24[%c0_33, %c8_34] : memref<16x32xf32, #tpu.memory_space<vmem>>, vector<8x4xf32>
    tpu.vector_store %arg24[%c0_33, %c8_34], %75 {strides = array<i32>} : memref<16x32xf32, #tpu.memory_space<vmem>>, vector<8x4xf32>,
    %77 = vector.extract_strided_slice %9 {offsets = [0, 12], sizes = [8, 4], strides = [1, 1]} : vector<16x32xbf16> to vector<8x4xbf16>
    %78 = vector.extract_strided_slice %10 {offsets = [0, 12], sizes = [8, 4], strides = [1, 1]} : vector<16x32xbf16> to vector<8x4xbf16>
    %cst_35 = arith.constant dense<0.000000e+00> : vector<8x8xf32>
    %79 = tpu.matmul %77, %78, %cst_35 {dimension_numbers = #tpu.dot_dimension_numbers<[1], [1], [0], [0], [0, 0, 1, 0], [], []>} : vector<8x4xbf16>, vector<8x4xbf16>, vector<8x8xf32> -> vector<8x8xf32>
    %80 = arith.addf %79, %13 : vector<8x8xf32>
    %cst_36 = arith.constant dense<0xFF800000> : vector<8xf32>
    %81 = vector.multi_reduction <maximumf>, %80, %cst_36 [1] : vector<8x8xf32> to vector<8xf32>
    %82 = vector.shape_cast %81 : vector<8xf32> to vector<8x1xf32>
    %83 = vector.broadcast %82 : vector<8x1xf32> to vector<8x8xf32>
    %84 = arith.subf %80, %83 : vector<8x8xf32>
    %85 = math.exp %84 : vector<8x8xf32>
    %cst_37 = arith.constant dense<0.000000e+00> : vector<8xf32>
    %86 = vector.multi_reduction <add>, %85, %cst_37 [1] : vector<8x8xf32> to vector<8xf32>
    %87 = vector.shape_cast %86 : vector<8xf32> to vector<8x1xf32>
    %88 = tpu.reciprocal %87 {approx = true} : vector<8x1xf32> -> vector<8x1xf32>
    %89 = vector.broadcast %88 : vector<8x1xf32> to vector<8x8xf32>
    %90 = arith.mulf %85, %89 : vector<8x8xf32>
    %91 = arith.truncf %90 : vector<8x8xf32> to vector<8x8xbf16>
    %c0_38 = arith.constant 0 : index
    %c0_39 = arith.constant 0 : index
    %c0_40 = arith.constant 0 : index
    %c24 = arith.constant 24 : index
    %92 = vector.load %arg21[%c0_38, %c0_39, %c0_40, %c24] : memref<1x2x8x64xbf16, #tpu.memory_space<vmem>>, vector<1x1x8x8xbf16>
    %93 = vector.shape_cast %92 : vector<1x1x8x8xbf16> to vector<8x8xbf16>
    %94 = vector.shape_cast %91 : vector<8x8xbf16> to vector<1x1x8x8xbf16>
    tpu.vector_store %arg21[%c0_38, %c0_39, %c0_40, %c24], %94 {strides = array<i32>} : memref<1x2x8x64xbf16, #tpu.memory_space<vmem>>, vector<1x1x8x8xbf16>,
    %95 = vector.extract_strided_slice %11 {offsets = [0, 12], sizes = [8, 4], strides = [1, 1]} : vector<16x32xbf16> to vector<8x4xbf16>
    %cst_41 = arith.constant dense<0.000000e+00> : vector<8x4xf32>
    %96 = tpu.matmul %91, %95, %cst_41 {dimension_numbers = #tpu.dot_dimension_numbers<[1], [0], [0], [1], [0, 0, 1, 1], [], []>} : vector<8x8xbf16>, vector<8x4xbf16>, vector<8x4xf32> -> vector<8x4xf32>
    %c0_42 = arith.constant 0 : index
    %c12 = arith.constant 12 : index
    %97 = vector.load %arg24[%c0_42, %c12] : memref<16x32xf32, #tpu.memory_space<vmem>>, vector<8x4xf32>
    tpu.vector_store %arg24[%c0_42, %c12], %96 {strides = array<i32>} : memref<16x32xf32, #tpu.memory_space<vmem>>, vector<8x4xf32>,
    %98 = vector.extract_strided_slice %9 {offsets = [0, 16], sizes = [8, 4], strides = [1, 1]} : vector<16x32xbf16> to vector<8x4xbf16>
    %99 = vector.extract_strided_slice %10 {offsets = [0, 16], sizes = [8, 4], strides = [1, 1]} : vector<16x32xbf16> to vector<8x4xbf16>
    %cst_43 = arith.constant dense<0.000000e+00> : vector<8x8xf32>
    %100 = tpu.matmul %98, %99, %cst_43 {dimension_numbers = #tpu.dot_dimension_numbers<[1], [1], [0], [0], [0, 0, 1, 0], [], []>} : vector<8x4xbf16>, vector<8x4xbf16>, vector<8x8xf32> -> vector<8x8xf32>
    %101 = arith.addf %100, %13 : vector<8x8xf32>
    %cst_44 = arith.constant dense<0xFF800000> : vector<8xf32>
    %102 = vector.multi_reduction <maximumf>, %101, %cst_44 [1] : vector<8x8xf32> to vector<8xf32>
    %103 = vector.shape_cast %102 : vector<8xf32> to vector<8x1xf32>
    %104 = vector.broadcast %103 : vector<8x1xf32> to vector<8x8xf32>
    %105 = arith.subf %101, %104 : vector<8x8xf32>
    %106 = math.exp %105 : vector<8x8xf32>
    %cst_45 = arith.constant dense<0.000000e+00> : vector<8xf32>
    %107 = vector.multi_reduction <add>, %106, %cst_45 [1] : vector<8x8xf32> to vector<8xf32>
    %108 = vector.shape_cast %107 : vector<8xf32> to vector<8x1xf32>
    %109 = tpu.reciprocal %108 {approx = true} : vector<8x1xf32> -> vector<8x1xf32>
    %110 = vector.broadcast %109 : vector<8x1xf32> to vector<8x8xf32>
    %111 = arith.mulf %106, %110 : vector<8x8xf32>
    %112 = arith.truncf %111 : vector<8x8xf32> to vector<8x8xbf16>
    %c0_46 = arith.constant 0 : index
    %c0_47 = arith.constant 0 : index
    %c0_48 = arith.constant 0 : index
    %c32 = arith.constant 32 : index
    %113 = vector.load %arg21[%c0_46, %c0_47, %c0_48, %c32] : memref<1x2x8x64xbf16, #tpu.memory_space<vmem>>, vector<1x1x8x8xbf16>
    %114 = vector.shape_cast %113 : vector<1x1x8x8xbf16> to vector<8x8xbf16>
    %115 = vector.shape_cast %112 : vector<8x8xbf16> to vector<1x1x8x8xbf16>
    tpu.vector_store %arg21[%c0_46, %c0_47, %c0_48, %c32], %115 {strides = array<i32>} : memref<1x2x8x64xbf16, #tpu.memory_space<vmem>>, vector<1x1x8x8xbf16>,
    %116 = vector.extract_strided_slice %11 {offsets = [0, 16], sizes = [8, 4], strides = [1, 1]} : vector<16x32xbf16> to vector<8x4xbf16>
    %cst_49 = arith.constant dense<0.000000e+00> : vector<8x4xf32>
    %117 = tpu.matmul %112, %116, %cst_49 {dimension_numbers = #tpu.dot_dimension_numbers<[1], [0], [0], [1], [0, 0, 1, 1], [], []>} : vector<8x8xbf16>, vector<8x4xbf16>, vector<8x4xf32> -> vector<8x4xf32>
    %c0_50 = arith.constant 0 : index
    %c16_51 = arith.constant 16 : index
    %118 = vector.load %arg24[%c0_50, %c16_51] : memref<16x32xf32, #tpu.memory_space<vmem>>, vector<8x4xf32>
    tpu.vector_store %arg24[%c0_50, %c16_51], %117 {strides = array<i32>} : memref<16x32xf32, #tpu.memory_space<vmem>>, vector<8x4xf32>,
    %119 = vector.extract_strided_slice %9 {offsets = [0, 20], sizes = [8, 4], strides = [1, 1]} : vector<16x32xbf16> to vector<8x4xbf16>
    %120 = vector.extract_strided_slice %10 {offsets = [0, 20], sizes = [8, 4], strides = [1, 1]} : vector<16x32xbf16> to vector<8x4xbf16>
    %cst_52 = arith.constant dense<0.000000e+00> : vector<8x8xf32>
    %121 = tpu.matmul %119, %120, %cst_52 {dimension_numbers = #tpu.dot_dimension_numbers<[1], [1], [0], [0], [0, 0, 1, 0], [], []>} : vector<8x4xbf16>, vector<8x4xbf16>, vector<8x8xf32> -> vector<8x8xf32>
    %122 = arith.addf %121, %13 : vector<8x8xf32>
    %cst_53 = arith.constant dense<0xFF800000> : vector<8xf32>
    %123 = vector.multi_reduction <maximumf>, %122, %cst_53 [1] : vector<8x8xf32> to vector<8xf32>
    %124 = vector.shape_cast %123 : vector<8xf32> to vector<8x1xf32>
    %125 = vector.broadcast %124 : vector<8x1xf32> to vector<8x8xf32>
    %126 = arith.subf %122, %125 : vector<8x8xf32>
    %127 = math.exp %126 : vector<8x8xf32>
    %cst_54 = arith.constant dense<0.000000e+00> : vector<8xf32>
    %128 = vector.multi_reduction <add>, %127, %cst_54 [1] : vector<8x8xf32> to vector<8xf32>
    %129 = vector.shape_cast %128 : vector<8xf32> to vector<8x1xf32>
    %130 = tpu.reciprocal %129 {approx = true} : vector<8x1xf32> -> vector<8x1xf32>
    %131 = vector.broadcast %130 : vector<8x1xf32> to vector<8x8xf32>
    %132 = arith.mulf %127, %131 : vector<8x8xf32>
    %133 = arith.truncf %132 : vector<8x8xf32> to vector<8x8xbf16>
    %c0_55 = arith.constant 0 : index
    %c0_56 = arith.constant 0 : index
    %c0_57 = arith.constant 0 : index
    %c40 = arith.constant 40 : index
    %134 = vector.load %arg21[%c0_55, %c0_56, %c0_57, %c40] : memref<1x2x8x64xbf16, #tpu.memory_space<vmem>>, vector<1x1x8x8xbf16>
    %135 = vector.shape_cast %134 : vector<1x1x8x8xbf16> to vector<8x8xbf16>
    %136 = vector.shape_cast %133 : vector<8x8xbf16> to vector<1x1x8x8xbf16>
    tpu.vector_store %arg21[%c0_55, %c0_56, %c0_57, %c40], %136 {strides = array<i32>} : memref<1x2x8x64xbf16, #tpu.memory_space<vmem>>, vector<1x1x8x8xbf16>,
    %137 = vector.extract_strided_slice %11 {offsets = [0, 20], sizes = [8, 4], strides = [1, 1]} : vector<16x32xbf16> to vector<8x4xbf16>
    %cst_58 = arith.constant dense<0.000000e+00> : vector<8x4xf32>
    %138 = tpu.matmul %133, %137, %cst_58 {dimension_numbers = #tpu.dot_dimension_numbers<[1], [0], [0], [1], [0, 0, 1, 1], [], []>} : vector<8x8xbf16>, vector<8x4xbf16>, vector<8x4xf32> -> vector<8x4xf32>
    %c0_59 = arith.constant 0 : index
    %c20 = arith.constant 20 : index
    %139 = vector.load %arg24[%c0_59, %c20] : memref<16x32xf32, #tpu.memory_space<vmem>>, vector<8x4xf32>
    tpu.vector_store %arg24[%c0_59, %c20], %138 {strides = array<i32>} : memref<16x32xf32, #tpu.memory_space<vmem>>, vector<8x4xf32>,
    %140 = vector.extract_strided_slice %9 {offsets = [0, 24], sizes = [8, 4], strides = [1, 1]} : vector<16x32xbf16> to vector<8x4xbf16>
    %141 = vector.extract_strided_slice %10 {offsets = [0, 24], sizes = [8, 4], strides = [1, 1]} : vector<16x32xbf16> to vector<8x4xbf16>
    %cst_60 = arith.constant dense<0.000000e+00> : vector<8x8xf32>
    %142 = tpu.matmul %140, %141, %cst_60 {dimension_numbers = #tpu.dot_dimension_numbers<[1], [1], [0], [0], [0, 0, 1, 0], [], []>} : vector<8x4xbf16>, vector<8x4xbf16>, vector<8x8xf32> -> vector<8x8xf32>
    %143 = arith.addf %142, %13 : vector<8x8xf32>
    %cst_61 = arith.constant dense<0xFF800000> : vector<8xf32>
    %144 = vector.multi_reduction <maximumf>, %143, %cst_61 [1] : vector<8x8xf32> to vector<8xf32>
    %145 = vector.shape_cast %144 : vector<8xf32> to vector<8x1xf32>
    %146 = vector.broadcast %145 : vector<8x1xf32> to vector<8x8xf32>
    %147 = arith.subf %143, %146 : vector<8x8xf32>
    %148 = math.exp %147 : vector<8x8xf32>
    %cst_62 = arith.constant dense<0.000000e+00> : vector<8xf32>
    %149 = vector.multi_reduction <add>, %148, %cst_62 [1] : vector<8x8xf32> to vector<8xf32>
    %150 = vector.shape_cast %149 : vector<8xf32> to vector<8x1xf32>
    %151 = tpu.reciprocal %150 {approx = true} : vector<8x1xf32> -> vector<8x1xf32>
    %152 = vector.broadcast %151 : vector<8x1xf32> to vector<8x8xf32>
    %153 = arith.mulf %148, %152 : vector<8x8xf32>
    %154 = arith.truncf %153 : vector<8x8xf32> to vector<8x8xbf16>
    %c0_63 = arith.constant 0 : index
    %c0_64 = arith.constant 0 : index
    %c0_65 = arith.constant 0 : index
    %c48 = arith.constant 48 : index
    %155 = vector.load %arg21[%c0_63, %c0_64, %c0_65, %c48] : memref<1x2x8x64xbf16, #tpu.memory_space<vmem>>, vector<1x1x8x8xbf16>
    %156 = vector.shape_cast %155 : vector<1x1x8x8xbf16> to vector<8x8xbf16>
    %157 = vector.shape_cast %154 : vector<8x8xbf16> to vector<1x1x8x8xbf16>
    tpu.vector_store %arg21[%c0_63, %c0_64, %c0_65, %c48], %157 {strides = array<i32>} : memref<1x2x8x64xbf16, #tpu.memory_space<vmem>>, vector<1x1x8x8xbf16>,
    %158 = vector.extract_strided_slice %11 {offsets = [0, 24], sizes = [8, 4], strides = [1, 1]} : vector<16x32xbf16> to vector<8x4xbf16>
    %cst_66 = arith.constant dense<0.000000e+00> : vector<8x4xf32>
    %159 = tpu.matmul %154, %158, %cst_66 {dimension_numbers = #tpu.dot_dimension_numbers<[1], [0], [0], [1], [0, 0, 1, 1], [], []>} : vector<8x8xbf16>, vector<8x4xbf16>, vector<8x4xf32> -> vector<8x4xf32>
    %c0_67 = arith.constant 0 : index
    %c24_68 = arith.constant 24 : index
    %160 = vector.load %arg24[%c0_67, %c24_68] : memref<16x32xf32, #tpu.memory_space<vmem>>, vector<8x4xf32>
    tpu.vector_store %arg24[%c0_67, %c24_68], %159 {strides = array<i32>} : memref<16x32xf32, #tpu.memory_space<vmem>>, vector<8x4xf32>,
    %161 = vector.extract_strided_slice %9 {offsets = [0, 28], sizes = [8, 4], strides = [1, 1]} : vector<16x32xbf16> to vector<8x4xbf16>
    %162 = vector.extract_strided_slice %10 {offsets = [0, 28], sizes = [8, 4], strides = [1, 1]} : vector<16x32xbf16> to vector<8x4xbf16>
    %cst_69 = arith.constant dense<0.000000e+00> : vector<8x8xf32>
    %163 = tpu.matmul %161, %162, %cst_69 {dimension_numbers = #tpu.dot_dimension_numbers<[1], [1], [0], [0], [0, 0, 1, 0], [], []>} : vector<8x4xbf16>, vector<8x4xbf16>, vector<8x8xf32> -> vector<8x8xf32>
    %164 = arith.addf %163, %13 : vector<8x8xf32>
    %cst_70 = arith.constant dense<0xFF800000> : vector<8xf32>
    %165 = vector.multi_reduction <maximumf>, %164, %cst_70 [1] : vector<8x8xf32> to vector<8xf32>
    %166 = vector.shape_cast %165 : vector<8xf32> to vector<8x1xf32>
    %167 = vector.broadcast %166 : vector<8x1xf32> to vector<8x8xf32>
    %168 = arith.subf %164, %167 : vector<8x8xf32>
    %169 = math.exp %168 : vector<8x8xf32>
    %cst_71 = arith.constant dense<0.000000e+00> : vector<8xf32>
    %170 = vector.multi_reduction <add>, %169, %cst_71 [1] : vector<8x8xf32> to vector<8xf32>
    %171 = vector.shape_cast %170 : vector<8xf32> to vector<8x1xf32>
    %172 = tpu.reciprocal %171 {approx = true} : vector<8x1xf32> -> vector<8x1xf32>
    %173 = vector.broadcast %172 : vector<8x1xf32> to vector<8x8xf32>
    %174 = arith.mulf %169, %173 : vector<8x8xf32>
    %175 = arith.truncf %174 : vector<8x8xf32> to vector<8x8xbf16>
    %c0_72 = arith.constant 0 : index
    %c0_73 = arith.constant 0 : index
    %c0_74 = arith.constant 0 : index
    %c56 = arith.constant 56 : index
    %176 = vector.load %arg21[%c0_72, %c0_73, %c0_74, %c56] : memref<1x2x8x64xbf16, #tpu.memory_space<vmem>>, vector<1x1x8x8xbf16>
    %177 = vector.shape_cast %176 : vector<1x1x8x8xbf16> to vector<8x8xbf16>
    %178 = vector.shape_cast %175 : vector<8x8xbf16> to vector<1x1x8x8xbf16>
    tpu.vector_store %arg21[%c0_72, %c0_73, %c0_74, %c56], %178 {strides = array<i32>} : memref<1x2x8x64xbf16, #tpu.memory_space<vmem>>, vector<1x1x8x8xbf16>,
    %179 = vector.extract_strided_slice %11 {offsets = [0, 28], sizes = [8, 4], strides = [1, 1]} : vector<16x32xbf16> to vector<8x4xbf16>
    %cst_75 = arith.constant dense<0.000000e+00> : vector<8x4xf32>
    %180 = tpu.matmul %175, %179, %cst_75 {dimension_numbers = #tpu.dot_dimension_numbers<[1], [0], [0], [1], [0, 0, 1, 1], [], []>} : vector<8x8xbf16>, vector<8x4xbf16>, vector<8x4xf32> -> vector<8x4xf32>
    %c0_76 = arith.constant 0 : index
    %c28 = arith.constant 28 : index
    %181 = vector.load %arg24[%c0_76, %c28] : memref<16x32xf32, #tpu.memory_space<vmem>>, vector<8x4xf32>
    tpu.vector_store %arg24[%c0_76, %c28], %180 {strides = array<i32>} : memref<16x32xf32, #tpu.memory_space<vmem>>, vector<8x4xf32>,
    %c1 = arith.constant 1 : index
    %c0_77 = arith.constant 0 : index
    %c0_78 = arith.constant 0 : index
    %182 = vector.load %arg3[%c1, %c0_77, %c0_78] : memref<2x8x8xf32, #tpu.memory_space<vmem>>, vector<1x8x8xf32>
    %183 = vector.shape_cast %182 : vector<1x8x8xf32> to vector<8x8xf32>
    %184 = vector.extract_strided_slice %9 {offsets = [8, 0], sizes = [8, 4], strides = [1, 1]} : vector<16x32xbf16> to vector<8x4xbf16>
    %185 = vector.extract_strided_slice %10 {offsets = [8, 0], sizes = [8, 4], strides = [1, 1]} : vector<16x32xbf16> to vector<8x4xbf16>
    %cst_79 = arith.constant dense<0.000000e+00> : vector<8x8xf32>
    %186 = tpu.matmul %184, %185, %cst_79 {dimension_numbers = #tpu.dot_dimension_numbers<[1], [1], [0], [0], [0, 0, 1, 0], [], []>} : vector<8x4xbf16>, vector<8x4xbf16>, vector<8x8xf32> -> vector<8x8xf32>
    %187 = arith.addf %186, %183 : vector<8x8xf32>
    %cst_80 = arith.constant dense<0xFF800000> : vector<8xf32>
    %188 = vector.multi_reduction <maximumf>, %187, %cst_80 [1] : vector<8x8xf32> to vector<8xf32>
    %189 = vector.shape_cast %188 : vector<8xf32> to vector<8x1xf32>
    %190 = vector.broadcast %189 : vector<8x1xf32> to vector<8x8xf32>
    %191 = arith.subf %187, %190 : vector<8x8xf32>
    %192 = math.exp %191 : vector<8x8xf32>
    %cst_81 = arith.constant dense<0.000000e+00> : vector<8xf32>
    %193 = vector.multi_reduction <add>, %192, %cst_81 [1] : vector<8x8xf32> to vector<8xf32>
    %194 = vector.shape_cast %193 : vector<8xf32> to vector<8x1xf32>
    %195 = tpu.reciprocal %194 {approx = true} : vector<8x1xf32> -> vector<8x1xf32>
    %196 = vector.broadcast %195 : vector<8x1xf32> to vector<8x8xf32>
    %197 = arith.mulf %192, %196 : vector<8x8xf32>
    %198 = arith.truncf %197 : vector<8x8xf32> to vector<8x8xbf16>
    %c0_82 = arith.constant 0 : index
    %c1_83 = arith.constant 1 : index
    %c0_84 = arith.constant 0 : index
    %c0_85 = arith.constant 0 : index
    %199 = vector.load %arg21[%c0_82, %c1_83, %c0_84, %c0_85] : memref<1x2x8x64xbf16, #tpu.memory_space<vmem>>, vector<1x1x8x8xbf16>
    %200 = vector.shape_cast %199 : vector<1x1x8x8xbf16> to vector<8x8xbf16>
    %201 = vector.shape_cast %198 : vector<8x8xbf16> to vector<1x1x8x8xbf16>
    tpu.vector_store %arg21[%c0_82, %c1_83, %c0_84, %c0_85], %201 {strides = array<i32>} : memref<1x2x8x64xbf16, #tpu.memory_space<vmem>>, vector<1x1x8x8xbf16>,
    %202 = vector.extract_strided_slice %11 {offsets = [8, 0], sizes = [8, 4], strides = [1, 1]} : vector<16x32xbf16> to vector<8x4xbf16>
    %cst_86 = arith.constant dense<0.000000e+00> : vector<8x4xf32>
    %203 = tpu.matmul %198, %202, %cst_86 {dimension_numbers = #tpu.dot_dimension_numbers<[1], [0], [0], [1], [0, 0, 1, 1], [], []>} : vector<8x8xbf16>, vector<8x4xbf16>, vector<8x4xf32> -> vector<8x4xf32>
    %c8_87 = arith.constant 8 : index
    %c0_88 = arith.constant 0 : index
    %204 = vector.load %arg24[%c8_87, %c0_88] : memref<16x32xf32, #tpu.memory_space<vmem>>, vector<8x4xf32>
    tpu.vector_store %arg24[%c8_87, %c0_88], %203 {strides = array<i32>} : memref<16x32xf32, #tpu.memory_space<vmem>>, vector<8x4xf32>,
    %205 = vector.extract_strided_slice %9 {offsets = [8, 4], sizes = [8, 4], strides = [1, 1]} : vector<16x32xbf16> to vector<8x4xbf16>
    %206 = vector.extract_strided_slice %10 {offsets = [8, 4], sizes = [8, 4], strides = [1, 1]} : vector<16x32xbf16> to vector<8x4xbf16>
    %cst_89 = arith.constant dense<0.000000e+00> : vector<8x8xf32>
    %207 = tpu.matmul %205, %206, %cst_89 {dimension_numbers = #tpu.dot_dimension_numbers<[1], [1], [0], [0], [0, 0, 1, 0], [], []>} : vector<8x4xbf16>, vector<8x4xbf16>, vector<8x8xf32> -> vector<8x8xf32>
    %208 = arith.addf %207, %183 : vector<8x8xf32>
    %cst_90 = arith.constant dense<0xFF800000> : vector<8xf32>
    %209 = vector.multi_reduction <maximumf>, %208, %cst_90 [1] : vector<8x8xf32> to vector<8xf32>
    %210 = vector.shape_cast %209 : vector<8xf32> to vector<8x1xf32>
    %211 = vector.broadcast %210 : vector<8x1xf32> to vector<8x8xf32>
    %212 = arith.subf %208, %211 : vector<8x8xf32>
    %213 = math.exp %212 : vector<8x8xf32>
    %cst_91 = arith.constant dense<0.000000e+00> : vector<8xf32>
    %214 = vector.multi_reduction <add>, %213, %cst_91 [1] : vector<8x8xf32> to vector<8xf32>
    %215 = vector.shape_cast %214 : vector<8xf32> to vector<8x1xf32>
    %216 = tpu.reciprocal %215 {approx = true} : vector<8x1xf32> -> vector<8x1xf32>
    %217 = vector.broadcast %216 : vector<8x1xf32> to vector<8x8xf32>
    %218 = arith.mulf %213, %217 : vector<8x8xf32>
    %219 = arith.truncf %218 : vector<8x8xf32> to vector<8x8xbf16>
    %c0_92 = arith.constant 0 : index
    %c1_93 = arith.constant 1 : index
    %c0_94 = arith.constant 0 : index
    %c8_95 = arith.constant 8 : index
    %220 = vector.load %arg21[%c0_92, %c1_93, %c0_94, %c8_95] : memref<1x2x8x64xbf16, #tpu.memory_space<vmem>>, vector<1x1x8x8xbf16>
    %221 = vector.shape_cast %220 : vector<1x1x8x8xbf16> to vector<8x8xbf16>
    %222 = vector.shape_cast %219 : vector<8x8xbf16> to vector<1x1x8x8xbf16>
    tpu.vector_store %arg21[%c0_92, %c1_93, %c0_94, %c8_95], %222 {strides = array<i32>} : memref<1x2x8x64xbf16, #tpu.memory_space<vmem>>, vector<1x1x8x8xbf16>,
    %223 = vector.extract_strided_slice %11 {offsets = [8, 4], sizes = [8, 4], strides = [1, 1]} : vector<16x32xbf16> to vector<8x4xbf16>
    %cst_96 = arith.constant dense<0.000000e+00> : vector<8x4xf32>
    %224 = tpu.matmul %219, %223, %cst_96 {dimension_numbers = #tpu.dot_dimension_numbers<[1], [0], [0], [1], [0, 0, 1, 1], [], []>} : vector<8x8xbf16>, vector<8x4xbf16>, vector<8x4xf32> -> vector<8x4xf32>
    %c8_97 = arith.constant 8 : index
    %c4_98 = arith.constant 4 : index
    %225 = vector.load %arg24[%c8_97, %c4_98] : memref<16x32xf32, #tpu.memory_space<vmem>>, vector<8x4xf32>
    tpu.vector_store %arg24[%c8_97, %c4_98], %224 {strides = array<i32>} : memref<16x32xf32, #tpu.memory_space<vmem>>, vector<8x4xf32>,
    %226 = vector.extract_strided_slice %9 {offsets = [8, 8], sizes = [8, 4], strides = [1, 1]} : vector<16x32xbf16> to vector<8x4xbf16>
    %227 = vector.extract_strided_slice %10 {offsets = [8, 8], sizes = [8, 4], strides = [1, 1]} : vector<16x32xbf16> to vector<8x4xbf16>
    %cst_99 = arith.constant dense<0.000000e+00> : vector<8x8xf32>
    %228 = tpu.matmul %226, %227, %cst_99 {dimension_numbers = #tpu.dot_dimension_numbers<[1], [1], [0], [0], [0, 0, 1, 0], [], []>} : vector<8x4xbf16>, vector<8x4xbf16>, vector<8x8xf32> -> vector<8x8xf32>
    %229 = arith.addf %228, %183 : vector<8x8xf32>
    %cst_100 = arith.constant dense<0xFF800000> : vector<8xf32>
    %230 = vector.multi_reduction <maximumf>, %229, %cst_100 [1] : vector<8x8xf32> to vector<8xf32>
    %231 = vector.shape_cast %230 : vector<8xf32> to vector<8x1xf32>
    %232 = vector.broadcast %231 : vector<8x1xf32> to vector<8x8xf32>
    %233 = arith.subf %229, %232 : vector<8x8xf32>
    %234 = math.exp %233 : vector<8x8xf32>
    %cst_101 = arith.constant dense<0.000000e+00> : vector<8xf32>
    %235 = vector.multi_reduction <add>, %234, %cst_101 [1] : vector<8x8xf32> to vector<8xf32>
    %236 = vector.shape_cast %235 : vector<8xf32> to vector<8x1xf32>
    %237 = tpu.reciprocal %236 {approx = true} : vector<8x1xf32> -> vector<8x1xf32>
    %238 = vector.broadcast %237 : vector<8x1xf32> to vector<8x8xf32>
    %239 = arith.mulf %234, %238 : vector<8x8xf32>
    %240 = arith.truncf %239 : vector<8x8xf32> to vector<8x8xbf16>
    %c0_102 = arith.constant 0 : index
    %c1_103 = arith.constant 1 : index
    %c0_104 = arith.constant 0 : index
    %c16_105 = arith.constant 16 : index
    %241 = vector.load %arg21[%c0_102, %c1_103, %c0_104, %c16_105] : memref<1x2x8x64xbf16, #tpu.memory_space<vmem>>, vector<1x1x8x8xbf16>
    %242 = vector.shape_cast %241 : vector<1x1x8x8xbf16> to vector<8x8xbf16>
    %243 = vector.shape_cast %240 : vector<8x8xbf16> to vector<1x1x8x8xbf16>
    tpu.vector_store %arg21[%c0_102, %c1_103, %c0_104, %c16_105], %243 {strides = array<i32>} : memref<1x2x8x64xbf16, #tpu.memory_space<vmem>>, vector<1x1x8x8xbf16>,
    %244 = vector.extract_strided_slice %11 {offsets = [8, 8], sizes = [8, 4], strides = [1, 1]} : vector<16x32xbf16> to vector<8x4xbf16>
    %cst_106 = arith.constant dense<0.000000e+00> : vector<8x4xf32>
    %245 = tpu.matmul %240, %244, %cst_106 {dimension_numbers = #tpu.dot_dimension_numbers<[1], [0], [0], [1], [0, 0, 1, 1], [], []>} : vector<8x8xbf16>, vector<8x4xbf16>, vector<8x4xf32> -> vector<8x4xf32>
    %c8_107 = arith.constant 8 : index
    %c8_108 = arith.constant 8 : index
    %246 = vector.load %arg24[%c8_107, %c8_108] : memref<16x32xf32, #tpu.memory_space<vmem>>, vector<8x4xf32>
    tpu.vector_store %arg24[%c8_107, %c8_108], %245 {strides = array<i32>} : memref<16x32xf32, #tpu.memory_space<vmem>>, vector<8x4xf32>,
    %247 = vector.extract_strided_slice %9 {offsets = [8, 12], sizes = [8, 4], strides = [1, 1]} : vector<16x32xbf16> to vector<8x4xbf16>
    %248 = vector.extract_strided_slice %10 {offsets = [8, 12], sizes = [8, 4], strides = [1, 1]} : vector<16x32xbf16> to vector<8x4xbf16>
    %cst_109 = arith.constant dense<0.000000e+00> : vector<8x8xf32>
    %249 = tpu.matmul %247, %248, %cst_109 {dimension_numbers = #tpu.dot_dimension_numbers<[1], [1], [0], [0], [0, 0, 1, 0], [], []>} : vector<8x4xbf16>, vector<8x4xbf16>, vector<8x8xf32> -> vector<8x8xf32>
    %250 = arith.addf %249, %183 : vector<8x8xf32>
    %cst_110 = arith.constant dense<0xFF800000> : vector<8xf32>
    %251 = vector.multi_reduction <maximumf>, %250, %cst_110 [1] : vector<8x8xf32> to vector<8xf32>
    %252 = vector.shape_cast %251 : vector<8xf32> to vector<8x1xf32>
    %253 = vector.broadcast %252 : vector<8x1xf32> to vector<8x8xf32>
    %254 = arith.subf %250, %253 : vector<8x8xf32>
    %255 = math.exp %254 : vector<8x8xf32>
    %cst_111 = arith.constant dense<0.000000e+00> : vector<8xf32>
    %256 = vector.multi_reduction <add>, %255, %cst_111 [1] : vector<8x8xf32> to vector<8xf32>
    %257 = vector.shape_cast %256 : vector<8xf32> to vector<8x1xf32>
    %258 = tpu.reciprocal %257 {approx = true} : vector<8x1xf32> -> vector<8x1xf32>
    %259 = vector.broadcast %258 : vector<8x1xf32> to vector<8x8xf32>
    %260 = arith.mulf %255, %259 : vector<8x8xf32>
    %261 = arith.truncf %260 : vector<8x8xf32> to vector<8x8xbf16>
    %c0_112 = arith.constant 0 : index
    %c1_113 = arith.constant 1 : index
    %c0_114 = arith.constant 0 : index
    %c24_115 = arith.constant 24 : index
    %262 = vector.load %arg21[%c0_112, %c1_113, %c0_114, %c24_115] : memref<1x2x8x64xbf16, #tpu.memory_space<vmem>>, vector<1x1x8x8xbf16>
    %263 = vector.shape_cast %262 : vector<1x1x8x8xbf16> to vector<8x8xbf16>
    %264 = vector.shape_cast %261 : vector<8x8xbf16> to vector<1x1x8x8xbf16>
    tpu.vector_store %arg21[%c0_112, %c1_113, %c0_114, %c24_115], %264 {strides = array<i32>} : memref<1x2x8x64xbf16, #tpu.memory_space<vmem>>, vector<1x1x8x8xbf16>,
    %265 = vector.extract_strided_slice %11 {offsets = [8, 12], sizes = [8, 4], strides = [1, 1]} : vector<16x32xbf16> to vector<8x4xbf16>
    %cst_116 = arith.constant dense<0.000000e+00> : vector<8x4xf32>
    %266 = tpu.matmul %261, %265, %cst_116 {dimension_numbers = #tpu.dot_dimension_numbers<[1], [0], [0], [1], [0, 0, 1, 1], [], []>} : vector<8x8xbf16>, vector<8x4xbf16>, vector<8x4xf32> -> vector<8x4xf32>
    %c8_117 = arith.constant 8 : index
    %c12_118 = arith.constant 12 : index
    %267 = vector.load %arg24[%c8_117, %c12_118] : memref<16x32xf32, #tpu.memory_space<vmem>>, vector<8x4xf32>
    tpu.vector_store %arg24[%c8_117, %c12_118], %266 {strides = array<i32>} : memref<16x32xf32, #tpu.memory_space<vmem>>, vector<8x4xf32>,
    %268 = vector.extract_strided_slice %9 {offsets = [8, 16], sizes = [8, 4], strides = [1, 1]} : vector<16x32xbf16> to vector<8x4xbf16>
    %269 = vector.extract_strided_slice %10 {offsets = [8, 16], sizes = [8, 4], strides = [1, 1]} : vector<16x32xbf16> to vector<8x4xbf16>
    %cst_119 = arith.constant dense<0.000000e+00> : vector<8x8xf32>
    %270 = tpu.matmul %268, %269, %cst_119 {dimension_numbers = #tpu.dot_dimension_numbers<[1], [1], [0], [0], [0, 0, 1, 0], [], []>} : vector<8x4xbf16>, vector<8x4xbf16>, vector<8x8xf32> -> vector<8x8xf32>
    %271 = arith.addf %270, %183 : vector<8x8xf32>
    %cst_120 = arith.constant dense<0xFF800000> : vector<8xf32>
    %272 = vector.multi_reduction <maximumf>, %271, %cst_120 [1] : vector<8x8xf32> to vector<8xf32>
    %273 = vector.shape_cast %272 : vector<8xf32> to vector<8x1xf32>
    %274 = vector.broadcast %273 : vector<8x1xf32> to vector<8x8xf32>
    %275 = arith.subf %271, %274 : vector<8x8xf32>
    %276 = math.exp %275 : vector<8x8xf32>
    %cst_121 = arith.constant dense<0.000000e+00> : vector<8xf32>
    %277 = vector.multi_reduction <add>, %276, %cst_121 [1] : vector<8x8xf32> to vector<8xf32>
    %278 = vector.shape_cast %277 : vector<8xf32> to vector<8x1xf32>
    %279 = tpu.reciprocal %278 {approx = true} : vector<8x1xf32> -> vector<8x1xf32>
    %280 = vector.broadcast %279 : vector<8x1xf32> to vector<8x8xf32>
    %281 = arith.mulf %276, %280 : vector<8x8xf32>
    %282 = arith.truncf %281 : vector<8x8xf32> to vector<8x8xbf16>
    %c0_122 = arith.constant 0 : index
    %c1_123 = arith.constant 1 : index
    %c0_124 = arith.constant 0 : index
    %c32_125 = arith.constant 32 : index
    %283 = vector.load %arg21[%c0_122, %c1_123, %c0_124, %c32_125] : memref<1x2x8x64xbf16, #tpu.memory_space<vmem>>, vector<1x1x8x8xbf16>
    %284 = vector.shape_cast %283 : vector<1x1x8x8xbf16> to vector<8x8xbf16>
    %285 = vector.shape_cast %282 : vector<8x8xbf16> to vector<1x1x8x8xbf16>
    tpu.vector_store %arg21[%c0_122, %c1_123, %c0_124, %c32_125], %285 {strides = array<i32>} : memref<1x2x8x64xbf16, #tpu.memory_space<vmem>>, vector<1x1x8x8xbf16>,
    %286 = vector.extract_strided_slice %11 {offsets = [8, 16], sizes = [8, 4], strides = [1, 1]} : vector<16x32xbf16> to vector<8x4xbf16>
    %cst_126 = arith.constant dense<0.000000e+00> : vector<8x4xf32>
    %287 = tpu.matmul %282, %286, %cst_126 {dimension_numbers = #tpu.dot_dimension_numbers<[1], [0], [0], [1], [0, 0, 1, 1], [], []>} : vector<8x8xbf16>, vector<8x4xbf16>, vector<8x4xf32> -> vector<8x4xf32>
    %c8_127 = arith.constant 8 : index
    %c16_128 = arith.constant 16 : index
    %288 = vector.load %arg24[%c8_127, %c16_128] : memref<16x32xf32, #tpu.memory_space<vmem>>, vector<8x4xf32>
    tpu.vector_store %arg24[%c8_127, %c16_128], %287 {strides = array<i32>} : memref<16x32xf32, #tpu.memory_space<vmem>>, vector<8x4xf32>,
    %289 = vector.extract_strided_slice %9 {offsets = [8, 20], sizes = [8, 4], strides = [1, 1]} : vector<16x32xbf16> to vector<8x4xbf16>
    %290 = vector.extract_strided_slice %10 {offsets = [8, 20], sizes = [8, 4], strides = [1, 1]} : vector<16x32xbf16> to vector<8x4xbf16>
    %cst_129 = arith.constant dense<0.000000e+00> : vector<8x8xf32>
    %291 = tpu.matmul %289, %290, %cst_129 {dimension_numbers = #tpu.dot_dimension_numbers<[1], [1], [0], [0], [0, 0, 1, 0], [], []>} : vector<8x4xbf16>, vector<8x4xbf16>, vector<8x8xf32> -> vector<8x8xf32>
    %292 = arith.addf %291, %183 : vector<8x8xf32>
    %cst_130 = arith.constant dense<0xFF800000> : vector<8xf32>
    %293 = vector.multi_reduction <maximumf>, %292, %cst_130 [1] : vector<8x8xf32> to vector<8xf32>
    %294 = vector.shape_cast %293 : vector<8xf32> to vector<8x1xf32>
    %295 = vector.broadcast %294 : vector<8x1xf32> to vector<8x8xf32>
    %296 = arith.subf %292, %295 : vector<8x8xf32>
    %297 = math.exp %296 : vector<8x8xf32>
    %cst_131 = arith.constant dense<0.000000e+00> : vector<8xf32>
    %298 = vector.multi_reduction <add>, %297, %cst_131 [1] : vector<8x8xf32> to vector<8xf32>
    %299 = vector.shape_cast %298 : vector<8xf32> to vector<8x1xf32>
    %300 = tpu.reciprocal %299 {approx = true} : vector<8x1xf32> -> vector<8x1xf32>
    %301 = vector.broadcast %300 : vector<8x1xf32> to vector<8x8xf32>
    %302 = arith.mulf %297, %301 : vector<8x8xf32>
    %303 = arith.truncf %302 : vector<8x8xf32> to vector<8x8xbf16>
    %c0_132 = arith.constant 0 : index
    %c1_133 = arith.constant 1 : index
    %c0_134 = arith.constant 0 : index
    %c40_135 = arith.constant 40 : index
    %304 = vector.load %arg21[%c0_132, %c1_133, %c0_134, %c40_135] : memref<1x2x8x64xbf16, #tpu.memory_space<vmem>>, vector<1x1x8x8xbf16>
    %305 = vector.shape_cast %304 : vector<1x1x8x8xbf16> to vector<8x8xbf16>
    %306 = vector.shape_cast %303 : vector<8x8xbf16> to vector<1x1x8x8xbf16>
    tpu.vector_store %arg21[%c0_132, %c1_133, %c0_134, %c40_135], %306 {strides = array<i32>} : memref<1x2x8x64xbf16, #tpu.memory_space<vmem>>, vector<1x1x8x8xbf16>,
    %307 = vector.extract_strided_slice %11 {offsets = [8, 20], sizes = [8, 4], strides = [1, 1]} : vector<16x32xbf16> to vector<8x4xbf16>
    %cst_136 = arith.constant dense<0.000000e+00> : vector<8x4xf32>
    %308 = tpu.matmul %303, %307, %cst_136 {dimension_numbers = #tpu.dot_dimension_numbers<[1], [0], [0], [1], [0, 0, 1, 1], [], []>} : vector<8x8xbf16>, vector<8x4xbf16>, vector<8x4xf32> -> vector<8x4xf32>
    %c8_137 = arith.constant 8 : index
    %c20_138 = arith.constant 20 : index
    %309 = vector.load %arg24[%c8_137, %c20_138] : memref<16x32xf32, #tpu.memory_space<vmem>>, vector<8x4xf32>
    tpu.vector_store %arg24[%c8_137, %c20_138], %308 {strides = array<i32>} : memref<16x32xf32, #tpu.memory_space<vmem>>, vector<8x4xf32>,
    %310 = vector.extract_strided_slice %9 {offsets = [8, 24], sizes = [8, 4], strides = [1, 1]} : vector<16x32xbf16> to vector<8x4xbf16>
    %311 = vector.extract_strided_slice %10 {offsets = [8, 24], sizes = [8, 4], strides = [1, 1]} : vector<16x32xbf16> to vector<8x4xbf16>
    %cst_139 = arith.constant dense<0.000000e+00> : vector<8x8xf32>
    %312 = tpu.matmul %310, %311, %cst_139 {dimension_numbers = #tpu.dot_dimension_numbers<[1], [1], [0], [0], [0, 0, 1, 0], [], []>} : vector<8x4xbf16>, vector<8x4xbf16>, vector<8x8xf32> -> vector<8x8xf32>
    %313 = arith.addf %312, %183 : vector<8x8xf32>
    %cst_140 = arith.constant dense<0xFF800000> : vector<8xf32>
    %314 = vector.multi_reduction <maximumf>, %313, %cst_140 [1] : vector<8x8xf32> to vector<8xf32>
    %315 = vector.shape_cast %314 : vector<8xf32> to vector<8x1xf32>
    %316 = vector.broadcast %315 : vector<8x1xf32> to vector<8x8xf32>
    %317 = arith.subf %313, %316 : vector<8x8xf32>
    %318 = math.exp %317 : vector<8x8xf32>
    %cst_141 = arith.constant dense<0.000000e+00> : vector<8xf32>
    %319 = vector.multi_reduction <add>, %318, %cst_141 [1] : vector<8x8xf32> to vector<8xf32>
    %320 = vector.shape_cast %319 : vector<8xf32> to vector<8x1xf32>
    %321 = tpu.reciprocal %320 {approx = true} : vector<8x1xf32> -> vector<8x1xf32>
    %322 = vector.broadcast %321 : vector<8x1xf32> to vector<8x8xf32>
    %323 = arith.mulf %318, %322 : vector<8x8xf32>
    %324 = arith.truncf %323 : vector<8x8xf32> to vector<8x8xbf16>
    %c0_142 = arith.constant 0 : index
    %c1_143 = arith.constant 1 : index
    %c0_144 = arith.constant 0 : index
    %c48_145 = arith.constant 48 : index
    %325 = vector.load %arg21[%c0_142, %c1_143, %c0_144, %c48_145] : memref<1x2x8x64xbf16, #tpu.memory_space<vmem>>, vector<1x1x8x8xbf16>
    %326 = vector.shape_cast %325 : vector<1x1x8x8xbf16> to vector<8x8xbf16>
    %327 = vector.shape_cast %324 : vector<8x8xbf16> to vector<1x1x8x8xbf16>
    tpu.vector_store %arg21[%c0_142, %c1_143, %c0_144, %c48_145], %327 {strides = array<i32>} : memref<1x2x8x64xbf16, #tpu.memory_space<vmem>>, vector<1x1x8x8xbf16>,
    %328 = vector.extract_strided_slice %11 {offsets = [8, 24], sizes = [8, 4], strides = [1, 1]} : vector<16x32xbf16> to vector<8x4xbf16>
    %cst_146 = arith.constant dense<0.000000e+00> : vector<8x4xf32>
    %329 = tpu.matmul %324, %328, %cst_146 {dimension_numbers = #tpu.dot_dimension_numbers<[1], [0], [0], [1], [0, 0, 1, 1], [], []>} : vector<8x8xbf16>, vector<8x4xbf16>, vector<8x4xf32> -> vector<8x4xf32>
    %c8_147 = arith.constant 8 : index
    %c24_148 = arith.constant 24 : index
    %330 = vector.load %arg24[%c8_147, %c24_148] : memref<16x32xf32, #tpu.memory_space<vmem>>, vector<8x4xf32>
    tpu.vector_store %arg24[%c8_147, %c24_148], %329 {strides = array<i32>} : memref<16x32xf32, #tpu.memory_space<vmem>>, vector<8x4xf32>,
    %331 = vector.extract_strided_slice %9 {offsets = [8, 28], sizes = [8, 4], strides = [1, 1]} : vector<16x32xbf16> to vector<8x4xbf16>
    %332 = vector.extract_strided_slice %10 {offsets = [8, 28], sizes = [8, 4], strides = [1, 1]} : vector<16x32xbf16> to vector<8x4xbf16>
    %cst_149 = arith.constant dense<0.000000e+00> : vector<8x8xf32>
    %333 = tpu.matmul %331, %332, %cst_149 {dimension_numbers = #tpu.dot_dimension_numbers<[1], [1], [0], [0], [0, 0, 1, 0], [], []>} : vector<8x4xbf16>, vector<8x4xbf16>, vector<8x8xf32> -> vector<8x8xf32>
    %334 = arith.addf %333, %183 : vector<8x8xf32>
    %cst_150 = arith.constant dense<0xFF800000> : vector<8xf32>
    %335 = vector.multi_reduction <maximumf>, %334, %cst_150 [1] : vector<8x8xf32> to vector<8xf32>
    %336 = vector.shape_cast %335 : vector<8xf32> to vector<8x1xf32>
    %337 = vector.broadcast %336 : vector<8x1xf32> to vector<8x8xf32>
    %338 = arith.subf %334, %337 : vector<8x8xf32>
    %339 = math.exp %338 : vector<8x8xf32>
    %cst_151 = arith.constant dense<0.000000e+00> : vector<8xf32>
    %340 = vector.multi_reduction <add>, %339, %cst_151 [1] : vector<8x8xf32> to vector<8xf32>
    %341 = vector.shape_cast %340 : vector<8xf32> to vector<8x1xf32>
    %342 = tpu.reciprocal %341 {approx = true} : vector<8x1xf32> -> vector<8x1xf32>
    %343 = vector.broadcast %342 : vector<8x1xf32> to vector<8x8xf32>
    %344 = arith.mulf %339, %343 : vector<8x8xf32>
    %345 = arith.truncf %344 : vector<8x8xf32> to vector<8x8xbf16>
    %c0_152 = arith.constant 0 : index
    %c1_153 = arith.constant 1 : index
    %c0_154 = arith.constant 0 : index
    %c56_155 = arith.constant 56 : index
    %346 = vector.load %arg21[%c0_152, %c1_153, %c0_154, %c56_155] : memref<1x2x8x64xbf16, #tpu.memory_space<vmem>>, vector<1x1x8x8xbf16>
    %347 = vector.shape_cast %346 : vector<1x1x8x8xbf16> to vector<8x8xbf16>
    %348 = vector.shape_cast %345 : vector<8x8xbf16> to vector<1x1x8x8xbf16>
    tpu.vector_store %arg21[%c0_152, %c1_153, %c0_154, %c56_155], %348 {strides = array<i32>} : memref<1x2x8x64xbf16, #tpu.memory_space<vmem>>, vector<1x1x8x8xbf16>,
    %349 = vector.extract_strided_slice %11 {offsets = [8, 28], sizes = [8, 4], strides = [1, 1]} : vector<16x32xbf16> to vector<8x4xbf16>
    %cst_156 = arith.constant dense<0.000000e+00> : vector<8x4xf32>
    %350 = tpu.matmul %345, %349, %cst_156 {dimension_numbers = #tpu.dot_dimension_numbers<[1], [0], [0], [1], [0, 0, 1, 1], [], []>} : vector<8x8xbf16>, vector<8x4xbf16>, vector<8x4xf32> -> vector<8x4xf32>
    %c8_157 = arith.constant 8 : index
    %c28_158 = arith.constant 28 : index
    %351 = vector.load %arg24[%c8_157, %c28_158] : memref<16x32xf32, #tpu.memory_space<vmem>>, vector<8x4xf32>
    tpu.vector_store %arg24[%c8_157, %c28_158], %350 {strides = array<i32>} : memref<16x32xf32, #tpu.memory_space<vmem>>, vector<8x4xf32>,
    %c0_159 = arith.constant 0 : index
    %c0_160 = arith.constant 0 : index
    %352 = vector.load %arg24[%c0_159, %c0_160] : memref<16x32xf32, #tpu.memory_space<vmem>>, vector<16x32xf32>
    %353 = arith.truncf %352 : vector<16x32xf32> to vector<16x32xbf16>
    %c0_161 = arith.constant 0 : index
    %c0_162 = arith.constant 0 : index
    %c0_163 = arith.constant 0 : index
    %354 = vector.load %arg6[%c0_161, %c0_162, %c0_163] : memref<1x32x32xbf16, #tpu.memory_space<vmem>>, vector<1x32x32xbf16>
    %355 = vector.shape_cast %354 : vector<1x32x32xbf16> to vector<32x32xbf16>
    %cst_164 = arith.constant dense<0.000000e+00> : vector<16x32xf32>
    %356 = tpu.matmul %353, %355, %cst_164 {dimension_numbers = #tpu.dot_dimension_numbers<[1], [0], [0], [1], [0, 0, 1, 1], [], []>} : vector<16x32xbf16>, vector<32x32xbf16>, vector<16x32xf32> -> vector<16x32xf32>
    %357 = arith.addf %356, %3 : vector<16x32xf32>
    %c0_165 = arith.constant 0 : index
    %c0_166 = arith.constant 0 : index
    %c0_167 = arith.constant 0 : index
    %358 = vector.load %arg7[%c0_165, %c0_166, %c0_167] : memref<1x1x32xf32, #tpu.memory_space<vmem>>, vector<1x1x32xf32>
    %359 = vector.shape_cast %358 : vector<1x1x32xf32> to vector<1x32xf32>
    %c0_168 = arith.constant 0 : index
    %c0_169 = arith.constant 0 : index
    %c0_170 = arith.constant 0 : index
    %360 = vector.load %arg8[%c0_168, %c0_169, %c0_170] : memref<1x1x32xf32, #tpu.memory_space<vmem>>, vector<1x1x32xf32>
    %361 = vector.shape_cast %360 : vector<1x1x32xf32> to vector<1x32xf32>
    %cst_171 = arith.constant dense<0.000000e+00> : vector<16xf32>
    %362 = vector.multi_reduction <add>, %357, %cst_171 [1] : vector<16x32xf32> to vector<16xf32>
    %363 = vector.shape_cast %362 : vector<16xf32> to vector<16x1xf32>
    %cst_172 = arith.constant 3.200000e+01 : f32
    %364 = vector.broadcast %cst_172 : f32 to vector<16x1xf32>
    %365 = arith.divf %363, %364 : vector<16x1xf32>
    %366 = vector.broadcast %365 : vector<16x1xf32> to vector<16x32xf32>
    %367 = arith.subf %357, %366 : vector<16x32xf32>
    %368 = arith.mulf %367, %367 : vector<16x32xf32>
    %cst_173 = arith.constant dense<0.000000e+00> : vector<16xf32>
    %369 = vector.multi_reduction <add>, %368, %cst_173 [1] : vector<16x32xf32> to vector<16xf32>
    %370 = vector.shape_cast %369 : vector<16xf32> to vector<16x1xf32>
    %cst_174 = arith.constant 3.200000e+01 : f32
    %371 = vector.broadcast %cst_174 : f32 to vector<16x1xf32>
    %372 = arith.divf %370, %371 : vector<16x1xf32>
    %373 = vector.broadcast %365 : vector<16x1xf32> to vector<16x32xf32>
    %374 = arith.subf %357, %373 : vector<16x32xf32>
    %cst_175 = arith.constant 9.99999997E-7 : f32
    %375 = vector.broadcast %cst_175 : f32 to vector<16x1xf32>
    %376 = arith.addf %372, %375 : vector<16x1xf32>
    %377 = math.rsqrt %376 : vector<16x1xf32>
    %378 = vector.broadcast %377 : vector<16x1xf32> to vector<16x32xf32>
    %379 = arith.mulf %374, %378 : vector<16x32xf32>
    %380 = vector.broadcast %359 : vector<1x32xf32> to vector<16x32xf32>
    %381 = arith.mulf %379, %380 : vector<16x32xf32>
    %382 = vector.broadcast %361 : vector<1x32xf32> to vector<16x32xf32>
    %383 = arith.addf %381, %382 : vector<16x32xf32>
    %384 = arith.truncf %383 : vector<16x32xf32> to vector<16x32xbf16>
    %c0_176 = arith.constant 0 : index
    %c0_177 = arith.constant 0 : index
    %c0_178 = arith.constant 0 : index
    %385 = vector.load %arg9[%c0_176, %c0_177, %c0_178] : memref<1x32x32xbf16, #tpu.memory_space<vmem>>, vector<1x32x32xbf16>
    %386 = vector.shape_cast %385 : vector<1x32x32xbf16> to vector<32x32xbf16>
    %cst_179 = arith.constant dense<0.000000e+00> : vector<16x32xf32>
    %387 = tpu.matmul %384, %386, %cst_179 {dimension_numbers = #tpu.dot_dimension_numbers<[1], [0], [0], [1], [0, 0, 1, 1], [], []>} : vector<16x32xbf16>, vector<32x32xbf16>, vector<16x32xf32> -> vector<16x32xf32>
    %c0_180 = arith.constant 0 : index
    %c0_181 = arith.constant 0 : index
    %388 = vector.load %arg2[%c0_180, %c0_181] : memref<32x32xbf16, #tpu.memory_space<vmem>>, vector<32x32xbf16>
    %c0_182 = arith.constant 0 : index
    %c0_183 = arith.constant 0 : index
    %c0_184 = arith.constant 0 : index
    %389 = vector.load %arg10[%c0_182, %c0_183, %c0_184] : memref<1x32x64xbf16, #tpu.memory_space<vmem>>, vector<1x32x64xbf16>
    %390 = vector.shape_cast %389 : vector<1x32x64xbf16> to vector<32x64xbf16>
    %cst_185 = arith.constant dense<0.000000e+00> : vector<32x64xf32>
    %391 = tpu.matmul %388, %390, %cst_185 {dimension_numbers = #tpu.dot_dimension_numbers<[1], [0], [0], [1], [0, 0, 1, 1], [], []>} : vector<32x32xbf16>, vector<32x64xbf16>, vector<32x64xf32> -> vector<32x64xf32>
    %392 = arith.truncf %391 : vector<32x64xf32> to vector<32x64xbf16>
    %393 = arith.truncf %387 : vector<16x32xf32> to vector<16x32xbf16>
    %394 = vector.extract_strided_slice %392 {offsets = [0, 0], sizes = [32, 32], strides = [1, 1]} : vector<32x64xbf16> to vector<32x32xbf16>
    %395 = vector.extract_strided_slice %392 {offsets = [0, 32], sizes = [32, 32], strides = [1, 1]} : vector<32x64xbf16> to vector<32x32xbf16>
    %c0_186 = arith.constant 0 : index
    %c0_187 = arith.constant 0 : index
    %c0_188 = arith.constant 0 : index
    %396 = vector.load %arg4[%c0_186, %c0_187, %c0_188] : memref<2x1x16xf32, #tpu.memory_space<vmem>>, vector<1x1x16xf32>
    %397 = vector.shape_cast %396 : vector<1x1x16xf32> to vector<1x16xf32>
    %398 = vector.extract_strided_slice %393 {offsets = [0, 0], sizes = [8, 4], strides = [1, 1]} : vector<16x32xbf16> to vector<8x4xbf16>
    %399 = vector.extract_strided_slice %394 {offsets = [0, 0], sizes = [16, 4], strides = [1, 1]} : vector<32x32xbf16> to vector<16x4xbf16>
    %cst_189 = arith.constant dense<0.000000e+00> : vector<8x16xf32>
    %400 = tpu.matmul %398, %399, %cst_189 {dimension_numbers = #tpu.dot_dimension_numbers<[1], [1], [0], [0], [0, 0, 1, 0], [], []>} : vector<8x4xbf16>, vector<16x4xbf16>, vector<8x16xf32> -> vector<8x16xf32>
    %401 = vector.broadcast %397 : vector<1x16xf32> to vector<8x16xf32>
    %402 = arith.addf %400, %401 : vector<8x16xf32>
    %cst_190 = arith.constant dense<0xFF800000> : vector<8xf32>
    %403 = vector.multi_reduction <maximumf>, %402, %cst_190 [1] : vector<8x16xf32> to vector<8xf32>
    %404 = vector.shape_cast %403 : vector<8xf32> to vector<8x1xf32>
    %405 = vector.broadcast %404 : vector<8x1xf32> to vector<8x16xf32>
    %406 = arith.subf %402, %405 : vector<8x16xf32>
    %407 = math.exp %406 : vector<8x16xf32>
    %cst_191 = arith.constant dense<0.000000e+00> : vector<8xf32>
    %408 = vector.multi_reduction <add>, %407, %cst_191 [1] : vector<8x16xf32> to vector<8xf32>
    %409 = vector.shape_cast %408 : vector<8xf32> to vector<8x1xf32>
    %410 = tpu.reciprocal %409 {approx = true} : vector<8x1xf32> -> vector<8x1xf32>
    %411 = vector.broadcast %410 : vector<8x1xf32> to vector<8x16xf32>
    %412 = arith.mulf %407, %411 : vector<8x16xf32>
    %413 = arith.truncf %412 : vector<8x16xf32> to vector<8x16xbf16>
    %c0_192 = arith.constant 0 : index
    %c0_193 = arith.constant 0 : index
    %c0_194 = arith.constant 0 : index
    %c0_195 = arith.constant 0 : index
    %414 = vector.load %arg22[%c0_192, %c0_193, %c0_194, %c0_195] : memref<1x2x8x128xbf16, #tpu.memory_space<vmem>>, vector<1x1x8x16xbf16>
    %415 = vector.shape_cast %414 : vector<1x1x8x16xbf16> to vector<8x16xbf16>
    %416 = vector.shape_cast %413 : vector<8x16xbf16> to vector<1x1x8x16xbf16>
    tpu.vector_store %arg22[%c0_192, %c0_193, %c0_194, %c0_195], %416 {strides = array<i32>} : memref<1x2x8x128xbf16, #tpu.memory_space<vmem>>, vector<1x1x8x16xbf16>,
    %417 = vector.extract_strided_slice %395 {offsets = [0, 0], sizes = [16, 4], strides = [1, 1]} : vector<32x32xbf16> to vector<16x4xbf16>
    %cst_196 = arith.constant dense<0.000000e+00> : vector<8x4xf32>
    %418 = tpu.matmul %413, %417, %cst_196 {dimension_numbers = #tpu.dot_dimension_numbers<[1], [0], [0], [1], [0, 0, 1, 1], [], []>} : vector<8x16xbf16>, vector<16x4xbf16>, vector<8x4xf32> -> vector<8x4xf32>
    %c0_197 = arith.constant 0 : index
    %c0_198 = arith.constant 0 : index
    %419 = vector.load %arg24[%c0_197, %c0_198] : memref<16x32xf32, #tpu.memory_space<vmem>>, vector<8x4xf32>
    tpu.vector_store %arg24[%c0_197, %c0_198], %418 {strides = array<i32>} : memref<16x32xf32, #tpu.memory_space<vmem>>, vector<8x4xf32>,
    %420 = vector.extract_strided_slice %393 {offsets = [0, 4], sizes = [8, 4], strides = [1, 1]} : vector<16x32xbf16> to vector<8x4xbf16>
    %421 = vector.extract_strided_slice %394 {offsets = [0, 4], sizes = [16, 4], strides = [1, 1]} : vector<32x32xbf16> to vector<16x4xbf16>
    %cst_199 = arith.constant dense<0.000000e+00> : vector<8x16xf32>
    %422 = tpu.matmul %420, %421, %cst_199 {dimension_numbers = #tpu.dot_dimension_numbers<[1], [1], [0], [0], [0, 0, 1, 0], [], []>} : vector<8x4xbf16>, vector<16x4xbf16>, vector<8x16xf32> -> vector<8x16xf32>
    %423 = vector.broadcast %397 : vector<1x16xf32> to vector<8x16xf32>
    %424 = arith.addf %422, %423 : vector<8x16xf32>
    %cst_200 = arith.constant dense<0xFF800000> : vector<8xf32>
    %425 = vector.multi_reduction <maximumf>, %424, %cst_200 [1] : vector<8x16xf32> to vector<8xf32>
    %426 = vector.shape_cast %425 : vector<8xf32> to vector<8x1xf32>
    %427 = vector.broadcast %426 : vector<8x1xf32> to vector<8x16xf32>
    %428 = arith.subf %424, %427 : vector<8x16xf32>
    %429 = math.exp %428 : vector<8x16xf32>
    %cst_201 = arith.constant dense<0.000000e+00> : vector<8xf32>
    %430 = vector.multi_reduction <add>, %429, %cst_201 [1] : vector<8x16xf32> to vector<8xf32>
    %431 = vector.shape_cast %430 : vector<8xf32> to vector<8x1xf32>
    %432 = tpu.reciprocal %431 {approx = true} : vector<8x1xf32> -> vector<8x1xf32>
    %433 = vector.broadcast %432 : vector<8x1xf32> to vector<8x16xf32>
    %434 = arith.mulf %429, %433 : vector<8x16xf32>
    %435 = arith.truncf %434 : vector<8x16xf32> to vector<8x16xbf16>
    %c0_202 = arith.constant 0 : index
    %c0_203 = arith.constant 0 : index
    %c0_204 = arith.constant 0 : index
    %c16_205 = arith.constant 16 : index
    %436 = vector.load %arg22[%c0_202, %c0_203, %c0_204, %c16_205] : memref<1x2x8x128xbf16, #tpu.memory_space<vmem>>, vector<1x1x8x16xbf16>
    %437 = vector.shape_cast %436 : vector<1x1x8x16xbf16> to vector<8x16xbf16>
    %438 = vector.shape_cast %435 : vector<8x16xbf16> to vector<1x1x8x16xbf16>
    tpu.vector_store %arg22[%c0_202, %c0_203, %c0_204, %c16_205], %438 {strides = array<i32>} : memref<1x2x8x128xbf16, #tpu.memory_space<vmem>>, vector<1x1x8x16xbf16>,
    %439 = vector.extract_strided_slice %395 {offsets = [0, 4], sizes = [16, 4], strides = [1, 1]} : vector<32x32xbf16> to vector<16x4xbf16>
    %cst_206 = arith.constant dense<0.000000e+00> : vector<8x4xf32>
    %440 = tpu.matmul %435, %439, %cst_206 {dimension_numbers = #tpu.dot_dimension_numbers<[1], [0], [0], [1], [0, 0, 1, 1], [], []>} : vector<8x16xbf16>, vector<16x4xbf16>, vector<8x4xf32> -> vector<8x4xf32>
    %c0_207 = arith.constant 0 : index
    %c4_208 = arith.constant 4 : index
    %441 = vector.load %arg24[%c0_207, %c4_208] : memref<16x32xf32, #tpu.memory_space<vmem>>, vector<8x4xf32>
    tpu.vector_store %arg24[%c0_207, %c4_208], %440 {strides = array<i32>} : memref<16x32xf32, #tpu.memory_space<vmem>>, vector<8x4xf32>,
    %442 = vector.extract_strided_slice %393 {offsets = [0, 8], sizes = [8, 4], strides = [1, 1]} : vector<16x32xbf16> to vector<8x4xbf16>
    %443 = vector.extract_strided_slice %394 {offsets = [0, 8], sizes = [16, 4], strides = [1, 1]} : vector<32x32xbf16> to vector<16x4xbf16>
    %cst_209 = arith.constant dense<0.000000e+00> : vector<8x16xf32>
    %444 = tpu.matmul %442, %443, %cst_209 {dimension_numbers = #tpu.dot_dimension_numbers<[1], [1], [0], [0], [0, 0, 1, 0], [], []>} : vector<8x4xbf16>, vector<16x4xbf16>, vector<8x16xf32> -> vector<8x16xf32>
    %445 = vector.broadcast %397 : vector<1x16xf32> to vector<8x16xf32>
    %446 = arith.addf %444, %445 : vector<8x16xf32>
    %cst_210 = arith.constant dense<0xFF800000> : vector<8xf32>
    %447 = vector.multi_reduction <maximumf>, %446, %cst_210 [1] : vector<8x16xf32> to vector<8xf32>
    %448 = vector.shape_cast %447 : vector<8xf32> to vector<8x1xf32>
    %449 = vector.broadcast %448 : vector<8x1xf32> to vector<8x16xf32>
    %450 = arith.subf %446, %449 : vector<8x16xf32>
    %451 = math.exp %450 : vector<8x16xf32>
    %cst_211 = arith.constant dense<0.000000e+00> : vector<8xf32>
    %452 = vector.multi_reduction <add>, %451, %cst_211 [1] : vector<8x16xf32> to vector<8xf32>
    %453 = vector.shape_cast %452 : vector<8xf32> to vector<8x1xf32>
    %454 = tpu.reciprocal %453 {approx = true} : vector<8x1xf32> -> vector<8x1xf32>
    %455 = vector.broadcast %454 : vector<8x1xf32> to vector<8x16xf32>
    %456 = arith.mulf %451, %455 : vector<8x16xf32>
    %457 = arith.truncf %456 : vector<8x16xf32> to vector<8x16xbf16>
    %c0_212 = arith.constant 0 : index
    %c0_213 = arith.constant 0 : index
    %c0_214 = arith.constant 0 : index
    %c32_215 = arith.constant 32 : index
    %458 = vector.load %arg22[%c0_212, %c0_213, %c0_214, %c32_215] : memref<1x2x8x128xbf16, #tpu.memory_space<vmem>>, vector<1x1x8x16xbf16>
    %459 = vector.shape_cast %458 : vector<1x1x8x16xbf16> to vector<8x16xbf16>
    %460 = vector.shape_cast %457 : vector<8x16xbf16> to vector<1x1x8x16xbf16>
    tpu.vector_store %arg22[%c0_212, %c0_213, %c0_214, %c32_215], %460 {strides = array<i32>} : memref<1x2x8x128xbf16, #tpu.memory_space<vmem>>, vector<1x1x8x16xbf16>,
    %461 = vector.extract_strided_slice %395 {offsets = [0, 8], sizes = [16, 4], strides = [1, 1]} : vector<32x32xbf16> to vector<16x4xbf16>
    %cst_216 = arith.constant dense<0.000000e+00> : vector<8x4xf32>
    %462 = tpu.matmul %457, %461, %cst_216 {dimension_numbers = #tpu.dot_dimension_numbers<[1], [0], [0], [1], [0, 0, 1, 1], [], []>} : vector<8x16xbf16>, vector<16x4xbf16>, vector<8x4xf32> -> vector<8x4xf32>
    %c0_217 = arith.constant 0 : index
    %c8_218 = arith.constant 8 : index
    %463 = vector.load %arg24[%c0_217, %c8_218] : memref<16x32xf32, #tpu.memory_space<vmem>>, vector<8x4xf32>
    tpu.vector_store %arg24[%c0_217, %c8_218], %462 {strides = array<i32>} : memref<16x32xf32, #tpu.memory_space<vmem>>, vector<8x4xf32>,
    %464 = vector.extract_strided_slice %393 {offsets = [0, 12], sizes = [8, 4], strides = [1, 1]} : vector<16x32xbf16> to vector<8x4xbf16>
    %465 = vector.extract_strided_slice %394 {offsets = [0, 12], sizes = [16, 4], strides = [1, 1]} : vector<32x32xbf16> to vector<16x4xbf16>
    %cst_219 = arith.constant dense<0.000000e+00> : vector<8x16xf32>
    %466 = tpu.matmul %464, %465, %cst_219 {dimension_numbers = #tpu.dot_dimension_numbers<[1], [1], [0], [0], [0, 0, 1, 0], [], []>} : vector<8x4xbf16>, vector<16x4xbf16>, vector<8x16xf32> -> vector<8x16xf32>
    %467 = vector.broadcast %397 : vector<1x16xf32> to vector<8x16xf32>
    %468 = arith.addf %466, %467 : vector<8x16xf32>
    %cst_220 = arith.constant dense<0xFF800000> : vector<8xf32>
    %469 = vector.multi_reduction <maximumf>, %468, %cst_220 [1] : vector<8x16xf32> to vector<8xf32>
    %470 = vector.shape_cast %469 : vector<8xf32> to vector<8x1xf32>
    %471 = vector.broadcast %470 : vector<8x1xf32> to vector<8x16xf32>
    %472 = arith.subf %468, %471 : vector<8x16xf32>
    %473 = math.exp %472 : vector<8x16xf32>
    %cst_221 = arith.constant dense<0.000000e+00> : vector<8xf32>
    %474 = vector.multi_reduction <add>, %473, %cst_221 [1] : vector<8x16xf32> to vector<8xf32>
    %475 = vector.shape_cast %474 : vector<8xf32> to vector<8x1xf32>
    %476 = tpu.reciprocal %475 {approx = true} : vector<8x1xf32> -> vector<8x1xf32>
    %477 = vector.broadcast %476 : vector<8x1xf32> to vector<8x16xf32>
    %478 = arith.mulf %473, %477 : vector<8x16xf32>
    %479 = arith.truncf %478 : vector<8x16xf32> to vector<8x16xbf16>
    %c0_222 = arith.constant 0 : index
    %c0_223 = arith.constant 0 : index
    %c0_224 = arith.constant 0 : index
    %c48_225 = arith.constant 48 : index
    %480 = vector.load %arg22[%c0_222, %c0_223, %c0_224, %c48_225] : memref<1x2x8x128xbf16, #tpu.memory_space<vmem>>, vector<1x1x8x16xbf16>
    %481 = vector.shape_cast %480 : vector<1x1x8x16xbf16> to vector<8x16xbf16>
    %482 = vector.shape_cast %479 : vector<8x16xbf16> to vector<1x1x8x16xbf16>
    tpu.vector_store %arg22[%c0_222, %c0_223, %c0_224, %c48_225], %482 {strides = array<i32>} : memref<1x2x8x128xbf16, #tpu.memory_space<vmem>>, vector<1x1x8x16xbf16>,
    %483 = vector.extract_strided_slice %395 {offsets = [0, 12], sizes = [16, 4], strides = [1, 1]} : vector<32x32xbf16> to vector<16x4xbf16>
    %cst_226 = arith.constant dense<0.000000e+00> : vector<8x4xf32>
    %484 = tpu.matmul %479, %483, %cst_226 {dimension_numbers = #tpu.dot_dimension_numbers<[1], [0], [0], [1], [0, 0, 1, 1], [], []>} : vector<8x16xbf16>, vector<16x4xbf16>, vector<8x4xf32> -> vector<8x4xf32>
    %c0_227 = arith.constant 0 : index
    %c12_228 = arith.constant 12 : index
    %485 = vector.load %arg24[%c0_227, %c12_228] : memref<16x32xf32, #tpu.memory_space<vmem>>, vector<8x4xf32>
    tpu.vector_store %arg24[%c0_227, %c12_228], %484 {strides = array<i32>} : memref<16x32xf32, #tpu.memory_space<vmem>>, vector<8x4xf32>,
    %486 = vector.extract_strided_slice %393 {offsets = [0, 16], sizes = [8, 4], strides = [1, 1]} : vector<16x32xbf16> to vector<8x4xbf16>
    %487 = vector.extract_strided_slice %394 {offsets = [0, 16], sizes = [16, 4], strides = [1, 1]} : vector<32x32xbf16> to vector<16x4xbf16>
    %cst_229 = arith.constant dense<0.000000e+00> : vector<8x16xf32>
    %488 = tpu.matmul %486, %487, %cst_229 {dimension_numbers = #tpu.dot_dimension_numbers<[1], [1], [0], [0], [0, 0, 1, 0], [], []>} : vector<8x4xbf16>, vector<16x4xbf16>, vector<8x16xf32> -> vector<8x16xf32>
    %489 = vector.broadcast %397 : vector<1x16xf32> to vector<8x16xf32>
    %490 = arith.addf %488, %489 : vector<8x16xf32>
    %cst_230 = arith.constant dense<0xFF800000> : vector<8xf32>
    %491 = vector.multi_reduction <maximumf>, %490, %cst_230 [1] : vector<8x16xf32> to vector<8xf32>
    %492 = vector.shape_cast %491 : vector<8xf32> to vector<8x1xf32>
    %493 = vector.broadcast %492 : vector<8x1xf32> to vector<8x16xf32>
    %494 = arith.subf %490, %493 : vector<8x16xf32>
    %495 = math.exp %494 : vector<8x16xf32>
    %cst_231 = arith.constant dense<0.000000e+00> : vector<8xf32>
    %496 = vector.multi_reduction <add>, %495, %cst_231 [1] : vector<8x16xf32> to vector<8xf32>
    %497 = vector.shape_cast %496 : vector<8xf32> to vector<8x1xf32>
    %498 = tpu.reciprocal %497 {approx = true} : vector<8x1xf32> -> vector<8x1xf32>
    %499 = vector.broadcast %498 : vector<8x1xf32> to vector<8x16xf32>
    %500 = arith.mulf %495, %499 : vector<8x16xf32>
    %501 = arith.truncf %500 : vector<8x16xf32> to vector<8x16xbf16>
    %c0_232 = arith.constant 0 : index
    %c0_233 = arith.constant 0 : index
    %c0_234 = arith.constant 0 : index
    %c64 = arith.constant 64 : index
    %502 = vector.load %arg22[%c0_232, %c0_233, %c0_234, %c64] : memref<1x2x8x128xbf16, #tpu.memory_space<vmem>>, vector<1x1x8x16xbf16>
    %503 = vector.shape_cast %502 : vector<1x1x8x16xbf16> to vector<8x16xbf16>
    %504 = vector.shape_cast %501 : vector<8x16xbf16> to vector<1x1x8x16xbf16>
    tpu.vector_store %arg22[%c0_232, %c0_233, %c0_234, %c64], %504 {strides = array<i32>} : memref<1x2x8x128xbf16, #tpu.memory_space<vmem>>, vector<1x1x8x16xbf16>,
    %505 = vector.extract_strided_slice %395 {offsets = [0, 16], sizes = [16, 4], strides = [1, 1]} : vector<32x32xbf16> to vector<16x4xbf16>
    %cst_235 = arith.constant dense<0.000000e+00> : vector<8x4xf32>
    %506 = tpu.matmul %501, %505, %cst_235 {dimension_numbers = #tpu.dot_dimension_numbers<[1], [0], [0], [1], [0, 0, 1, 1], [], []>} : vector<8x16xbf16>, vector<16x4xbf16>, vector<8x4xf32> -> vector<8x4xf32>
    %c0_236 = arith.constant 0 : index
    %c16_237 = arith.constant 16 : index
    %507 = vector.load %arg24[%c0_236, %c16_237] : memref<16x32xf32, #tpu.memory_space<vmem>>, vector<8x4xf32>
    tpu.vector_store %arg24[%c0_236, %c16_237], %506 {strides = array<i32>} : memref<16x32xf32, #tpu.memory_space<vmem>>, vector<8x4xf32>,
    %508 = vector.extract_strided_slice %393 {offsets = [0, 20], sizes = [8, 4], strides = [1, 1]} : vector<16x32xbf16> to vector<8x4xbf16>
    %509 = vector.extract_strided_slice %394 {offsets = [0, 20], sizes = [16, 4], strides = [1, 1]} : vector<32x32xbf16> to vector<16x4xbf16>
    %cst_238 = arith.constant dense<0.000000e+00> : vector<8x16xf32>
    %510 = tpu.matmul %508, %509, %cst_238 {dimension_numbers = #tpu.dot_dimension_numbers<[1], [1], [0], [0], [0, 0, 1, 0], [], []>} : vector<8x4xbf16>, vector<16x4xbf16>, vector<8x16xf32> -> vector<8x16xf32>
    %511 = vector.broadcast %397 : vector<1x16xf32> to vector<8x16xf32>
    %512 = arith.addf %510, %511 : vector<8x16xf32>
    %cst_239 = arith.constant dense<0xFF800000> : vector<8xf32>
    %513 = vector.multi_reduction <maximumf>, %512, %cst_239 [1] : vector<8x16xf32> to vector<8xf32>
    %514 = vector.shape_cast %513 : vector<8xf32> to vector<8x1xf32>
    %515 = vector.broadcast %514 : vector<8x1xf32> to vector<8x16xf32>
    %516 = arith.subf %512, %515 : vector<8x16xf32>
    %517 = math.exp %516 : vector<8x16xf32>
    %cst_240 = arith.constant dense<0.000000e+00> : vector<8xf32>
    %518 = vector.multi_reduction <add>, %517, %cst_240 [1] : vector<8x16xf32> to vector<8xf32>
    %519 = vector.shape_cast %518 : vector<8xf32> to vector<8x1xf32>
    %520 = tpu.reciprocal %519 {approx = true} : vector<8x1xf32> -> vector<8x1xf32>
    %521 = vector.broadcast %520 : vector<8x1xf32> to vector<8x16xf32>
    %522 = arith.mulf %517, %521 : vector<8x16xf32>
    %523 = arith.truncf %522 : vector<8x16xf32> to vector<8x16xbf16>
    %c0_241 = arith.constant 0 : index
    %c0_242 = arith.constant 0 : index
    %c0_243 = arith.constant 0 : index
    %c80 = arith.constant 80 : index
    %524 = vector.load %arg22[%c0_241, %c0_242, %c0_243, %c80] : memref<1x2x8x128xbf16, #tpu.memory_space<vmem>>, vector<1x1x8x16xbf16>
    %525 = vector.shape_cast %524 : vector<1x1x8x16xbf16> to vector<8x16xbf16>
    %526 = vector.shape_cast %523 : vector<8x16xbf16> to vector<1x1x8x16xbf16>
    tpu.vector_store %arg22[%c0_241, %c0_242, %c0_243, %c80], %526 {strides = array<i32>} : memref<1x2x8x128xbf16, #tpu.memory_space<vmem>>, vector<1x1x8x16xbf16>,
    %527 = vector.extract_strided_slice %395 {offsets = [0, 20], sizes = [16, 4], strides = [1, 1]} : vector<32x32xbf16> to vector<16x4xbf16>
    %cst_244 = arith.constant dense<0.000000e+00> : vector<8x4xf32>
    %528 = tpu.matmul %523, %527, %cst_244 {dimension_numbers = #tpu.dot_dimension_numbers<[1], [0], [0], [1], [0, 0, 1, 1], [], []>} : vector<8x16xbf16>, vector<16x4xbf16>, vector<8x4xf32> -> vector<8x4xf32>
    %c0_245 = arith.constant 0 : index
    %c20_246 = arith.constant 20 : index
    %529 = vector.load %arg24[%c0_245, %c20_246] : memref<16x32xf32, #tpu.memory_space<vmem>>, vector<8x4xf32>
    tpu.vector_store %arg24[%c0_245, %c20_246], %528 {strides = array<i32>} : memref<16x32xf32, #tpu.memory_space<vmem>>, vector<8x4xf32>,
    %530 = vector.extract_strided_slice %393 {offsets = [0, 24], sizes = [8, 4], strides = [1, 1]} : vector<16x32xbf16> to vector<8x4xbf16>
    %531 = vector.extract_strided_slice %394 {offsets = [0, 24], sizes = [16, 4], strides = [1, 1]} : vector<32x32xbf16> to vector<16x4xbf16>
    %cst_247 = arith.constant dense<0.000000e+00> : vector<8x16xf32>
    %532 = tpu.matmul %530, %531, %cst_247 {dimension_numbers = #tpu.dot_dimension_numbers<[1], [1], [0], [0], [0, 0, 1, 0], [], []>} : vector<8x4xbf16>, vector<16x4xbf16>, vector<8x16xf32> -> vector<8x16xf32>
    %533 = vector.broadcast %397 : vector<1x16xf32> to vector<8x16xf32>
    %534 = arith.addf %532, %533 : vector<8x16xf32>
    %cst_248 = arith.constant dense<0xFF800000> : vector<8xf32>
    %535 = vector.multi_reduction <maximumf>, %534, %cst_248 [1] : vector<8x16xf32> to vector<8xf32>
    %536 = vector.shape_cast %535 : vector<8xf32> to vector<8x1xf32>
    %537 = vector.broadcast %536 : vector<8x1xf32> to vector<8x16xf32>
    %538 = arith.subf %534, %537 : vector<8x16xf32>
    %539 = math.exp %538 : vector<8x16xf32>
    %cst_249 = arith.constant dense<0.000000e+00> : vector<8xf32>
    %540 = vector.multi_reduction <add>, %539, %cst_249 [1] : vector<8x16xf32> to vector<8xf32>
    %541 = vector.shape_cast %540 : vector<8xf32> to vector<8x1xf32>
    %542 = tpu.reciprocal %541 {approx = true} : vector<8x1xf32> -> vector<8x1xf32>
    %543 = vector.broadcast %542 : vector<8x1xf32> to vector<8x16xf32>
    %544 = arith.mulf %539, %543 : vector<8x16xf32>
    %545 = arith.truncf %544 : vector<8x16xf32> to vector<8x16xbf16>
    %c0_250 = arith.constant 0 : index
    %c0_251 = arith.constant 0 : index
    %c0_252 = arith.constant 0 : index
    %c96 = arith.constant 96 : index
    %546 = vector.load %arg22[%c0_250, %c0_251, %c0_252, %c96] : memref<1x2x8x128xbf16, #tpu.memory_space<vmem>>, vector<1x1x8x16xbf16>
    %547 = vector.shape_cast %546 : vector<1x1x8x16xbf16> to vector<8x16xbf16>
    %548 = vector.shape_cast %545 : vector<8x16xbf16> to vector<1x1x8x16xbf16>
    tpu.vector_store %arg22[%c0_250, %c0_251, %c0_252, %c96], %548 {strides = array<i32>} : memref<1x2x8x128xbf16, #tpu.memory_space<vmem>>, vector<1x1x8x16xbf16>,
    %549 = vector.extract_strided_slice %395 {offsets = [0, 24], sizes = [16, 4], strides = [1, 1]} : vector<32x32xbf16> to vector<16x4xbf16>
    %cst_253 = arith.constant dense<0.000000e+00> : vector<8x4xf32>
    %550 = tpu.matmul %545, %549, %cst_253 {dimension_numbers = #tpu.dot_dimension_numbers<[1], [0], [0], [1], [0, 0, 1, 1], [], []>} : vector<8x16xbf16>, vector<16x4xbf16>, vector<8x4xf32> -> vector<8x4xf32>
    %c0_254 = arith.constant 0 : index
    %c24_255 = arith.constant 24 : index
    %551 = vector.load %arg24[%c0_254, %c24_255] : memref<16x32xf32, #tpu.memory_space<vmem>>, vector<8x4xf32>
    tpu.vector_store %arg24[%c0_254, %c24_255], %550 {strides = array<i32>} : memref<16x32xf32, #tpu.memory_space<vmem>>, vector<8x4xf32>,
    %552 = vector.extract_strided_slice %393 {offsets = [0, 28], sizes = [8, 4], strides = [1, 1]} : vector<16x32xbf16> to vector<8x4xbf16>
    %553 = vector.extract_strided_slice %394 {offsets = [0, 28], sizes = [16, 4], strides = [1, 1]} : vector<32x32xbf16> to vector<16x4xbf16>
    %cst_256 = arith.constant dense<0.000000e+00> : vector<8x16xf32>
    %554 = tpu.matmul %552, %553, %cst_256 {dimension_numbers = #tpu.dot_dimension_numbers<[1], [1], [0], [0], [0, 0, 1, 0], [], []>} : vector<8x4xbf16>, vector<16x4xbf16>, vector<8x16xf32> -> vector<8x16xf32>
    %555 = vector.broadcast %397 : vector<1x16xf32> to vector<8x16xf32>
    %556 = arith.addf %554, %555 : vector<8x16xf32>
    %cst_257 = arith.constant dense<0xFF800000> : vector<8xf32>
    %557 = vector.multi_reduction <maximumf>, %556, %cst_257 [1] : vector<8x16xf32> to vector<8xf32>
    %558 = vector.shape_cast %557 : vector<8xf32> to vector<8x1xf32>
    %559 = vector.broadcast %558 : vector<8x1xf32> to vector<8x16xf32>
    %560 = arith.subf %556, %559 : vector<8x16xf32>
    %561 = math.exp %560 : vector<8x16xf32>
    %cst_258 = arith.constant dense<0.000000e+00> : vector<8xf32>
    %562 = vector.multi_reduction <add>, %561, %cst_258 [1] : vector<8x16xf32> to vector<8xf32>
    %563 = vector.shape_cast %562 : vector<8xf32> to vector<8x1xf32>
    %564 = tpu.reciprocal %563 {approx = true} : vector<8x1xf32> -> vector<8x1xf32>
    %565 = vector.broadcast %564 : vector<8x1xf32> to vector<8x16xf32>
    %566 = arith.mulf %561, %565 : vector<8x16xf32>
    %567 = arith.truncf %566 : vector<8x16xf32> to vector<8x16xbf16>
    %c0_259 = arith.constant 0 : index
    %c0_260 = arith.constant 0 : index
    %c0_261 = arith.constant 0 : index
    %c112 = arith.constant 112 : index
    %568 = vector.load %arg22[%c0_259, %c0_260, %c0_261, %c112] : memref<1x2x8x128xbf16, #tpu.memory_space<vmem>>, vector<1x1x8x16xbf16>
    %569 = vector.shape_cast %568 : vector<1x1x8x16xbf16> to vector<8x16xbf16>
    %570 = vector.shape_cast %567 : vector<8x16xbf16> to vector<1x1x8x16xbf16>
    tpu.vector_store %arg22[%c0_259, %c0_260, %c0_261, %c112], %570 {strides = array<i32>} : memref<1x2x8x128xbf16, #tpu.memory_space<vmem>>, vector<1x1x8x16xbf16>,
    %571 = vector.extract_strided_slice %395 {offsets = [0, 28], sizes = [16, 4], strides = [1, 1]} : vector<32x32xbf16> to vector<16x4xbf16>
    %cst_262 = arith.constant dense<0.000000e+00> : vector<8x4xf32>
    %572 = tpu.matmul %567, %571, %cst_262 {dimension_numbers = #tpu.dot_dimension_numbers<[1], [0], [0], [1], [0, 0, 1, 1], [], []>} : vector<8x16xbf16>, vector<16x4xbf16>, vector<8x4xf32> -> vector<8x4xf32>
    %c0_263 = arith.constant 0 : index
    %c28_264 = arith.constant 28 : index
    %573 = vector.load %arg24[%c0_263, %c28_264] : memref<16x32xf32, #tpu.memory_space<vmem>>, vector<8x4xf32>
    tpu.vector_store %arg24[%c0_263, %c28_264], %572 {strides = array<i32>} : memref<16x32xf32, #tpu.memory_space<vmem>>, vector<8x4xf32>,
    %c1_265 = arith.constant 1 : index
    %c0_266 = arith.constant 0 : index
    %c0_267 = arith.constant 0 : index
    %574 = vector.load %arg4[%c1_265, %c0_266, %c0_267] : memref<2x1x16xf32, #tpu.memory_space<vmem>>, vector<1x1x16xf32>
    %575 = vector.shape_cast %574 : vector<1x1x16xf32> to vector<1x16xf32>
    %576 = vector.extract_strided_slice %393 {offsets = [8, 0], sizes = [8, 4], strides = [1, 1]} : vector<16x32xbf16> to vector<8x4xbf16>
    %577 = vector.extract_strided_slice %394 {offsets = [16, 0], sizes = [16, 4], strides = [1, 1]} : vector<32x32xbf16> to vector<16x4xbf16>
    %cst_268 = arith.constant dense<0.000000e+00> : vector<8x16xf32>
    %578 = tpu.matmul %576, %577, %cst_268 {dimension_numbers = #tpu.dot_dimension_numbers<[1], [1], [0], [0], [0, 0, 1, 0], [], []>} : vector<8x4xbf16>, vector<16x4xbf16>, vector<8x16xf32> -> vector<8x16xf32>
    %579 = vector.broadcast %575 : vector<1x16xf32> to vector<8x16xf32>
    %580 = arith.addf %578, %579 : vector<8x16xf32>
    %cst_269 = arith.constant dense<0xFF800000> : vector<8xf32>
    %581 = vector.multi_reduction <maximumf>, %580, %cst_269 [1] : vector<8x16xf32> to vector<8xf32>
    %582 = vector.shape_cast %581 : vector<8xf32> to vector<8x1xf32>
    %583 = vector.broadcast %582 : vector<8x1xf32> to vector<8x16xf32>
    %584 = arith.subf %580, %583 : vector<8x16xf32>
    %585 = math.exp %584 : vector<8x16xf32>
    %cst_270 = arith.constant dense<0.000000e+00> : vector<8xf32>
    %586 = vector.multi_reduction <add>, %585, %cst_270 [1] : vector<8x16xf32> to vector<8xf32>
    %587 = vector.shape_cast %586 : vector<8xf32> to vector<8x1xf32>
    %588 = tpu.reciprocal %587 {approx = true} : vector<8x1xf32> -> vector<8x1xf32>
    %589 = vector.broadcast %588 : vector<8x1xf32> to vector<8x16xf32>
    %590 = arith.mulf %585, %589 : vector<8x16xf32>
    %591 = arith.truncf %590 : vector<8x16xf32> to vector<8x16xbf16>
    %c0_271 = arith.constant 0 : index
    %c1_272 = arith.constant 1 : index
    %c0_273 = arith.constant 0 : index
    %c0_274 = arith.constant 0 : index
    %592 = vector.load %arg22[%c0_271, %c1_272, %c0_273, %c0_274] : memref<1x2x8x128xbf16, #tpu.memory_space<vmem>>, vector<1x1x8x16xbf16>
    %593 = vector.shape_cast %592 : vector<1x1x8x16xbf16> to vector<8x16xbf16>
    %594 = vector.shape_cast %591 : vector<8x16xbf16> to vector<1x1x8x16xbf16>
    tpu.vector_store %arg22[%c0_271, %c1_272, %c0_273, %c0_274], %594 {strides = array<i32>} : memref<1x2x8x128xbf16, #tpu.memory_space<vmem>>, vector<1x1x8x16xbf16>,
    %595 = vector.extract_strided_slice %395 {offsets = [16, 0], sizes = [16, 4], strides = [1, 1]} : vector<32x32xbf16> to vector<16x4xbf16>
    %cst_275 = arith.constant dense<0.000000e+00> : vector<8x4xf32>
    %596 = tpu.matmul %591, %595, %cst_275 {dimension_numbers = #tpu.dot_dimension_numbers<[1], [0], [0], [1], [0, 0, 1, 1], [], []>} : vector<8x16xbf16>, vector<16x4xbf16>, vector<8x4xf32> -> vector<8x4xf32>
    %c8_276 = arith.constant 8 : index
    %c0_277 = arith.constant 0 : index
    %597 = vector.load %arg24[%c8_276, %c0_277] : memref<16x32xf32, #tpu.memory_space<vmem>>, vector<8x4xf32>
    tpu.vector_store %arg24[%c8_276, %c0_277], %596 {strides = array<i32>} : memref<16x32xf32, #tpu.memory_space<vmem>>, vector<8x4xf32>,
    %598 = vector.extract_strided_slice %393 {offsets = [8, 4], sizes = [8, 4], strides = [1, 1]} : vector<16x32xbf16> to vector<8x4xbf16>
    %599 = vector.extract_strided_slice %394 {offsets = [16, 4], sizes = [16, 4], strides = [1, 1]} : vector<32x32xbf16> to vector<16x4xbf16>
    %cst_278 = arith.constant dense<0.000000e+00> : vector<8x16xf32>
    %600 = tpu.matmul %598, %599, %cst_278 {dimension_numbers = #tpu.dot_dimension_numbers<[1], [1], [0], [0], [0, 0, 1, 0], [], []>} : vector<8x4xbf16>, vector<16x4xbf16>, vector<8x16xf32> -> vector<8x16xf32>
    %601 = vector.broadcast %575 : vector<1x16xf32> to vector<8x16xf32>
    %602 = arith.addf %600, %601 : vector<8x16xf32>
    %cst_279 = arith.constant dense<0xFF800000> : vector<8xf32>
    %603 = vector.multi_reduction <maximumf>, %602, %cst_279 [1] : vector<8x16xf32> to vector<8xf32>
    %604 = vector.shape_cast %603 : vector<8xf32> to vector<8x1xf32>
    %605 = vector.broadcast %604 : vector<8x1xf32> to vector<8x16xf32>
    %606 = arith.subf %602, %605 : vector<8x16xf32>
    %607 = math.exp %606 : vector<8x16xf32>
    %cst_280 = arith.constant dense<0.000000e+00> : vector<8xf32>
    %608 = vector.multi_reduction <add>, %607, %cst_280 [1] : vector<8x16xf32> to vector<8xf32>
    %609 = vector.shape_cast %608 : vector<8xf32> to vector<8x1xf32>
    %610 = tpu.reciprocal %609 {approx = true} : vector<8x1xf32> -> vector<8x1xf32>
    %611 = vector.broadcast %610 : vector<8x1xf32> to vector<8x16xf32>
    %612 = arith.mulf %607, %611 : vector<8x16xf32>
    %613 = arith.truncf %612 : vector<8x16xf32> to vector<8x16xbf16>
    %c0_281 = arith.constant 0 : index
    %c1_282 = arith.constant 1 : index
    %c0_283 = arith.constant 0 : index
    %c16_284 = arith.constant 16 : index
    %614 = vector.load %arg22[%c0_281, %c1_282, %c0_283, %c16_284] : memref<1x2x8x128xbf16, #tpu.memory_space<vmem>>, vector<1x1x8x16xbf16>
    %615 = vector.shape_cast %614 : vector<1x1x8x16xbf16> to vector<8x16xbf16>
    %616 = vector.shape_cast %613 : vector<8x16xbf16> to vector<1x1x8x16xbf16>
    tpu.vector_store %arg22[%c0_281, %c1_282, %c0_283, %c16_284], %616 {strides = array<i32>} : memref<1x2x8x128xbf16, #tpu.memory_space<vmem>>, vector<1x1x8x16xbf16>,
    %617 = vector.extract_strided_slice %395 {offsets = [16, 4], sizes = [16, 4], strides = [1, 1]} : vector<32x32xbf16> to vector<16x4xbf16>
    %cst_285 = arith.constant dense<0.000000e+00> : vector<8x4xf32>
    %618 = tpu.matmul %613, %617, %cst_285 {dimension_numbers = #tpu.dot_dimension_numbers<[1], [0], [0], [1], [0, 0, 1, 1], [], []>} : vector<8x16xbf16>, vector<16x4xbf16>, vector<8x4xf32> -> vector<8x4xf32>
    %c8_286 = arith.constant 8 : index
    %c4_287 = arith.constant 4 : index
    %619 = vector.load %arg24[%c8_286, %c4_287] : memref<16x32xf32, #tpu.memory_space<vmem>>, vector<8x4xf32>
    tpu.vector_store %arg24[%c8_286, %c4_287], %618 {strides = array<i32>} : memref<16x32xf32, #tpu.memory_space<vmem>>, vector<8x4xf32>,
    %620 = vector.extract_strided_slice %393 {offsets = [8, 8], sizes = [8, 4], strides = [1, 1]} : vector<16x32xbf16> to vector<8x4xbf16>
    %621 = vector.extract_strided_slice %394 {offsets = [16, 8], sizes = [16, 4], strides = [1, 1]} : vector<32x32xbf16> to vector<16x4xbf16>
    %cst_288 = arith.constant dense<0.000000e+00> : vector<8x16xf32>
    %622 = tpu.matmul %620, %621, %cst_288 {dimension_numbers = #tpu.dot_dimension_numbers<[1], [1], [0], [0], [0, 0, 1, 0], [], []>} : vector<8x4xbf16>, vector<16x4xbf16>, vector<8x16xf32> -> vector<8x16xf32>
    %623 = vector.broadcast %575 : vector<1x16xf32> to vector<8x16xf32>
    %624 = arith.addf %622, %623 : vector<8x16xf32>
    %cst_289 = arith.constant dense<0xFF800000> : vector<8xf32>
    %625 = vector.multi_reduction <maximumf>, %624, %cst_289 [1] : vector<8x16xf32> to vector<8xf32>
    %626 = vector.shape_cast %625 : vector<8xf32> to vector<8x1xf32>
    %627 = vector.broadcast %626 : vector<8x1xf32> to vector<8x16xf32>
    %628 = arith.subf %624, %627 : vector<8x16xf32>
    %629 = math.exp %628 : vector<8x16xf32>
    %cst_290 = arith.constant dense<0.000000e+00> : vector<8xf32>
    %630 = vector.multi_reduction <add>, %629, %cst_290 [1] : vector<8x16xf32> to vector<8xf32>
    %631 = vector.shape_cast %630 : vector<8xf32> to vector<8x1xf32>
    %632 = tpu.reciprocal %631 {approx = true} : vector<8x1xf32> -> vector<8x1xf32>
    %633 = vector.broadcast %632 : vector<8x1xf32> to vector<8x16xf32>
    %634 = arith.mulf %629, %633 : vector<8x16xf32>
    %635 = arith.truncf %634 : vector<8x16xf32> to vector<8x16xbf16>
    %c0_291 = arith.constant 0 : index
    %c1_292 = arith.constant 1 : index
    %c0_293 = arith.constant 0 : index
    %c32_294 = arith.constant 32 : index
    %636 = vector.load %arg22[%c0_291, %c1_292, %c0_293, %c32_294] : memref<1x2x8x128xbf16, #tpu.memory_space<vmem>>, vector<1x1x8x16xbf16>
    %637 = vector.shape_cast %636 : vector<1x1x8x16xbf16> to vector<8x16xbf16>
    %638 = vector.shape_cast %635 : vector<8x16xbf16> to vector<1x1x8x16xbf16>
    tpu.vector_store %arg22[%c0_291, %c1_292, %c0_293, %c32_294], %638 {strides = array<i32>} : memref<1x2x8x128xbf16, #tpu.memory_space<vmem>>, vector<1x1x8x16xbf16>,
    %639 = vector.extract_strided_slice %395 {offsets = [16, 8], sizes = [16, 4], strides = [1, 1]} : vector<32x32xbf16> to vector<16x4xbf16>
    %cst_295 = arith.constant dense<0.000000e+00> : vector<8x4xf32>
    %640 = tpu.matmul %635, %639, %cst_295 {dimension_numbers = #tpu.dot_dimension_numbers<[1], [0], [0], [1], [0, 0, 1, 1], [], []>} : vector<8x16xbf16>, vector<16x4xbf16>, vector<8x4xf32> -> vector<8x4xf32>
    %c8_296 = arith.constant 8 : index
    %c8_297 = arith.constant 8 : index
    %641 = vector.load %arg24[%c8_296, %c8_297] : memref<16x32xf32, #tpu.memory_space<vmem>>, vector<8x4xf32>
    tpu.vector_store %arg24[%c8_296, %c8_297], %640 {strides = array<i32>} : memref<16x32xf32, #tpu.memory_space<vmem>>, vector<8x4xf32>,
    %642 = vector.extract_strided_slice %393 {offsets = [8, 12], sizes = [8, 4], strides = [1, 1]} : vector<16x32xbf16> to vector<8x4xbf16>
    %643 = vector.extract_strided_slice %394 {offsets = [16, 12], sizes = [16, 4], strides = [1, 1]} : vector<32x32xbf16> to vector<16x4xbf16>
    %cst_298 = arith.constant dense<0.000000e+00> : vector<8x16xf32>
    %644 = tpu.matmul %642, %643, %cst_298 {dimension_numbers = #tpu.dot_dimension_numbers<[1], [1], [0], [0], [0, 0, 1, 0], [], []>} : vector<8x4xbf16>, vector<16x4xbf16>, vector<8x16xf32> -> vector<8x16xf32>
    %645 = vector.broadcast %575 : vector<1x16xf32> to vector<8x16xf32>
    %646 = arith.addf %644, %645 : vector<8x16xf32>
    %cst_299 = arith.constant dense<0xFF800000> : vector<8xf32>
    %647 = vector.multi_reduction <maximumf>, %646, %cst_299 [1] : vector<8x16xf32> to vector<8xf32>
    %648 = vector.shape_cast %647 : vector<8xf32> to vector<8x1xf32>
    %649 = vector.broadcast %648 : vector<8x1xf32> to vector<8x16xf32>
    %650 = arith.subf %646, %649 : vector<8x16xf32>
    %651 = math.exp %650 : vector<8x16xf32>
    %cst_300 = arith.constant dense<0.000000e+00> : vector<8xf32>
    %652 = vector.multi_reduction <add>, %651, %cst_300 [1] : vector<8x16xf32> to vector<8xf32>
    %653 = vector.shape_cast %652 : vector<8xf32> to vector<8x1xf32>
    %654 = tpu.reciprocal %653 {approx = true} : vector<8x1xf32> -> vector<8x1xf32>
    %655 = vector.broadcast %654 : vector<8x1xf32> to vector<8x16xf32>
    %656 = arith.mulf %651, %655 : vector<8x16xf32>
    %657 = arith.truncf %656 : vector<8x16xf32> to vector<8x16xbf16>
    %c0_301 = arith.constant 0 : index
    %c1_302 = arith.constant 1 : index
    %c0_303 = arith.constant 0 : index
    %c48_304 = arith.constant 48 : index
    %658 = vector.load %arg22[%c0_301, %c1_302, %c0_303, %c48_304] : memref<1x2x8x128xbf16, #tpu.memory_space<vmem>>, vector<1x1x8x16xbf16>
    %659 = vector.shape_cast %658 : vector<1x1x8x16xbf16> to vector<8x16xbf16>
    %660 = vector.shape_cast %657 : vector<8x16xbf16> to vector<1x1x8x16xbf16>
    tpu.vector_store %arg22[%c0_301, %c1_302, %c0_303, %c48_304], %660 {strides = array<i32>} : memref<1x2x8x128xbf16, #tpu.memory_space<vmem>>, vector<1x1x8x16xbf16>,
    %661 = vector.extract_strided_slice %395 {offsets = [16, 12], sizes = [16, 4], strides = [1, 1]} : vector<32x32xbf16> to vector<16x4xbf16>
    %cst_305 = arith.constant dense<0.000000e+00> : vector<8x4xf32>
    %662 = tpu.matmul %657, %661, %cst_305 {dimension_numbers = #tpu.dot_dimension_numbers<[1], [0], [0], [1], [0, 0, 1, 1], [], []>} : vector<8x16xbf16>, vector<16x4xbf16>, vector<8x4xf32> -> vector<8x4xf32>
    %c8_306 = arith.constant 8 : index
    %c12_307 = arith.constant 12 : index
    %663 = vector.load %arg24[%c8_306, %c12_307] : memref<16x32xf32, #tpu.memory_space<vmem>>, vector<8x4xf32>
    tpu.vector_store %arg24[%c8_306, %c12_307], %662 {strides = array<i32>} : memref<16x32xf32, #tpu.memory_space<vmem>>, vector<8x4xf32>,
    %664 = vector.extract_strided_slice %393 {offsets = [8, 16], sizes = [8, 4], strides = [1, 1]} : vector<16x32xbf16> to vector<8x4xbf16>
    %665 = vector.extract_strided_slice %394 {offsets = [16, 16], sizes = [16, 4], strides = [1, 1]} : vector<32x32xbf16> to vector<16x4xbf16>
    %cst_308 = arith.constant dense<0.000000e+00> : vector<8x16xf32>
    %666 = tpu.matmul %664, %665, %cst_308 {dimension_numbers = #tpu.dot_dimension_numbers<[1], [1], [0], [0], [0, 0, 1, 0], [], []>} : vector<8x4xbf16>, vector<16x4xbf16>, vector<8x16xf32> -> vector<8x16xf32>
    %667 = vector.broadcast %575 : vector<1x16xf32> to vector<8x16xf32>
    %668 = arith.addf %666, %667 : vector<8x16xf32>
    %cst_309 = arith.constant dense<0xFF800000> : vector<8xf32>
    %669 = vector.multi_reduction <maximumf>, %668, %cst_309 [1] : vector<8x16xf32> to vector<8xf32>
    %670 = vector.shape_cast %669 : vector<8xf32> to vector<8x1xf32>
    %671 = vector.broadcast %670 : vector<8x1xf32> to vector<8x16xf32>
    %672 = arith.subf %668, %671 : vector<8x16xf32>
    %673 = math.exp %672 : vector<8x16xf32>
    %cst_310 = arith.constant dense<0.000000e+00> : vector<8xf32>
    %674 = vector.multi_reduction <add>, %673, %cst_310 [1] : vector<8x16xf32> to vector<8xf32>
    %675 = vector.shape_cast %674 : vector<8xf32> to vector<8x1xf32>
    %676 = tpu.reciprocal %675 {approx = true} : vector<8x1xf32> -> vector<8x1xf32>
    %677 = vector.broadcast %676 : vector<8x1xf32> to vector<8x16xf32>
    %678 = arith.mulf %673, %677 : vector<8x16xf32>
    %679 = arith.truncf %678 : vector<8x16xf32> to vector<8x16xbf16>
    %c0_311 = arith.constant 0 : index
    %c1_312 = arith.constant 1 : index
    %c0_313 = arith.constant 0 : index
    %c64_314 = arith.constant 64 : index
    %680 = vector.load %arg22[%c0_311, %c1_312, %c0_313, %c64_314] : memref<1x2x8x128xbf16, #tpu.memory_space<vmem>>, vector<1x1x8x16xbf16>
    %681 = vector.shape_cast %680 : vector<1x1x8x16xbf16> to vector<8x16xbf16>
    %682 = vector.shape_cast %679 : vector<8x16xbf16> to vector<1x1x8x16xbf16>
    tpu.vector_store %arg22[%c0_311, %c1_312, %c0_313, %c64_314], %682 {strides = array<i32>} : memref<1x2x8x128xbf16, #tpu.memory_space<vmem>>, vector<1x1x8x16xbf16>,
    %683 = vector.extract_strided_slice %395 {offsets = [16, 16], sizes = [16, 4], strides = [1, 1]} : vector<32x32xbf16> to vector<16x4xbf16>
    %cst_315 = arith.constant dense<0.000000e+00> : vector<8x4xf32>
    %684 = tpu.matmul %679, %683, %cst_315 {dimension_numbers = #tpu.dot_dimension_numbers<[1], [0], [0], [1], [0, 0, 1, 1], [], []>} : vector<8x16xbf16>, vector<16x4xbf16>, vector<8x4xf32> -> vector<8x4xf32>
    %c8_316 = arith.constant 8 : index
    %c16_317 = arith.constant 16 : index
    %685 = vector.load %arg24[%c8_316, %c16_317] : memref<16x32xf32, #tpu.memory_space<vmem>>, vector<8x4xf32>
    tpu.vector_store %arg24[%c8_316, %c16_317], %684 {strides = array<i32>} : memref<16x32xf32, #tpu.memory_space<vmem>>, vector<8x4xf32>,
    %686 = vector.extract_strided_slice %393 {offsets = [8, 20], sizes = [8, 4], strides = [1, 1]} : vector<16x32xbf16> to vector<8x4xbf16>
    %687 = vector.extract_strided_slice %394 {offsets = [16, 20], sizes = [16, 4], strides = [1, 1]} : vector<32x32xbf16> to vector<16x4xbf16>
    %cst_318 = arith.constant dense<0.000000e+00> : vector<8x16xf32>
    %688 = tpu.matmul %686, %687, %cst_318 {dimension_numbers = #tpu.dot_dimension_numbers<[1], [1], [0], [0], [0, 0, 1, 0], [], []>} : vector<8x4xbf16>, vector<16x4xbf16>, vector<8x16xf32> -> vector<8x16xf32>
    %689 = vector.broadcast %575 : vector<1x16xf32> to vector<8x16xf32>
    %690 = arith.addf %688, %689 : vector<8x16xf32>
    %cst_319 = arith.constant dense<0xFF800000> : vector<8xf32>
    %691 = vector.multi_reduction <maximumf>, %690, %cst_319 [1] : vector<8x16xf32> to vector<8xf32>
    %692 = vector.shape_cast %691 : vector<8xf32> to vector<8x1xf32>
    %693 = vector.broadcast %692 : vector<8x1xf32> to vector<8x16xf32>
    %694 = arith.subf %690, %693 : vector<8x16xf32>
    %695 = math.exp %694 : vector<8x16xf32>
    %cst_320 = arith.constant dense<0.000000e+00> : vector<8xf32>
    %696 = vector.multi_reduction <add>, %695, %cst_320 [1] : vector<8x16xf32> to vector<8xf32>
    %697 = vector.shape_cast %696 : vector<8xf32> to vector<8x1xf32>
    %698 = tpu.reciprocal %697 {approx = true} : vector<8x1xf32> -> vector<8x1xf32>
    %699 = vector.broadcast %698 : vector<8x1xf32> to vector<8x16xf32>
    %700 = arith.mulf %695, %699 : vector<8x16xf32>
    %701 = arith.truncf %700 : vector<8x16xf32> to vector<8x16xbf16>
    %c0_321 = arith.constant 0 : index
    %c1_322 = arith.constant 1 : index
    %c0_323 = arith.constant 0 : index
    %c80_324 = arith.constant 80 : index
    %702 = vector.load %arg22[%c0_321, %c1_322, %c0_323, %c80_324] : memref<1x2x8x128xbf16, #tpu.memory_space<vmem>>, vector<1x1x8x16xbf16>
    %703 = vector.shape_cast %702 : vector<1x1x8x16xbf16> to vector<8x16xbf16>
    %704 = vector.shape_cast %701 : vector<8x16xbf16> to vector<1x1x8x16xbf16>
    tpu.vector_store %arg22[%c0_321, %c1_322, %c0_323, %c80_324], %704 {strides = array<i32>} : memref<1x2x8x128xbf16, #tpu.memory_space<vmem>>, vector<1x1x8x16xbf16>,
    %705 = vector.extract_strided_slice %395 {offsets = [16, 20], sizes = [16, 4], strides = [1, 1]} : vector<32x32xbf16> to vector<16x4xbf16>
    %cst_325 = arith.constant dense<0.000000e+00> : vector<8x4xf32>
    %706 = tpu.matmul %701, %705, %cst_325 {dimension_numbers = #tpu.dot_dimension_numbers<[1], [0], [0], [1], [0, 0, 1, 1], [], []>} : vector<8x16xbf16>, vector<16x4xbf16>, vector<8x4xf32> -> vector<8x4xf32>
    %c8_326 = arith.constant 8 : index
    %c20_327 = arith.constant 20 : index
    %707 = vector.load %arg24[%c8_326, %c20_327] : memref<16x32xf32, #tpu.memory_space<vmem>>, vector<8x4xf32>
    tpu.vector_store %arg24[%c8_326, %c20_327], %706 {strides = array<i32>} : memref<16x32xf32, #tpu.memory_space<vmem>>, vector<8x4xf32>,
    %708 = vector.extract_strided_slice %393 {offsets = [8, 24], sizes = [8, 4], strides = [1, 1]} : vector<16x32xbf16> to vector<8x4xbf16>
    %709 = vector.extract_strided_slice %394 {offsets = [16, 24], sizes = [16, 4], strides = [1, 1]} : vector<32x32xbf16> to vector<16x4xbf16>
    %cst_328 = arith.constant dense<0.000000e+00> : vector<8x16xf32>
    %710 = tpu.matmul %708, %709, %cst_328 {dimension_numbers = #tpu.dot_dimension_numbers<[1], [1], [0], [0], [0, 0, 1, 0], [], []>} : vector<8x4xbf16>, vector<16x4xbf16>, vector<8x16xf32> -> vector<8x16xf32>
    %711 = vector.broadcast %575 : vector<1x16xf32> to vector<8x16xf32>
    %712 = arith.addf %710, %711 : vector<8x16xf32>
    %cst_329 = arith.constant dense<0xFF800000> : vector<8xf32>
    %713 = vector.multi_reduction <maximumf>, %712, %cst_329 [1] : vector<8x16xf32> to vector<8xf32>
    %714 = vector.shape_cast %713 : vector<8xf32> to vector<8x1xf32>
    %715 = vector.broadcast %714 : vector<8x1xf32> to vector<8x16xf32>
    %716 = arith.subf %712, %715 : vector<8x16xf32>
    %717 = math.exp %716 : vector<8x16xf32>
    %cst_330 = arith.constant dense<0.000000e+00> : vector<8xf32>
    %718 = vector.multi_reduction <add>, %717, %cst_330 [1] : vector<8x16xf32> to vector<8xf32>
    %719 = vector.shape_cast %718 : vector<8xf32> to vector<8x1xf32>
    %720 = tpu.reciprocal %719 {approx = true} : vector<8x1xf32> -> vector<8x1xf32>
    %721 = vector.broadcast %720 : vector<8x1xf32> to vector<8x16xf32>
    %722 = arith.mulf %717, %721 : vector<8x16xf32>
    %723 = arith.truncf %722 : vector<8x16xf32> to vector<8x16xbf16>
    %c0_331 = arith.constant 0 : index
    %c1_332 = arith.constant 1 : index
    %c0_333 = arith.constant 0 : index
    %c96_334 = arith.constant 96 : index
    %724 = vector.load %arg22[%c0_331, %c1_332, %c0_333, %c96_334] : memref<1x2x8x128xbf16, #tpu.memory_space<vmem>>, vector<1x1x8x16xbf16>
    %725 = vector.shape_cast %724 : vector<1x1x8x16xbf16> to vector<8x16xbf16>
    %726 = vector.shape_cast %723 : vector<8x16xbf16> to vector<1x1x8x16xbf16>
    tpu.vector_store %arg22[%c0_331, %c1_332, %c0_333, %c96_334], %726 {strides = array<i32>} : memref<1x2x8x128xbf16, #tpu.memory_space<vmem>>, vector<1x1x8x16xbf16>,
    %727 = vector.extract_strided_slice %395 {offsets = [16, 24], sizes = [16, 4], strides = [1, 1]} : vector<32x32xbf16> to vector<16x4xbf16>
    %cst_335 = arith.constant dense<0.000000e+00> : vector<8x4xf32>
    %728 = tpu.matmul %723, %727, %cst_335 {dimension_numbers = #tpu.dot_dimension_numbers<[1], [0], [0], [1], [0, 0, 1, 1], [], []>} : vector<8x16xbf16>, vector<16x4xbf16>, vector<8x4xf32> -> vector<8x4xf32>
    %c8_336 = arith.constant 8 : index
    %c24_337 = arith.constant 24 : index
    %729 = vector.load %arg24[%c8_336, %c24_337] : memref<16x32xf32, #tpu.memory_space<vmem>>, vector<8x4xf32>
    tpu.vector_store %arg24[%c8_336, %c24_337], %728 {strides = array<i32>} : memref<16x32xf32, #tpu.memory_space<vmem>>, vector<8x4xf32>,
    %730 = vector.extract_strided_slice %393 {offsets = [8, 28], sizes = [8, 4], strides = [1, 1]} : vector<16x32xbf16> to vector<8x4xbf16>
    %731 = vector.extract_strided_slice %394 {offsets = [16, 28], sizes = [16, 4], strides = [1, 1]} : vector<32x32xbf16> to vector<16x4xbf16>
    %cst_338 = arith.constant dense<0.000000e+00> : vector<8x16xf32>
    %732 = tpu.matmul %730, %731, %cst_338 {dimension_numbers = #tpu.dot_dimension_numbers<[1], [1], [0], [0], [0, 0, 1, 0], [], []>} : vector<8x4xbf16>, vector<16x4xbf16>, vector<8x16xf32> -> vector<8x16xf32>
    %733 = vector.broadcast %575 : vector<1x16xf32> to vector<8x16xf32>
    %734 = arith.addf %732, %733 : vector<8x16xf32>
    %cst_339 = arith.constant dense<0xFF800000> : vector<8xf32>
    %735 = vector.multi_reduction <maximumf>, %734, %cst_339 [1] : vector<8x16xf32> to vector<8xf32>
    %736 = vector.shape_cast %735 : vector<8xf32> to vector<8x1xf32>
    %737 = vector.broadcast %736 : vector<8x1xf32> to vector<8x16xf32>
    %738 = arith.subf %734, %737 : vector<8x16xf32>
    %739 = math.exp %738 : vector<8x16xf32>
    %cst_340 = arith.constant dense<0.000000e+00> : vector<8xf32>
    %740 = vector.multi_reduction <add>, %739, %cst_340 [1] : vector<8x16xf32> to vector<8xf32>
    %741 = vector.shape_cast %740 : vector<8xf32> to vector<8x1xf32>
    %742 = tpu.reciprocal %741 {approx = true} : vector<8x1xf32> -> vector<8x1xf32>
    %743 = vector.broadcast %742 : vector<8x1xf32> to vector<8x16xf32>
    %744 = arith.mulf %739, %743 : vector<8x16xf32>
    %745 = arith.truncf %744 : vector<8x16xf32> to vector<8x16xbf16>
    %c0_341 = arith.constant 0 : index
    %c1_342 = arith.constant 1 : index
    %c0_343 = arith.constant 0 : index
    %c112_344 = arith.constant 112 : index
    %746 = vector.load %arg22[%c0_341, %c1_342, %c0_343, %c112_344] : memref<1x2x8x128xbf16, #tpu.memory_space<vmem>>, vector<1x1x8x16xbf16>
    %747 = vector.shape_cast %746 : vector<1x1x8x16xbf16> to vector<8x16xbf16>
    %748 = vector.shape_cast %745 : vector<8x16xbf16> to vector<1x1x8x16xbf16>
    tpu.vector_store %arg22[%c0_341, %c1_342, %c0_343, %c112_344], %748 {strides = array<i32>} : memref<1x2x8x128xbf16, #tpu.memory_space<vmem>>, vector<1x1x8x16xbf16>,
    %749 = vector.extract_strided_slice %395 {offsets = [16, 28], sizes = [16, 4], strides = [1, 1]} : vector<32x32xbf16> to vector<16x4xbf16>
    %cst_345 = arith.constant dense<0.000000e+00> : vector<8x4xf32>
    %750 = tpu.matmul %745, %749, %cst_345 {dimension_numbers = #tpu.dot_dimension_numbers<[1], [0], [0], [1], [0, 0, 1, 1], [], []>} : vector<8x16xbf16>, vector<16x4xbf16>, vector<8x4xf32> -> vector<8x4xf32>
    %c8_346 = arith.constant 8 : index
    %c28_347 = arith.constant 28 : index
    %751 = vector.load %arg24[%c8_346, %c28_347] : memref<16x32xf32, #tpu.memory_space<vmem>>, vector<8x4xf32>
    tpu.vector_store %arg24[%c8_346, %c28_347], %750 {strides = array<i32>} : memref<16x32xf32, #tpu.memory_space<vmem>>, vector<8x4xf32>,
    %c0_348 = arith.constant 0 : index
    %c0_349 = arith.constant 0 : index
    %752 = vector.load %arg24[%c0_348, %c0_349] : memref<16x32xf32, #tpu.memory_space<vmem>>, vector<16x32xf32>
    %753 = arith.truncf %752 : vector<16x32xf32> to vector<16x32xbf16>
    %c0_350 = arith.constant 0 : index
    %c0_351 = arith.constant 0 : index
    %c0_352 = arith.constant 0 : index
    %754 = vector.load %arg11[%c0_350, %c0_351, %c0_352] : memref<1x32x32xbf16, #tpu.memory_space<vmem>>, vector<1x32x32xbf16>
    %755 = vector.shape_cast %754 : vector<1x32x32xbf16> to vector<32x32xbf16>
    %cst_353 = arith.constant dense<0.000000e+00> : vector<16x32xf32>
    %756 = tpu.matmul %753, %755, %cst_353 {dimension_numbers = #tpu.dot_dimension_numbers<[1], [0], [0], [1], [0, 0, 1, 1], [], []>} : vector<16x32xbf16>, vector<32x32xbf16>, vector<16x32xf32> -> vector<16x32xf32>
    %757 = arith.addf %756, %383 : vector<16x32xf32>
    %c0_354 = arith.constant 0 : index
    %c0_355 = arith.constant 0 : index
    %c0_356 = arith.constant 0 : index
    %758 = vector.load %arg12[%c0_354, %c0_355, %c0_356] : memref<1x1x32xf32, #tpu.memory_space<vmem>>, vector<1x1x32xf32>
    %759 = vector.shape_cast %758 : vector<1x1x32xf32> to vector<1x32xf32>
    %c0_357 = arith.constant 0 : index
    %c0_358 = arith.constant 0 : index
    %c0_359 = arith.constant 0 : index
    %760 = vector.load %arg13[%c0_357, %c0_358, %c0_359] : memref<1x1x32xf32, #tpu.memory_space<vmem>>, vector<1x1x32xf32>
    %761 = vector.shape_cast %760 : vector<1x1x32xf32> to vector<1x32xf32>
    %cst_360 = arith.constant dense<0.000000e+00> : vector<16xf32>
    %762 = vector.multi_reduction <add>, %757, %cst_360 [1] : vector<16x32xf32> to vector<16xf32>
    %763 = vector.shape_cast %762 : vector<16xf32> to vector<16x1xf32>
    %cst_361 = arith.constant 3.200000e+01 : f32
    %764 = vector.broadcast %cst_361 : f32 to vector<16x1xf32>
    %765 = arith.divf %763, %764 : vector<16x1xf32>
    %766 = vector.broadcast %765 : vector<16x1xf32> to vector<16x32xf32>
    %767 = arith.subf %757, %766 : vector<16x32xf32>
    %768 = arith.mulf %767, %767 : vector<16x32xf32>
    %cst_362 = arith.constant dense<0.000000e+00> : vector<16xf32>
    %769 = vector.multi_reduction <add>, %768, %cst_362 [1] : vector<16x32xf32> to vector<16xf32>
    %770 = vector.shape_cast %769 : vector<16xf32> to vector<16x1xf32>
    %cst_363 = arith.constant 3.200000e+01 : f32
    %771 = vector.broadcast %cst_363 : f32 to vector<16x1xf32>
    %772 = arith.divf %770, %771 : vector<16x1xf32>
    %773 = vector.broadcast %765 : vector<16x1xf32> to vector<16x32xf32>
    %774 = arith.subf %757, %773 : vector<16x32xf32>
    %cst_364 = arith.constant 9.99999997E-7 : f32
    %775 = vector.broadcast %cst_364 : f32 to vector<16x1xf32>
    %776 = arith.addf %772, %775 : vector<16x1xf32>
    %777 = math.rsqrt %776 : vector<16x1xf32>
    %778 = vector.broadcast %777 : vector<16x1xf32> to vector<16x32xf32>
    %779 = arith.mulf %774, %778 : vector<16x32xf32>
    %780 = vector.broadcast %759 : vector<1x32xf32> to vector<16x32xf32>
    %781 = arith.mulf %779, %780 : vector<16x32xf32>
    %782 = vector.broadcast %761 : vector<1x32xf32> to vector<16x32xf32>
    %783 = arith.addf %781, %782 : vector<16x32xf32>
    %784 = arith.truncf %783 : vector<16x32xf32> to vector<16x32xbf16>
    %c0_365 = arith.constant 0 : index
    %c0_366 = arith.constant 0 : index
    %c0_367 = arith.constant 0 : index
    %785 = vector.load %arg14[%c0_365, %c0_366, %c0_367] : memref<1x32x64xbf16, #tpu.memory_space<vmem>>, vector<1x32x64xbf16>
    %786 = vector.shape_cast %785 : vector<1x32x64xbf16> to vector<32x64xbf16>
    %cst_368 = arith.constant dense<0.000000e+00> : vector<16x64xf32>
    %787 = tpu.matmul %784, %786, %cst_368 {dimension_numbers = #tpu.dot_dimension_numbers<[1], [0], [0], [1], [0, 0, 1, 1], [], []>} : vector<16x32xbf16>, vector<32x64xbf16>, vector<16x64xf32> -> vector<16x64xf32>
    %c0_369 = arith.constant 0 : index
    %c0_370 = arith.constant 0 : index
    %c0_371 = arith.constant 0 : index
    %788 = vector.load %arg15[%c0_369, %c0_370, %c0_371] : memref<1x1x64xf32, #tpu.memory_space<vmem>>, vector<1x1x64xf32>
    %789 = vector.shape_cast %788 : vector<1x1x64xf32> to vector<1x64xf32>
    %790 = vector.broadcast %789 : vector<1x64xf32> to vector<16x64xf32>
    %791 = arith.addf %787, %790 : vector<16x64xf32>
    %cst_372 = arith.constant 0.000000e+00 : f32
    %792 = vector.broadcast %cst_372 : f32 to vector<16x64xf32>
    %793 = arith.maximumf %791, %792 : vector<16x64xf32>
    %794 = arith.truncf %793 : vector<16x64xf32> to vector<16x64xbf16>
    %c0_373 = arith.constant 0 : index
    %c0_374 = arith.constant 0 : index
    %c0_375 = arith.constant 0 : index
    %795 = vector.load %arg16[%c0_373, %c0_374, %c0_375] : memref<1x64x32xbf16, #tpu.memory_space<vmem>>, vector<1x64x32xbf16>
    %796 = vector.shape_cast %795 : vector<1x64x32xbf16> to vector<64x32xbf16>
    %cst_376 = arith.constant dense<0.000000e+00> : vector<16x32xf32>
    %797 = tpu.matmul %794, %796, %cst_376 {dimension_numbers = #tpu.dot_dimension_numbers<[1], [0], [0], [1], [0, 0, 1, 1], [], []>} : vector<16x64xbf16>, vector<64x32xbf16>, vector<16x32xf32> -> vector<16x32xf32>
    %c0_377 = arith.constant 0 : index
    %c0_378 = arith.constant 0 : index
    %c0_379 = arith.constant 0 : index
    %798 = vector.load %arg17[%c0_377, %c0_378, %c0_379] : memref<1x1x32xf32, #tpu.memory_space<vmem>>, vector<1x1x32xf32>
    %799 = vector.shape_cast %798 : vector<1x1x32xf32> to vector<1x32xf32>
    %800 = vector.broadcast %799 : vector<1x32xf32> to vector<16x32xf32>
    %801 = arith.addf %797, %800 : vector<16x32xf32>
    %802 = arith.addf %801, %783 : vector<16x32xf32>
    %c0_380 = arith.constant 0 : index
    %c0_381 = arith.constant 0 : index
    %c0_382 = arith.constant 0 : index
    %803 = vector.load %arg18[%c0_380, %c0_381, %c0_382] : memref<1x1x32xf32, #tpu.memory_space<vmem>>, vector<1x1x32xf32>
    %804 = vector.shape_cast %803 : vector<1x1x32xf32> to vector<1x32xf32>
    %c0_383 = arith.constant 0 : index
    %c0_384 = arith.constant 0 : index
    %c0_385 = arith.constant 0 : index
    %805 = vector.load %arg19[%c0_383, %c0_384, %c0_385] : memref<1x1x32xf32, #tpu.memory_space<vmem>>, vector<1x1x32xf32>
    %806 = vector.shape_cast %805 : vector<1x1x32xf32> to vector<1x32xf32>
    %cst_386 = arith.constant dense<0.000000e+00> : vector<16xf32>
    %807 = vector.multi_reduction <add>, %802, %cst_386 [1] : vector<16x32xf32> to vector<16xf32>
    %808 = vector.shape_cast %807 : vector<16xf32> to vector<16x1xf32>
    %cst_387 = arith.constant 3.200000e+01 : f32
    %809 = vector.broadcast %cst_387 : f32 to vector<16x1xf32>
    %810 = arith.divf %808, %809 : vector<16x1xf32>
    %811 = vector.broadcast %810 : vector<16x1xf32> to vector<16x32xf32>
    %812 = arith.subf %802, %811 : vector<16x32xf32>
    %813 = arith.mulf %812, %812 : vector<16x32xf32>
    %cst_388 = arith.constant dense<0.000000e+00> : vector<16xf32>
    %814 = vector.multi_reduction <add>, %813, %cst_388 [1] : vector<16x32xf32> to vector<16xf32>
    %815 = vector.shape_cast %814 : vector<16xf32> to vector<16x1xf32>
    %cst_389 = arith.constant 3.200000e+01 : f32
    %816 = vector.broadcast %cst_389 : f32 to vector<16x1xf32>
    %817 = arith.divf %815, %816 : vector<16x1xf32>
    %818 = vector.broadcast %810 : vector<16x1xf32> to vector<16x32xf32>
    %819 = arith.subf %802, %818 : vector<16x32xf32>
    %cst_390 = arith.constant 9.99999997E-7 : f32
    %820 = vector.broadcast %cst_390 : f32 to vector<16x1xf32>
    %821 = arith.addf %817, %820 : vector<16x1xf32>
    %822 = math.rsqrt %821 : vector<16x1xf32>
    %823 = vector.broadcast %822 : vector<16x1xf32> to vector<16x32xf32>
    %824 = arith.mulf %819, %823 : vector<16x32xf32>
    %825 = vector.broadcast %804 : vector<1x32xf32> to vector<16x32xf32>
    %826 = arith.mulf %824, %825 : vector<16x32xf32>
    %827 = vector.broadcast %806 : vector<1x32xf32> to vector<16x32xf32>
    %828 = arith.addf %826, %827 : vector<16x32xf32>
    %c0_391 = arith.constant 0 : index
    %c0_392 = arith.constant 0 : index
    %829 = vector.load %arg23[%c0_391, %c0_392] : memref<16x32xf32, #tpu.memory_space<vmem>>, vector<16x32xf32>
    tpu.vector_store %arg23[%c0_391, %c0_392], %828 {strides = array<i32>} : memref<16x32xf32, #tpu.memory_space<vmem>>, vector<16x32xf32>,
    %c1_i32 = arith.constant 1 : i32
    %830 = arith.cmpi eq, %arg0, %c1_i32 : i32
    %831 = arith.extui %830 : i1 to i32
    %c0_i32_393 = arith.constant 0 : i32
    %832 = arith.cmpi ne, %831, %c0_i32_393 : i32
    scf.if %832 {
      %c0_394 = arith.constant 0 : index
      %c0_395 = arith.constant 0 : index
      %833 = vector.load %arg20[%c0_394, %c0_395] : memref<16x32xf32, #tpu.memory_space<vmem>>, vector<16x32xf32>
      tpu.vector_store %arg20[%c0_394, %c0_395], %828 {strides = array<i32>} : memref<16x32xf32, #tpu.memory_space<vmem>>, vector<16x32xf32>,
    } else {
    }
    return
  }
  func.func @transform_0(%arg0: i32) -> (i32, i32) {
    %c0_i32 = arith.constant 0 : i32
    %c0_i32_0 = arith.constant 0 : i32
    %c0_i32_1 = arith.constant 0 : i32
    return %c0_i32, %c0_i32_0 : i32, i32
  }
  func.func @transform_1(%arg0: i32) -> (i32, i32) {
    %c0_i32 = arith.constant 0 : i32
    %c0_i32_0 = arith.constant 0 : i32
    %c0_i32_1 = arith.constant 0 : i32
    return %c0_i32, %c0_i32_0 : i32, i32
  }
  func.func @transform_2(%arg0: i32) -> (i32, i32, i32) {
    %c0_i32 = arith.constant 0 : i32
    %c0_i32_0 = arith.constant 0 : i32
    %c0_i32_1 = arith.constant 0 : i32
    %c0_i32_2 = arith.constant 0 : i32
    return %c0_i32, %c0_i32_0, %c0_i32_1 : i32, i32, i32
  }
  func.func @transform_3(%arg0: i32) -> (i32, i32, i32) {
    %c0_i32 = arith.constant 0 : i32
    %c0_i32_0 = arith.constant 0 : i32
    %c0_i32_1 = arith.constant 0 : i32
    %c0_i32_2 = arith.constant 0 : i32
    return %c0_i32, %c0_i32_0, %c0_i32_1 : i32, i32, i32
  }
  func.func @transform_4(%arg0: i32) -> (i32, i32, i32) {
    %c0_i32 = arith.constant 0 : i32
    %c0_i32_0 = arith.constant 0 : i32
    %c0_i32_1 = arith.constant 0 : i32
    return %arg0, %c0_i32, %c0_i32_0 : i32, i32, i32
  }
  func.func @transform_5(%arg0: i32) -> (i32, i32, i32) {
    %c0_i32 = arith.constant 0 : i32
    %c0_i32_0 = arith.constant 0 : i32
    %c0_i32_1 = arith.constant 0 : i32
    return %arg0, %c0_i32, %c0_i32_0 : i32, i32, i32
  }
  func.func @transform_6(%arg0: i32) -> (i32, i32, i32) {
    %c0_i32 = arith.constant 0 : i32
    %c0_i32_0 = arith.constant 0 : i32
    %c0_i32_1 = arith.constant 0 : i32
    return %arg0, %c0_i32, %c0_i32_0 : i32, i32, i32
  }
  func.func @transform_7(%arg0: i32) -> (i32, i32, i32) {
    %c0_i32 = arith.constant 0 : i32
    %c0_i32_0 = arith.constant 0 : i32
    %c0_i32_1 = arith.constant 0 : i32
    return %arg0, %c0_i32, %c0_i32_0 : i32, i32, i32
  }
  func.func @transform_8(%arg0: i32) -> (i32, i32, i32) {
    %c0_i32 = arith.constant 0 : i32
    %c0_i32_0 = arith.constant 0 : i32
    %c0_i32_1 = arith.constant 0 : i32
    return %arg0, %c0_i32, %c0_i32_0 : i32, i32, i32
  }
  func.func @transform_9(%arg0: i32) -> (i32, i32, i32) {
    %c0_i32 = arith.constant 0 : i32
    %c0_i32_0 = arith.constant 0 : i32
    %c0_i32_1 = arith.constant 0 : i32
    return %arg0, %c0_i32, %c0_i32_0 : i32, i32, i32
  }
  func.func @transform_10(%arg0: i32) -> (i32, i32, i32) {
    %c0_i32 = arith.constant 0 : i32
    %c0_i32_0 = arith.constant 0 : i32
    %c0_i32_1 = arith.constant 0 : i32
    return %arg0, %c0_i32, %c0_i32_0 : i32, i32, i32
  }
  func.func @transform_11(%arg0: i32) -> (i32, i32, i32) {
    %c0_i32 = arith.constant 0 : i32
    %c0_i32_0 = arith.constant 0 : i32
    %c0_i32_1 = arith.constant 0 : i32
    return %arg0, %c0_i32, %c0_i32_0 : i32, i32, i32
  }
  func.func @transform_12(%arg0: i32) -> (i32, i32, i32) {
    %c0_i32 = arith.constant 0 : i32
    %c0_i32_0 = arith.constant 0 : i32
    %c0_i32_1 = arith.constant 0 : i32
    return %arg0, %c0_i32, %c0_i32_0 : i32, i32, i32
  }
  func.func @transform_13(%arg0: i32) -> (i32, i32, i32) {
    %c0_i32 = arith.constant 0 : i32
    %c0_i32_0 = arith.constant 0 : i32
    %c0_i32_1 = arith.constant 0 : i32
    return %arg0, %c0_i32, %c0_i32_0 : i32, i32, i32
  }
  func.func @transform_14(%arg0: i32) -> (i32, i32, i32) {
    %c0_i32 = arith.constant 0 : i32
    %c0_i32_0 = arith.constant 0 : i32
    %c0_i32_1 = arith.constant 0 : i32
    return %arg0, %c0_i32, %c0_i32_0 : i32, i32, i32
  }
  func.func @transform_15(%arg0: i32) -> (i32, i32, i32) {
    %c0_i32 = arith.constant 0 : i32
    %c0_i32_0 = arith.constant 0 : i32
    %c0_i32_1 = arith.constant 0 : i32
    return %arg0, %c0_i32, %c0_i32_0 : i32, i32, i32
  }
  func.func @transform_16(%arg0: i32) -> (i32, i32, i32) {
    %c0_i32 = arith.constant 0 : i32
    %c0_i32_0 = arith.constant 0 : i32
    %c0_i32_1 = arith.constant 0 : i32
    return %arg0, %c0_i32, %c0_i32_0 : i32, i32, i32
  }
  func.func @transform_17(%arg0: i32) -> (i32, i32, i32) {
    %c0_i32 = arith.constant 0 : i32
    %c0_i32_0 = arith.constant 0 : i32
    %c0_i32_1 = arith.constant 0 : i32
    return %arg0, %c0_i32, %c0_i32_0 : i32, i32, i32
  }
  func.func @transform_18(%arg0: i32) -> (i32, i32, i32) {
    %c0_i32 = arith.constant 0 : i32
    %c0_i32_0 = arith.constant 0 : i32
    %c0_i32_1 = arith.constant 0 : i32
    return %arg0, %c0_i32, %c0_i32_0 : i32, i32, i32
  }
  func.func @transform_19(%arg0: i32) -> (i32, i32) {
    %c0_i32 = arith.constant 0 : i32
    %c0_i32_0 = arith.constant 0 : i32
    %c0_i32_1 = arith.constant 0 : i32
    return %c0_i32, %c0_i32_0 : i32, i32
  }
  func.func @transform_20(%arg0: i32) -> (i32, i32, i32, i32) {
    %c0_i32 = arith.constant 0 : i32
    %c0_i32_0 = arith.constant 0 : i32
    %c0_i32_1 = arith.constant 0 : i32
    %c0_i32_2 = arith.constant 0 : i32
    return %arg0, %c0_i32, %c0_i32_0, %c0_i32_1 : i32, i32, i32, i32
  }
  func.func @transform_21(%arg0: i32) -> (i32, i32, i32, i32) {
    %c0_i32 = arith.constant 0 : i32
    %c0_i32_0 = arith.constant 0 : i32
    %c0_i32_1 = arith.constant 0 : i32
    %c0_i32_2 = arith.constant 0 : i32
    return %arg0, %c0_i32, %c0_i32_0, %c0_i32_1 : i32, i32, i32, i32
  }
}

</mosaic_0001>

<llo_original>
// kernel: tpu_custom_call.1
$region0: #{tpu_custom_call.1}
  #allocation0 [shape = 'u32[]', space=smem, size = 0x4, offset = 0x4, fixed_abs, tag = 'smem constant byte address 0x4 - core index']
  #allocation1 [shape = 'u32[144,128]{1,0:T(1,128)}', space=vmem, size = 0x12000, scoped, tag = 'internal scratch']
  #allocation2 [shape = 'f32[16,32]{1,0:T(8,128)}', space=vmem, size = 0x2000, scoped, tag = 'scratch operand']
  #allocation3 [shape = 'f32[16,32]{1,0:T(8,128)}', space=vmem, size = 0x2000, scoped, tag = 'scratch operand']
  %s0 = inlined_call_operand.hbm [shape: f32[16,32], index: 0, kind: input, shape index: {}]
  %s1 = inlined_call_operand.hbm [shape: bf16[32,32], index: 1, kind: input, shape index: {}]
  %s2 = inlined_call_operand.hbm [shape: f32[2,8,8], index: 2, kind: input, shape index: {}]
  %s3 = inlined_call_operand.vmem [shape: f32[2,1,16], index: 3, kind: input, shape index: {}]
  %s4 = inlined_call_operand.vmem [shape: bf16[2,32,96], index: 4, kind: input, shape index: {}]
  %s5 = inlined_call_operand.vmem [shape: bf16[2,32,32], index: 5, kind: input, shape index: {}]
  %s6 = inlined_call_operand.vmem [shape: f32[2,1,32], index: 6, kind: input, shape index: {}]
  %s7 = inlined_call_operand.vmem [shape: f32[2,1,32], index: 7, kind: input, shape index: {}]
  %s8 = inlined_call_operand.vmem [shape: bf16[2,32,32], index: 8, kind: input, shape index: {}]
  %s9 = inlined_call_operand.hbm [shape: bf16[2,32,64], index: 9, kind: input, shape index: {}]
  %s10 = inlined_call_operand.hbm [shape: bf16[2,32,32], index: 10, kind: input, shape index: {}]
  %s11 = inlined_call_operand.vmem [shape: f32[2,1,32], index: 11, kind: input, shape index: {}]
  %s12 = inlined_call_operand.vmem [shape: f32[2,1,32], index: 12, kind: input, shape index: {}]
  %s13 = inlined_call_operand.hbm [shape: bf16[2,32,64], index: 13, kind: input, shape index: {}]
  %s14 = inlined_call_operand.vmem [shape: f32[2,1,64], index: 14, kind: input, shape index: {}]
  %s15 = inlined_call_operand.vmem [shape: bf16[2,64,32], index: 15, kind: input, shape index: {}]
  %s16 = inlined_call_operand.vmem [shape: f32[2,1,32], index: 16, kind: input, shape index: {}]
  %s17 = inlined_call_operand.vmem [shape: f32[2,1,32], index: 17, kind: input, shape index: {}]
  %s18 = inlined_call_operand.vmem [shape: f32[2,1,32], index: 18, kind: input, shape index: {}]
  %s19 = inlined_call_operand.hbm [shape: f32[16,32], index: 19, kind: output, shape index: {0}]
  %s20 = inlined_call_operand.hbm [shape: bf16[2,2,8,64], index: 20, kind: output, shape index: {1}]
  %s21 = inlined_call_operand.hbm [shape: bf16[2,2,8,128], index: 21, kind: output, shape index: {2}]
  %22 = xla_tuple %s19, %s20, %s21
  %s23 = sld [smem:[#allocation0]]
  $region157: #{tpu_custom_call.1} parent=0
    _
  %s25 = ssub.s32 1, %s23
  %s26 = scalar_select 0, %s25, %s23
  $region1: #{tpu_custom_call.1} parent=0
    #allocation4 [shape = 'u8[8192]{0}', space=vmem, size = 0x2000, scoped, tag = 'input window, operand 0, single buffered']
    #allocation5 [shape = 's32[2]{0}', space=sflag, size = 0x8, scoped, tag = 'scoped memory for tpu_custom_call.1']
    #allocation6 [shape = 's32[2]{0}', space=sflag, size = 0x8, scoped, tag = 'scoped memory for tpu_custom_call.1']
    #allocation7 [shape = 'u8[8192]{0}', space=vmem, size = 0x2000, scoped, tag = 'input window, operand 1, single buffered']
    #allocation8 [shape = 's32[1]{0}', space=sflag, size = 0x4, scoped, tag = 'scoped memory for tpu_custom_call.1']
    #allocation9 [shape = 'u8[8192]{0}', space=vmem, size = 0x2000, scoped, tag = 'input window, operand 2, single buffered']
    #allocation10 [shape = 'u8[16384]{0}', space=vmem, size = 0x4000, scoped, tag = 'input window, operand 9']
    #allocation11 [shape = 's32[2]{0}', space=sflag, size = 0x8, scoped, tag = 'scoped memory for tpu_custom_call.1']
    #allocation12 [shape = 'u8[16384]{0}', space=vmem, size = 0x4000, scoped, tag = 'input window, operand 10']
    #allocation13 [shape = 'u8[16384]{0}', space=vmem, size = 0x4000, scoped, tag = 'input window, operand 13']
    #allocation14 [shape = 's32[2]{0}', space=sflag, size = 0x8, scoped, tag = 'scoped memory for tpu_custom_call.1']
    #allocation15 [shape = 'u8[8192]{0}', space=vmem, size = 0x2000, scoped, tag = 'output window, operand 0, single buffered']
    #allocation16 [shape = 'u8[8192]{0}', space=vmem, size = 0x2000, scoped, tag = 'output window, operand 1']
    #allocation17 [shape = 's32[2]{0}', space=sflag, size = 0x8, scoped, tag = 'scoped memory for tpu_custom_call.1']
    #allocation18 [shape = 'u8[8192]{0}', space=vmem, size = 0x2000, scoped, tag = 'output window, operand 2']
    %27 = vsyncpa [#allocation5], 0
    %28 = vsyncpa [#allocation8], 0
    %29 = vsyncpa [#allocation11], 0
    %s30 = scalar_lea.sflag [#allocation11], 1
    %31 = vsyncpa %s30, 0
    %32 = vsyncpa [#allocation14], 0
    %s33 = scalar_lea.sflag [#allocation14], 1
    %34 = vsyncpa %s33, 0
    %35 = vsyncpa [#allocation6], 0
    %36 = vsyncpa [#allocation17], 0
    %s37 = scalar_lea.sflag [#allocation17], 1
    %38 = vsyncpa %s37, 0
    loop: start=0, step=1, limit=4
    $region2: #{tpu_custom_call.1} parent=1 // loop_pre_header
      _
    $region3: #{tpu_custom_call.1} parent=1 // loop_header
      %s40 = sphi 0, %s44
      %p41 = scmp.ge.s32.totalorder %s40, 4
      %s48 = sphi 0, %s48
      %s50 = sphi 0, %s48
      %s51 = sphi 0, %s50
      %s65 = sphi 0, %s51
      %s69 = sphi 0, %s69
      %s71 = sphi 0, %s69
      %s72 = sphi 0, %s71
      %s86 = sphi 0, %s72
      %s90 = sphi 0, %s90
      %s92 = sphi 0, %s90
      %s93 = sphi 0, %s92
      %s107 = sphi 0, %s93
      %s111 = sphi 0, %s111
      %s113 = sphi 0, %s111
      %s114 = sphi 0, %s113
      %s128 = sphi 0, %s114
      %s134 = sphi 0, %s136
      %s137 = sphi 0, %s134
      %s138 = sphi 0, %s137
      %s154 = sphi 0, %s138
      %s160 = sphi 0, %s162
      %s163 = sphi 0, %s160
      %s164 = sphi 0, %s163
      %s180 = sphi 0, %s164
      %s186 = sphi 0, %s188
      %s189 = sphi 0, %s186
      %s190 = sphi 0, %s189
      %s206 = sphi 0, %s190
      %s212 = sphi 0, %s214
      %s215 = sphi 0, %s212
      %s216 = sphi 0, %s215
      %s232 = sphi 0, %s216
      %s238 = sphi 0, %s240
      %s241 = sphi 0, %s238
      %s242 = sphi 0, %s241
      %s258 = sphi 0, %s242
      %s264 = sphi 0, %s266
      %s267 = sphi 0, %s264
      %s268 = sphi 0, %s267
      %s284 = sphi 0, %s268
      %s290 = sphi 0, %s292
      %s293 = sphi 0, %s290
      %s294 = sphi 0, %s293
      %s310 = sphi 0, %s294
      %s316 = sphi 0, %s318
      %s319 = sphi 0, %s316
      %s320 = sphi 0, %s319
      %s336 = sphi 0, %s320
      %s342 = sphi 0, %s344
      %s345 = sphi 0, %s342
      %s346 = sphi 0, %s345
      %s362 = sphi 0, %s346
      %s368 = sphi 0, %s370
      %s371 = sphi 0, %s368
      %s372 = sphi 0, %s371
      %s388 = sphi 0, %s372
      %s394 = sphi 0, %s396
      %s397 = sphi 0, %s394
      %s398 = sphi 0, %s397
      %s414 = sphi 0, %s398
      %s420 = sphi 0, %s422
      %s423 = sphi 0, %s420
      %s424 = sphi 0, %s423
      %s440 = sphi 0, %s424
      %s446 = sphi 0, %s448
      %s449 = sphi 0, %s446
      %s450 = sphi 0, %s449
      %s466 = sphi 0, %s450
      %s472 = sphi 0, %s474
      %s475 = sphi 0, %s472
      %s476 = sphi 0, %s475
      %s492 = sphi 0, %s476
      %s498 = sphi 0, %s500
      %s501 = sphi 0, %s498
      %s502 = sphi 0, %s501
      %s518 = sphi 0, %s502
      %s522 = sphi 0, %s522
      %s524 = sphi 0, %s522
      %s525 = sphi 0, %s524
      %s539 = sphi 0, %s525
      %s545 = sphi 0, %s547
      %s548 = sphi 0, %s545
      %s549 = sphi 0, %s548
      %s565 = sphi 0, %s549
      %s571 = sphi 0, %s573
      %s574 = sphi 0, %s571
      %s575 = sphi 0, %s574
      %s591 = sphi 0, %s575
    $region4: #{tpu_custom_call.1} parent=1 // loop_header_branch
      %43 = sbr.rel (%p41) target = $region8
    $region5: #{tpu_custom_call.1} parent=1 // loop_body
      %s45 = ssub.s32 %s40, 1
      %s46 = ssub.s32 %s40, 2
      %s47 = sadd.s32 %s40, 1
      %s49 = sadd.s32 %s48, 1
      %p52 = scmp.eq.s32.totalorder %s40, 1
      %p53 = scmp.ne.s32.totalorder %s48, %s50
      %p54 = scmp.eq.s32.totalorder %s40, 0
      %p55 = por %p53, %p54
      %p56 = scmp.ne.s32.totalorder %s48, %s50
      %p57 = scmp.eq.s32.totalorder %s45, 1
      %p58 = por %p56, %p57
      %p59 = scmp.ne.s32.totalorder %s50, %s51
      %p60 = scmp.eq.s32.totalorder %s45, 0
      %p61 = por %p59, %p60
      %p62 = scmp.ne.s32.totalorder %s50, %s51
      %p63 = scmp.eq.s32.totalorder %s46, 1
      %p64 = por %p62, %p63
      %p66 = scmp.ne.s32.totalorder %s51, %s65
      %p67 = scmp.eq.s32.totalorder %s46, 0
      %p68 = por %p66, %p67
      %s70 = sadd.s32 %s69, 1
      %p73 = scmp.eq.s32.totalorder %s40, 1
      %p74 = scmp.ne.s32.totalorder %s69, %s71
      %p75 = scmp.eq.s32.totalorder %s40, 0
      %p76 = por %p74, %p75
      %p77 = scmp.ne.s32.totalorder %s69, %s71
      %p78 = scmp.eq.s32.totalorder %s45, 1
      %p79 = por %p77, %p78
      %p80 = scmp.ne.s32.totalorder %s71, %s72
      %p81 = scmp.eq.s32.totalorder %s45, 0
      %p82 = por %p80, %p81
      %p83 = scmp.ne.s32.totalorder %s71, %s72
      %p84 = scmp.eq.s32.totalorder %s46, 1
      %p85 = por %p83, %p84
      %p87 = scmp.ne.s32.totalorder %s72, %s86
      %p88 = scmp.eq.s32.totalorder %s46, 0
      %p89 = por %p87, %p88
      %s91 = sadd.s32 %s90, 1
      %p94 = scmp.eq.s32.totalorder %s40, 1
      %p95 = scmp.ne.s32.totalorder %s90, %s92
      %p96 = scmp.eq.s32.totalorder %s40, 0
      %p97 = por %p95, %p96
      %p98 = scmp.ne.s32.totalorder %s90, %s92
      %p99 = scmp.eq.s32.totalorder %s45, 1
      %p100 = por %p98, %p99
      %p101 = scmp.ne.s32.totalorder %s92, %s93
      %p102 = scmp.eq.s32.totalorder %s45, 0
      %p103 = por %p101, %p102
      %p104 = scmp.ne.s32.totalorder %s92, %s93
      %p105 = scmp.eq.s32.totalorder %s46, 1
      %p106 = por %p104, %p105
      %p108 = scmp.ne.s32.totalorder %s93, %s107
      %p109 = scmp.eq.s32.totalorder %s46, 0
      %p110 = por %p108, %p109
      %s112 = sadd.s32 %s111, 1
      %p115 = scmp.eq.s32.totalorder %s40, 1
      %p116 = scmp.ne.s32.totalorder %s111, %s113
      %p117 = scmp.eq.s32.totalorder %s40, 0
      %p118 = por %p116, %p117
      %p119 = scmp.ne.s32.totalorder %s111, %s113
      %p120 = scmp.eq.s32.totalorder %s45, 1
      %p121 = por %p119, %p120
      %p122 = scmp.ne.s32.totalorder %s113, %s114
      %p123 = scmp.eq.s32.totalorder %s45, 0
      %p124 = por %p122, %p123
      %p125 = scmp.ne.s32.totalorder %s113, %s114
      %p126 = scmp.eq.s32.totalorder %s46, 1
      %p127 = por %p125, %p126
      %p129 = scmp.ne.s32.totalorder %s114, %s128
      %p130 = scmp.eq.s32.totalorder %s46, 0
      %p131 = por %p129, %p130
      %s132 = ssub.s32 %s40, %s47
      %p133 = scmp.eq.s32.totalorder %s132, 0
      %s135 = sadd.s32 %s134, 1
      %s136 = scalar_select %p133, %s134, %s135
      %p139 = pneg %p133
      %p140 = scmp.eq.s32.totalorder %s40, 1
      %p141 = por %p139, %p140
      %p142 = scmp.ne.s32.totalorder %s134, %s137
      %p143 = scmp.eq.s32.totalorder %s40, 0
      %p144 = por %p142, %p143
      %p145 = scmp.ne.s32.totalorder %s134, %s137
      %p146 = scmp.eq.s32.totalorder %s45, 1
      %p147 = por %p145, %p146
      %p148 = scmp.ne.s32.totalorder %s137, %s138
      %p149 = scmp.eq.s32.totalorder %s45, 0
      %p150 = por %p148, %p149
      %p151 = scmp.ne.s32.totalorder %s137, %s138
      %p152 = scmp.eq.s32.totalorder %s46, 1
      %p153 = por %p151, %p152
      %p155 = scmp.ne.s32.totalorder %s138, %s154
      %p156 = scmp.eq.s32.totalorder %s46, 0
      %p157 = por %p155, %p156
      %s158 = ssub.s32 %s40, %s47
      %p159 = scmp.eq.s32.totalorder %s158, 0
      %s161 = sadd.s32 %s160, 1
      %s162 = scalar_select %p159, %s160, %s161
      %p165 = pneg %p159
      %p166 = scmp.eq.s32.totalorder %s40, 1
      %p167 = por %p165, %p166
      %p168 = scmp.ne.s32.totalorder %s160, %s163
      %p169 = scmp.eq.s32.totalorder %s40, 0
      %p170 = por %p168, %p169
      %p171 = scmp.ne.s32.totalorder %s160, %s163
      %p172 = scmp.eq.s32.totalorder %s45, 1
      %p173 = por %p171, %p172
      %p174 = scmp.ne.s32.totalorder %s163, %s164
      %p175 = scmp.eq.s32.totalorder %s45, 0
      %p176 = por %p174, %p175
      %p177 = scmp.ne.s32.totalorder %s163, %s164
      %p178 = scmp.eq.s32.totalorder %s46, 1
      %p179 = por %p177, %p178
      %p181 = scmp.ne.s32.totalorder %s164, %s180
      %p182 = scmp.eq.s32.totalorder %s46, 0
      %p183 = por %p181, %p182
      %s184 = ssub.s32 %s40, %s47
      %p185 = scmp.eq.s32.totalorder %s184, 0
      %s187 = sadd.s32 %s186, 1
      %s188 = scalar_select %p185, %s186, %s187
      %p191 = pneg %p185
      %p192 = scmp.eq.s32.totalorder %s40, 1
      %p193 = por %p191, %p192
      %p194 = scmp.ne.s32.totalorder %s186, %s189
      %p195 = scmp.eq.s32.totalorder %s40, 0
      %p196 = por %p194, %p195
      %p197 = scmp.ne.s32.totalorder %s186, %s189
      %p198 = scmp.eq.s32.totalorder %s45, 1
      %p199 = por %p197, %p198
      %p200 = scmp.ne.s32.totalorder %s189, %s190
      %p201 = scmp.eq.s32.totalorder %s45, 0
      %p202 = por %p200, %p201
      %p203 = scmp.ne.s32.totalorder %s189, %s190
      %p204 = scmp.eq.s32.totalorder %s46, 1
      %p205 = por %p203, %p204
      %p207 = scmp.ne.s32.totalorder %s190, %s206
      %p208 = scmp.eq.s32.totalorder %s46, 0
      %p209 = por %p207, %p208
      %s210 = ssub.s32 %s40, %s47
      %p211 = scmp.eq.s32.totalorder %s210, 0
      %s213 = sadd.s32 %s212, 1
      %s214 = scalar_select %p211, %s212, %s213
      %p217 = pneg %p211
      %p218 = scmp.eq.s32.totalorder %s40, 1
      %p219 = por %p217, %p218
      %p220 = scmp.ne.s32.totalorder %s212, %s215
      %p221 = scmp.eq.s32.totalorder %s40, 0
      %p222 = por %p220, %p221
      %p223 = scmp.ne.s32.totalorder %s212, %s215
      %p224 = scmp.eq.s32.totalorder %s45, 1
      %p225 = por %p223, %p224
      %p226 = scmp.ne.s32.totalorder %s215, %s216
      %p227 = scmp.eq.s32.totalorder %s45, 0
      %p228 = por %p226, %p227
      %p229 = scmp.ne.s32.totalorder %s215, %s216
      %p230 = scmp.eq.s32.totalorder %s46, 1
      %p231 = por %p229, %p230
      %p233 = scmp.ne.s32.totalorder %s216, %s232
      %p234 = scmp.eq.s32.totalorder %s46, 0
      %p235 = por %p233, %p234
      %s236 = ssub.s32 %s40, %s47
      %p237 = scmp.eq.s32.totalorder %s236, 0
      %s239 = sadd.s32 %s238, 1
      %s240 = scalar_select %p237, %s238, %s239
      %p243 = pneg %p237
      %p244 = scmp.eq.s32.totalorder %s40, 1
      %p245 = por %p243, %p244
      %p246 = scmp.ne.s32.totalorder %s238, %s241
      %p247 = scmp.eq.s32.totalorder %s40, 0
      %p248 = por %p246, %p247
      %p249 = scmp.ne.s32.totalorder %s238, %s241
      %p250 = scmp.eq.s32.totalorder %s45, 1
      %p251 = por %p249, %p250
      %p252 = scmp.ne.s32.totalorder %s241, %s242
      %p253 = scmp.eq.s32.totalorder %s45, 0
      %p254 = por %p252, %p253
      %p255 = scmp.ne.s32.totalorder %s241, %s242
      %p256 = scmp.eq.s32.totalorder %s46, 1
      %p257 = por %p255, %p256
      %p259 = scmp.ne.s32.totalorder %s242, %s258
      %p260 = scmp.eq.s32.totalorder %s46, 0
      %p261 = por %p259, %p260
      %s262 = ssub.s32 %s40, %s47
      %p263 = scmp.eq.s32.totalorder %s262, 0
      %s265 = sadd.s32 %s264, 1
      %s266 = scalar_select %p263, %s264, %s265
      %p269 = pneg %p263
      %p270 = scmp.eq.s32.totalorder %s40, 1
      %p271 = por %p269, %p270
      %p272 = scmp.ne.s32.totalorder %s264, %s267
      %p273 = scmp.eq.s32.totalorder %s40, 0
      %p274 = por %p272, %p273
      %p275 = scmp.ne.s32.totalorder %s264, %s267
      %p276 = scmp.eq.s32.totalorder %s45, 1
      %p277 = por %p275, %p276
      %p278 = scmp.ne.s32.totalorder %s267, %s268
      %p279 = scmp.eq.s32.totalorder %s45, 0
      %p280 = por %p278, %p279
      %p281 = scmp.ne.s32.totalorder %s267, %s268
      %p282 = scmp.eq.s32.totalorder %s46, 1
      %p283 = por %p281, %p282
      %p285 = scmp.ne.s32.totalorder %s268, %s284
      %p286 = scmp.eq.s32.totalorder %s46, 0
      %p287 = por %p285, %p286
      %s288 = ssub.s32 %s40, %s47
      %p289 = scmp.eq.s32.totalorder %s288, 0
      %s291 = sadd.s32 %s290, 1
      %s292 = scalar_select %p289, %s290, %s291
      %p295 = pneg %p289
      %p296 = scmp.eq.s32.totalorder %s40, 1
      %p297 = por %p295, %p296
      %p298 = scmp.ne.s32.totalorder %s290, %s293
      %p299 = scmp.eq.s32.totalorder %s40, 0
      %p300 = por %p298, %p299
      %p301 = scmp.ne.s32.totalorder %s290, %s293
      %p302 = scmp.eq.s32.totalorder %s45, 1
      %p303 = por %p301, %p302
      %p304 = scmp.ne.s32.totalorder %s293, %s294
      %p305 = scmp.eq.s32.totalorder %s45, 0
      %p306 = por %p304, %p305
      %p307 = scmp.ne.s32.totalorder %s293, %s294
      %p308 = scmp.eq.s32.totalorder %s46, 1
      %p309 = por %p307, %p308
      %p311 = scmp.ne.s32.totalorder %s294, %s310
      %p312 = scmp.eq.s32.totalorder %s46, 0
      %p313 = por %p311, %p312
      %s314 = ssub.s32 %s40, %s47
      %p315 = scmp.eq.s32.totalorder %s314, 0
      %s317 = sadd.s32 %s316, 1
      %s318 = scalar_select %p315, %s316, %s317
      %p321 = pneg %p315
      %p322 = scmp.eq.s32.totalorder %s40, 1
      %p323 = por %p321, %p322
      %p324 = scmp.ne.s32.totalorder %s316, %s319
      %p325 = scmp.eq.s32.totalorder %s40, 0
      %p326 = por %p324, %p325
      %p327 = scmp.ne.s32.totalorder %s316, %s319
      %p328 = scmp.eq.s32.totalorder %s45, 1
      %p329 = por %p327, %p328
      %p330 = scmp.ne.s32.totalorder %s319, %s320
      %p331 = scmp.eq.s32.totalorder %s45, 0
      %p332 = por %p330, %p331
      %p333 = scmp.ne.s32.totalorder %s319, %s320
      %p334 = scmp.eq.s32.totalorder %s46, 1
      %p335 = por %p333, %p334
      %p337 = scmp.ne.s32.totalorder %s320, %s336
      %p338 = scmp.eq.s32.totalorder %s46, 0
      %p339 = por %p337, %p338
      %s340 = ssub.s32 %s40, %s47
      %p341 = scmp.eq.s32.totalorder %s340, 0
      %s343 = sadd.s32 %s342, 1
      %s344 = scalar_select %p341, %s342, %s343
      %p347 = pneg %p341
      %p348 = scmp.eq.s32.totalorder %s40, 1
      %p349 = por %p347, %p348
      %p350 = scmp.ne.s32.totalorder %s342, %s345
      %p351 = scmp.eq.s32.totalorder %s40, 0
      %p352 = por %p350, %p351
      %p353 = scmp.ne.s32.totalorder %s342, %s345
      %p354 = scmp.eq.s32.totalorder %s45, 1
      %p355 = por %p353, %p354
      %p356 = scmp.ne.s32.totalorder %s345, %s346
      %p357 = scmp.eq.s32.totalorder %s45, 0
      %p358 = por %p356, %p357
      %p359 = scmp.ne.s32.totalorder %s345, %s346
      %p360 = scmp.eq.s32.totalorder %s46, 1
      %p361 = por %p359, %p360
      %p363 = scmp.ne.s32.totalorder %s346, %s362
      %p364 = scmp.eq.s32.totalorder %s46, 0
      %p365 = por %p363, %p364
      %s366 = ssub.s32 %s40, %s47
      %p367 = scmp.eq.s32.totalorder %s366, 0
      %s369 = sadd.s32 %s368, 1
      %s370 = scalar_select %p367, %s368, %s369
      %p373 = pneg %p367
      %p374 = scmp.eq.s32.totalorder %s40, 1
      %p375 = por %p373, %p374
      %p376 = scmp.ne.s32.totalorder %s368, %s371
      %p377 = scmp.eq.s32.totalorder %s40, 0
      %p378 = por %p376, %p377
      %p379 = scmp.ne.s32.totalorder %s368, %s371
      %p380 = scmp.eq.s32.totalorder %s45, 1
      %p381 = por %p379, %p380
      %p382 = scmp.ne.s32.totalorder %s371, %s372
      %p383 = scmp.eq.s32.totalorder %s45, 0
      %p384 = por %p382, %p383
      %p385 = scmp.ne.s32.totalorder %s371, %s372
      %p386 = scmp.eq.s32.totalorder %s46, 1
      %p387 = por %p385, %p386
      %p389 = scmp.ne.s32.totalorder %s372, %s388
      %p390 = scmp.eq.s32.totalorder %s46, 0
      %p391 = por %p389, %p390
      %s392 = ssub.s32 %s40, %s47
      %p393 = scmp.eq.s32.totalorder %s392, 0
      %s395 = sadd.s32 %s394, 1
      %s396 = scalar_select %p393, %s394, %s395
      %p399 = pneg %p393
      %p400 = scmp.eq.s32.totalorder %s40, 1
      %p401 = por %p399, %p400
      %p402 = scmp.ne.s32.totalorder %s394, %s397
      %p403 = scmp.eq.s32.totalorder %s40, 0
      %p404 = por %p402, %p403
      %p405 = scmp.ne.s32.totalorder %s394, %s397
      %p406 = scmp.eq.s32.totalorder %s45, 1
      %p407 = por %p405, %p406
      %p408 = scmp.ne.s32.totalorder %s397, %s398
      %p409 = scmp.eq.s32.totalorder %s45, 0
      %p410 = por %p408, %p409
      %p411 = scmp.ne.s32.totalorder %s397, %s398
      %p412 = scmp.eq.s32.totalorder %s46, 1
      %p413 = por %p411, %p412
      %p415 = scmp.ne.s32.totalorder %s398, %s414
      %p416 = scmp.eq.s32.totalorder %s46, 0
      %p417 = por %p415, %p416
      %s418 = ssub.s32 %s40, %s47
      %p419 = scmp.eq.s32.totalorder %s418, 0
      %s421 = sadd.s32 %s420, 1
      %s422 = scalar_select %p419, %s420, %s421
      %p425 = pneg %p419
      %p426 = scmp.eq.s32.totalorder %s40, 1
      %p427 = por %p425, %p426
      %p428 = scmp.ne.s32.totalorder %s420, %s423
      %p429 = scmp.eq.s32.totalorder %s40, 0
      %p430 = por %p428, %p429
      %p431 = scmp.ne.s32.totalorder %s420, %s423
      %p432 = scmp.eq.s32.totalorder %s45, 1
      %p433 = por %p431, %p432
      %p434 = scmp.ne.s32.totalorder %s423, %s424
      %p435 = scmp.eq.s32.totalorder %s45, 0
      %p436 = por %p434, %p435
      %p437 = scmp.ne.s32.totalorder %s423, %s424
      %p438 = scmp.eq.s32.totalorder %s46, 1
      %p439 = por %p437, %p438
      %p441 = scmp.ne.s32.totalorder %s424, %s440
      %p442 = scmp.eq.s32.totalorder %s46, 0
      %p443 = por %p441, %p442
      %s444 = ssub.s32 %s40, %s47
      %p445 = scmp.eq.s32.totalorder %s444, 0
      %s447 = sadd.s32 %s446, 1
      %s448 = scalar_select %p445, %s446, %s447
      %p451 = pneg %p445
      %p452 = scmp.eq.s32.totalorder %s40, 1
      %p453 = por %p451, %p452
      %p454 = scmp.ne.s32.totalorder %s446, %s449
      %p455 = scmp.eq.s32.totalorder %s40, 0
      %p456 = por %p454, %p455
      %p457 = scmp.ne.s32.totalorder %s446, %s449
      %p458 = scmp.eq.s32.totalorder %s45, 1
      %p459 = por %p457, %p458
      %p460 = scmp.ne.s32.totalorder %s449, %s450
      %p461 = scmp.eq.s32.totalorder %s45, 0
      %p462 = por %p460, %p461
      %p463 = scmp.ne.s32.totalorder %s449, %s450
      %p464 = scmp.eq.s32.totalorder %s46, 1
      %p465 = por %p463, %p464
      %p467 = scmp.ne.s32.totalorder %s450, %s466
      %p468 = scmp.eq.s32.totalorder %s46, 0
      %p469 = por %p467, %p468
      %s470 = ssub.s32 %s40, %s47
      %p471 = scmp.eq.s32.totalorder %s470, 0
      %s473 = sadd.s32 %s472, 1
      %s474 = scalar_select %p471, %s472, %s473
      %p477 = pneg %p471
      %p478 = scmp.eq.s32.totalorder %s40, 1
      %p479 = por %p477, %p478
      %p480 = scmp.ne.s32.totalorder %s472, %s475
      %p481 = scmp.eq.s32.totalorder %s40, 0
      %p482 = por %p480, %p481
      %p483 = scmp.ne.s32.totalorder %s472, %s475
      %p484 = scmp.eq.s32.totalorder %s45, 1
      %p485 = por %p483, %p484
      %p486 = scmp.ne.s32.totalorder %s475, %s476
      %p487 = scmp.eq.s32.totalorder %s45, 0
      %p488 = por %p486, %p487
      %p489 = scmp.ne.s32.totalorder %s475, %s476
      %p490 = scmp.eq.s32.totalorder %s46, 1
      %p491 = por %p489, %p490
      %p493 = scmp.ne.s32.totalorder %s476, %s492
      %p494 = scmp.eq.s32.totalorder %s46, 0
      %p495 = por %p493, %p494
      %s496 = ssub.s32 %s40, %s47
      %p497 = scmp.eq.s32.totalorder %s496, 0
      %s499 = sadd.s32 %s498, 1
      %s500 = scalar_select %p497, %s498, %s499
      %p503 = pneg %p497
      %p504 = scmp.eq.s32.totalorder %s40, 1
      %p505 = por %p503, %p504
      %p506 = scmp.ne.s32.totalorder %s498, %s501
      %p507 = scmp.eq.s32.totalorder %s40, 0
      %p508 = por %p506, %p507
      %p509 = scmp.ne.s32.totalorder %s498, %s501
      %p510 = scmp.eq.s32.totalorder %s45, 1
      %p511 = por %p509, %p510
      %p512 = scmp.ne.s32.totalorder %s501, %s502
      %p513 = scmp.eq.s32.totalorder %s45, 0
      %p514 = por %p512, %p513
      %p515 = scmp.ne.s32.totalorder %s501, %s502
      %p516 = scmp.eq.s32.totalorder %s46, 1
      %p517 = por %p515, %p516
      %p519 = scmp.ne.s32.totalorder %s502, %s518
      %p520 = scmp.eq.s32.totalorder %s46, 0
      %p521 = por %p519, %p520
      %s523 = sadd.s32 %s522, 1
      %p526 = scmp.eq.s32.totalorder %s40, 1
      %p527 = scmp.ne.s32.totalorder %s522, %s524
      %p528 = scmp.eq.s32.totalorder %s40, 0
      %p529 = por %p527, %p528
      %p530 = scmp.ne.s32.totalorder %s522, %s524
      %p531 = scmp.eq.s32.totalorder %s45, 1
      %p532 = por %p530, %p531
      %p533 = scmp.ne.s32.totalorder %s524, %s525
      %p534 = scmp.eq.s32.totalorder %s45, 0
      %p535 = por %p533, %p534
      %p536 = scmp.ne.s32.totalorder %s524, %s525
      %p537 = scmp.eq.s32.totalorder %s46, 1
      %p538 = por %p536, %p537
      %p540 = scmp.ne.s32.totalorder %s525, %s539
      %p541 = scmp.eq.s32.totalorder %s46, 0
      %p542 = por %p540, %p541
      %s543 = ssub.s32 %s40, %s47
      %p544 = scmp.eq.s32.totalorder %s543, 0
      %s546 = sadd.s32 %s545, 1
      %s547 = scalar_select %p544, %s545, %s546
      %p550 = pneg %p544
      %p551 = scmp.eq.s32.totalorder %s40, 1
      %p552 = por %p550, %p551
      %p553 = scmp.ne.s32.totalorder %s545, %s548
      %p554 = scmp.eq.s32.totalorder %s40, 0
      %p555 = por %p553, %p554
      %p556 = scmp.ne.s32.totalorder %s545, %s548
      %p557 = scmp.eq.s32.totalorder %s45, 1
      %p558 = por %p556, %p557
      %p559 = scmp.ne.s32.totalorder %s548, %s549
      %p560 = scmp.eq.s32.totalorder %s45, 0
      %p561 = por %p559, %p560
      %p562 = scmp.ne.s32.totalorder %s548, %s549
      %p563 = scmp.eq.s32.totalorder %s46, 1
      %p564 = por %p562, %p563
      %p566 = scmp.ne.s32.totalorder %s549, %s565
      %p567 = scmp.eq.s32.totalorder %s46, 0
      %p568 = por %p566, %p567
      %s569 = ssub.s32 %s40, %s47
      %p570 = scmp.eq.s32.totalorder %s569, 0
      %s572 = sadd.s32 %s571, 1
      %s573 = scalar_select %p570, %s571, %s572
      %p576 = pneg %p570
      %p577 = scmp.eq.s32.totalorder %s40, 1
      %p578 = por %p576, %p577
      %p579 = scmp.ne.s32.totalorder %s571, %s574
      %p580 = scmp.eq.s32.totalorder %s40, 0
      %p581 = por %p579, %p580
      %p582 = scmp.ne.s32.totalorder %s571, %s574
      %p583 = scmp.eq.s32.totalorder %s45, 1
      %p584 = por %p582, %p583
      %p585 = scmp.ne.s32.totalorder %s574, %s575
      %p586 = scmp.eq.s32.totalorder %s45, 0
      %p587 = por %p585, %p586
      %p588 = scmp.ne.s32.totalorder %s574, %s575
      %p589 = scmp.eq.s32.totalorder %s46, 1
      %p590 = por %p588, %p589
      %p592 = scmp.ne.s32.totalorder %s575, %s591
      %p593 = scmp.eq.s32.totalorder %s46, 0
      %p594 = por %p592, %p593
      %p595 = scmp.le.s32.totalorder 1, %s40
      %p596 = scmp.lt.s32.totalorder %s40, 3
      %p597 = pnand %p595, %p596
      %p598 = pneg %p597
      // Predicated region
      $region9: #{tpu_custom_call.1} parent=5 // pred_check
        _
      $region10: #{tpu_custom_call.1} parent=5 // pred_check_branch
        %600 = sbr.rel (%p597) target = $region12
      $region11: #{tpu_custom_call.1} parent=5 // pred_region
        %s601 = ssub.s32 %s40, 1
        // Predicated region
        $region13: #{tpu_custom_call.1} parent=11 // pred_check
          %p602 = pneg %p61
        $region14: #{tpu_custom_call.1} parent=11 // pred_check_branch
          %604 = sbr.rel (%p602) target = $region16
        $region15: #{tpu_custom_call.1} parent=11 // pred_region
          %s606 = ssub.s32 256, 256
          %607 = vsyncadd [#allocation5], %s606
          %s608 = sshll.u32 [#allocation4], 4
          %s609 = int_to_ptr.vmem [resolvable:$true] %s608
          %614 = dma.hbm_to_vmem [thread:$0]  %s0, 256, %s609, [#allocation5], 128, 128, 8
        $region16: #{tpu_custom_call.1} parent=11 // pred_fallthru
          _
        // Predicated region
        $region17: #{tpu_custom_call.1} parent=11 // pred_check
          %p615 = pneg %p82
        $region18: #{tpu_custom_call.1} parent=11 // pred_check_branch
          %617 = sbr.rel (%p615) target = $region20
        $region19: #{tpu_custom_call.1} parent=11 // pred_region
          %s619 = ssub.s32 256, 256
          %620 = vsyncadd [#allocation8], %s619
          %s621 = sshll.u32 [#allocation7], 4
          %s622 = int_to_ptr.vmem [resolvable:$true] %s621
          %627 = dma.hbm_to_vmem [thread:$0]  %s1, 256, %s622, [#allocation8], 64, 64, 4
        $region20: #{tpu_custom_call.1} parent=11 // pred_fallthru
          _
        // Predicated region
        $region21: #{tpu_custom_call.1} parent=11 // pred_check
          %p628 = pneg %p103
        $region22: #{tpu_custom_call.1} parent=11 // pred_check_branch
          %630 = sbr.rel (%p628) target = $region24
        $region23: #{tpu_custom_call.1} parent=11 // pred_region
          %s632 = ssub.s32 256, 256
          %633 = vsyncadd [#allocation8], %s632
          %s634 = sshll.u32 [#allocation9], 4
          %s635 = int_to_ptr.vmem [resolvable:$true] %s634
          %640 = dma.hbm_to_vmem [thread:$0]  %s2, 256, %s635, [#allocation8], 128, 128, 8
        $region24: #{tpu_custom_call.1} parent=11 // pred_fallthru
          _
        // Predicated region
        $region25: #{tpu_custom_call.1} parent=11 // pred_check
          %p641 = pneg %p124
        $region26: #{tpu_custom_call.1} parent=11 // pred_check_branch
          %643 = sbr.rel (%p641) target = $region28
        $region27: #{tpu_custom_call.1} parent=11 // pred_region
          _
        $region28: #{tpu_custom_call.1} parent=11 // pred_fallthru
          _
      $region12: #{tpu_custom_call.1} parent=5 // pred_fallthru
        _
      %p644 = scmp.lt.s32.totalorder %s40, 2
      // Predicated region
      $region29: #{tpu_custom_call.1} parent=5 // pred_check
        %p645 = pneg %p644
      $region30: #{tpu_custom_call.1} parent=5 // pred_check_branch
        %647 = sbr.rel (%p645) target = $region32
      $region31: #{tpu_custom_call.1} parent=5 // pred_region
        // Predicated region
        $region33: #{tpu_custom_call.1} parent=31 // pred_check
          %p648 = pneg %p144
        $region34: #{tpu_custom_call.1} parent=31 // pred_check_branch
          %650 = sbr.rel (%p648) target = $region36
        $region35: #{tpu_custom_call.1} parent=31 // pred_region
          %p651 = scmp.lt.s32.totalorder %s40, 1
          %s652 = scalar_select %p651, %s40, 1
          %s653 = smul.addr %s652, 4
          %s654 = smul.addr %s653, 4
          %s655 = scalar_lea.vmem %s4, %s654
        $region36: #{tpu_custom_call.1} parent=31 // pred_fallthru
          _
        // Predicated region
        $region37: #{tpu_custom_call.1} parent=31 // pred_check
          %p656 = pneg %p170
        $region38: #{tpu_custom_call.1} parent=31 // pred_check_branch
          %658 = sbr.rel (%p656) target = $region40
        $region39: #{tpu_custom_call.1} parent=31 // pred_region
          %p659 = scmp.lt.s32.totalorder %s40, 1
          %s660 = scalar_select %p659, %s40, 1
          %s661 = smul.addr %s660, 4
          %s662 = smul.addr %s661, 4
          %s663 = scalar_lea.vmem %s5, %s662
        $region40: #{tpu_custom_call.1} parent=31 // pred_fallthru
          _
        // Predicated region
        $region41: #{tpu_custom_call.1} parent=31 // pred_check
          %p664 = pneg %p196
        $region42: #{tpu_custom_call.1} parent=31 // pred_check_branch
          %666 = sbr.rel (%p664) target = $region44
        $region43: #{tpu_custom_call.1} parent=31 // pred_region
          %p667 = scmp.lt.s32.totalorder %s40, 1
          %s668 = scalar_select %p667, %s40, 1
          %s669 = scalar_lea.vmem %s6, %s668
        $region44: #{tpu_custom_call.1} parent=31 // pred_fallthru
          _
        // Predicated region
        $region45: #{tpu_custom_call.1} parent=31 // pred_check
          %p670 = pneg %p222
        $region46: #{tpu_custom_call.1} parent=31 // pred_check_branch
          %672 = sbr.rel (%p670) target = $region48
        $region47: #{tpu_custom_call.1} parent=31 // pred_region
          %p673 = scmp.lt.s32.totalorder %s40, 1
          %s674 = scalar_select %p673, %s40, 1
          %s675 = scalar_lea.vmem %s7, %s674
        $region48: #{tpu_custom_call.1} parent=31 // pred_fallthru
          _
        // Predicated region
        $region49: #{tpu_custom_call.1} parent=31 // pred_check
          %p676 = pneg %p248
        $region50: #{tpu_custom_call.1} parent=31 // pred_check_branch
          %678 = sbr.rel (%p676) target = $region52
        $region51: #{tpu_custom_call.1} parent=31 // pred_region
          %p679 = scmp.lt.s32.totalorder %s40, 1
          %s680 = scalar_select %p679, %s40, 1
          %s681 = smul.addr %s680, 4
          %s682 = smul.addr %s681, 4
          %s683 = scalar_lea.vmem %s8, %s682
        $region52: #{tpu_custom_call.1} parent=31 // pred_fallthru
          _
        // Predicated region
        $region53: #{tpu_custom_call.1} parent=31 // pred_check
          %p684 = pneg %p274
        $region54: #{tpu_custom_call.1} parent=31 // pred_check_branch
          %686 = sbr.rel (%p684) target = $region56
        $region55: #{tpu_custom_call.1} parent=31 // pred_region
          %s687 = sand.u32 %s40, 1
          %s688 = scalar_lea.sflag [#allocation11], %s687
          %s689 = sand.u32 %s264, 1
          %s690 = smul.addr %s689, 16
          %s691 = scalar_lea.vmem [#allocation10], %s690
          %s693 = ssub.s32 256, 256
          %694 = vsyncadd %s688, %s693
          %s695 = smul.addr %s40, 4
          %s696 = smul.addr %s695, 64
          %s697 = scalar_lea.hbm %s9, %s696
          %s698 = sshll.u32 %s691, 4
          %s699 = int_to_ptr.vmem [resolvable:$true] %s698
          %704 = dma.hbm_to_vmem [thread:$0]  %s697, 256, %s699, %s688, 64, 64, 4
        $region56: #{tpu_custom_call.1} parent=31 // pred_fallthru
          _
        // Predicated region
        $region57: #{tpu_custom_call.1} parent=31 // pred_check
          %p705 = pneg %p300
        $region58: #{tpu_custom_call.1} parent=31 // pred_check_branch
          %707 = sbr.rel (%p705) target = $region60
        $region59: #{tpu_custom_call.1} parent=31 // pred_region
          %s708 = sand.u32 %s40, 1
          %s709 = scalar_lea.sflag [#allocation11], %s708
          %s710 = sand.u32 %s290, 1
          %s711 = smul.addr %s710, 16
          %s712 = scalar_lea.vmem [#allocation12], %s711
          %s714 = ssub.s32 256, 256
          %715 = vsyncadd %s709, %s714
          %s716 = smul.addr %s40, 4
          %s717 = smul.addr %s716, 64
          %s718 = scalar_lea.hbm %s10, %s717
          %s719 = sshll.u32 %s712, 4
          %s720 = int_to_ptr.vmem [resolvable:$true] %s719
          %725 = dma.hbm_to_vmem [thread:$0]  %s718, 256, %s720, %s709, 64, 64, 4
        $region60: #{tpu_custom_call.1} parent=31 // pred_fallthru
          _
        // Predicated region
        $region61: #{tpu_custom_call.1} parent=31 // pred_check
          %p726 = pneg %p326
        $region62: #{tpu_custom_call.1} parent=31 // pred_check_branch
          %728 = sbr.rel (%p726) target = $region64
        $region63: #{tpu_custom_call.1} parent=31 // pred_region
          %p729 = scmp.lt.s32.totalorder %s40, 1
          %s730 = scalar_select %p729, %s40, 1
          %s731 = scalar_lea.vmem %s11, %s730
        $region64: #{tpu_custom_call.1} parent=31 // pred_fallthru
          _
        // Predicated region
        $region65: #{tpu_custom_call.1} parent=31 // pred_check
          %p732 = pneg %p352
        $region66: #{tpu_custom_call.1} parent=31 // pred_check_branch
          %734 = sbr.rel (%p732) target = $region68
        $region67: #{tpu_custom_call.1} parent=31 // pred_region
          %p735 = scmp.lt.s32.totalorder %s40, 1
          %s736 = scalar_select %p735, %s40, 1
          %s737 = scalar_lea.vmem %s12, %s736
        $region68: #{tpu_custom_call.1} parent=31 // pred_fallthru
          _
        // Predicated region
        $region69: #{tpu_custom_call.1} parent=31 // pred_check
          %p738 = pneg %p378
        $region70: #{tpu_custom_call.1} parent=31 // pred_check_branch
          %740 = sbr.rel (%p738) target = $region72
        $region71: #{tpu_custom_call.1} parent=31 // pred_region
          %s741 = sand.u32 %s368, 1
          %s742 = scalar_lea.sflag [#allocation14], %s741
          %s743 = sand.u32 %s368, 1
          %s744 = smul.addr %s743, 16
          %s745 = scalar_lea.vmem [#allocation13], %s744
          %s747 = ssub.s32 256, 256
          %748 = vsyncadd %s742, %s747
          %s749 = smul.addr %s40, 4
          %s750 = smul.addr %s749, 64
          %s751 = scalar_lea.hbm %s13, %s750
          %s752 = sshll.u32 %s745, 4
          %s753 = int_to_ptr.vmem [resolvable:$true] %s752
          %758 = dma.hbm_to_vmem [thread:$0]  %s751, 256, %s753, %s742, 64, 64, 4
        $region72: #{tpu_custom_call.1} parent=31 // pred_fallthru
          _
        // Predicated region
        $region73: #{tpu_custom_call.1} parent=31 // pred_check
          %p759 = pneg %p404
        $region74: #{tpu_custom_call.1} parent=31 // pred_check_branch
          %761 = sbr.rel (%p759) target = $region76
        $region75: #{tpu_custom_call.1} parent=31 // pred_region
          %p762 = scmp.lt.s32.totalorder %s40, 1
          %s763 = scalar_select %p762, %s40, 1
          %s764 = scalar_lea.vmem %s14, %s763
        $region76: #{tpu_custom_call.1} parent=31 // pred_fallthru
          _
        // Predicated region
        $region77: #{tpu_custom_call.1} parent=31 // pred_check
          %p765 = pneg %p430
        $region78: #{tpu_custom_call.1} parent=31 // pred_check_branch
          %767 = sbr.rel (%p765) target = $region80
        $region79: #{tpu_custom_call.1} parent=31 // pred_region
          %p768 = scmp.lt.s32.totalorder %s40, 1
          %s769 = scalar_select %p768, %s40, 1
          %s770 = smul.addr %s769, 8
          %s771 = smul.addr %s770, 4
          %s772 = scalar_lea.vmem %s15, %s771
        $region80: #{tpu_custom_call.1} parent=31 // pred_fallthru
          _
        // Predicated region
        $region81: #{tpu_custom_call.1} parent=31 // pred_check
          %p773 = pneg %p456
        $region82: #{tpu_custom_call.1} parent=31 // pred_check_branch
          %775 = sbr.rel (%p773) target = $region84
        $region83: #{tpu_custom_call.1} parent=31 // pred_region
          %p776 = scmp.lt.s32.totalorder %s40, 1
          %s777 = scalar_select %p776, %s40, 1
          %s778 = scalar_lea.vmem %s16, %s777
        $region84: #{tpu_custom_call.1} parent=31 // pred_fallthru
          _
        // Predicated region
        $region85: #{tpu_custom_call.1} parent=31 // pred_check
          %p779 = pneg %p482
        $region86: #{tpu_custom_call.1} parent=31 // pred_check_branch
          %781 = sbr.rel (%p779) target = $region88
        $region87: #{tpu_custom_call.1} parent=31 // pred_region
          %p782 = scmp.lt.s32.totalorder %s40, 1
          %s783 = scalar_select %p782, %s40, 1
          %s784 = scalar_lea.vmem %s17, %s783
        $region88: #{tpu_custom_call.1} parent=31 // pred_fallthru
          _
        // Predicated region
        $region89: #{tpu_custom_call.1} parent=31 // pred_check
          %p785 = pneg %p508
        $region90: #{tpu_custom_call.1} parent=31 // pred_check_branch
          %787 = sbr.rel (%p785) target = $region92
        $region91: #{tpu_custom_call.1} parent=31 // pred_region
          %p788 = scmp.lt.s32.totalorder %s40, 1
          %s789 = scalar_select %p788, %s40, 1
          %s790 = scalar_lea.vmem %s18, %s789
        $region92: #{tpu_custom_call.1} parent=31 // pred_fallthru
          _
      $region32: #{tpu_custom_call.1} parent=5 // pred_fallthru
        _
      %p791 = scmp.le.s32.totalorder 1, %s40
      %p792 = scmp.lt.s32.totalorder %s40, 3
      %p793 = pnand %p791, %p792
      %p794 = pneg %p793
      // Predicated region
      $region93: #{tpu_custom_call.1} parent=5 // pred_check
        _
      $region94: #{tpu_custom_call.1} parent=5 // pred_check_branch
        %796 = sbr.rel (%p793) target = $region96
      $region95: #{tpu_custom_call.1} parent=5 // pred_region
        %s797 = ssub.s32 %s40, 1
        // Predicated region
        $region97: #{tpu_custom_call.1} parent=95 // pred_check
          %p798 = pneg %p61
        $region98: #{tpu_custom_call.1} parent=95 // pred_check_branch
          %800 = sbr.rel (%p798) target = $region100
        $region99: #{tpu_custom_call.1} parent=95 // pred_region
          %801 = dma.done [#allocation5], 256
        $region100: #{tpu_custom_call.1} parent=95 // pred_fallthru
          _
        // Predicated region
        $region101: #{tpu_custom_call.1} parent=95 // pred_check
          %p802 = pneg %p82
        $region102: #{tpu_custom_call.1} parent=95 // pred_check_branch
          %804 = sbr.rel (%p802) target = $region104
        $region103: #{tpu_custom_call.1} parent=95 // pred_region
          %805 = dma.done [#allocation8], 256
        $region104: #{tpu_custom_call.1} parent=95 // pred_fallthru
          _
        // Predicated region
        $region105: #{tpu_custom_call.1} parent=95 // pred_check
          %p806 = pneg %p103
        $region106: #{tpu_custom_call.1} parent=95 // pred_check_branch
          %808 = sbr.rel (%p806) target = $region108
        $region107: #{tpu_custom_call.1} parent=95 // pred_region
          %809 = dma.done [#allocation8], 256
        $region108: #{tpu_custom_call.1} parent=95 // pred_fallthru
          _
        %s810 = sand.u32 %s45, 1
        %s811 = scalar_lea.sflag [#allocation11], %s810
        %s812 = sand.u32 %s267, 1
        %s813 = smul.addr %s812, 16
        %s814 = scalar_lea.vmem [#allocation10], %s813
        // Predicated region
        $region109: #{tpu_custom_call.1} parent=95 // pred_check
          %p815 = pneg %p280
        $region110: #{tpu_custom_call.1} parent=95 // pred_check_branch
          %817 = sbr.rel (%p815) target = $region112
        $region111: #{tpu_custom_call.1} parent=95 // pred_region
          %818 = dma.done %s811, 256
        $region112: #{tpu_custom_call.1} parent=95 // pred_fallthru
          _
        %s819 = sand.u32 %s45, 1
        %s820 = scalar_lea.sflag [#allocation11], %s819
        %s821 = sand.u32 %s293, 1
        %s822 = smul.addr %s821, 16
        %s823 = scalar_lea.vmem [#allocation12], %s822
        // Predicated region
        $region113: #{tpu_custom_call.1} parent=95 // pred_check
          %p824 = pneg %p306
        $region114: #{tpu_custom_call.1} parent=95 // pred_check_branch
          %826 = sbr.rel (%p824) target = $region116
        $region115: #{tpu_custom_call.1} parent=95 // pred_region
          %827 = dma.done %s820, 256
        $region116: #{tpu_custom_call.1} parent=95 // pred_fallthru
          _
        %s828 = sand.u32 %s371, 1
        %s829 = scalar_lea.sflag [#allocation14], %s828
        %s830 = sand.u32 %s371, 1
        %s831 = smul.addr %s830, 16
        %s832 = scalar_lea.vmem [#allocation13], %s831
        // Predicated region
        $region117: #{tpu_custom_call.1} parent=95 // pred_check
          %p833 = pneg %p384
        $region118: #{tpu_custom_call.1} parent=95 // pred_check_branch
          %835 = sbr.rel (%p833) target = $region120
        $region119: #{tpu_custom_call.1} parent=95 // pred_region
          %836 = dma.done %s829, 256
        $region120: #{tpu_custom_call.1} parent=95 // pred_fallthru
          _
        %p837 = pneg %p61
        %p838 = pneg %p58
        %p839 = pneg %p82
        %p840 = pneg %p79
        %p841 = pneg %p103
        %p842 = pneg %p100
        %p843 = pneg %p124
        %p844 = pneg %p121
        %p845 = scmp.lt.s32.totalorder %s45, 1
        %s846 = scalar_select %p845, %s45, 1
        %s847 = smul.addr %s846, 4
        %s848 = smul.addr %s847, 4
        %s849 = scalar_lea.vmem %s4, %s848
        %p850 = pneg %p150
        %p851 = pneg %p147
        %p852 = scmp.lt.s32.totalorder %s45, 1
        %s853 = scalar_select %p852, %s45, 1
        %s854 = smul.addr %s853, 4
        %s855 = smul.addr %s854, 4
        %s856 = scalar_lea.vmem %s5, %s855
        %p857 = pneg %p176
        %p858 = pneg %p173
        %p859 = scmp.lt.s32.totalorder %s45, 1
        %s860 = scalar_select %p859, %s45, 1
        %s861 = scalar_lea.vmem %s6, %s860
        %p862 = pneg %p202
        %p863 = pneg %p199
        %p864 = scmp.lt.s32.totalorder %s45, 1
        %s865 = scalar_select %p864, %s45, 1
        %s866 = scalar_lea.vmem %s7, %s865
        %p867 = pneg %p228
        %p868 = pneg %p225
        %p869 = scmp.lt.s32.totalorder %s45, 1
        %s870 = scalar_select %p869, %s45, 1
        %s871 = smul.addr %s870, 4
        %s872 = smul.addr %s871, 4
        %s873 = scalar_lea.vmem %s8, %s872
        %p874 = pneg %p254
        %p875 = pneg %p251
        %s876 = sand.u32 %s45, 1
        %s877 = scalar_lea.sflag [#allocation11], %s876
        %s878 = sand.u32 %s267, 1
        %s879 = smul.addr %s878, 16
        %s880 = scalar_lea.vmem [#allocation10], %s879
        %p881 = pneg %p280
        %p882 = pneg %p277
        %s883 = sand.u32 %s45, 1
        %s884 = scalar_lea.sflag [#allocation11], %s883
        %s885 = sand.u32 %s293, 1
        %s886 = smul.addr %s885, 16
        %s887 = scalar_lea.vmem [#allocation12], %s886
        %p888 = pneg %p306
        %p889 = pneg %p303
        %p890 = scmp.lt.s32.totalorder %s45, 1
        %s891 = scalar_select %p890, %s45, 1
        %s892 = scalar_lea.vmem %s11, %s891
        %p893 = pneg %p332
        %p894 = pneg %p329
        %p895 = scmp.lt.s32.totalorder %s45, 1
        %s896 = scalar_select %p895, %s45, 1
        %s897 = scalar_lea.vmem %s12, %s896
        %p898 = pneg %p358
        %p899 = pneg %p355
        %s900 = sand.u32 %s371, 1
        %s901 = scalar_lea.sflag [#allocation14], %s900
        %s902 = sand.u32 %s371, 1
        %s903 = smul.addr %s902, 16
        %s904 = scalar_lea.vmem [#allocation13], %s903
        %p905 = pneg %p384
        %p906 = pneg %p381
        %p907 = scmp.lt.s32.totalorder %s45, 1
        %s908 = scalar_select %p907, %s45, 1
        %s909 = scalar_lea.vmem %s14, %s908
        %p910 = pneg %p410
        %p911 = pneg %p407
        %p912 = scmp.lt.s32.totalorder %s45, 1
        %s913 = scalar_select %p912, %s45, 1
        %s914 = smul.addr %s913, 8
        %s915 = smul.addr %s914, 4
        %s916 = scalar_lea.vmem %s15, %s915
        %p917 = pneg %p436
        %p918 = pneg %p433
        %p919 = scmp.lt.s32.totalorder %s45, 1
        %s920 = scalar_select %p919, %s45, 1
        %s921 = scalar_lea.vmem %s16, %s920
        %p922 = pneg %p462
        %p923 = pneg %p459
        %p924 = scmp.lt.s32.totalorder %s45, 1
        %s925 = scalar_select %p924, %s45, 1
        %s926 = scalar_lea.vmem %s17, %s925
        %p927 = pneg %p488
        %p928 = pneg %p485
        %p929 = scmp.lt.s32.totalorder %s45, 1
        %s930 = scalar_select %p929, %s45, 1
        %s931 = scalar_lea.vmem %s18, %s930
        %p932 = pneg %p514
        %p933 = pneg %p511
        %p934 = pneg %p535
        %p935 = pneg %p532
        %p936 = pneg %p561
        %p937 = pneg %p558
        %s938 = sand.u32 %s45, 1
        %s939 = scalar_lea.sflag [#allocation17], %s938
        %s940 = sand.u32 %s548, 1
        %s941 = smul.addr %s940, 8
        %s942 = scalar_lea.vmem [#allocation16], %s941
        %p943 = pneg %p587
        %p944 = pneg %p584
        %s945 = sand.u32 %s45, 1
        %s946 = scalar_lea.sflag [#allocation17], %s945
        %s947 = sand.u32 %s574, 1
        %s948 = smul.addr %s947, 8
        %s949 = scalar_lea.vmem [#allocation18], %s948
        %p950 = scmp.lt.s32.totalorder %s45, 1
        %s951 = scalar_select %p950, %s45, 1
        %s952 = smul.addr %s951, 4
        %s953 = smul.addr %s952, 4
        %s954 = scalar_lea.vmem %s4, %s953
        %p955 = scmp.lt.s32.totalorder %s45, 1
        %s956 = scalar_select %p955, %s45, 1
        %s957 = smul.addr %s956, 4
        %s958 = smul.addr %s957, 4
        %s959 = scalar_lea.vmem %s5, %s958
        %p960 = scmp.lt.s32.totalorder %s45, 1
        %s961 = scalar_select %p960, %s45, 1
        %s962 = scalar_lea.vmem %s6, %s961
        %p963 = scmp.lt.s32.totalorder %s45, 1
        %s964 = scalar_select %p963, %s45, 1
        %s965 = scalar_lea.vmem %s7, %s964
        %p966 = scmp.lt.s32.totalorder %s45, 1
        %s967 = scalar_select %p966, %s45, 1
        %s968 = smul.addr %s967, 4
        %s969 = smul.addr %s968, 4
        %s970 = scalar_lea.vmem %s8, %s969
        %p971 = scmp.lt.s32.totalorder %s45, 1
        %s972 = scalar_select %p971, %s45, 1
        %s973 = scalar_lea.vmem %s11, %s972
        %p974 = scmp.lt.s32.totalorder %s45, 1
        %s975 = scalar_select %p974, %s45, 1
        %s976 = scalar_lea.vmem %s12, %s975
        %p977 = scmp.lt.s32.totalorder %s45, 1
        %s978 = scalar_select %p977, %s45, 1
        %s979 = scalar_lea.vmem %s14, %s978
        %p980 = scmp.lt.s32.totalorder %s45, 1
        %s981 = scalar_select %p980, %s45, 1
        %s982 = smul.addr %s981, 8
        %s983 = smul.addr %s982, 4
        %s984 = scalar_lea.vmem %s15, %s983
        %p985 = scmp.lt.s32.totalorder %s45, 1
        %s986 = scalar_select %p985, %s45, 1
        %s987 = scalar_lea.vmem %s16, %s986
        %p988 = scmp.lt.s32.totalorder %s45, 1
        %s989 = scalar_select %p988, %s45, 1
        %s990 = scalar_lea.vmem %s17, %s989
        %p991 = scmp.lt.s32.totalorder %s45, 1
        %s992 = scalar_select %p991, %s45, 1
        %s993 = scalar_lea.vmem %s18, %s992
        %p995 = scmp.eq.s32.totalorder %s45, 0
        // Predicated region
        $region121: #{tpu_custom_call.1} parent=95 // pred_check
          %p996 = pneg %p995
        $region122: #{tpu_custom_call.1} parent=95 // pred_check_branch
          %998 = sbr.rel (%p996) target = $region124
        $region123: #{tpu_custom_call.1} parent=95 // pred_region
          %v999 = vld [vmem:[#allocation4] sm:$0xff]
          %v1000 = vld [vmem:[#allocation4 + $0x8] sm:$0xff]
          %vm1001 = vcmask 261120
          %1002 = vst.msk [vmem:[#allocation2] sm:$0xff] %vm1001, %v999
          %1003 = vst.msk [vmem:[#allocation2 + $0x8] sm:$0xff] %vm1001, %v1000
        $region124: #{tpu_custom_call.1} parent=95 // pred_fallthru
          _
        %v1004 = vld [vmem:[#allocation2] sm:$0xff]
        %v1005 = vld [vmem:[#allocation2 + $0x8] sm:$0xff]
        %v1006 = vpack.c.bf16 %v1005, %v1004
        %v1007 = vld [vmem:[%s954] sm:$0xf]
        %v1008 = vld [vmem:[%s954 + $0x4] sm:$0xf]
        %v1009 = vld [vmem:[%s954 + $0x8] sm:$0xf]
        %v1010 = vld [vmem:[%s954 + $0xc] sm:$0xf]
        %v1015 = vunpack.c.l.b16 %v1007
        %v1016 = vunpack.c.l.b16 %v1008
        %v1017 = vunpack.c.l.b16 %v1009
        %v1018 = vunpack.c.l.b16 %v1010
        %v1019 = vpack.c.b16 %v1016, %v1015
        %v1020 = vpack.c.b16 %v1018, %v1017
        %vm1023 = vcmask 261120
        %v1025 = vsel %vm1023, %v1006, 0
        %1027 = vmatprep.subr.bf16.mxu0 0
        %1028 = vmatpush1.bf16.msra.mxu0 0
        %1029 = vmatprep.subr.bf16.mxu0 0
        %1030 = vmatpush1.bf16.msra.mxu0 0
        %1031 = vmatprep.subr.bf16.mxu0 0
        %1032 = vmatpush1.bf16.msra.mxu0 0
        %1033 = vmatprep.subr.bf16.mxu0 0
        %1034 = vmatpush1.bf16.msra.mxu0 0
        %1035 = vmatprep.subr.bf16.mxu0 0
        %1036 = vmatpush1.bf16.msra.mxu0 0
        %1037 = vmatprep.subr.bf16.mxu0 0
        %1038 = vmatpush1.bf16.msra.mxu0 0
        %1039 = vmatprep.subr.bf16.mxu0 0
        %1040 = vmatpush1.bf16.msra.mxu0 %v1020
        %1041 = vmatprep.subr.bf16.mxu0 0
        %1042 = vmatpush1.bf16.msra.mxu0 %v1019
        %1043 = vmatprep.subr.bf16.mxu0 0
        %1044 = vmatpush2.bf16.msra.mxu0 0
        %1045 = vmatprep.subr.bf16.mxu0 0
        %1046 = vmatpush2.bf16.msra.mxu0 0
        %1047 = vmatprep.subr.bf16.mxu0 0
        %1048 = vmatpush2.bf16.msra.mxu0 0
        %1049 = vmatprep.subr.bf16.mxu0 0
        %1050 = vmatpush2.bf16.msra.mxu0 0
        %1051 = vmatprep.subr.bf16.mxu0 0
        %1052 = vmatpush2.bf16.msra.mxu0 0
        %1053 = vmatprep.subr.bf16.mxu0 0
        %1054 = vmatpush2.bf16.msra.mxu0 0
        %1055 = vmatprep.subr.bf16.mxu0 0
        %1056 = vmatpush2.bf16.msra.mxu0 0
        %1057 = vmatprep.subr.bf16.mxu0 0
        %1058 = vmatpush2.bf16.msra.mxu0 0
        %1059 = vmatprep.mubr.bf16.mxu0 0
        %1060 = vmatmul.mubr.bf16.gmra.mxu0 %v1025
        %v1061 = vpop.f32.mrf.mxu0
        %v1062 = vadd.f32 0.0, %v1061
        %v1063 = vpop.f32.mrf.mxu0
        %v1064 = vpop.f32.mrf.mxu0
        %v1065 = vadd.f32 0.0, %v1064
        %v1066 = vpop.f32.mrf.mxu0
        %1067 = vdwg.mxu0
        %v1068 = vpack.c.bf16 %v1065, %v1062
        %v1069 = vld [vmem:[#allocation9] sm:$0xff]
        %1071 = vrot.lane.b32.xlu0 %v1068, 96
        %v1072 = vpop.permute.xlu0 %1071
        %vm1073 = vcmask 31744
        %v1075 = vsel %vm1073, %v1068, 0
        %v1078 = vsel %vm1073, %v1072, 0
        %1080 = vmatprep.subr.bf16.mxu0 0
        %1081 = vmatpush1.bf16.xpose.msra.mxu0 0
        %1082 = vmatprep.subr.bf16.mxu0 0
        %1083 = vmatpush1.bf16.xpose.msra.mxu0 0
        %1084 = vmatprep.subr.bf16.mxu0 0
        %1085 = vmatpush1.bf16.xpose.msra.mxu0 0
        %1086 = vmatprep.subr.bf16.mxu0 0
        %1087 = vmatpush1.bf16.xpose.msra.mxu0 0
        %1088 = vmatprep.subr.bf16.mxu0 0
        %1089 = vmatpush1.bf16.xpose.msra.mxu0 0
        %1090 = vmatprep.subr.bf16.mxu0 0
        %1091 = vmatpush1.bf16.xpose.msra.mxu0 0
        %1092 = vmatprep.subr.bf16.mxu0 0
        %1093 = vmatpush1.bf16.xpose.msra.mxu0 0
        %1094 = vmatprep.subr.bf16.mxu0 0
        %1095 = vmatpush1.bf16.xpose.msra.mxu0 %v1078
        %1096 = vmatprep.subr.bf16.mxu0 0
        %1097 = vmatpush2.bf16.xpose.msra.mxu0 0
        %1098 = vmatprep.subr.bf16.mxu0 0
        %1099 = vmatpush2.bf16.xpose.msra.mxu0 0
        %1100 = vmatprep.subr.bf16.mxu0 0
        %1101 = vmatpush2.bf16.xpose.msra.mxu0 0
        %1102 = vmatprep.subr.bf16.mxu0 0
        %1103 = vmatpush2.bf16.xpose.msra.mxu0 0
        %1104 = vmatprep.subr.bf16.mxu0 0
        %1105 = vmatpush2.bf16.xpose.msra.mxu0 0
        %1106 = vmatprep.subr.bf16.mxu0 0
        %1107 = vmatpush2.bf16.xpose.msra.mxu0 0
        %1108 = vmatprep.subr.bf16.mxu0 0
        %1109 = vmatpush2.bf16.xpose.msra.mxu0 0
        %1110 = vmatprep.subr.bf16.mxu0 0
        %1111 = vmatpush2.bf16.xpose.msra.mxu0 0
        %1112 = vmatprep.mubr.bf16.mxu0 0
        %1113 = vmatmul.mubr.bf16.gmra.mxu0 %v1075
        %v1114 = vpop.f32.mrf.mxu0
        %v1115 = vadd.f32 %v1069, %v1114
        %v1116 = vpop.f32.mrf.mxu0
        %v1117 = vpop.f32.mrf.mxu0
        %v1118 = vpop.f32.mrf.mxu0
        %1119 = vdwg.mxu0
        %vm1120 = vcmask 64512
        %v1121 = vsel %vm1120, %v1115, -inf
        %1122 = vmax.xlane.f32.xlu0 %v1121
        %v1123 = vpop.xlane.xlu0 %1122
        %v1124 = vsub.f32 %v1115, %v1123
        %v1125 = vmul.f32 %v1124, 1.442695
        %v1126 = vpow.pop %v1125
        %v1127 = vsel %vm1120, %v1126, 0.0
        %1128 = vadd.xlane.f32.xlu0 %v1127
        %v1129 = vpop.xlane.xlu0 %1128
        %v1130 = vrcp.pop %v1129
        %v1131 = vmul.f32 %v1126, %v1130
        %v1132 = vpack.c.bf16 %v1131, %v1131
        %vm1133 = vcmask 60416
        %1134 = vst.msk [vmem:[%s942] sm:$0xf] %vm1133, %v1132
        %1135 = vrot.lane.b32.xlu0 %v1068, 64
        %v1136 = vpop.permute.xlu0 %1135
        %v1138 = vsel %vm1120, %v1132, 0
        %vm1140 = vcmask 1043456
        %v1142 = vsel %vm1140, %v1136, 0
        %1144 = vmatprep.subr.bf16.mxu0 0
        %1145 = vmatpush1.bf16.msra.mxu0 0
        %1146 = vmatprep.subr.bf16.mxu0 0
        %1147 = vmatpush1.bf16.msra.mxu0 0
        %1148 = vmatprep.subr.bf16.mxu0 0
        %1149 = vmatpush1.bf16.msra.mxu0 0
        %1150 = vmatprep.subr.bf16.mxu0 0
        %1151 = vmatpush1.bf16.msra.mxu0 0
        %1152 = vmatprep.subr.bf16.mxu0 0
        %1153 = vmatpush1.bf16.msra.mxu0 0
        %1154 = vmatprep.subr.bf16.mxu0 0
        %1155 = vmatpush1.bf16.msra.mxu0 0
        %1156 = vmatprep.subr.bf16.mxu0 0
        %1157 = vmatpush1.bf16.msra.mxu0 0
        %1158 = vmatprep.subr.bf16.mxu0 0
        %1159 = vmatpush1.bf16.msra.mxu0 %v1142
        %1160 = vmatprep.subr.bf16.mxu0 0
        %1161 = vmatpush2.bf16.msra.mxu0 0
        %1162 = vmatprep.subr.bf16.mxu0 0
        %1163 = vmatpush2.bf16.msra.mxu0 0
        %1164 = vmatprep.subr.bf16.mxu0 0
        %1165 = vmatpush2.bf16.msra.mxu0 0
        %1166 = vmatprep.subr.bf16.mxu0 0
        %1167 = vmatpush2.bf16.msra.mxu0 0
        %1168 = vmatprep.subr.bf16.mxu0 0
        %1169 = vmatpush2.bf16.msra.mxu0 0
        %1170 = vmatprep.subr.bf16.mxu0 0
        %1171 = vmatpush2.bf16.msra.mxu0 0
        %1172 = vmatprep.subr.bf16.mxu0 0
        %1173 = vmatpush2.bf16.msra.mxu0 0
        %1174 = vmatprep.subr.bf16.mxu0 0
        %1175 = vmatpush2.bf16.msra.mxu0 0
        %1176 = vmatprep.mubr.bf16.mxu0 0
        %1177 = vmatmul.mubr.bf16.gmra.mxu0 %v1138
        %v1178 = vpop.f32.mrf.mxu0
        %v1179 = vadd.f32 0.0, %v1178
        %v1180 = vpop.f32.mrf.mxu0
        %v1181 = vpop.f32.mrf.mxu0
        %v1182 = vpop.f32.mrf.mxu0
        %1183 = vdwg.mxu0
        %1184 = vst.msk [vmem:[#allocation3] sm:$0xff] %vm1073, %v1179
        %1185 = vrot.lane.b32.xlu0 %v1068, 124
        %v1186 = vpop.permute.xlu0 %1185
        %1187 = vrot.lane.b32.xlu0 %v1068, 92
        %v1188 = vpop.permute.xlu0 %1187
        %v1190 = vsel %vm1073, %v1186, 0
        %v1193 = vsel %vm1073, %v1188, 0
        %1195 = vmatprep.subr.bf16.mxu0 0
        %1196 = vmatpush1.bf16.xpose.msra.mxu0 0
        %1197 = vmatprep.subr.bf16.mxu0 0
        %1198 = vmatpush1.bf16.xpose.msra.mxu0 0
        %1199 = vmatprep.subr.bf16.mxu0 0
        %1200 = vmatpush1.bf16.xpose.msra.mxu0 0
        %1201 = vmatprep.subr.bf16.mxu0 0
        %1202 = vmatpush1.bf16.xpose.msra.mxu0 0
        %1203 = vmatprep.subr.bf16.mxu0 0
        %1204 = vmatpush1.bf16.xpose.msra.mxu0 0
        %1205 = vmatprep.subr.bf16.mxu0 0
        %1206 = vmatpush1.bf16.xpose.msra.mxu0 0
        %1207 = vmatprep.subr.bf16.mxu0 0
        %1208 = vmatpush1.bf16.xpose.msra.mxu0 0
        %1209 = vmatprep.subr.bf16.mxu0 0
        %1210 = vmatpush1.bf16.xpose.msra.mxu0 %v1193
        %1211 = vmatprep.subr.bf16.mxu0 0
        %1212 = vmatpush2.bf16.xpose.msra.mxu0 0
        %1213 = vmatprep.subr.bf16.mxu0 0
        %1214 = vmatpush2.bf16.xpose.msra.mxu0 0
        %1215 = vmatprep.subr.bf16.mxu0 0
        %1216 = vmatpush2.bf16.xpose.msra.mxu0 0
        %1217 = vmatprep.subr.bf16.mxu0 0
        %1218 = vmatpush2.bf16.xpose.msra.mxu0 0
        %1219 = vmatprep.subr.bf16.mxu0 0
        %1220 = vmatpush2.bf16.xpose.msra.mxu0 0
        %1221 = vmatprep.subr.bf16.mxu0 0
        %1222 = vmatpush2.bf16.xpose.msra.mxu0 0
        %1223 = vmatprep.subr.bf16.mxu0 0
        %1224 = vmatpush2.bf16.xpose.msra.mxu0 0
        %1225 = vmatprep.subr.bf16.mxu0 0
        %1226 = vmatpush2.bf16.xpose.msra.mxu0 0
        %1227 = vmatprep.mubr.bf16.mxu0 0
        %1228 = vmatmul.mubr.bf16.gmra.mxu0 %v1190
        %v1229 = vpop.f32.mrf.mxu0
        %v1230 = vadd.f32 %v1069, %v1229
        %v1231 = vpop.f32.mrf.mxu0
        %v1232 = vpop.f32.mrf.mxu0
        %v1233 = vpop.f32.mrf.mxu0
        %1234 = vdwg.mxu0
        %v1235 = vsel %vm1120, %v1230, -inf
        %1236 = vmax.xlane.f32.xlu0 %v1235
        %v1237 = vpop.xlane.xlu0 %1236
        %v1238 = vsub.f32 %v1230, %v1237
        %v1239 = vmul.f32 %v1238, 1.442695
        %v1240 = vpow.pop %v1239
        %v1241 = vsel %vm1120, %v1240, 0.0
        %1242 = vadd.xlane.f32.xlu0 %v1241
        %v1243 = vpop.xlane.xlu0 %1242
        %v1244 = vrcp.pop %v1243
        %v1245 = vmul.f32 %v1240, %v1244
        %v1246 = vpack.c.bf16 %v1245, %v1245
        %v1248 = vunpack.c.l.b16 %v1246
        %v1249 = vpack.c.b16 %v1248, %v1248
        %1250 = vrot.lane.b32.xlu0 %v1249, 8
        %v1251 = vpop.permute.xlu0 %1250
        %vm1253 = vcmask 126016
        %1254 = vst.msk [vmem:[%s942] sm:$0xf] %vm1253, %v1251
        %1255 = vrot.lane.b32.xlu0 %v1068, 60
        %v1256 = vpop.permute.xlu0 %1255
        %v1258 = vsel %vm1120, %v1246, 0
        %v1261 = vsel %vm1140, %v1256, 0
        %1263 = vmatprep.subr.bf16.mxu0 0
        %1264 = vmatpush1.bf16.msra.mxu0 0
        %1265 = vmatprep.subr.bf16.mxu0 0
        %1266 = vmatpush1.bf16.msra.mxu0 0
        %1267 = vmatprep.subr.bf16.mxu0 0
        %1268 = vmatpush1.bf16.msra.mxu0 0
        %1269 = vmatprep.subr.bf16.mxu0 0
        %1270 = vmatpush1.bf16.msra.mxu0 0
        %1271 = vmatprep.subr.bf16.mxu0 0
        %1272 = vmatpush1.bf16.msra.mxu0 0
        %1273 = vmatprep.subr.bf16.mxu0 0
        %1274 = vmatpush1.bf16.msra.mxu0 0
        %1275 = vmatprep.subr.bf16.mxu0 0
        %1276 = vmatpush1.bf16.msra.mxu0 0
        %1277 = vmatprep.subr.bf16.mxu0 0
        %1278 = vmatpush1.bf16.msra.mxu0 %v1261
        %1279 = vmatprep.subr.bf16.mxu0 0
        %1280 = vmatpush2.bf16.msra.mxu0 0
        %1281 = vmatprep.subr.bf16.mxu0 0
        %1282 = vmatpush2.bf16.msra.mxu0 0
        %1283 = vmatprep.subr.bf16.mxu0 0
        %1284 = vmatpush2.bf16.msra.mxu0 0
        %1285 = vmatprep.subr.bf16.mxu0 0
        %1286 = vmatpush2.bf16.msra.mxu0 0
        %1287 = vmatprep.subr.bf16.mxu0 0
        %1288 = vmatpush2.bf16.msra.mxu0 0
        %1289 = vmatprep.subr.bf16.mxu0 0
        %1290 = vmatpush2.bf16.msra.mxu0 0
        %1291 = vmatprep.subr.bf16.mxu0 0
        %1292 = vmatpush2.bf16.msra.mxu0 0
        %1293 = vmatprep.subr.bf16.mxu0 0
        %1294 = vmatpush2.bf16.msra.mxu0 0
        %1295 = vmatprep.mubr.bf16.mxu0 0
        %1296 = vmatmul.mubr.bf16.gmra.mxu0 %v1258
        %v1297 = vpop.f32.mrf.mxu0
        %v1298 = vadd.f32 0.0, %v1297
        %v1299 = vpop.f32.mrf.mxu0
        %v1300 = vpop.f32.mrf.mxu0
        %v1301 = vpop.f32.mrf.mxu0
        %1302 = vdwg.mxu0
        %1304 = vrot.lane.b32.xlu0 %v1298, 4
        %v1305 = vpop.permute.xlu0 %1304
        %vm1307 = vcmask 64544
        %1308 = vst.msk [vmem:[#allocation3] sm:$0xff] %vm1307, %v1305
        %1309 = vrot.lane.b32.xlu0 %v1068, 120
        %v1310 = vpop.permute.xlu0 %1309
        %1311 = vrot.lane.b32.xlu0 %v1068, 88
        %v1312 = vpop.permute.xlu0 %1311
        %v1314 = vsel %vm1073, %v1310, 0
        %v1317 = vsel %vm1073, %v1312, 0
        %1319 = vmatprep.subr.bf16.mxu0 0
        %1320 = vmatpush1.bf16.xpose.msra.mxu0 0
        %1321 = vmatprep.subr.bf16.mxu0 0
        %1322 = vmatpush1.bf16.xpose.msra.mxu0 0
        %1323 = vmatprep.subr.bf16.mxu0 0
        %1324 = vmatpush1.bf16.xpose.msra.mxu0 0
        %1325 = vmatprep.subr.bf16.mxu0 0
        %1326 = vmatpush1.bf16.xpose.msra.mxu0 0
        %1327 = vmatprep.subr.bf16.mxu0 0
        %1328 = vmatpush1.bf16.xpose.msra.mxu0 0
        %1329 = vmatprep.subr.bf16.mxu0 0
        %1330 = vmatpush1.bf16.xpose.msra.mxu0 0
        %1331 = vmatprep.subr.bf16.mxu0 0
        %1332 = vmatpush1.bf16.xpose.msra.mxu0 0
        %1333 = vmatprep.subr.bf16.mxu0 0
        %1334 = vmatpush1.bf16.xpose.msra.mxu0 %v1317
        %1335 = vmatprep.subr.bf16.mxu0 0
        %1336 = vmatpush2.bf16.xpose.msra.mxu0 0
        %1337 = vmatprep.subr.bf16.mxu0 0
        %1338 = vmatpush2.bf16.xpose.msra.mxu0 0
        %1339 = vmatprep.subr.bf16.mxu0 0
        %1340 = vmatpush2.bf16.xpose.msra.mxu0 0
        %1341 = vmatprep.subr.bf16.mxu0 0
        %1342 = vmatpush2.bf16.xpose.msra.mxu0 0
        %1343 = vmatprep.subr.bf16.mxu0 0
        %1344 = vmatpush2.bf16.xpose.msra.mxu0 0
        %1345 = vmatprep.subr.bf16.mxu0 0
        %1346 = vmatpush2.bf16.xpose.msra.mxu0 0
        %1347 = vmatprep.subr.bf16.mxu0 0
        %1348 = vmatpush2.bf16.xpose.msra.mxu0 0
        %1349 = vmatprep.subr.bf16.mxu0 0
        %1350 = vmatpush2.bf16.xpose.msra.mxu0 0
        %1351 = vmatprep.mubr.bf16.mxu0 0
        %1352 = vmatmul.mubr.bf16.gmra.mxu0 %v1314
        %v1353 = vpop.f32.mrf.mxu0
        %v1354 = vadd.f32 %v1069, %v1353
        %v1355 = vpop.f32.mrf.mxu0
        %v1356 = vpop.f32.mrf.mxu0
        %v1357 = vpop.f32.mrf.mxu0
        %1358 = vdwg.mxu0
        %v1359 = vsel %vm1120, %v1354, -inf
        %1360 = vmax.xlane.f32.xlu0 %v1359
        %v1361 = vpop.xlane.xlu0 %1360
        %v1362 = vsub.f32 %v1354, %v1361
        %v1363 = vmul.f32 %v1362, 1.442695
        %v1364 = vpow.pop %v1363
        %v1365 = vsel %vm1120, %v1364, 0.0
        %1366 = vadd.xlane.f32.xlu0 %v1365
        %v1367 = vpop.xlane.xlu0 %1366
        %v1368 = vrcp.pop %v1367
        %v1369 = vmul.f32 %v1364, %v1368
        %v1370 = vpack.c.bf16 %v1369, %v1369
        %v1372 = vunpack.c.l.b16 %v1370
        %v1373 = vpack.c.b16 %v1372, %v1372
        %1374 = vrot.lane.b32.xlu0 %v1373, 16
        %v1375 = vpop.permute.xlu0 %1374
        %vm1377 = vcmask 191616
        %1378 = vst.msk [vmem:[%s942] sm:$0xf] %vm1377, %v1375
        %1379 = vrot.lane.b32.xlu0 %v1068, 56
        %v1380 = vpop.permute.xlu0 %1379
        %v1382 = vsel %vm1120, %v1370, 0
        %v1385 = vsel %vm1140, %v1380, 0
        %1387 = vmatprep.subr.bf16.mxu0 0
        %1388 = vmatpush1.bf16.msra.mxu0 0
        %1389 = vmatprep.subr.bf16.mxu0 0
        %1390 = vmatpush1.bf16.msra.mxu0 0
        %1391 = vmatprep.subr.bf16.mxu0 0
        %1392 = vmatpush1.bf16.msra.mxu0 0
        %1393 = vmatprep.subr.bf16.mxu0 0
        %1394 = vmatpush1.bf16.msra.mxu0 0
        %1395 = vmatprep.subr.bf16.mxu0 0
        %1396 = vmatpush1.bf16.msra.mxu0 0
        %1397 = vmatprep.subr.bf16.mxu0 0
        %1398 = vmatpush1.bf16.msra.mxu0 0
        %1399 = vmatprep.subr.bf16.mxu0 0
        %1400 = vmatpush1.bf16.msra.mxu0 0
        %1401 = vmatprep.subr.bf16.mxu0 0
        %1402 = vmatpush1.bf16.msra.mxu0 %v1385
        %1403 = vmatprep.subr.bf16.mxu0 0
        %1404 = vmatpush2.bf16.msra.mxu0 0
        %1405 = vmatprep.subr.bf16.mxu0 0
        %1406 = vmatpush2.bf16.msra.mxu0 0
        %1407 = vmatprep.subr.bf16.mxu0 0
        %1408 = vmatpush2.bf16.msra.mxu0 0
        %1409 = vmatprep.subr.bf16.mxu0 0
        %1410 = vmatpush2.bf16.msra.mxu0 0
        %1411 = vmatprep.subr.bf16.mxu0 0
        %1412 = vmatpush2.bf16.msra.mxu0 0
        %1413 = vmatprep.subr.bf16.mxu0 0
        %1414 = vmatpush2.bf16.msra.mxu0 0
        %1415 = vmatprep.subr.bf16.mxu0 0
        %1416 = vmatpush2.bf16.msra.mxu0 0
        %1417 = vmatprep.subr.bf16.mxu0 0
        %1418 = vmatpush2.bf16.msra.mxu0 0
        %1419 = vmatprep.mubr.bf16.mxu0 0
        %1420 = vmatmul.mubr.bf16.gmra.mxu0 %v1382
        %v1421 = vpop.f32.mrf.mxu0
        %v1422 = vadd.f32 0.0, %v1421
        %v1423 = vpop.f32.mrf.mxu0
        %v1424 = vpop.f32.mrf.mxu0
        %v1425 = vpop.f32.mrf.mxu0
        %1426 = vdwg.mxu0
        %1428 = vrot.lane.b32.xlu0 %v1422, 8
        %v1429 = vpop.permute.xlu0 %1428
        %vm1431 = vcmask 97344
        %1432 = vst.msk [vmem:[#allocation3] sm:$0xff] %vm1431, %v1429
        %1433 = vrot.lane.b32.xlu0 %v1068, 116
        %v1434 = vpop.permute.xlu0 %1433
        %1435 = vrot.lane.b32.xlu0 %v1068, 84
        %v1436 = vpop.permute.xlu0 %1435
        %v1438 = vsel %vm1073, %v1434, 0
        %v1441 = vsel %vm1073, %v1436, 0
        %1443 = vmatprep.subr.bf16.mxu0 0
        %1444 = vmatpush1.bf16.xpose.msra.mxu0 0
        %1445 = vmatprep.subr.bf16.mxu0 0
        %1446 = vmatpush1.bf16.xpose.msra.mxu0 0
        %1447 = vmatprep.subr.bf16.mxu0 0
        %1448 = vmatpush1.bf16.xpose.msra.mxu0 0
        %1449 = vmatprep.subr.bf16.mxu0 0
        %1450 = vmatpush1.bf16.xpose.msra.mxu0 0
        %1451 = vmatprep.subr.bf16.mxu0 0
        %1452 = vmatpush1.bf16.xpose.msra.mxu0 0
        %1453 = vmatprep.subr.bf16.mxu0 0
        %1454 = vmatpush1.bf16.xpose.msra.mxu0 0
        %1455 = vmatprep.subr.bf16.mxu0 0
        %1456 = vmatpush1.bf16.xpose.msra.mxu0 0
        %1457 = vmatprep.subr.bf16.mxu0 0
        %1458 = vmatpush1.bf16.xpose.msra.mxu0 %v1441
        %1459 = vmatprep.subr.bf16.mxu0 0
        %1460 = vmatpush2.bf16.xpose.msra.mxu0 0
        %1461 = vmatprep.subr.bf16.mxu0 0
        %1462 = vmatpush2.bf16.xpose.msra.mxu0 0
        %1463 = vmatprep.subr.bf16.mxu0 0
        %1464 = vmatpush2.bf16.xpose.msra.mxu0 0
        %1465 = vmatprep.subr.bf16.mxu0 0
        %1466 = vmatpush2.bf16.xpose.msra.mxu0 0
        %1467 = vmatprep.subr.bf16.mxu0 0
        %1468 = vmatpush2.bf16.xpose.msra.mxu0 0
        %1469 = vmatprep.subr.bf16.mxu0 0
        %1470 = vmatpush2.bf16.xpose.msra.mxu0 0
        %1471 = vmatprep.subr.bf16.mxu0 0
        %1472 = vmatpush2.bf16.xpose.msra.mxu0 0
        %1473 = vmatprep.subr.bf16.mxu0 0
        %1474 = vmatpush2.bf16.xpose.msra.mxu0 0
        %1475 = vmatprep.mubr.bf16.mxu0 0
        %1476 = vmatmul.mubr.bf16.gmra.mxu0 %v1438
        %v1477 = vpop.f32.mrf.mxu0
        %v1478 = vadd.f32 %v1069, %v1477
        %v1479 = vpop.f32.mrf.mxu0
        %v1480 = vpop.f32.mrf.mxu0
        %v1481 = vpop.f32.mrf.mxu0
        %1482 = vdwg.mxu0
        %v1483 = vsel %vm1120, %v1478, -inf
        %1484 = vmax.xlane.f32.xlu0 %v1483
        %v1485 = vpop.xlane.xlu0 %1484
        %v1486 = vsub.f32 %v1478, %v1485
        %v1487 = vmul.f32 %v1486, 1.442695
        %v1488 = vpow.pop %v1487
        %v1489 = vsel %vm1120, %v1488, 0.0
        %1490 = vadd.xlane.f32.xlu0 %v1489
        %v1491 = vpop.xlane.xlu0 %1490
        %v1492 = vrcp.pop %v1491
        %v1493 = vmul.f32 %v1488, %v1492
        %v1494 = vpack.c.bf16 %v1493, %v1493
        %v1496 = vunpack.c.l.b16 %v1494
        %v1497 = vpack.c.b16 %v1496, %v1496
        %1498 = vrot.lane.b32.xlu0 %v1497, 24
        %v1499 = vpop.permute.xlu0 %1498
        %vm1501 = vcmask 257216
        %1502 = vst.msk [vmem:[%s942] sm:$0xf] %vm1501, %v1499
        %1503 = vrot.lane.b32.xlu0 %v1068, 52
        %v1504 = vpop.permute.xlu0 %1503
        %v1506 = vsel %vm1120, %v1494, 0
        %v1509 = vsel %vm1140, %v1504, 0
        %1511 = vmatprep.subr.bf16.mxu0 0
        %1512 = vmatpush1.bf16.msra.mxu0 0
        %1513 = vmatprep.subr.bf16.mxu0 0
        %1514 = vmatpush1.bf16.msra.mxu0 0
        %1515 = vmatprep.subr.bf16.mxu0 0
        %1516 = vmatpush1.bf16.msra.mxu0 0
        %1517 = vmatprep.subr.bf16.mxu0 0
        %1518 = vmatpush1.bf16.msra.mxu0 0
        %1519 = vmatprep.subr.bf16.mxu0 0
        %1520 = vmatpush1.bf16.msra.mxu0 0
        %1521 = vmatprep.subr.bf16.mxu0 0
        %1522 = vmatpush1.bf16.msra.mxu0 0
        %1523 = vmatprep.subr.bf16.mxu0 0
        %1524 = vmatpush1.bf16.msra.mxu0 0
        %1525 = vmatprep.subr.bf16.mxu0 0
        %1526 = vmatpush1.bf16.msra.mxu0 %v1509
        %1527 = vmatprep.subr.bf16.mxu0 0
        %1528 = vmatpush2.bf16.msra.mxu0 0
        %1529 = vmatprep.subr.bf16.mxu0 0
        %1530 = vmatpush2.bf16.msra.mxu0 0
        %1531 = vmatprep.subr.bf16.mxu0 0
        %1532 = vmatpush2.bf16.msra.mxu0 0
        %1533 = vmatprep.subr.bf16.mxu0 0
        %1534 = vmatpush2.bf16.msra.mxu0 0
        %1535 = vmatprep.subr.bf16.mxu0 0
        %1536 = vmatpush2.bf16.msra.mxu0 0
        %1537 = vmatprep.subr.bf16.mxu0 0
        %1538 = vmatpush2.bf16.msra.mxu0 0
        %1539 = vmatprep.subr.bf16.mxu0 0
        %1540 = vmatpush2.bf16.msra.mxu0 0
        %1541 = vmatprep.subr.bf16.mxu0 0
        %1542 = vmatpush2.bf16.msra.mxu0 0
        %1543 = vmatprep.mubr.bf16.mxu0 0
        %1544 = vmatmul.mubr.bf16.gmra.mxu0 %v1506
        %v1545 = vpop.f32.mrf.mxu0
        %v1546 = vadd.f32 0.0, %v1545
        %v1547 = vpop.f32.mrf.mxu0
        %v1548 = vpop.f32.mrf.mxu0
        %v1549 = vpop.f32.mrf.mxu0
        %1550 = vdwg.mxu0
        %1552 = vrot.lane.b32.xlu0 %v1546, 12
        %v1553 = vpop.permute.xlu0 %1552
        %vm1555 = vcmask 130144
        %1556 = vst.msk [vmem:[#allocation3] sm:$0xff] %vm1555, %v1553
        %1557 = vrot.lane.b32.xlu0 %v1068, 112
        %v1558 = vpop.permute.xlu0 %1557
        %1559 = vrot.lane.b32.xlu0 %v1068, 80
        %v1560 = vpop.permute.xlu0 %1559
        %v1562 = vsel %vm1073, %v1558, 0
        %v1565 = vsel %vm1073, %v1560, 0
        %1567 = vmatprep.subr.bf16.mxu0 0
        %1568 = vmatpush1.bf16.xpose.msra.mxu0 0
        %1569 = vmatprep.subr.bf16.mxu0 0
        %1570 = vmatpush1.bf16.xpose.msra.mxu0 0
        %1571 = vmatprep.subr.bf16.mxu0 0
        %1572 = vmatpush1.bf16.xpose.msra.mxu0 0
        %1573 = vmatprep.subr.bf16.mxu0 0
        %1574 = vmatpush1.bf16.xpose.msra.mxu0 0
        %1575 = vmatprep.subr.bf16.mxu0 0
        %1576 = vmatpush1.bf16.xpose.msra.mxu0 0
        %1577 = vmatprep.subr.bf16.mxu0 0
        %1578 = vmatpush1.bf16.xpose.msra.mxu0 0
        %1579 = vmatprep.subr.bf16.mxu0 0
        %1580 = vmatpush1.bf16.xpose.msra.mxu0 0
        %1581 = vmatprep.subr.bf16.mxu0 0
        %1582 = vmatpush1.bf16.xpose.msra.mxu0 %v1565
        %1583 = vmatprep.subr.bf16.mxu0 0
        %1584 = vmatpush2.bf16.xpose.msra.mxu0 0
        %1585 = vmatprep.subr.bf16.mxu0 0
        %1586 = vmatpush2.bf16.xpose.msra.mxu0 0
        %1587 = vmatprep.subr.bf16.mxu0 0
        %1588 = vmatpush2.bf16.xpose.msra.mxu0 0
        %1589 = vmatprep.subr.bf16.mxu0 0
        %1590 = vmatpush2.bf16.xpose.msra.mxu0 0
        %1591 = vmatprep.subr.bf16.mxu0 0
        %1592 = vmatpush2.bf16.xpose.msra.mxu0 0
        %1593 = vmatprep.subr.bf16.mxu0 0
        %1594 = vmatpush2.bf16.xpose.msra.mxu0 0
        %1595 = vmatprep.subr.bf16.mxu0 0
        %1596 = vmatpush2.bf16.xpose.msra.mxu0 0
        %1597 = vmatprep.subr.bf16.mxu0 0
        %1598 = vmatpush2.bf16.xpose.msra.mxu0 0
        %1599 = vmatprep.mubr.bf16.mxu0 0
        %1600 = vmatmul.mubr.bf16.gmra.mxu0 %v1562
        %v1601 = vpop.f32.mrf.mxu0
        %v1602 = vadd.f32 %v1069, %v1601
        %v1603 = vpop.f32.mrf.mxu0
        %v1604 = vpop.f32.mrf.mxu0
        %v1605 = vpop.f32.mrf.mxu0
        %1606 = vdwg.mxu0
        %v1607 = vsel %vm1120, %v1602, -inf
        %1608 = vmax.xlane.f32.xlu0 %v1607
        %v1609 = vpop.xlane.xlu0 %1608
        %v1610 = vsub.f32 %v1602, %v1609
        %v1611 = vmul.f32 %v1610, 1.442695
        %v1612 = vpow.pop %v1611
        %v1613 = vsel %vm1120, %v1612, 0.0
        %1614 = vadd.xlane.f32.xlu0 %v1613
        %v1615 = vpop.xlane.xlu0 %1614
        %v1616 = vrcp.pop %v1615
        %v1617 = vmul.f32 %v1612, %v1616
        %v1618 = vpack.c.bf16 %v1617, %v1617
        %v1620 = vunpack.c.l.b16 %v1618
        %v1621 = vpack.c.b16 %v1620, %v1620
        %1622 = vrot.lane.b32.xlu0 %v1621, 32
        %v1623 = vpop.permute.xlu0 %1622
        %vm1625 = vcmask 322816
        %1626 = vst.msk [vmem:[%s942] sm:$0xf] %vm1625, %v1623
        %1627 = vrot.lane.b32.xlu0 %v1068, 48
        %v1628 = vpop.permute.xlu0 %1627
        %v1630 = vsel %vm1120, %v1618, 0
        %v1633 = vsel %vm1140, %v1628, 0
        %1635 = vmatprep.subr.bf16.mxu0 0
        %1636 = vmatpush1.bf16.msra.mxu0 0
        %1637 = vmatprep.subr.bf16.mxu0 0
        %1638 = vmatpush1.bf16.msra.mxu0 0
        %1639 = vmatprep.subr.bf16.mxu0 0
        %1640 = vmatpush1.bf16.msra.mxu0 0
        %1641 = vmatprep.subr.bf16.mxu0 0
        %1642 = vmatpush1.bf16.msra.mxu0 0
        %1643 = vmatprep.subr.bf16.mxu0 0
        %1644 = vmatpush1.bf16.msra.mxu0 0
        %1645 = vmatprep.subr.bf16.mxu0 0
        %1646 = vmatpush1.bf16.msra.mxu0 0
        %1647 = vmatprep.subr.bf16.mxu0 0
        %1648 = vmatpush1.bf16.msra.mxu0 0
        %1649 = vmatprep.subr.bf16.mxu0 0
        %1650 = vmatpush1.bf16.msra.mxu0 %v1633
        %1651 = vmatprep.subr.bf16.mxu0 0
        %1652 = vmatpush2.bf16.msra.mxu0 0
        %1653 = vmatprep.subr.bf16.mxu0 0
        %1654 = vmatpush2.bf16.msra.mxu0 0
        %1655 = vmatprep.subr.bf16.mxu0 0
        %1656 = vmatpush2.bf16.msra.mxu0 0
        %1657 = vmatprep.subr.bf16.mxu0 0
        %1658 = vmatpush2.bf16.msra.mxu0 0
        %1659 = vmatprep.subr.bf16.mxu0 0
        %1660 = vmatpush2.bf16.msra.mxu0 0
        %1661 = vmatprep.subr.bf16.mxu0 0
        %1662 = vmatpush2.bf16.msra.mxu0 0
        %1663 = vmatprep.subr.bf16.mxu0 0
        %1664 = vmatpush2.bf16.msra.mxu0 0
        %1665 = vmatprep.subr.bf16.mxu0 0
        %1666 = vmatpush2.bf16.msra.mxu0 0
        %1667 = vmatprep.mubr.bf16.mxu0 0
        %1668 = vmatmul.mubr.bf16.gmra.mxu0 %v1630
        %v1669 = vpop.f32.mrf.mxu0
        %v1670 = vadd.f32 0.0, %v1669
        %v1671 = vpop.f32.mrf.mxu0
        %v1672 = vpop.f32.mrf.mxu0
        %v1673 = vpop.f32.mrf.mxu0
        %1674 = vdwg.mxu0
        %1676 = vrot.lane.b32.xlu0 %v1670, 16
        %v1677 = vpop.permute.xlu0 %1676
        %vm1679 = vcmask 162944
        %1680 = vst.msk [vmem:[#allocation3] sm:$0xff] %vm1679, %v1677
        %1681 = vrot.lane.b32.xlu0 %v1068, 108
        %v1682 = vpop.permute.xlu0 %1681
        %1683 = vrot.lane.b32.xlu0 %v1068, 76
        %v1684 = vpop.permute.xlu0 %1683
        %v1686 = vsel %vm1073, %v1682, 0
        %v1689 = vsel %vm1073, %v1684, 0
        %1691 = vmatprep.subr.bf16.mxu0 0
        %1692 = vmatpush1.bf16.xpose.msra.mxu0 0
        %1693 = vmatprep.subr.bf16.mxu0 0
        %1694 = vmatpush1.bf16.xpose.msra.mxu0 0
        %1695 = vmatprep.subr.bf16.mxu0 0
        %1696 = vmatpush1.bf16.xpose.msra.mxu0 0
        %1697 = vmatprep.subr.bf16.mxu0 0
        %1698 = vmatpush1.bf16.xpose.msra.mxu0 0
        %1699 = vmatprep.subr.bf16.mxu0 0
        %1700 = vmatpush1.bf16.xpose.msra.mxu0 0
        %1701 = vmatprep.subr.bf16.mxu0 0
        %1702 = vmatpush1.bf16.xpose.msra.mxu0 0
        %1703 = vmatprep.subr.bf16.mxu0 0
        %1704 = vmatpush1.bf16.xpose.msra.mxu0 0
        %1705 = vmatprep.subr.bf16.mxu0 0
        %1706 = vmatpush1.bf16.xpose.msra.mxu0 %v1689
        %1707 = vmatprep.subr.bf16.mxu0 0
        %1708 = vmatpush2.bf16.xpose.msra.mxu0 0
        %1709 = vmatprep.subr.bf16.mxu0 0
        %1710 = vmatpush2.bf16.xpose.msra.mxu0 0
        %1711 = vmatprep.subr.bf16.mxu0 0
        %1712 = vmatpush2.bf16.xpose.msra.mxu0 0
        %1713 = vmatprep.subr.bf16.mxu0 0
        %1714 = vmatpush2.bf16.xpose.msra.mxu0 0
        %1715 = vmatprep.subr.bf16.mxu0 0
        %1716 = vmatpush2.bf16.xpose.msra.mxu0 0
        %1717 = vmatprep.subr.bf16.mxu0 0
        %1718 = vmatpush2.bf16.xpose.msra.mxu0 0
        %1719 = vmatprep.subr.bf16.mxu0 0
        %1720 = vmatpush2.bf16.xpose.msra.mxu0 0
        %1721 = vmatprep.subr.bf16.mxu0 0
        %1722 = vmatpush2.bf16.xpose.msra.mxu0 0
        %1723 = vmatprep.mubr.bf16.mxu0 0
        %1724 = vmatmul.mubr.bf16.gmra.mxu0 %v1686
        %v1725 = vpop.f32.mrf.mxu0
        %v1726 = vadd.f32 %v1069, %v1725
        %v1727 = vpop.f32.mrf.mxu0
        %v1728 = vpop.f32.mrf.mxu0
        %v1729 = vpop.f32.mrf.mxu0
        %1730 = vdwg.mxu0
        %v1731 = vsel %vm1120, %v1726, -inf
        %1732 = vmax.xlane.f32.xlu0 %v1731
        %v1733 = vpop.xlane.xlu0 %1732
        %v1734 = vsub.f32 %v1726, %v1733
        %v1735 = vmul.f32 %v1734, 1.442695
        %v1736 = vpow.pop %v1735
        %v1737 = vsel %vm1120, %v1736, 0.0
        %1738 = vadd.xlane.f32.xlu0 %v1737
        %v1739 = vpop.xlane.xlu0 %1738
        %v1740 = vrcp.pop %v1739
        %v1741 = vmul.f32 %v1736, %v1740
        %v1742 = vpack.c.bf16 %v1741, %v1741
        %v1744 = vunpack.c.l.b16 %v1742
        %v1745 = vpack.c.b16 %v1744, %v1744
        %1746 = vrot.lane.b32.xlu0 %v1745, 40
        %v1747 = vpop.permute.xlu0 %1746
        %vm1749 = vcmask 388416
        %1750 = vst.msk [vmem:[%s942] sm:$0xf] %vm1749, %v1747
        %1751 = vrot.lane.b32.xlu0 %v1068, 44
        %v1752 = vpop.permute.xlu0 %1751
        %v1754 = vsel %vm1120, %v1742, 0
        %v1757 = vsel %vm1140, %v1752, 0
        %1759 = vmatprep.subr.bf16.mxu0 0
        %1760 = vmatpush1.bf16.msra.mxu0 0
        %1761 = vmatprep.subr.bf16.mxu0 0
        %1762 = vmatpush1.bf16.msra.mxu0 0
        %1763 = vmatprep.subr.bf16.mxu0 0
        %1764 = vmatpush1.bf16.msra.mxu0 0
        %1765 = vmatprep.subr.bf16.mxu0 0
        %1766 = vmatpush1.bf16.msra.mxu0 0
        %1767 = vmatprep.subr.bf16.mxu0 0
        %1768 = vmatpush1.bf16.msra.mxu0 0
        %1769 = vmatprep.subr.bf16.mxu0 0
        %1770 = vmatpush1.bf16.msra.mxu0 0
        %1771 = vmatprep.subr.bf16.mxu0 0
        %1772 = vmatpush1.bf16.msra.mxu0 0
        %1773 = vmatprep.subr.bf16.mxu0 0
        %1774 = vmatpush1.bf16.msra.mxu0 %v1757
        %1775 = vmatprep.subr.bf16.mxu0 0
        %1776 = vmatpush2.bf16.msra.mxu0 0
        %1777 = vmatprep.subr.bf16.mxu0 0
        %1778 = vmatpush2.bf16.msra.mxu0 0
        %1779 = vmatprep.subr.bf16.mxu0 0
        %1780 = vmatpush2.bf16.msra.mxu0 0
        %1781 = vmatprep.subr.bf16.mxu0 0
        %1782 = vmatpush2.bf16.msra.mxu0 0
        %1783 = vmatprep.subr.bf16.mxu0 0
        %1784 = vmatpush2.bf16.msra.mxu0 0
        %1785 = vmatprep.subr.bf16.mxu0 0
        %1786 = vmatpush2.bf16.msra.mxu0 0
        %1787 = vmatprep.subr.bf16.mxu0 0
        %1788 = vmatpush2.bf16.msra.mxu0 0
        %1789 = vmatprep.subr.bf16.mxu0 0
        %1790 = vmatpush2.bf16.msra.mxu0 0
        %1791 = vmatprep.mubr.bf16.mxu0 0
        %1792 = vmatmul.mubr.bf16.gmra.mxu0 %v1754
        %v1793 = vpop.f32.mrf.mxu0
        %v1794 = vadd.f32 0.0, %v1793
        %v1795 = vpop.f32.mrf.mxu0
        %v1796 = vpop.f32.mrf.mxu0
        %v1797 = vpop.f32.mrf.mxu0
        %1798 = vdwg.mxu0
        %1800 = vrot.lane.b32.xlu0 %v1794, 20
        %v1801 = vpop.permute.xlu0 %1800
        %vm1803 = vcmask 195744
        %1804 = vst.msk [vmem:[#allocation3] sm:$0xff] %vm1803, %v1801
        %1805 = vrot.lane.b32.xlu0 %v1068, 104
        %v1806 = vpop.permute.xlu0 %1805
        %1807 = vrot.lane.b32.xlu0 %v1068, 72
        %v1808 = vpop.permute.xlu0 %1807
        %v1810 = vsel %vm1073, %v1806, 0
        %v1813 = vsel %vm1073, %v1808, 0
        %1815 = vmatprep.subr.bf16.mxu0 0
        %1816 = vmatpush1.bf16.xpose.msra.mxu0 0
        %1817 = vmatprep.subr.bf16.mxu0 0
        %1818 = vmatpush1.bf16.xpose.msra.mxu0 0
        %1819 = vmatprep.subr.bf16.mxu0 0
        %1820 = vmatpush1.bf16.xpose.msra.mxu0 0
        %1821 = vmatprep.subr.bf16.mxu0 0
        %1822 = vmatpush1.bf16.xpose.msra.mxu0 0
        %1823 = vmatprep.subr.bf16.mxu0 0
        %1824 = vmatpush1.bf16.xpose.msra.mxu0 0
        %1825 = vmatprep.subr.bf16.mxu0 0
        %1826 = vmatpush1.bf16.xpose.msra.mxu0 0
        %1827 = vmatprep.subr.bf16.mxu0 0
        %1828 = vmatpush1.bf16.xpose.msra.mxu0 0
        %1829 = vmatprep.subr.bf16.mxu0 0
        %1830 = vmatpush1.bf16.xpose.msra.mxu0 %v1813
        %1831 = vmatprep.subr.bf16.mxu0 0
        %1832 = vmatpush2.bf16.xpose.msra.mxu0 0
        %1833 = vmatprep.subr.bf16.mxu0 0
        %1834 = vmatpush2.bf16.xpose.msra.mxu0 0
        %1835 = vmatprep.subr.bf16.mxu0 0
        %1836 = vmatpush2.bf16.xpose.msra.mxu0 0
        %1837 = vmatprep.subr.bf16.mxu0 0
        %1838 = vmatpush2.bf16.xpose.msra.mxu0 0
        %1839 = vmatprep.subr.bf16.mxu0 0
        %1840 = vmatpush2.bf16.xpose.msra.mxu0 0
        %1841 = vmatprep.subr.bf16.mxu0 0
        %1842 = vmatpush2.bf16.xpose.msra.mxu0 0
        %1843 = vmatprep.subr.bf16.mxu0 0
        %1844 = vmatpush2.bf16.xpose.msra.mxu0 0
        %1845 = vmatprep.subr.bf16.mxu0 0
        %1846 = vmatpush2.bf16.xpose.msra.mxu0 0
        %1847 = vmatprep.mubr.bf16.mxu0 0
        %1848 = vmatmul.mubr.bf16.gmra.mxu0 %v1810
        %v1849 = vpop.f32.mrf.mxu0
        %v1850 = vadd.f32 %v1069, %v1849
        %v1851 = vpop.f32.mrf.mxu0
        %v1852 = vpop.f32.mrf.mxu0
        %v1853 = vpop.f32.mrf.mxu0
        %1854 = vdwg.mxu0
        %v1855 = vsel %vm1120, %v1850, -inf
        %1856 = vmax.xlane.f32.xlu0 %v1855
        %v1857 = vpop.xlane.xlu0 %1856
        %v1858 = vsub.f32 %v1850, %v1857
        %v1859 = vmul.f32 %v1858, 1.442695
        %v1860 = vpow.pop %v1859
        %v1861 = vsel %vm1120, %v1860, 0.0
        %1862 = vadd.xlane.f32.xlu0 %v1861
        %v1863 = vpop.xlane.xlu0 %1862
        %v1864 = vrcp.pop %v1863
        %v1865 = vmul.f32 %v1860, %v1864
        %v1866 = vpack.c.bf16 %v1865, %v1865
        %v1868 = vunpack.c.l.b16 %v1866
        %v1869 = vpack.c.b16 %v1868, %v1868
        %1870 = vrot.lane.b32.xlu0 %v1869, 48
        %v1871 = vpop.permute.xlu0 %1870
        %vm1873 = vcmask 454016
        %1874 = vst.msk [vmem:[%s942] sm:$0xf] %vm1873, %v1871
        %1875 = vrot.lane.b32.xlu0 %v1068, 40
        %v1876 = vpop.permute.xlu0 %1875
        %v1878 = vsel %vm1120, %v1866, 0
        %v1881 = vsel %vm1140, %v1876, 0
        %1883 = vmatprep.subr.bf16.mxu0 0
        %1884 = vmatpush1.bf16.msra.mxu0 0
        %1885 = vmatprep.subr.bf16.mxu0 0
        %1886 = vmatpush1.bf16.msra.mxu0 0
        %1887 = vmatprep.subr.bf16.mxu0 0
        %1888 = vmatpush1.bf16.msra.mxu0 0
        %1889 = vmatprep.subr.bf16.mxu0 0
        %1890 = vmatpush1.bf16.msra.mxu0 0
        %1891 = vmatprep.subr.bf16.mxu0 0
        %1892 = vmatpush1.bf16.msra.mxu0 0
        %1893 = vmatprep.subr.bf16.mxu0 0
        %1894 = vmatpush1.bf16.msra.mxu0 0
        %1895 = vmatprep.subr.bf16.mxu0 0
        %1896 = vmatpush1.bf16.msra.mxu0 0
        %1897 = vmatprep.subr.bf16.mxu0 0
        %1898 = vmatpush1.bf16.msra.mxu0 %v1881
        %1899 = vmatprep.subr.bf16.mxu0 0
        %1900 = vmatpush2.bf16.msra.mxu0 0
        %1901 = vmatprep.subr.bf16.mxu0 0
        %1902 = vmatpush2.bf16.msra.mxu0 0
        %1903 = vmatprep.subr.bf16.mxu0 0
        %1904 = vmatpush2.bf16.msra.mxu0 0
        %1905 = vmatprep.subr.bf16.mxu0 0
        %1906 = vmatpush2.bf16.msra.mxu0 0
        %1907 = vmatprep.subr.bf16.mxu0 0
        %1908 = vmatpush2.bf16.msra.mxu0 0
        %1909 = vmatprep.subr.bf16.mxu0 0
        %1910 = vmatpush2.bf16.msra.mxu0 0
        %1911 = vmatprep.subr.bf16.mxu0 0
        %1912 = vmatpush2.bf16.msra.mxu0 0
        %1913 = vmatprep.subr.bf16.mxu0 0
        %1914 = vmatpush2.bf16.msra.mxu0 0
        %1915 = vmatprep.mubr.bf16.mxu0 0
        %1916 = vmatmul.mubr.bf16.gmra.mxu0 %v1878
        %v1917 = vpop.f32.mrf.mxu0
        %v1918 = vadd.f32 0.0, %v1917
        %v1919 = vpop.f32.mrf.mxu0
        %v1920 = vpop.f32.mrf.mxu0
        %v1921 = vpop.f32.mrf.mxu0
        %1922 = vdwg.mxu0
        %1924 = vrot.lane.b32.xlu0 %v1918, 24
        %v1925 = vpop.permute.xlu0 %1924
        %vm1927 = vcmask 228544
        %1928 = vst.msk [vmem:[#allocation3] sm:$0xff] %vm1927, %v1925
        %1929 = vrot.lane.b32.xlu0 %v1068, 100
        %v1930 = vpop.permute.xlu0 %1929
        %1931 = vrot.lane.b32.xlu0 %v1068, 68
        %v1932 = vpop.permute.xlu0 %1931
        %v1934 = vsel %vm1073, %v1930, 0
        %v1937 = vsel %vm1073, %v1932, 0
        %1939 = vmatprep.subr.bf16.mxu0 0
        %1940 = vmatpush1.bf16.xpose.msra.mxu0 0
        %1941 = vmatprep.subr.bf16.mxu0 0
        %1942 = vmatpush1.bf16.xpose.msra.mxu0 0
        %1943 = vmatprep.subr.bf16.mxu0 0
        %1944 = vmatpush1.bf16.xpose.msra.mxu0 0
        %1945 = vmatprep.subr.bf16.mxu0 0
        %1946 = vmatpush1.bf16.xpose.msra.mxu0 0
        %1947 = vmatprep.subr.bf16.mxu0 0
        %1948 = vmatpush1.bf16.xpose.msra.mxu0 0
        %1949 = vmatprep.subr.bf16.mxu0 0
        %1950 = vmatpush1.bf16.xpose.msra.mxu0 0
        %1951 = vmatprep.subr.bf16.mxu0 0
        %1952 = vmatpush1.bf16.xpose.msra.mxu0 0
        %1953 = vmatprep.subr.bf16.mxu0 0
        %1954 = vmatpush1.bf16.xpose.msra.mxu0 %v1937
        %1955 = vmatprep.subr.bf16.mxu0 0
        %1956 = vmatpush2.bf16.xpose.msra.mxu0 0
        %1957 = vmatprep.subr.bf16.mxu0 0
        %1958 = vmatpush2.bf16.xpose.msra.mxu0 0
        %1959 = vmatprep.subr.bf16.mxu0 0
        %1960 = vmatpush2.bf16.xpose.msra.mxu0 0
        %1961 = vmatprep.subr.bf16.mxu0 0
        %1962 = vmatpush2.bf16.xpose.msra.mxu0 0
        %1963 = vmatprep.subr.bf16.mxu0 0
        %1964 = vmatpush2.bf16.xpose.msra.mxu0 0
        %1965 = vmatprep.subr.bf16.mxu0 0
        %1966 = vmatpush2.bf16.xpose.msra.mxu0 0
        %1967 = vmatprep.subr.bf16.mxu0 0
        %1968 = vmatpush2.bf16.xpose.msra.mxu0 0
        %1969 = vmatprep.subr.bf16.mxu0 0
        %1970 = vmatpush2.bf16.xpose.msra.mxu0 0
        %1971 = vmatprep.mubr.bf16.mxu0 0
        %1972 = vmatmul.mubr.bf16.gmra.mxu0 %v1934
        %v1973 = vpop.f32.mrf.mxu0
        %v1974 = vadd.f32 %v1069, %v1973
        %v1975 = vpop.f32.mrf.mxu0
        %v1976 = vpop.f32.mrf.mxu0
        %v1977 = vpop.f32.mrf.mxu0
        %1978 = vdwg.mxu0
        %v1979 = vsel %vm1120, %v1974, -inf
        %1980 = vmax.xlane.f32.xlu0 %v1979
        %v1981 = vpop.xlane.xlu0 %1980
        %v1982 = vsub.f32 %v1974, %v1981
        %v1983 = vmul.f32 %v1982, 1.442695
        %v1984 = vpow.pop %v1983
        %v1985 = vsel %vm1120, %v1984, 0.0
        %1986 = vadd.xlane.f32.xlu0 %v1985
        %v1987 = vpop.xlane.xlu0 %1986
        %v1988 = vrcp.pop %v1987
        %v1989 = vmul.f32 %v1984, %v1988
        %v1990 = vpack.c.bf16 %v1989, %v1989
        %v1992 = vunpack.c.l.b16 %v1990
        %v1993 = vpack.c.b16 %v1992, %v1992
        %1994 = vrot.lane.b32.xlu0 %v1993, 56
        %v1995 = vpop.permute.xlu0 %1994
        %vm1997 = vcmask 519616
        %1998 = vst.msk [vmem:[%s942] sm:$0xf] %vm1997, %v1995
        %1999 = vrot.lane.b32.xlu0 %v1068, 36
        %v2000 = vpop.permute.xlu0 %1999
        %v2002 = vsel %vm1120, %v1990, 0
        %v2005 = vsel %vm1140, %v2000, 0
        %2007 = vmatprep.subr.bf16.mxu0 0
        %2008 = vmatpush1.bf16.msra.mxu0 0
        %2009 = vmatprep.subr.bf16.mxu0 0
        %2010 = vmatpush1.bf16.msra.mxu0 0
        %2011 = vmatprep.subr.bf16.mxu0 0
        %2012 = vmatpush1.bf16.msra.mxu0 0
        %2013 = vmatprep.subr.bf16.mxu0 0
        %2014 = vmatpush1.bf16.msra.mxu0 0
        %2015 = vmatprep.subr.bf16.mxu0 0
        %2016 = vmatpush1.bf16.msra.mxu0 0
        %2017 = vmatprep.subr.bf16.mxu0 0
        %2018 = vmatpush1.bf16.msra.mxu0 0
        %2019 = vmatprep.subr.bf16.mxu0 0
        %2020 = vmatpush1.bf16.msra.mxu0 0
        %2021 = vmatprep.subr.bf16.mxu0 0
        %2022 = vmatpush1.bf16.msra.mxu0 %v2005
        %2023 = vmatprep.subr.bf16.mxu0 0
        %2024 = vmatpush2.bf16.msra.mxu0 0
        %2025 = vmatprep.subr.bf16.mxu0 0
        %2026 = vmatpush2.bf16.msra.mxu0 0
        %2027 = vmatprep.subr.bf16.mxu0 0
        %2028 = vmatpush2.bf16.msra.mxu0 0
        %2029 = vmatprep.subr.bf16.mxu0 0
        %2030 = vmatpush2.bf16.msra.mxu0 0
        %2031 = vmatprep.subr.bf16.mxu0 0
        %2032 = vmatpush2.bf16.msra.mxu0 0
        %2033 = vmatprep.subr.bf16.mxu0 0
        %2034 = vmatpush2.bf16.msra.mxu0 0
        %2035 = vmatprep.subr.bf16.mxu0 0
        %2036 = vmatpush2.bf16.msra.mxu0 0
        %2037 = vmatprep.subr.bf16.mxu0 0
        %2038 = vmatpush2.bf16.msra.mxu0 0
        %2039 = vmatprep.mubr.bf16.mxu0 0
        %2040 = vmatmul.mubr.bf16.gmra.mxu0 %v2002
        %v2041 = vpop.f32.mrf.mxu0
        %v2042 = vadd.f32 0.0, %v2041
        %v2043 = vpop.f32.mrf.mxu0
        %v2044 = vpop.f32.mrf.mxu0
        %v2045 = vpop.f32.mrf.mxu0
        %2046 = vdwg.mxu0
        %2048 = vrot.lane.b32.xlu0 %v2042, 28
        %v2049 = vpop.permute.xlu0 %2048
        %vm2051 = vcmask 261344
        %2052 = vst.msk [vmem:[#allocation3] sm:$0xff] %vm2051, %v2049
        %s2053 = scalar_lea.vmem [#allocation9], 8
        %v2054 = vld [vmem:[%s2053] sm:$0xff]
        %v2055 = vrot.slane %v1068, 4
        %2056 = vrot.lane.b32.xlu0 %v2055, 96
        %v2057 = vpop.permute.xlu0 %2056
        %v2059 = vsel %vm1073, %v2055, 0
        %v2062 = vsel %vm1073, %v2057, 0
        %2064 = vmatprep.subr.bf16.mxu0 0
        %2065 = vmatpush1.bf16.xpose.msra.mxu0 0
        %2066 = vmatprep.subr.bf16.mxu0 0
        %2067 = vmatpush1.bf16.xpose.msra.mxu0 0
        %2068 = vmatprep.subr.bf16.mxu0 0
        %2069 = vmatpush1.bf16.xpose.msra.mxu0 0
        %2070 = vmatprep.subr.bf16.mxu0 0
        %2071 = vmatpush1.bf16.xpose.msra.mxu0 0
        %2072 = vmatprep.subr.bf16.mxu0 0
        %2073 = vmatpush1.bf16.xpose.msra.mxu0 0
        %2074 = vmatprep.subr.bf16.mxu0 0
        %2075 = vmatpush1.bf16.xpose.msra.mxu0 0
        %2076 = vmatprep.subr.bf16.mxu0 0
        %2077 = vmatpush1.bf16.xpose.msra.mxu0 0
        %2078 = vmatprep.subr.bf16.mxu0 0
        %2079 = vmatpush1.bf16.xpose.msra.mxu0 %v2062
        %2080 = vmatprep.subr.bf16.mxu0 0
        %2081 = vmatpush2.bf16.xpose.msra.mxu0 0
        %2082 = vmatprep.subr.bf16.mxu0 0
        %2083 = vmatpush2.bf16.xpose.msra.mxu0 0
        %2084 = vmatprep.subr.bf16.mxu0 0
        %2085 = vmatpush2.bf16.xpose.msra.mxu0 0
        %2086 = vmatprep.subr.bf16.mxu0 0
        %2087 = vmatpush2.bf16.xpose.msra.mxu0 0
        %2088 = vmatprep.subr.bf16.mxu0 0
        %2089 = vmatpush2.bf16.xpose.msra.mxu0 0
        %2090 = vmatprep.subr.bf16.mxu0 0
        %2091 = vmatpush2.bf16.xpose.msra.mxu0 0
        %2092 = vmatprep.subr.bf16.mxu0 0
        %2093 = vmatpush2.bf16.xpose.msra.mxu0 0
        %2094 = vmatprep.subr.bf16.mxu0 0
        %2095 = vmatpush2.bf16.xpose.msra.mxu0 0
        %2096 = vmatprep.mubr.bf16.mxu0 0
        %2097 = vmatmul.mubr.bf16.gmra.mxu0 %v2059
        %v2098 = vpop.f32.mrf.mxu0
        %v2099 = vadd.f32 %v2054, %v2098
        %v2100 = vpop.f32.mrf.mxu0
        %v2101 = vpop.f32.mrf.mxu0
        %v2102 = vpop.f32.mrf.mxu0
        %2103 = vdwg.mxu0
        %v2104 = vsel %vm1120, %v2099, -inf
        %2105 = vmax.xlane.f32.xlu0 %v2104
        %v2106 = vpop.xlane.xlu0 %2105
        %v2107 = vsub.f32 %v2099, %v2106
        %v2108 = vmul.f32 %v2107, 1.442695
        %v2109 = vpow.pop %v2108
        %v2110 = vsel %vm1120, %v2109, 0.0
        %2111 = vadd.xlane.f32.xlu0 %v2110
        %v2112 = vpop.xlane.xlu0 %2111
        %v2113 = vrcp.pop %v2112
        %v2114 = vmul.f32 %v2109, %v2113
        %v2115 = vpack.c.bf16 %v2114, %v2114
        %s2116 = scalar_lea.vmem %s942, 4 [#allocation16]
        %2117 = vst.msk [vmem:[%s2116] sm:$0xf] %vm1133, %v2115
        %2118 = vrot.lane.b32.xlu0 %v2055, 64
        %v2119 = vpop.permute.xlu0 %2118
        %v2121 = vsel %vm1120, %v2115, 0
        %v2124 = vsel %vm1140, %v2119, 0
        %2126 = vmatprep.subr.bf16.mxu0 0
        %2127 = vmatpush1.bf16.msra.mxu0 0
        %2128 = vmatprep.subr.bf16.mxu0 0
        %2129 = vmatpush1.bf16.msra.mxu0 0
        %2130 = vmatprep.subr.bf16.mxu0 0
        %2131 = vmatpush1.bf16.msra.mxu0 0
        %2132 = vmatprep.subr.bf16.mxu0 0
        %2133 = vmatpush1.bf16.msra.mxu0 0
        %2134 = vmatprep.subr.bf16.mxu0 0
        %2135 = vmatpush1.bf16.msra.mxu0 0
        %2136 = vmatprep.subr.bf16.mxu0 0
        %2137 = vmatpush1.bf16.msra.mxu0 0
        %2138 = vmatprep.subr.bf16.mxu0 0
        %2139 = vmatpush1.bf16.msra.mxu0 0
        %2140 = vmatprep.subr.bf16.mxu0 0
        %2141 = vmatpush1.bf16.msra.mxu0 %v2124
        %2142 = vmatprep.subr.bf16.mxu0 0
        %2143 = vmatpush2.bf16.msra.mxu0 0
        %2144 = vmatprep.subr.bf16.mxu0 0
        %2145 = vmatpush2.bf16.msra.mxu0 0
        %2146 = vmatprep.subr.bf16.mxu0 0
        %2147 = vmatpush2.bf16.msra.mxu0 0
        %2148 = vmatprep.subr.bf16.mxu0 0
        %2149 = vmatpush2.bf16.msra.mxu0 0
        %2150 = vmatprep.subr.bf16.mxu0 0
        %2151 = vmatpush2.bf16.msra.mxu0 0
        %2152 = vmatprep.subr.bf16.mxu0 0
        %2153 = vmatpush2.bf16.msra.mxu0 0
        %2154 = vmatprep.subr.bf16.mxu0 0
        %2155 = vmatpush2.bf16.msra.mxu0 0
        %2156 = vmatprep.subr.bf16.mxu0 0
        %2157 = vmatpush2.bf16.msra.mxu0 0
        %2158 = vmatprep.mubr.bf16.mxu0 0
        %2159 = vmatmul.mubr.bf16.gmra.mxu0 %v2121
        %v2160 = vpop.f32.mrf.mxu0
        %v2161 = vadd.f32 0.0, %v2160
        %v2162 = vpop.f32.mrf.mxu0
        %v2163 = vpop.f32.mrf.mxu0
        %v2164 = vpop.f32.mrf.mxu0
        %2165 = vdwg.mxu0
        %2166 = vst.msk [vmem:[#allocation3 + $0x8] sm:$0xff] %vm1073, %v2161
        %2167 = vrot.lane.b32.xlu0 %v2055, 124
        %v2168 = vpop.permute.xlu0 %2167
        %2169 = vrot.lane.b32.xlu0 %v2055, 92
        %v2170 = vpop.permute.xlu0 %2169
        %v2172 = vsel %vm1073, %v2168, 0
        %v2175 = vsel %vm1073, %v2170, 0
        %2177 = vmatprep.subr.bf16.mxu0 0
        %2178 = vmatpush1.bf16.xpose.msra.mxu0 0
        %2179 = vmatprep.subr.bf16.mxu0 0
        %2180 = vmatpush1.bf16.xpose.msra.mxu0 0
        %2181 = vmatprep.subr.bf16.mxu0 0
        %2182 = vmatpush1.bf16.xpose.msra.mxu0 0
        %2183 = vmatprep.subr.bf16.mxu0 0
        %2184 = vmatpush1.bf16.xpose.msra.mxu0 0
        %2185 = vmatprep.subr.bf16.mxu0 0
        %2186 = vmatpush1.bf16.xpose.msra.mxu0 0
        %2187 = vmatprep.subr.bf16.mxu0 0
        %2188 = vmatpush1.bf16.xpose.msra.mxu0 0
        %2189 = vmatprep.subr.bf16.mxu0 0
        %2190 = vmatpush1.bf16.xpose.msra.mxu0 0
        %2191 = vmatprep.subr.bf16.mxu0 0
        %2192 = vmatpush1.bf16.xpose.msra.mxu0 %v2175
        %2193 = vmatprep.subr.bf16.mxu0 0
        %2194 = vmatpush2.bf16.xpose.msra.mxu0 0
        %2195 = vmatprep.subr.bf16.mxu0 0
        %2196 = vmatpush2.bf16.xpose.msra.mxu0 0
        %2197 = vmatprep.subr.bf16.mxu0 0
        %2198 = vmatpush2.bf16.xpose.msra.mxu0 0
        %2199 = vmatprep.subr.bf16.mxu0 0
        %2200 = vmatpush2.bf16.xpose.msra.mxu0 0
        %2201 = vmatprep.subr.bf16.mxu0 0
        %2202 = vmatpush2.bf16.xpose.msra.mxu0 0
        %2203 = vmatprep.subr.bf16.mxu0 0
        %2204 = vmatpush2.bf16.xpose.msra.mxu0 0
        %2205 = vmatprep.subr.bf16.mxu0 0
        %2206 = vmatpush2.bf16.xpose.msra.mxu0 0
        %2207 = vmatprep.subr.bf16.mxu0 0
        %2208 = vmatpush2.bf16.xpose.msra.mxu0 0
        %2209 = vmatprep.mubr.bf16.mxu0 0
        %2210 = vmatmul.mubr.bf16.gmra.mxu0 %v2172
        %v2211 = vpop.f32.mrf.mxu0
        %v2212 = vadd.f32 %v2054, %v2211
        %v2213 = vpop.f32.mrf.mxu0
        %v2214 = vpop.f32.mrf.mxu0
        %v2215 = vpop.f32.mrf.mxu0
        %2216 = vdwg.mxu0
        %v2217 = vsel %vm1120, %v2212, -inf
        %2218 = vmax.xlane.f32.xlu0 %v2217
        %v2219 = vpop.xlane.xlu0 %2218
        %v2220 = vsub.f32 %v2212, %v2219
        %v2221 = vmul.f32 %v2220, 1.442695
        %v2222 = vpow.pop %v2221
        %v2223 = vsel %vm1120, %v2222, 0.0
        %2224 = vadd.xlane.f32.xlu0 %v2223
        %v2225 = vpop.xlane.xlu0 %2224
        %v2226 = vrcp.pop %v2225
        %v2227 = vmul.f32 %v2222, %v2226
        %v2228 = vpack.c.bf16 %v2227, %v2227
        %v2230 = vunpack.c.l.b16 %v2228
        %v2231 = vpack.c.b16 %v2230, %v2230
        %2232 = vrot.lane.b32.xlu0 %v2231, 8
        %v2233 = vpop.permute.xlu0 %2232
        %2235 = vst.msk [vmem:[%s2116] sm:$0xf] %vm1253, %v2233
        %2236 = vrot.lane.b32.xlu0 %v2055, 60
        %v2237 = vpop.permute.xlu0 %2236
        %v2239 = vsel %vm1120, %v2228, 0
        %v2242 = vsel %vm1140, %v2237, 0
        %2244 = vmatprep.subr.bf16.mxu0 0
        %2245 = vmatpush1.bf16.msra.mxu0 0
        %2246 = vmatprep.subr.bf16.mxu0 0
        %2247 = vmatpush1.bf16.msra.mxu0 0
        %2248 = vmatprep.subr.bf16.mxu0 0
        %2249 = vmatpush1.bf16.msra.mxu0 0
        %2250 = vmatprep.subr.bf16.mxu0 0
        %2251 = vmatpush1.bf16.msra.mxu0 0
        %2252 = vmatprep.subr.bf16.mxu0 0
        %2253 = vmatpush1.bf16.msra.mxu0 0
        %2254 = vmatprep.subr.bf16.mxu0 0
        %2255 = vmatpush1.bf16.msra.mxu0 0
        %2256 = vmatprep.subr.bf16.mxu0 0
        %2257 = vmatpush1.bf16.msra.mxu0 0
        %2258 = vmatprep.subr.bf16.mxu0 0
        %2259 = vmatpush1.bf16.msra.mxu0 %v2242
        %2260 = vmatprep.subr.bf16.mxu0 0
        %2261 = vmatpush2.bf16.msra.mxu0 0
        %2262 = vmatprep.subr.bf16.mxu0 0
        %2263 = vmatpush2.bf16.msra.mxu0 0
        %2264 = vmatprep.subr.bf16.mxu0 0
        %2265 = vmatpush2.bf16.msra.mxu0 0
        %2266 = vmatprep.subr.bf16.mxu0 0
        %2267 = vmatpush2.bf16.msra.mxu0 0
        %2268 = vmatprep.subr.bf16.mxu0 0
        %2269 = vmatpush2.bf16.msra.mxu0 0
        %2270 = vmatprep.subr.bf16.mxu0 0
        %2271 = vmatpush2.bf16.msra.mxu0 0
        %2272 = vmatprep.subr.bf16.mxu0 0
        %2273 = vmatpush2.bf16.msra.mxu0 0
        %2274 = vmatprep.subr.bf16.mxu0 0
        %2275 = vmatpush2.bf16.msra.mxu0 0
        %2276 = vmatprep.mubr.bf16.mxu0 0
        %2277 = vmatmul.mubr.bf16.gmra.mxu0 %v2239
        %v2278 = vpop.f32.mrf.mxu0
        %v2279 = vadd.f32 0.0, %v2278
        %v2280 = vpop.f32.mrf.mxu0
        %v2281 = vpop.f32.mrf.mxu0
        %v2282 = vpop.f32.mrf.mxu0
        %2283 = vdwg.mxu0
        %2285 = vrot.lane.b32.xlu0 %v2279, 4
        %v2286 = vpop.permute.xlu0 %2285
        %2288 = vst.msk [vmem:[#allocation3 + $0x8] sm:$0xff] %vm1307, %v2286
        %2289 = vrot.lane.b32.xlu0 %v2055, 120
        %v2290 = vpop.permute.xlu0 %2289
        %2291 = vrot.lane.b32.xlu0 %v2055, 88
        %v2292 = vpop.permute.xlu0 %2291
        %v2294 = vsel %vm1073, %v2290, 0
        %v2297 = vsel %vm1073, %v2292, 0
        %2299 = vmatprep.subr.bf16.mxu0 0
        %2300 = vmatpush1.bf16.xpose.msra.mxu0 0
        %2301 = vmatprep.subr.bf16.mxu0 0
        %2302 = vmatpush1.bf16.xpose.msra.mxu0 0
        %2303 = vmatprep.subr.bf16.mxu0 0
        %2304 = vmatpush1.bf16.xpose.msra.mxu0 0
        %2305 = vmatprep.subr.bf16.mxu0 0
        %2306 = vmatpush1.bf16.xpose.msra.mxu0 0
        %2307 = vmatprep.subr.bf16.mxu0 0
        %2308 = vmatpush1.bf16.xpose.msra.mxu0 0
        %2309 = vmatprep.subr.bf16.mxu0 0
        %2310 = vmatpush1.bf16.xpose.msra.mxu0 0
        %2311 = vmatprep.subr.bf16.mxu0 0
        %2312 = vmatpush1.bf16.xpose.msra.mxu0 0
        %2313 = vmatprep.subr.bf16.mxu0 0
        %2314 = vmatpush1.bf16.xpose.msra.mxu0 %v2297
        %2315 = vmatprep.subr.bf16.mxu0 0
        %2316 = vmatpush2.bf16.xpose.msra.mxu0 0
        %2317 = vmatprep.subr.bf16.mxu0 0
        %2318 = vmatpush2.bf16.xpose.msra.mxu0 0
        %2319 = vmatprep.subr.bf16.mxu0 0
        %2320 = vmatpush2.bf16.xpose.msra.mxu0 0
        %2321 = vmatprep.subr.bf16.mxu0 0
        %2322 = vmatpush2.bf16.xpose.msra.mxu0 0
        %2323 = vmatprep.subr.bf16.mxu0 0
        %2324 = vmatpush2.bf16.xpose.msra.mxu0 0
        %2325 = vmatprep.subr.bf16.mxu0 0
        %2326 = vmatpush2.bf16.xpose.msra.mxu0 0
        %2327 = vmatprep.subr.bf16.mxu0 0
        %2328 = vmatpush2.bf16.xpose.msra.mxu0 0
        %2329 = vmatprep.subr.bf16.mxu0 0
        %2330 = vmatpush2.bf16.xpose.msra.mxu0 0
        %2331 = vmatprep.mubr.bf16.mxu0 0
        %2332 = vmatmul.mubr.bf16.gmra.mxu0 %v2294
        %v2333 = vpop.f32.mrf.mxu0
        %v2334 = vadd.f32 %v2054, %v2333
        %v2335 = vpop.f32.mrf.mxu0
        %v2336 = vpop.f32.mrf.mxu0
        %v2337 = vpop.f32.mrf.mxu0
        %2338 = vdwg.mxu0
        %v2339 = vsel %vm1120, %v2334, -inf
        %2340 = vmax.xlane.f32.xlu0 %v2339
        %v2341 = vpop.xlane.xlu0 %2340
        %v2342 = vsub.f32 %v2334, %v2341
        %v2343 = vmul.f32 %v2342, 1.442695
        %v2344 = vpow.pop %v2343
        %v2345 = vsel %vm1120, %v2344, 0.0
        %2346 = vadd.xlane.f32.xlu0 %v2345
        %v2347 = vpop.xlane.xlu0 %2346
        %v2348 = vrcp.pop %v2347
        %v2349 = vmul.f32 %v2344, %v2348
        %v2350 = vpack.c.bf16 %v2349, %v2349
        %v2352 = vunpack.c.l.b16 %v2350
        %v2353 = vpack.c.b16 %v2352, %v2352
        %2354 = vrot.lane.b32.xlu0 %v2353, 16
        %v2355 = vpop.permute.xlu0 %2354
        %2357 = vst.msk [vmem:[%s2116] sm:$0xf] %vm1377, %v2355
        %2358 = vrot.lane.b32.xlu0 %v2055, 56
        %v2359 = vpop.permute.xlu0 %2358
        %v2361 = vsel %vm1120, %v2350, 0
        %v2364 = vsel %vm1140, %v2359, 0
        %2366 = vmatprep.subr.bf16.mxu0 0
        %2367 = vmatpush1.bf16.msra.mxu0 0
        %2368 = vmatprep.subr.bf16.mxu0 0
        %2369 = vmatpush1.bf16.msra.mxu0 0
        %2370 = vmatprep.subr.bf16.mxu0 0
        %2371 = vmatpush1.bf16.msra.mxu0 0
        %2372 = vmatprep.subr.bf16.mxu0 0
        %2373 = vmatpush1.bf16.msra.mxu0 0
        %2374 = vmatprep.subr.bf16.mxu0 0
        %2375 = vmatpush1.bf16.msra.mxu0 0
        %2376 = vmatprep.subr.bf16.mxu0 0
        %2377 = vmatpush1.bf16.msra.mxu0 0
        %2378 = vmatprep.subr.bf16.mxu0 0
        %2379 = vmatpush1.bf16.msra.mxu0 0
        %2380 = vmatprep.subr.bf16.mxu0 0
        %2381 = vmatpush1.bf16.msra.mxu0 %v2364
        %2382 = vmatprep.subr.bf16.mxu0 0
        %2383 = vmatpush2.bf16.msra.mxu0 0
        %2384 = vmatprep.subr.bf16.mxu0 0
        %2385 = vmatpush2.bf16.msra.mxu0 0
        %2386 = vmatprep.subr.bf16.mxu0 0
        %2387 = vmatpush2.bf16.msra.mxu0 0
        %2388 = vmatprep.subr.bf16.mxu0 0
        %2389 = vmatpush2.bf16.msra.mxu0 0
        %2390 = vmatprep.subr.bf16.mxu0 0
        %2391 = vmatpush2.bf16.msra.mxu0 0
        %2392 = vmatprep.subr.bf16.mxu0 0
        %2393 = vmatpush2.bf16.msra.mxu0 0
        %2394 = vmatprep.subr.bf16.mxu0 0
        %2395 = vmatpush2.bf16.msra.mxu0 0
        %2396 = vmatprep.subr.bf16.mxu0 0
        %2397 = vmatpush2.bf16.msra.mxu0 0
        %2398 = vmatprep.mubr.bf16.mxu0 0
        %2399 = vmatmul.mubr.bf16.gmra.mxu0 %v2361
        %v2400 = vpop.f32.mrf.mxu0
        %v2401 = vadd.f32 0.0, %v2400
        %v2402 = vpop.f32.mrf.mxu0
        %v2403 = vpop.f32.mrf.mxu0
        %v2404 = vpop.f32.mrf.mxu0
        %2405 = vdwg.mxu0
        %2407 = vrot.lane.b32.xlu0 %v2401, 8
        %v2408 = vpop.permute.xlu0 %2407
        %2410 = vst.msk [vmem:[#allocation3 + $0x8] sm:$0xff] %vm1431, %v2408
        %2411 = vrot.lane.b32.xlu0 %v2055, 116
        %v2412 = vpop.permute.xlu0 %2411
        %2413 = vrot.lane.b32.xlu0 %v2055, 84
        %v2414 = vpop.permute.xlu0 %2413
        %v2416 = vsel %vm1073, %v2412, 0
        %v2419 = vsel %vm1073, %v2414, 0
        %2421 = vmatprep.subr.bf16.mxu0 0
        %2422 = vmatpush1.bf16.xpose.msra.mxu0 0
        %2423 = vmatprep.subr.bf16.mxu0 0
        %2424 = vmatpush1.bf16.xpose.msra.mxu0 0
        %2425 = vmatprep.subr.bf16.mxu0 0
        %2426 = vmatpush1.bf16.xpose.msra.mxu0 0
        %2427 = vmatprep.subr.bf16.mxu0 0
        %2428 = vmatpush1.bf16.xpose.msra.mxu0 0
        %2429 = vmatprep.subr.bf16.mxu0 0
        %2430 = vmatpush1.bf16.xpose.msra.mxu0 0
        %2431 = vmatprep.subr.bf16.mxu0 0
        %2432 = vmatpush1.bf16.xpose.msra.mxu0 0
        %2433 = vmatprep.subr.bf16.mxu0 0
        %2434 = vmatpush1.bf16.xpose.msra.mxu0 0
        %2435 = vmatprep.subr.bf16.mxu0 0
        %2436 = vmatpush1.bf16.xpose.msra.mxu0 %v2419
        %2437 = vmatprep.subr.bf16.mxu0 0
        %2438 = vmatpush2.bf16.xpose.msra.mxu0 0
        %2439 = vmatprep.subr.bf16.mxu0 0
        %2440 = vmatpush2.bf16.xpose.msra.mxu0 0
        %2441 = vmatprep.subr.bf16.mxu0 0
        %2442 = vmatpush2.bf16.xpose.msra.mxu0 0
        %2443 = vmatprep.subr.bf16.mxu0 0
        %2444 = vmatpush2.bf16.xpose.msra.mxu0 0
        %2445 = vmatprep.subr.bf16.mxu0 0
        %2446 = vmatpush2.bf16.xpose.msra.mxu0 0
        %2447 = vmatprep.subr.bf16.mxu0 0
        %2448 = vmatpush2.bf16.xpose.msra.mxu0 0
        %2449 = vmatprep.subr.bf16.mxu0 0
        %2450 = vmatpush2.bf16.xpose.msra.mxu0 0
        %2451 = vmatprep.subr.bf16.mxu0 0
        %2452 = vmatpush2.bf16.xpose.msra.mxu0 0
        %2453 = vmatprep.mubr.bf16.mxu0 0
        %2454 = vmatmul.mubr.bf16.gmra.mxu0 %v2416
        %v2455 = vpop.f32.mrf.mxu0
        %v2456 = vadd.f32 %v2054, %v2455
        %v2457 = vpop.f32.mrf.mxu0
        %v2458 = vpop.f32.mrf.mxu0
        %v2459 = vpop.f32.mrf.mxu0
        %2460 = vdwg.mxu0
        %v2461 = vsel %vm1120, %v2456, -inf
        %2462 = vmax.xlane.f32.xlu0 %v2461
        %v2463 = vpop.xlane.xlu0 %2462
        %v2464 = vsub.f32 %v2456, %v2463
        %v2465 = vmul.f32 %v2464, 1.442695
        %v2466 = vpow.pop %v2465
        %v2467 = vsel %vm1120, %v2466, 0.0
        %2468 = vadd.xlane.f32.xlu0 %v2467
        %v2469 = vpop.xlane.xlu0 %2468
        %v2470 = vrcp.pop %v2469
        %v2471 = vmul.f32 %v2466, %v2470
        %v2472 = vpack.c.bf16 %v2471, %v2471
        %v2474 = vunpack.c.l.b16 %v2472
        %v2475 = vpack.c.b16 %v2474, %v2474
        %2476 = vrot.lane.b32.xlu0 %v2475, 24
        %v2477 = vpop.permute.xlu0 %2476
        %2479 = vst.msk [vmem:[%s2116] sm:$0xf] %vm1501, %v2477
        %2480 = vrot.lane.b32.xlu0 %v2055, 52
        %v2481 = vpop.permute.xlu0 %2480
        %v2483 = vsel %vm1120, %v2472, 0
        %v2486 = vsel %vm1140, %v2481, 0
        %2488 = vmatprep.subr.bf16.mxu0 0
        %2489 = vmatpush1.bf16.msra.mxu0 0
        %2490 = vmatprep.subr.bf16.mxu0 0
        %2491 = vmatpush1.bf16.msra.mxu0 0
        %2492 = vmatprep.subr.bf16.mxu0 0
        %2493 = vmatpush1.bf16.msra.mxu0 0
        %2494 = vmatprep.subr.bf16.mxu0 0
        %2495 = vmatpush1.bf16.msra.mxu0 0
        %2496 = vmatprep.subr.bf16.mxu0 0
        %2497 = vmatpush1.bf16.msra.mxu0 0
        %2498 = vmatprep.subr.bf16.mxu0 0
        %2499 = vmatpush1.bf16.msra.mxu0 0
        %2500 = vmatprep.subr.bf16.mxu0 0
        %2501 = vmatpush1.bf16.msra.mxu0 0
        %2502 = vmatprep.subr.bf16.mxu0 0
        %2503 = vmatpush1.bf16.msra.mxu0 %v2486
        %2504 = vmatprep.subr.bf16.mxu0 0
        %2505 = vmatpush2.bf16.msra.mxu0 0
        %2506 = vmatprep.subr.bf16.mxu0 0
        %2507 = vmatpush2.bf16.msra.mxu0 0
        %2508 = vmatprep.subr.bf16.mxu0 0
        %2509 = vmatpush2.bf16.msra.mxu0 0
        %2510 = vmatprep.subr.bf16.mxu0 0
        %2511 = vmatpush2.bf16.msra.mxu0 0
        %2512 = vmatprep.subr.bf16.mxu0 0
        %2513 = vmatpush2.bf16.msra.mxu0 0
        %2514 = vmatprep.subr.bf16.mxu0 0
        %2515 = vmatpush2.bf16.msra.mxu0 0
        %2516 = vmatprep.subr.bf16.mxu0 0
        %2517 = vmatpush2.bf16.msra.mxu0 0
        %2518 = vmatprep.subr.bf16.mxu0 0
        %2519 = vmatpush2.bf16.msra.mxu0 0
        %2520 = vmatprep.mubr.bf16.mxu0 0
        %2521 = vmatmul.mubr.bf16.gmra.mxu0 %v2483
        %v2522 = vpop.f32.mrf.mxu0
        %v2523 = vadd.f32 0.0, %v2522
        %v2524 = vpop.f32.mrf.mxu0
        %v2525 = vpop.f32.mrf.mxu0
        %v2526 = vpop.f32.mrf.mxu0
        %2527 = vdwg.mxu0
        %2529 = vrot.lane.b32.xlu0 %v2523, 12
        %v2530 = vpop.permute.xlu0 %2529
        %2532 = vst.msk [vmem:[#allocation3 + $0x8] sm:$0xff] %vm1555, %v2530
        %2533 = vrot.lane.b32.xlu0 %v2055, 112
        %v2534 = vpop.permute.xlu0 %2533
        %2535 = vrot.lane.b32.xlu0 %v2055, 80
        %v2536 = vpop.permute.xlu0 %2535
        %v2538 = vsel %vm1073, %v2534, 0
        %v2541 = vsel %vm1073, %v2536, 0
        %2543 = vmatprep.subr.bf16.mxu0 0
        %2544 = vmatpush1.bf16.xpose.msra.mxu0 0
        %2545 = vmatprep.subr.bf16.mxu0 0
        %2546 = vmatpush1.bf16.xpose.msra.mxu0 0
        %2547 = vmatprep.subr.bf16.mxu0 0
        %2548 = vmatpush1.bf16.xpose.msra.mxu0 0
        %2549 = vmatprep.subr.bf16.mxu0 0
        %2550 = vmatpush1.bf16.xpose.msra.mxu0 0
        %2551 = vmatprep.subr.bf16.mxu0 0
        %2552 = vmatpush1.bf16.xpose.msra.mxu0 0
        %2553 = vmatprep.subr.bf16.mxu0 0
        %2554 = vmatpush1.bf16.xpose.msra.mxu0 0
        %2555 = vmatprep.subr.bf16.mxu0 0
        %2556 = vmatpush1.bf16.xpose.msra.mxu0 0
        %2557 = vmatprep.subr.bf16.mxu0 0
        %2558 = vmatpush1.bf16.xpose.msra.mxu0 %v2541
        %2559 = vmatprep.subr.bf16.mxu0 0
        %2560 = vmatpush2.bf16.xpose.msra.mxu0 0
        %2561 = vmatprep.subr.bf16.mxu0 0
        %2562 = vmatpush2.bf16.xpose.msra.mxu0 0
        %2563 = vmatprep.subr.bf16.mxu0 0
        %2564 = vmatpush2.bf16.xpose.msra.mxu0 0
        %2565 = vmatprep.subr.bf16.mxu0 0
        %2566 = vmatpush2.bf16.xpose.msra.mxu0 0
        %2567 = vmatprep.subr.bf16.mxu0 0
        %2568 = vmatpush2.bf16.xpose.msra.mxu0 0
        %2569 = vmatprep.subr.bf16.mxu0 0
        %2570 = vmatpush2.bf16.xpose.msra.mxu0 0
        %2571 = vmatprep.subr.bf16.mxu0 0
        %2572 = vmatpush2.bf16.xpose.msra.mxu0 0
        %2573 = vmatprep.subr.bf16.mxu0 0
        %2574 = vmatpush2.bf16.xpose.msra.mxu0 0
        %2575 = vmatprep.mubr.bf16.mxu0 0
        %2576 = vmatmul.mubr.bf16.gmra.mxu0 %v2538
        %v2577 = vpop.f32.mrf.mxu0
        %v2578 = vadd.f32 %v2054, %v2577
        %v2579 = vpop.f32.mrf.mxu0
        %v2580 = vpop.f32.mrf.mxu0
        %v2581 = vpop.f32.mrf.mxu0
        %2582 = vdwg.mxu0
        %v2583 = vsel %vm1120, %v2578, -inf
        %2584 = vmax.xlane.f32.xlu0 %v2583
        %v2585 = vpop.xlane.xlu0 %2584
        %v2586 = vsub.f32 %v2578, %v2585
        %v2587 = vmul.f32 %v2586, 1.442695
        %v2588 = vpow.pop %v2587
        %v2589 = vsel %vm1120, %v2588, 0.0
        %2590 = vadd.xlane.f32.xlu0 %v2589
        %v2591 = vpop.xlane.xlu0 %2590
        %v2592 = vrcp.pop %v2591
        %v2593 = vmul.f32 %v2588, %v2592
        %v2594 = vpack.c.bf16 %v2593, %v2593
        %v2596 = vunpack.c.l.b16 %v2594
        %v2597 = vpack.c.b16 %v2596, %v2596
        %2598 = vrot.lane.b32.xlu0 %v2597, 32
        %v2599 = vpop.permute.xlu0 %2598
        %2601 = vst.msk [vmem:[%s2116] sm:$0xf] %vm1625, %v2599
        %2602 = vrot.lane.b32.xlu0 %v2055, 48
        %v2603 = vpop.permute.xlu0 %2602
        %v2605 = vsel %vm1120, %v2594, 0
        %v2608 = vsel %vm1140, %v2603, 0
        %2610 = vmatprep.subr.bf16.mxu0 0
        %2611 = vmatpush1.bf16.msra.mxu0 0
        %2612 = vmatprep.subr.bf16.mxu0 0
        %2613 = vmatpush1.bf16.msra.mxu0 0
        %2614 = vmatprep.subr.bf16.mxu0 0
        %2615 = vmatpush1.bf16.msra.mxu0 0
        %2616 = vmatprep.subr.bf16.mxu0 0
        %2617 = vmatpush1.bf16.msra.mxu0 0
        %2618 = vmatprep.subr.bf16.mxu0 0
        %2619 = vmatpush1.bf16.msra.mxu0 0
        %2620 = vmatprep.subr.bf16.mxu0 0
        %2621 = vmatpush1.bf16.msra.mxu0 0
        %2622 = vmatprep.subr.bf16.mxu0 0
        %2623 = vmatpush1.bf16.msra.mxu0 0
        %2624 = vmatprep.subr.bf16.mxu0 0
        %2625 = vmatpush1.bf16.msra.mxu0 %v2608
        %2626 = vmatprep.subr.bf16.mxu0 0
        %2627 = vmatpush2.bf16.msra.mxu0 0
        %2628 = vmatprep.subr.bf16.mxu0 0
        %2629 = vmatpush2.bf16.msra.mxu0 0
        %2630 = vmatprep.subr.bf16.mxu0 0
        %2631 = vmatpush2.bf16.msra.mxu0 0
        %2632 = vmatprep.subr.bf16.mxu0 0
        %2633 = vmatpush2.bf16.msra.mxu0 0
        %2634 = vmatprep.subr.bf16.mxu0 0
        %2635 = vmatpush2.bf16.msra.mxu0 0
        %2636 = vmatprep.subr.bf16.mxu0 0
        %2637 = vmatpush2.bf16.msra.mxu0 0
        %2638 = vmatprep.subr.bf16.mxu0 0
        %2639 = vmatpush2.bf16.msra.mxu0 0
        %2640 = vmatprep.subr.bf16.mxu0 0
        %2641 = vmatpush2.bf16.msra.mxu0 0
        %2642 = vmatprep.mubr.bf16.mxu0 0
        %2643 = vmatmul.mubr.bf16.gmra.mxu0 %v2605
        %v2644 = vpop.f32.mrf.mxu0
        %v2645 = vadd.f32 0.0, %v2644
        %v2646 = vpop.f32.mrf.mxu0
        %v2647 = vpop.f32.mrf.mxu0
        %v2648 = vpop.f32.mrf.mxu0
        %2649 = vdwg.mxu0
        %2651 = vrot.lane.b32.xlu0 %v2645, 16
        %v2652 = vpop.permute.xlu0 %2651
        %2654 = vst.msk [vmem:[#allocation3 + $0x8] sm:$0xff] %vm1679, %v2652
        %2655 = vrot.lane.b32.xlu0 %v2055, 108
        %v2656 = vpop.permute.xlu0 %2655
        %2657 = vrot.lane.b32.xlu0 %v2055, 76
        %v2658 = vpop.permute.xlu0 %2657
        %v2660 = vsel %vm1073, %v2656, 0
        %v2663 = vsel %vm1073, %v2658, 0
        %2665 = vmatprep.subr.bf16.mxu0 0
        %2666 = vmatpush1.bf16.xpose.msra.mxu0 0
        %2667 = vmatprep.subr.bf16.mxu0 0
        %2668 = vmatpush1.bf16.xpose.msra.mxu0 0
        %2669 = vmatprep.subr.bf16.mxu0 0
        %2670 = vmatpush1.bf16.xpose.msra.mxu0 0
        %2671 = vmatprep.subr.bf16.mxu0 0
        %2672 = vmatpush1.bf16.xpose.msra.mxu0 0
        %2673 = vmatprep.subr.bf16.mxu0 0
        %2674 = vmatpush1.bf16.xpose.msra.mxu0 0
        %2675 = vmatprep.subr.bf16.mxu0 0
        %2676 = vmatpush1.bf16.xpose.msra.mxu0 0
        %2677 = vmatprep.subr.bf16.mxu0 0
        %2678 = vmatpush1.bf16.xpose.msra.mxu0 0
        %2679 = vmatprep.subr.bf16.mxu0 0
        %2680 = vmatpush1.bf16.xpose.msra.mxu0 %v2663
        %2681 = vmatprep.subr.bf16.mxu0 0
        %2682 = vmatpush2.bf16.xpose.msra.mxu0 0
        %2683 = vmatprep.subr.bf16.mxu0 0
        %2684 = vmatpush2.bf16.xpose.msra.mxu0 0
        %2685 = vmatprep.subr.bf16.mxu0 0
        %2686 = vmatpush2.bf16.xpose.msra.mxu0 0
        %2687 = vmatprep.subr.bf16.mxu0 0
        %2688 = vmatpush2.bf16.xpose.msra.mxu0 0
        %2689 = vmatprep.subr.bf16.mxu0 0
        %2690 = vmatpush2.bf16.xpose.msra.mxu0 0
        %2691 = vmatprep.subr.bf16.mxu0 0
        %2692 = vmatpush2.bf16.xpose.msra.mxu0 0
        %2693 = vmatprep.subr.bf16.mxu0 0
        %2694 = vmatpush2.bf16.xpose.msra.mxu0 0
        %2695 = vmatprep.subr.bf16.mxu0 0
        %2696 = vmatpush2.bf16.xpose.msra.mxu0 0
        %2697 = vmatprep.mubr.bf16.mxu0 0
        %2698 = vmatmul.mubr.bf16.gmra.mxu0 %v2660
        %v2699 = vpop.f32.mrf.mxu0
        %v2700 = vadd.f32 %v2054, %v2699
        %v2701 = vpop.f32.mrf.mxu0
        %v2702 = vpop.f32.mrf.mxu0
        %v2703 = vpop.f32.mrf.mxu0
        %2704 = vdwg.mxu0
        %v2705 = vsel %vm1120, %v2700, -inf
        %2706 = vmax.xlane.f32.xlu0 %v2705
        %v2707 = vpop.xlane.xlu0 %2706
        %v2708 = vsub.f32 %v2700, %v2707
        %v2709 = vmul.f32 %v2708, 1.442695
        %v2710 = vpow.pop %v2709
        %v2711 = vsel %vm1120, %v2710, 0.0
        %2712 = vadd.xlane.f32.xlu0 %v2711
        %v2713 = vpop.xlane.xlu0 %2712
        %v2714 = vrcp.pop %v2713
        %v2715 = vmul.f32 %v2710, %v2714
        %v2716 = vpack.c.bf16 %v2715, %v2715
        %v2718 = vunpack.c.l.b16 %v2716
        %v2719 = vpack.c.b16 %v2718, %v2718
        %2720 = vrot.lane.b32.xlu0 %v2719, 40
        %v2721 = vpop.permute.xlu0 %2720
        %2723 = vst.msk [vmem:[%s2116] sm:$0xf] %vm1749, %v2721
        %2724 = vrot.lane.b32.xlu0 %v2055, 44
        %v2725 = vpop.permute.xlu0 %2724
        %v2727 = vsel %vm1120, %v2716, 0
        %v2730 = vsel %vm1140, %v2725, 0
        %2732 = vmatprep.subr.bf16.mxu0 0
        %2733 = vmatpush1.bf16.msra.mxu0 0
        %2734 = vmatprep.subr.bf16.mxu0 0
        %2735 = vmatpush1.bf16.msra.mxu0 0
        %2736 = vmatprep.subr.bf16.mxu0 0
        %2737 = vmatpush1.bf16.msra.mxu0 0
        %2738 = vmatprep.subr.bf16.mxu0 0
        %2739 = vmatpush1.bf16.msra.mxu0 0
        %2740 = vmatprep.subr.bf16.mxu0 0
        %2741 = vmatpush1.bf16.msra.mxu0 0
        %2742 = vmatprep.subr.bf16.mxu0 0
        %2743 = vmatpush1.bf16.msra.mxu0 0
        %2744 = vmatprep.subr.bf16.mxu0 0
        %2745 = vmatpush1.bf16.msra.mxu0 0
        %2746 = vmatprep.subr.bf16.mxu0 0
        %2747 = vmatpush1.bf16.msra.mxu0 %v2730
        %2748 = vmatprep.subr.bf16.mxu0 0
        %2749 = vmatpush2.bf16.msra.mxu0 0
        %2750 = vmatprep.subr.bf16.mxu0 0
        %2751 = vmatpush2.bf16.msra.mxu0 0
        %2752 = vmatprep.subr.bf16.mxu0 0
        %2753 = vmatpush2.bf16.msra.mxu0 0
        %2754 = vmatprep.subr.bf16.mxu0 0
        %2755 = vmatpush2.bf16.msra.mxu0 0
        %2756 = vmatprep.subr.bf16.mxu0 0
        %2757 = vmatpush2.bf16.msra.mxu0 0
        %2758 = vmatprep.subr.bf16.mxu0 0
        %2759 = vmatpush2.bf16.msra.mxu0 0
        %2760 = vmatprep.subr.bf16.mxu0 0
        %2761 = vmatpush2.bf16.msra.mxu0 0
        %2762 = vmatprep.subr.bf16.mxu0 0
        %2763 = vmatpush2.bf16.msra.mxu0 0
        %2764 = vmatprep.mubr.bf16.mxu0 0
        %2765 = vmatmul.mubr.bf16.gmra.mxu0 %v2727
        %v2766 = vpop.f32.mrf.mxu0
        %v2767 = vadd.f32 0.0, %v2766
        %v2768 = vpop.f32.mrf.mxu0
        %v2769 = vpop.f32.mrf.mxu0
        %v2770 = vpop.f32.mrf.mxu0
        %2771 = vdwg.mxu0
        %2773 = vrot.lane.b32.xlu0 %v2767, 20
        %v2774 = vpop.permute.xlu0 %2773
        %2776 = vst.msk [vmem:[#allocation3 + $0x8] sm:$0xff] %vm1803, %v2774
        %2777 = vrot.lane.b32.xlu0 %v2055, 104
        %v2778 = vpop.permute.xlu0 %2777
        %2779 = vrot.lane.b32.xlu0 %v2055, 72
        %v2780 = vpop.permute.xlu0 %2779
        %v2782 = vsel %vm1073, %v2778, 0
        %v2785 = vsel %vm1073, %v2780, 0
        %2787 = vmatprep.subr.bf16.mxu0 0
        %2788 = vmatpush1.bf16.xpose.msra.mxu0 0
        %2789 = vmatprep.subr.bf16.mxu0 0
        %2790 = vmatpush1.bf16.xpose.msra.mxu0 0
        %2791 = vmatprep.subr.bf16.mxu0 0
        %2792 = vmatpush1.bf16.xpose.msra.mxu0 0
        %2793 = vmatprep.subr.bf16.mxu0 0
        %2794 = vmatpush1.bf16.xpose.msra.mxu0 0
        %2795 = vmatprep.subr.bf16.mxu0 0
        %2796 = vmatpush1.bf16.xpose.msra.mxu0 0
        %2797 = vmatprep.subr.bf16.mxu0 0
        %2798 = vmatpush1.bf16.xpose.msra.mxu0 0
        %2799 = vmatprep.subr.bf16.mxu0 0
        %2800 = vmatpush1.bf16.xpose.msra.mxu0 0
        %2801 = vmatprep.subr.bf16.mxu0 0
        %2802 = vmatpush1.bf16.xpose.msra.mxu0 %v2785
        %2803 = vmatprep.subr.bf16.mxu0 0
        %2804 = vmatpush2.bf16.xpose.msra.mxu0 0
        %2805 = vmatprep.subr.bf16.mxu0 0
        %2806 = vmatpush2.bf16.xpose.msra.mxu0 0
        %2807 = vmatprep.subr.bf16.mxu0 0
        %2808 = vmatpush2.bf16.xpose.msra.mxu0 0
        %2809 = vmatprep.subr.bf16.mxu0 0
        %2810 = vmatpush2.bf16.xpose.msra.mxu0 0
        %2811 = vmatprep.subr.bf16.mxu0 0
        %2812 = vmatpush2.bf16.xpose.msra.mxu0 0
        %2813 = vmatprep.subr.bf16.mxu0 0
        %2814 = vmatpush2.bf16.xpose.msra.mxu0 0
        %2815 = vmatprep.subr.bf16.mxu0 0
        %2816 = vmatpush2.bf16.xpose.msra.mxu0 0
        %2817 = vmatprep.subr.bf16.mxu0 0
        %2818 = vmatpush2.bf16.xpose.msra.mxu0 0
        %2819 = vmatprep.mubr.bf16.mxu0 0
        %2820 = vmatmul.mubr.bf16.gmra.mxu0 %v2782
        %v2821 = vpop.f32.mrf.mxu0
        %v2822 = vadd.f32 %v2054, %v2821
        %v2823 = vpop.f32.mrf.mxu0
        %v2824 = vpop.f32.mrf.mxu0
        %v2825 = vpop.f32.mrf.mxu0
        %2826 = vdwg.mxu0
        %v2827 = vsel %vm1120, %v2822, -inf
        %2828 = vmax.xlane.f32.xlu0 %v2827
        %v2829 = vpop.xlane.xlu0 %2828
        %v2830 = vsub.f32 %v2822, %v2829
        %v2831 = vmul.f32 %v2830, 1.442695
        %v2832 = vpow.pop %v2831
        %v2833 = vsel %vm1120, %v2832, 0.0
        %2834 = vadd.xlane.f32.xlu0 %v2833
        %v2835 = vpop.xlane.xlu0 %2834
        %v2836 = vrcp.pop %v2835
        %v2837 = vmul.f32 %v2832, %v2836
        %v2838 = vpack.c.bf16 %v2837, %v2837
        %v2840 = vunpack.c.l.b16 %v2838
        %v2841 = vpack.c.b16 %v2840, %v2840
        %2842 = vrot.lane.b32.xlu0 %v2841, 48
        %v2843 = vpop.permute.xlu0 %2842
        %2845 = vst.msk [vmem:[%s2116] sm:$0xf] %vm1873, %v2843
        %2846 = vrot.lane.b32.xlu0 %v2055, 40
        %v2847 = vpop.permute.xlu0 %2846
        %v2849 = vsel %vm1120, %v2838, 0
        %v2852 = vsel %vm1140, %v2847, 0
        %2854 = vmatprep.subr.bf16.mxu0 0
        %2855 = vmatpush1.bf16.msra.mxu0 0
        %2856 = vmatprep.subr.bf16.mxu0 0
        %2857 = vmatpush1.bf16.msra.mxu0 0
        %2858 = vmatprep.subr.bf16.mxu0 0
        %2859 = vmatpush1.bf16.msra.mxu0 0
        %2860 = vmatprep.subr.bf16.mxu0 0
        %2861 = vmatpush1.bf16.msra.mxu0 0
        %2862 = vmatprep.subr.bf16.mxu0 0
        %2863 = vmatpush1.bf16.msra.mxu0 0
        %2864 = vmatprep.subr.bf16.mxu0 0
        %2865 = vmatpush1.bf16.msra.mxu0 0
        %2866 = vmatprep.subr.bf16.mxu0 0
        %2867 = vmatpush1.bf16.msra.mxu0 0
        %2868 = vmatprep.subr.bf16.mxu0 0
        %2869 = vmatpush1.bf16.msra.mxu0 %v2852
        %2870 = vmatprep.subr.bf16.mxu0 0
        %2871 = vmatpush2.bf16.msra.mxu0 0
        %2872 = vmatprep.subr.bf16.mxu0 0
        %2873 = vmatpush2.bf16.msra.mxu0 0
        %2874 = vmatprep.subr.bf16.mxu0 0
        %2875 = vmatpush2.bf16.msra.mxu0 0
        %2876 = vmatprep.subr.bf16.mxu0 0
        %2877 = vmatpush2.bf16.msra.mxu0 0
        %2878 = vmatprep.subr.bf16.mxu0 0
        %2879 = vmatpush2.bf16.msra.mxu0 0
        %2880 = vmatprep.subr.bf16.mxu0 0
        %2881 = vmatpush2.bf16.msra.mxu0 0
        %2882 = vmatprep.subr.bf16.mxu0 0
        %2883 = vmatpush2.bf16.msra.mxu0 0
        %2884 = vmatprep.subr.bf16.mxu0 0
        %2885 = vmatpush2.bf16.msra.mxu0 0
        %2886 = vmatprep.mubr.bf16.mxu0 0
        %2887 = vmatmul.mubr.bf16.gmra.mxu0 %v2849
        %v2888 = vpop.f32.mrf.mxu0
        %v2889 = vadd.f32 0.0, %v2888
        %v2890 = vpop.f32.mrf.mxu0
        %v2891 = vpop.f32.mrf.mxu0
        %v2892 = vpop.f32.mrf.mxu0
        %2893 = vdwg.mxu0
        %2895 = vrot.lane.b32.xlu0 %v2889, 24
        %v2896 = vpop.permute.xlu0 %2895
        %2898 = vst.msk [vmem:[#allocation3 + $0x8] sm:$0xff] %vm1927, %v2896
        %2899 = vrot.lane.b32.xlu0 %v2055, 100
        %v2900 = vpop.permute.xlu0 %2899
        %2901 = vrot.lane.b32.xlu0 %v2055, 68
        %v2902 = vpop.permute.xlu0 %2901
        %v2904 = vsel %vm1073, %v2900, 0
        %v2907 = vsel %vm1073, %v2902, 0
        %2909 = vmatprep.subr.bf16.mxu0 0
        %2910 = vmatpush1.bf16.xpose.msra.mxu0 0
        %2911 = vmatprep.subr.bf16.mxu0 0
        %2912 = vmatpush1.bf16.xpose.msra.mxu0 0
        %2913 = vmatprep.subr.bf16.mxu0 0
        %2914 = vmatpush1.bf16.xpose.msra.mxu0 0
        %2915 = vmatprep.subr.bf16.mxu0 0
        %2916 = vmatpush1.bf16.xpose.msra.mxu0 0
        %2917 = vmatprep.subr.bf16.mxu0 0
        %2918 = vmatpush1.bf16.xpose.msra.mxu0 0
        %2919 = vmatprep.subr.bf16.mxu0 0
        %2920 = vmatpush1.bf16.xpose.msra.mxu0 0
        %2921 = vmatprep.subr.bf16.mxu0 0
        %2922 = vmatpush1.bf16.xpose.msra.mxu0 0
        %2923 = vmatprep.subr.bf16.mxu0 0
        %2924 = vmatpush1.bf16.xpose.msra.mxu0 %v2907
        %2925 = vmatprep.subr.bf16.mxu0 0
        %2926 = vmatpush2.bf16.xpose.msra.mxu0 0
        %2927 = vmatprep.subr.bf16.mxu0 0
        %2928 = vmatpush2.bf16.xpose.msra.mxu0 0
        %2929 = vmatprep.subr.bf16.mxu0 0
        %2930 = vmatpush2.bf16.xpose.msra.mxu0 0
        %2931 = vmatprep.subr.bf16.mxu0 0
        %2932 = vmatpush2.bf16.xpose.msra.mxu0 0
        %2933 = vmatprep.subr.bf16.mxu0 0
        %2934 = vmatpush2.bf16.xpose.msra.mxu0 0
        %2935 = vmatprep.subr.bf16.mxu0 0
        %2936 = vmatpush2.bf16.xpose.msra.mxu0 0
        %2937 = vmatprep.subr.bf16.mxu0 0
        %2938 = vmatpush2.bf16.xpose.msra.mxu0 0
        %2939 = vmatprep.subr.bf16.mxu0 0
        %2940 = vmatpush2.bf16.xpose.msra.mxu0 0
        %2941 = vmatprep.mubr.bf16.mxu0 0
        %2942 = vmatmul.mubr.bf16.gmra.mxu0 %v2904
        %v2943 = vpop.f32.mrf.mxu0
        %v2944 = vadd.f32 %v2054, %v2943
        %v2945 = vpop.f32.mrf.mxu0
        %v2946 = vpop.f32.mrf.mxu0
        %v2947 = vpop.f32.mrf.mxu0
        %2948 = vdwg.mxu0
        %v2949 = vsel %vm1120, %v2944, -inf
        %2950 = vmax.xlane.f32.xlu0 %v2949
        %v2951 = vpop.xlane.xlu0 %2950
        %v2952 = vsub.f32 %v2944, %v2951
        %v2953 = vmul.f32 %v2952, 1.442695
        %v2954 = vpow.pop %v2953
        %v2955 = vsel %vm1120, %v2954, 0.0
        %2956 = vadd.xlane.f32.xlu0 %v2955
        %v2957 = vpop.xlane.xlu0 %2956
        %v2958 = vrcp.pop %v2957
        %v2959 = vmul.f32 %v2954, %v2958
        %v2960 = vpack.c.bf16 %v2959, %v2959
        %v2962 = vunpack.c.l.b16 %v2960
        %v2963 = vpack.c.b16 %v2962, %v2962
        %2964 = vrot.lane.b32.xlu0 %v2963, 56
        %v2965 = vpop.permute.xlu0 %2964
        %2967 = vst.msk [vmem:[%s2116] sm:$0xf] %vm1997, %v2965
        %2968 = vrot.lane.b32.xlu0 %v2055, 36
        %v2969 = vpop.permute.xlu0 %2968
        %v2971 = vsel %vm1120, %v2960, 0
        %v2974 = vsel %vm1140, %v2969, 0
        %2976 = vmatprep.subr.bf16.mxu0 0
        %2977 = vmatpush1.bf16.msra.mxu0 0
        %2978 = vmatprep.subr.bf16.mxu0 0
        %2979 = vmatpush1.bf16.msra.mxu0 0
        %2980 = vmatprep.subr.bf16.mxu0 0
        %2981 = vmatpush1.bf16.msra.mxu0 0
        %2982 = vmatprep.subr.bf16.mxu0 0
        %2983 = vmatpush1.bf16.msra.mxu0 0
        %2984 = vmatprep.subr.bf16.mxu0 0
        %2985 = vmatpush1.bf16.msra.mxu0 0
        %2986 = vmatprep.subr.bf16.mxu0 0
        %2987 = vmatpush1.bf16.msra.mxu0 0
        %2988 = vmatprep.subr.bf16.mxu0 0
        %2989 = vmatpush1.bf16.msra.mxu0 0
        %2990 = vmatprep.subr.bf16.mxu0 0
        %2991 = vmatpush1.bf16.msra.mxu0 %v2974
        %2992 = vmatprep.subr.bf16.mxu0 0
        %2993 = vmatpush2.bf16.msra.mxu0 0
        %2994 = vmatprep.subr.bf16.mxu0 0
        %2995 = vmatpush2.bf16.msra.mxu0 0
        %2996 = vmatprep.subr.bf16.mxu0 0
        %2997 = vmatpush2.bf16.msra.mxu0 0
        %2998 = vmatprep.subr.bf16.mxu0 0
        %2999 = vmatpush2.bf16.msra.mxu0 0
        %3000 = vmatprep.subr.bf16.mxu0 0
        %3001 = vmatpush2.bf16.msra.mxu0 0
        %3002 = vmatprep.subr.bf16.mxu0 0
        %3003 = vmatpush2.bf16.msra.mxu0 0
        %3004 = vmatprep.subr.bf16.mxu0 0
        %3005 = vmatpush2.bf16.msra.mxu0 0
        %3006 = vmatprep.subr.bf16.mxu0 0
        %3007 = vmatpush2.bf16.msra.mxu0 0
        %3008 = vmatprep.mubr.bf16.mxu0 0
        %3009 = vmatmul.mubr.bf16.gmra.mxu0 %v2971
        %v3010 = vpop.f32.mrf.mxu0
        %v3011 = vadd.f32 0.0, %v3010
        %v3012 = vpop.f32.mrf.mxu0
        %v3013 = vpop.f32.mrf.mxu0
        %v3014 = vpop.f32.mrf.mxu0
        %3015 = vdwg.mxu0
        %3017 = vrot.lane.b32.xlu0 %v3011, 28
        %v3018 = vpop.permute.xlu0 %3017
        %3020 = vst.msk [vmem:[#allocation3 + $0x8] sm:$0xff] %vm2051, %v3018
        %v3021 = vld [vmem:[#allocation3] sm:$0xff]
        %v3022 = vld [vmem:[#allocation3 + $0x8] sm:$0xff]
        %v3023 = vpack.c.bf16 %v3022, %v3021
        %v3024 = vld [vmem:[%s959] sm:$0xf]
        %v3025 = vld [vmem:[%s959 + $0x4] sm:$0xf]
        %v3026 = vld [vmem:[%s959 + $0x8] sm:$0xf]
        %v3027 = vld [vmem:[%s959 + $0xc] sm:$0xf]
        %v3032 = vunpack.c.l.b16 %v3024
        %v3033 = vunpack.c.l.b16 %v3025
        %v3034 = vunpack.c.l.b16 %v3026
        %v3035 = vunpack.c.l.b16 %v3027
        %v3036 = vpack.c.b16 %v3033, %v3032
        %v3037 = vpack.c.b16 %v3035, %v3034
        %v3041 = vsel %vm1023, %v3023, 0
        %3043 = vmatprep.subr.bf16.mxu0 0
        %3044 = vmatpush1.bf16.msra.mxu0 0
        %3045 = vmatprep.subr.bf16.mxu0 0
        %3046 = vmatpush1.bf16.msra.mxu0 0
        %3047 = vmatprep.subr.bf16.mxu0 0
        %3048 = vmatpush1.bf16.msra.mxu0 0
        %3049 = vmatprep.subr.bf16.mxu0 0
        %3050 = vmatpush1.bf16.msra.mxu0 0
        %3051 = vmatprep.subr.bf16.mxu0 0
        %3052 = vmatpush1.bf16.msra.mxu0 0
        %3053 = vmatprep.subr.bf16.mxu0 0
        %3054 = vmatpush1.bf16.msra.mxu0 0
        %3055 = vmatprep.subr.bf16.mxu0 0
        %3056 = vmatpush1.bf16.msra.mxu0 %v3037
        %3057 = vmatprep.subr.bf16.mxu0 0
        %3058 = vmatpush1.bf16.msra.mxu0 %v3036
        %3059 = vmatprep.subr.bf16.mxu0 0
        %3060 = vmatpush2.bf16.msra.mxu0 0
        %3061 = vmatprep.subr.bf16.mxu0 0
        %3062 = vmatpush2.bf16.msra.mxu0 0
        %3063 = vmatprep.subr.bf16.mxu0 0
        %3064 = vmatpush2.bf16.msra.mxu0 0
        %3065 = vmatprep.subr.bf16.mxu0 0
        %3066 = vmatpush2.bf16.msra.mxu0 0
        %3067 = vmatprep.subr.bf16.mxu0 0
        %3068 = vmatpush2.bf16.msra.mxu0 0
        %3069 = vmatprep.subr.bf16.mxu0 0
        %3070 = vmatpush2.bf16.msra.mxu0 0
        %3071 = vmatprep.subr.bf16.mxu0 0
        %3072 = vmatpush2.bf16.msra.mxu0 0
        %3073 = vmatprep.subr.bf16.mxu0 0
        %3074 = vmatpush2.bf16.msra.mxu0 0
        %3075 = vmatprep.mubr.bf16.mxu0 0
        %3076 = vmatmul.mubr.bf16.gmra.mxu0 %v3041
        %v3077 = vpop.f32.mrf.mxu0
        %v3078 = vadd.f32 %v1004, %v3077
        %v3079 = vpop.f32.mrf.mxu0
        %v3080 = vpop.f32.mrf.mxu0
        %v3081 = vadd.f32 %v1005, %v3080
        %v3082 = vpop.f32.mrf.mxu0
        %3083 = vdwg.mxu0
        %v3084 = vld [vmem:[%s962] sm:$0x1]
        %v3085 = vld [vmem:[%s965] sm:$0x1]
        %v3086 = vsel %vm1023, %v3078, 0.0
        %3087 = vadd.xlane.f32.xlu0 %v3086
        %v3088 = vpop.xlane.xlu0 %3087
        %v3089 = vsel %vm1023, %v3081, 0.0
        %3090 = vadd.xlane.f32.xlu0 %v3089
        %v3091 = vpop.xlane.xlu0 %3090
        %v3092 = vrcp.pop 32.0
        %v3093 = vmul.f32 %v3088, %v3092
        %v3094 = vmul.f32 %v3091, %v3092
        %v3095 = vsub.f32 %v3078, %v3093
        %v3096 = vsub.f32 %v3081, %v3094
        %v3097 = vmul.f32 %v3095, %v3095
        %v3098 = vmul.f32 %v3096, %v3096
        %v3099 = vsel %vm1023, %v3097, 0.0
        %3100 = vadd.xlane.f32.xlu0 %v3099
        %v3101 = vpop.xlane.xlu0 %3100
        %v3102 = vsel %vm1023, %v3098, 0.0
        %3103 = vadd.xlane.f32.xlu0 %v3102
        %v3104 = vpop.xlane.xlu0 %3103
        %v3105 = vmul.f32 %v3101, %v3092
        %v3106 = vmul.f32 %v3104, %v3092
        %v3107 = vadd.f32 %v3105, 1e-06
        %v3108 = vadd.f32 %v3106, 1e-06
        %v3109 = vrsqrt.pop %v3107
        %v3110 = vrsqrt.pop %v3108
        %v3111 = vmul.f32 %v3095, %v3109
        %v3112 = vmul.f32 %v3096, %v3110
        %v3114 = vlaneseq
        %v3115 = vshrl.u32 %v3114, 7
        %v3116 = vsub.s32 0, %v3115
        %v3117 = vrot.slane %v3084, %v3116
        %v3119 = vmul.f32 %v3111, %v3117
        %v3120 = vmul.f32 %v3112, %v3117
        %v3122 = vlaneseq
        %v3123 = vshrl.u32 %v3122, 7
        %v3124 = vsub.s32 0, %v3123
        %v3125 = vrot.slane %v3085, %v3124
        %v3127 = vadd.f32 %v3119, %v3125
        %v3128 = vadd.f32 %v3120, %v3125
        %v3129 = vpack.c.bf16 %v3128, %v3127
        %v3130 = vld [vmem:[%s970] sm:$0xf]
        %v3131 = vld [vmem:[%s970 + $0x4] sm:$0xf]
        %v3132 = vld [vmem:[%s970 + $0x8] sm:$0xf]
        %v3133 = vld [vmem:[%s970 + $0xc] sm:$0xf]
        %v3138 = vunpack.c.l.b16 %v3130
        %v3139 = vunpack.c.l.b16 %v3131
        %v3140 = vunpack.c.l.b16 %v3132
        %v3141 = vunpack.c.l.b16 %v3133
        %v3142 = vpack.c.b16 %v3139, %v3138
        %v3143 = vpack.c.b16 %v3141, %v3140
        %v3147 = vsel %vm1023, %v3129, 0
        %3149 = vmatprep.subr.bf16.mxu0 0
        %3150 = vmatpush1.bf16.msra.mxu0 0
        %3151 = vmatprep.subr.bf16.mxu0 0
        %3152 = vmatpush1.bf16.msra.mxu0 0
        %3153 = vmatprep.subr.bf16.mxu0 0
        %3154 = vmatpush1.bf16.msra.mxu0 0
        %3155 = vmatprep.subr.bf16.mxu0 0
        %3156 = vmatpush1.bf16.msra.mxu0 0
        %3157 = vmatprep.subr.bf16.mxu0 0
        %3158 = vmatpush1.bf16.msra.mxu0 0
        %3159 = vmatprep.subr.bf16.mxu0 0
        %3160 = vmatpush1.bf16.msra.mxu0 0
        %3161 = vmatprep.subr.bf16.mxu0 0
        %3162 = vmatpush1.bf16.msra.mxu0 %v3143
        %3163 = vmatprep.subr.bf16.mxu0 0
        %3164 = vmatpush1.bf16.msra.mxu0 %v3142
        %3165 = vmatprep.subr.bf16.mxu0 0
        %3166 = vmatpush2.bf16.msra.mxu0 0
        %3167 = vmatprep.subr.bf16.mxu0 0
        %3168 = vmatpush2.bf16.msra.mxu0 0
        %3169 = vmatprep.subr.bf16.mxu0 0
        %3170 = vmatpush2.bf16.msra.mxu0 0
        %3171 = vmatprep.subr.bf16.mxu0 0
        %3172 = vmatpush2.bf16.msra.mxu0 0
        %3173 = vmatprep.subr.bf16.mxu0 0
        %3174 = vmatpush2.bf16.msra.mxu0 0
        %3175 = vmatprep.subr.bf16.mxu0 0
        %3176 = vmatpush2.bf16.msra.mxu0 0
        %3177 = vmatprep.subr.bf16.mxu0 0
        %3178 = vmatpush2.bf16.msra.mxu0 0
        %3179 = vmatprep.subr.bf16.mxu0 0
        %3180 = vmatpush2.bf16.msra.mxu0 0
        %3181 = vmatprep.mubr.bf16.mxu0 0
        %3182 = vmatmul.mubr.bf16.gmra.mxu0 %v3147
        %v3183 = vpop.f32.mrf.mxu0
        %v3184 = vadd.f32 0.0, %v3183
        %v3185 = vpop.f32.mrf.mxu0
        %v3186 = vpop.f32.mrf.mxu0
        %v3187 = vadd.f32 0.0, %v3186
        %v3188 = vpop.f32.mrf.mxu0
        %3189 = vdwg.mxu0
        %v3190 = vld [vmem:[#allocation7] sm:$0xf]
        %v3191 = vld [vmem:[#allocation7 + $0x4] sm:$0xf]
        %v3192 = vld [vmem:[#allocation7 + $0x8] sm:$0xf]
        %v3193 = vld [vmem:[#allocation7 + $0xc] sm:$0xf]
        %v3194 = vld [vmem:[%s814] sm:$0xf]
        %v3195 = vld [vmem:[%s814 + $0x4] sm:$0xf]
        %v3196 = vld [vmem:[%s814 + $0x8] sm:$0xf]
        %v3197 = vld [vmem:[%s814 + $0xc] sm:$0xf]
        %v3202 = vunpack.c.l.b16 %v3190
        %v3203 = vunpack.c.l.b16 %v3191
        %v3204 = vunpack.c.l.b16 %v3192
        %v3205 = vunpack.c.l.b16 %v3193
        %v3206 = vpack.c.b16 %v3203, %v3202
        %v3207 = vpack.c.b16 %v3205, %v3204
        %v3212 = vunpack.c.l.b16 %v3194
        %v3213 = vunpack.c.l.b16 %v3195
        %v3214 = vunpack.c.l.b16 %v3196
        %v3215 = vunpack.c.l.b16 %v3197
        %v3216 = vpack.c.b16 %v3213, %v3212
        %v3217 = vpack.c.b16 %v3215, %v3214
        %v3221 = vsel %vm1023, %v3206, 0
        %v3224 = vsel %vm1023, %v3207, 0
        %3226 = vmatprep.subr.bf16.mxu0 0
        %3227 = vmatpush1.bf16.msra.mxu0 0
        %3228 = vmatprep.subr.bf16.mxu0 0
        %3229 = vmatpush1.bf16.msra.mxu0 0
        %3230 = vmatprep.subr.bf16.mxu0 0
        %3231 = vmatpush1.bf16.msra.mxu0 0
        %3232 = vmatprep.subr.bf16.mxu0 0
        %3233 = vmatpush1.bf16.msra.mxu0 0
        %3234 = vmatprep.subr.bf16.mxu0 0
        %3235 = vmatpush1.bf16.msra.mxu0 0
        %3236 = vmatprep.subr.bf16.mxu0 0
        %3237 = vmatpush1.bf16.msra.mxu0 0
        %3238 = vmatprep.subr.bf16.mxu0 0
        %3239 = vmatpush1.bf16.msra.mxu0 %v3217
        %3240 = vmatprep.subr.bf16.mxu0 0
        %3241 = vmatpush1.bf16.msra.mxu0 %v3216
        %3242 = vmatprep.subr.bf16.mxu0 0
        %3243 = vmatpush2.bf16.msra.mxu0 0
        %3244 = vmatprep.subr.bf16.mxu0 0
        %3245 = vmatpush2.bf16.msra.mxu0 0
        %3246 = vmatprep.subr.bf16.mxu0 0
        %3247 = vmatpush2.bf16.msra.mxu0 0
        %3248 = vmatprep.subr.bf16.mxu0 0
        %3249 = vmatpush2.bf16.msra.mxu0 0
        %3250 = vmatprep.subr.bf16.mxu0 0
        %3251 = vmatpush2.bf16.msra.mxu0 0
        %3252 = vmatprep.subr.bf16.mxu0 0
        %3253 = vmatpush2.bf16.msra.mxu0 0
        %3254 = vmatprep.subr.bf16.mxu0 0
        %3255 = vmatpush2.bf16.msra.mxu0 0
        %3256 = vmatprep.subr.bf16.mxu0 0
        %3257 = vmatpush2.bf16.msra.mxu0 0
        %3258 = vmatprep.mubr.bf16.mxu0 0
        %3259 = vmatmul.mubr.bf16.gmra.mxu0 %v3221
        %v3260 = vpop.f32.mrf.mxu0
        %v3261 = vadd.f32 0.0, %v3260
        %v3262 = vpop.f32.mrf.mxu0
        %v3263 = vpop.f32.mrf.mxu0
        %v3264 = vadd.f32 0.0, %v3263
        %v3265 = vpop.f32.mrf.mxu0
        %3266 = vmatprep.mubr.bf16.mxu0 0
        %3267 = vmatmul.mubr.bf16.gmra.mxu0 %v3224
        %v3268 = vpop.f32.mrf.mxu0
        %v3269 = vadd.f32 0.0, %v3268
        %v3270 = vpop.f32.mrf.mxu0
        %v3271 = vpop.f32.mrf.mxu0
        %v3272 = vadd.f32 0.0, %v3271
        %v3273 = vpop.f32.mrf.mxu0
        %3274 = vdwg.mxu0
        %v3275 = vpack.c.bf16 %v3264, %v3261
        %v3276 = vpack.c.bf16 %v3272, %v3269
        %v3277 = vpack.c.bf16 %v3187, %v3184
        %v3278 = vld [vmem:[%s3] sm:$0x1]
        %v3280 = vlaneseq
        %v3281 = vshrl.u32 %v3280, 7
        %v3282 = vsub.s32 0, %v3281
        %v3283 = vrot.slane %v3278, %v3282
        %v3286 = vsel %vm1073, %v3277, 0
        %v3289 = vsel %vm1073, %v3275, 0
        %3291 = vmatprep.subr.bf16.mxu0 0
        %3292 = vmatpush1.bf16.xpose.msra.mxu0 0
        %3293 = vmatprep.subr.bf16.mxu0 0
        %3294 = vmatpush1.bf16.xpose.msra.mxu0 0
        %3295 = vmatprep.subr.bf16.mxu0 0
        %3296 = vmatpush1.bf16.xpose.msra.mxu0 0
        %3297 = vmatprep.subr.bf16.mxu0 0
        %3298 = vmatpush1.bf16.xpose.msra.mxu0 0
        %3299 = vmatprep.subr.bf16.mxu0 0
        %3300 = vmatpush1.bf16.xpose.msra.mxu0 0
        %3301 = vmatprep.subr.bf16.mxu0 0
        %3302 = vmatpush1.bf16.xpose.msra.mxu0 0
        %3303 = vmatprep.subr.bf16.mxu0 0
        %3304 = vmatpush1.bf16.xpose.msra.mxu0 0
        %3305 = vmatprep.subr.bf16.mxu0 0
        %3306 = vmatpush1.bf16.xpose.msra.mxu0 %v3289
        %3307 = vmatprep.subr.bf16.mxu0 0
        %3308 = vmatpush2.bf16.xpose.msra.mxu0 0
        %3309 = vmatprep.subr.bf16.mxu0 0
        %3310 = vmatpush2.bf16.xpose.msra.mxu0 0
        %3311 = vmatprep.subr.bf16.mxu0 0
        %3312 = vmatpush2.bf16.xpose.msra.mxu0 0
        %3313 = vmatprep.subr.bf16.mxu0 0
        %3314 = vmatpush2.bf16.xpose.msra.mxu0 0
        %3315 = vmatprep.subr.bf16.mxu0 0
        %3316 = vmatpush2.bf16.xpose.msra.mxu0 0
        %3317 = vmatprep.subr.bf16.mxu0 0
        %3318 = vmatpush2.bf16.xpose.msra.mxu0 0
        %3319 = vmatprep.subr.bf16.mxu0 0
        %3320 = vmatpush2.bf16.xpose.msra.mxu0 0
        %3321 = vmatprep.subr.bf16.mxu0 0
        %3322 = vmatpush2.bf16.xpose.msra.mxu0 0
        %3323 = vmatprep.mubr.bf16.mxu0 0
        %3324 = vmatmul.mubr.bf16.gmra.mxu0 %v3286
        %v3325 = vpop.f32.mrf.mxu0
        %v3326 = vadd.f32 %v3283, %v3325
        %v3327 = vpop.f32.mrf.mxu0
        %v3328 = vpop.f32.mrf.mxu0
        %v3329 = vpop.f32.mrf.mxu0
        %3330 = vdwg.mxu0
        %vm3331 = vcmask 130048
        %v3332 = vsel %vm3331, %v3326, -inf
        %3333 = vmax.xlane.f32.xlu0 %v3332
        %v3334 = vpop.xlane.xlu0 %3333
        %v3335 = vsub.f32 %v3326, %v3334
        %v3336 = vmul.f32 %v3335, 1.442695
        %v3337 = vpow.pop %v3336
        %v3338 = vsel %vm3331, %v3337, 0.0
        %3339 = vadd.xlane.f32.xlu0 %v3338
        %v3340 = vpop.xlane.xlu0 %3339
        %v3341 = vrcp.pop %v3340
        %v3342 = vmul.f32 %v3337, %v3341
        %v3343 = vpack.c.bf16 %v3342, %v3342
        %vm3344 = vcmask 125952
        %3345 = vst.msk [vmem:[%s949] sm:$0xf] %vm3344, %v3343
        %3347 = vrot.lane.b32.xlu0 %v3275, 96
        %v3348 = vpop.permute.xlu0 %3347
        %v3351 = vsel %vm3331, %v3343, 0
        %3353 = vmatprep.subr.bf16.mxu0 0
        %3354 = vmatpush1.bf16.msra.mxu0 0
        %3355 = vmatprep.subr.bf16.mxu0 0
        %3356 = vmatpush1.bf16.msra.mxu0 0
        %3357 = vmatprep.subr.bf16.mxu0 0
        %3358 = vmatpush1.bf16.msra.mxu0 0
        %3359 = vmatprep.subr.bf16.mxu0 0
        %3360 = vmatpush1.bf16.msra.mxu0 0
        %3361 = vmatprep.subr.bf16.mxu0 0
        %3362 = vmatpush1.bf16.msra.mxu0 0
        %3363 = vmatprep.subr.bf16.mxu0 0
        %3364 = vmatpush1.bf16.msra.mxu0 0
        %3365 = vmatprep.subr.bf16.mxu0 0
        %3366 = vmatpush1.bf16.msra.mxu0 0
        %3367 = vmatprep.subr.bf16.mxu0 0
        %3368 = vmatpush1.bf16.msra.mxu0 %v3348
        %3369 = vmatprep.subr.bf16.mxu0 0
        %3370 = vmatpush2.bf16.msra.mxu0 0
        %3371 = vmatprep.subr.bf16.mxu0 0
        %3372 = vmatpush2.bf16.msra.mxu0 0
        %3373 = vmatprep.subr.bf16.mxu0 0
        %3374 = vmatpush2.bf16.msra.mxu0 0
        %3375 = vmatprep.subr.bf16.mxu0 0
        %3376 = vmatpush2.bf16.msra.mxu0 0
        %3377 = vmatprep.subr.bf16.mxu0 0
        %3378 = vmatpush2.bf16.msra.mxu0 0
        %3379 = vmatprep.subr.bf16.mxu0 0
        %3380 = vmatpush2.bf16.msra.mxu0 0
        %3381 = vmatprep.subr.bf16.mxu0 0
        %3382 = vmatpush2.bf16.msra.mxu0 0
        %3383 = vmatprep.subr.bf16.mxu0 0
        %3384 = vmatpush2.bf16.msra.mxu0 0
        %3385 = vmatprep.mubr.bf16.mxu0 0
        %3386 = vmatmul.mubr.bf16.gmra.mxu0 %v3351
        %v3387 = vpop.f32.mrf.mxu0
        %v3388 = vadd.f32 0.0, %v3387
        %v3389 = vpop.f32.mrf.mxu0
        %v3390 = vpop.f32.mrf.mxu0
        %v3391 = vpop.f32.mrf.mxu0
        %3392 = vdwg.mxu0
        %3393 = vst.msk [vmem:[#allocation3] sm:$0xff] %vm1073, %v3388
        %3395 = vrot.lane.b32.xlu0 %v3277, 124
        %v3396 = vpop.permute.xlu0 %3395
        %3397 = vrot.lane.b32.xlu0 %v3275, 124
        %v3398 = vpop.permute.xlu0 %3397
        %v3400 = vsel %vm1073, %v3396, 0
        %v3403 = vsel %vm1073, %v3398, 0
        %3405 = vmatprep.subr.bf16.mxu0 0
        %3406 = vmatpush1.bf16.xpose.msra.mxu0 0
        %3407 = vmatprep.subr.bf16.mxu0 0
        %3408 = vmatpush1.bf16.xpose.msra.mxu0 0
        %3409 = vmatprep.subr.bf16.mxu0 0
        %3410 = vmatpush1.bf16.xpose.msra.mxu0 0
        %3411 = vmatprep.subr.bf16.mxu0 0
        %3412 = vmatpush1.bf16.xpose.msra.mxu0 0
        %3413 = vmatprep.subr.bf16.mxu0 0
        %3414 = vmatpush1.bf16.xpose.msra.mxu0 0
        %3415 = vmatprep.subr.bf16.mxu0 0
        %3416 = vmatpush1.bf16.xpose.msra.mxu0 0
        %3417 = vmatprep.subr.bf16.mxu0 0
        %3418 = vmatpush1.bf16.xpose.msra.mxu0 0
        %3419 = vmatprep.subr.bf16.mxu0 0
        %3420 = vmatpush1.bf16.xpose.msra.mxu0 %v3403
        %3421 = vmatprep.subr.bf16.mxu0 0
        %3422 = vmatpush2.bf16.xpose.msra.mxu0 0
        %3423 = vmatprep.subr.bf16.mxu0 0
        %3424 = vmatpush2.bf16.xpose.msra.mxu0 0
        %3425 = vmatprep.subr.bf16.mxu0 0
        %3426 = vmatpush2.bf16.xpose.msra.mxu0 0
        %3427 = vmatprep.subr.bf16.mxu0 0
        %3428 = vmatpush2.bf16.xpose.msra.mxu0 0
        %3429 = vmatprep.subr.bf16.mxu0 0
        %3430 = vmatpush2.bf16.xpose.msra.mxu0 0
        %3431 = vmatprep.subr.bf16.mxu0 0
        %3432 = vmatpush2.bf16.xpose.msra.mxu0 0
        %3433 = vmatprep.subr.bf16.mxu0 0
        %3434 = vmatpush2.bf16.xpose.msra.mxu0 0
        %3435 = vmatprep.subr.bf16.mxu0 0
        %3436 = vmatpush2.bf16.xpose.msra.mxu0 0
        %3437 = vmatprep.mubr.bf16.mxu0 0
        %3438 = vmatmul.mubr.bf16.gmra.mxu0 %v3400
        %v3439 = vpop.f32.mrf.mxu0
        %v3440 = vadd.f32 %v3283, %v3439
        %v3441 = vpop.f32.mrf.mxu0
        %v3442 = vpop.f32.mrf.mxu0
        %v3443 = vpop.f32.mrf.mxu0
        %3444 = vdwg.mxu0
        %v3445 = vsel %vm3331, %v3440, -inf
        %3446 = vmax.xlane.f32.xlu0 %v3445
        %v3447 = vpop.xlane.xlu0 %3446
        %v3448 = vsub.f32 %v3440, %v3447
        %v3449 = vmul.f32 %v3448, 1.442695
        %v3450 = vpow.pop %v3449
        %v3451 = vsel %vm3331, %v3450, 0.0
        %3452 = vadd.xlane.f32.xlu0 %v3451
        %v3453 = vpop.xlane.xlu0 %3452
        %v3454 = vrcp.pop %v3453
        %v3455 = vmul.f32 %v3450, %v3454
        %v3456 = vpack.c.bf16 %v3455, %v3455
        %v3458 = vunpack.c.l.b16 %v3456
        %v3459 = vpack.c.b16 %v3458, %v3458
        %3460 = vrot.lane.b32.xlu0 %v3459, 16
        %v3461 = vpop.permute.xlu0 %3460
        %vm3463 = vcmask 257152
        %3464 = vst.msk [vmem:[%s949] sm:$0xf] %vm3463, %v3461
        %3465 = vrot.lane.b32.xlu0 %v3275, 92
        %v3466 = vpop.permute.xlu0 %3465
        %v3469 = vsel %vm3331, %v3456, 0
        %3471 = vmatprep.subr.bf16.mxu0 0
        %3472 = vmatpush1.bf16.msra.mxu0 0
        %3473 = vmatprep.subr.bf16.mxu0 0
        %3474 = vmatpush1.bf16.msra.mxu0 0
        %3475 = vmatprep.subr.bf16.mxu0 0
        %3476 = vmatpush1.bf16.msra.mxu0 0
        %3477 = vmatprep.subr.bf16.mxu0 0
        %3478 = vmatpush1.bf16.msra.mxu0 0
        %3479 = vmatprep.subr.bf16.mxu0 0
        %3480 = vmatpush1.bf16.msra.mxu0 0
        %3481 = vmatprep.subr.bf16.mxu0 0
        %3482 = vmatpush1.bf16.msra.mxu0 0
        %3483 = vmatprep.subr.bf16.mxu0 0
        %3484 = vmatpush1.bf16.msra.mxu0 0
        %3485 = vmatprep.subr.bf16.mxu0 0
        %3486 = vmatpush1.bf16.msra.mxu0 %v3466
        %3487 = vmatprep.subr.bf16.mxu0 0
        %3488 = vmatpush2.bf16.msra.mxu0 0
        %3489 = vmatprep.subr.bf16.mxu0 0
        %3490 = vmatpush2.bf16.msra.mxu0 0
        %3491 = vmatprep.subr.bf16.mxu0 0
        %3492 = vmatpush2.bf16.msra.mxu0 0
        %3493 = vmatprep.subr.bf16.mxu0 0
        %3494 = vmatpush2.bf16.msra.mxu0 0
        %3495 = vmatprep.subr.bf16.mxu0 0
        %3496 = vmatpush2.bf16.msra.mxu0 0
        %3497 = vmatprep.subr.bf16.mxu0 0
        %3498 = vmatpush2.bf16.msra.mxu0 0
        %3499 = vmatprep.subr.bf16.mxu0 0
        %3500 = vmatpush2.bf16.msra.mxu0 0
        %3501 = vmatprep.subr.bf16.mxu0 0
        %3502 = vmatpush2.bf16.msra.mxu0 0
        %3503 = vmatprep.mubr.bf16.mxu0 0
        %3504 = vmatmul.mubr.bf16.gmra.mxu0 %v3469
        %v3505 = vpop.f32.mrf.mxu0
        %v3506 = vadd.f32 0.0, %v3505
        %v3507 = vpop.f32.mrf.mxu0
        %v3508 = vpop.f32.mrf.mxu0
        %v3509 = vpop.f32.mrf.mxu0
        %3510 = vdwg.mxu0
        %3512 = vrot.lane.b32.xlu0 %v3506, 4
        %v3513 = vpop.permute.xlu0 %3512
        %3515 = vst.msk [vmem:[#allocation3] sm:$0xff] %vm1307, %v3513
        %3516 = vrot.lane.b32.xlu0 %v3277, 120
        %v3517 = vpop.permute.xlu0 %3516
        %3518 = vrot.lane.b32.xlu0 %v3275, 120
        %v3519 = vpop.permute.xlu0 %3518
        %v3521 = vsel %vm1073, %v3517, 0
        %v3524 = vsel %vm1073, %v3519, 0
        %3526 = vmatprep.subr.bf16.mxu0 0
        %3527 = vmatpush1.bf16.xpose.msra.mxu0 0
        %3528 = vmatprep.subr.bf16.mxu0 0
        %3529 = vmatpush1.bf16.xpose.msra.mxu0 0
        %3530 = vmatprep.subr.bf16.mxu0 0
        %3531 = vmatpush1.bf16.xpose.msra.mxu0 0
        %3532 = vmatprep.subr.bf16.mxu0 0
        %3533 = vmatpush1.bf16.xpose.msra.mxu0 0
        %3534 = vmatprep.subr.bf16.mxu0 0
        %3535 = vmatpush1.bf16.xpose.msra.mxu0 0
        %3536 = vmatprep.subr.bf16.mxu0 0
        %3537 = vmatpush1.bf16.xpose.msra.mxu0 0
        %3538 = vmatprep.subr.bf16.mxu0 0
        %3539 = vmatpush1.bf16.xpose.msra.mxu0 0
        %3540 = vmatprep.subr.bf16.mxu0 0
        %3541 = vmatpush1.bf16.xpose.msra.mxu0 %v3524
        %3542 = vmatprep.subr.bf16.mxu0 0
        %3543 = vmatpush2.bf16.xpose.msra.mxu0 0
        %3544 = vmatprep.subr.bf16.mxu0 0
        %3545 = vmatpush2.bf16.xpose.msra.mxu0 0
        %3546 = vmatprep.subr.bf16.mxu0 0
        %3547 = vmatpush2.bf16.xpose.msra.mxu0 0
        %3548 = vmatprep.subr.bf16.mxu0 0
        %3549 = vmatpush2.bf16.xpose.msra.mxu0 0
        %3550 = vmatprep.subr.bf16.mxu0 0
        %3551 = vmatpush2.bf16.xpose.msra.mxu0 0
        %3552 = vmatprep.subr.bf16.mxu0 0
        %3553 = vmatpush2.bf16.xpose.msra.mxu0 0
        %3554 = vmatprep.subr.bf16.mxu0 0
        %3555 = vmatpush2.bf16.xpose.msra.mxu0 0
        %3556 = vmatprep.subr.bf16.mxu0 0
        %3557 = vmatpush2.bf16.xpose.msra.mxu0 0
        %3558 = vmatprep.mubr.bf16.mxu0 0
        %3559 = vmatmul.mubr.bf16.gmra.mxu0 %v3521
        %v3560 = vpop.f32.mrf.mxu0
        %v3561 = vadd.f32 %v3283, %v3560
        %v3562 = vpop.f32.mrf.mxu0
        %v3563 = vpop.f32.mrf.mxu0
        %v3564 = vpop.f32.mrf.mxu0
        %3565 = vdwg.mxu0
        %v3566 = vsel %vm3331, %v3561, -inf
        %3567 = vmax.xlane.f32.xlu0 %v3566
        %v3568 = vpop.xlane.xlu0 %3567
        %v3569 = vsub.f32 %v3561, %v3568
        %v3570 = vmul.f32 %v3569, 1.442695
        %v3571 = vpow.pop %v3570
        %v3572 = vsel %vm3331, %v3571, 0.0
        %3573 = vadd.xlane.f32.xlu0 %v3572
        %v3574 = vpop.xlane.xlu0 %3573
        %v3575 = vrcp.pop %v3574
        %v3576 = vmul.f32 %v3571, %v3575
        %v3577 = vpack.c.bf16 %v3576, %v3576
        %v3579 = vunpack.c.l.b16 %v3577
        %v3580 = vpack.c.b16 %v3579, %v3579
        %3581 = vrot.lane.b32.xlu0 %v3580, 32
        %v3582 = vpop.permute.xlu0 %3581
        %vm3584 = vcmask 388352
        %3585 = vst.msk [vmem:[%s949] sm:$0xf] %vm3584, %v3582
        %3586 = vrot.lane.b32.xlu0 %v3275, 88
        %v3587 = vpop.permute.xlu0 %3586
        %v3590 = vsel %vm3331, %v3577, 0
        %3592 = vmatprep.subr.bf16.mxu0 0
        %3593 = vmatpush1.bf16.msra.mxu0 0
        %3594 = vmatprep.subr.bf16.mxu0 0
        %3595 = vmatpush1.bf16.msra.mxu0 0
        %3596 = vmatprep.subr.bf16.mxu0 0
        %3597 = vmatpush1.bf16.msra.mxu0 0
        %3598 = vmatprep.subr.bf16.mxu0 0
        %3599 = vmatpush1.bf16.msra.mxu0 0
        %3600 = vmatprep.subr.bf16.mxu0 0
        %3601 = vmatpush1.bf16.msra.mxu0 0
        %3602 = vmatprep.subr.bf16.mxu0 0
        %3603 = vmatpush1.bf16.msra.mxu0 0
        %3604 = vmatprep.subr.bf16.mxu0 0
        %3605 = vmatpush1.bf16.msra.mxu0 0
        %3606 = vmatprep.subr.bf16.mxu0 0
        %3607 = vmatpush1.bf16.msra.mxu0 %v3587
        %3608 = vmatprep.subr.bf16.mxu0 0
        %3609 = vmatpush2.bf16.msra.mxu0 0
        %3610 = vmatprep.subr.bf16.mxu0 0
        %3611 = vmatpush2.bf16.msra.mxu0 0
        %3612 = vmatprep.subr.bf16.mxu0 0
        %3613 = vmatpush2.bf16.msra.mxu0 0
        %3614 = vmatprep.subr.bf16.mxu0 0
        %3615 = vmatpush2.bf16.msra.mxu0 0
        %3616 = vmatprep.subr.bf16.mxu0 0
        %3617 = vmatpush2.bf16.msra.mxu0 0
        %3618 = vmatprep.subr.bf16.mxu0 0
        %3619 = vmatpush2.bf16.msra.mxu0 0
        %3620 = vmatprep.subr.bf16.mxu0 0
        %3621 = vmatpush2.bf16.msra.mxu0 0
        %3622 = vmatprep.subr.bf16.mxu0 0
        %3623 = vmatpush2.bf16.msra.mxu0 0
        %3624 = vmatprep.mubr.bf16.mxu0 0
        %3625 = vmatmul.mubr.bf16.gmra.mxu0 %v3590
        %v3626 = vpop.f32.mrf.mxu0
        %v3627 = vadd.f32 0.0, %v3626
        %v3628 = vpop.f32.mrf.mxu0
        %v3629 = vpop.f32.mrf.mxu0
        %v3630 = vpop.f32.mrf.mxu0
        %3631 = vdwg.mxu0
        %3633 = vrot.lane.b32.xlu0 %v3627, 8
        %v3634 = vpop.permute.xlu0 %3633
        %3636 = vst.msk [vmem:[#allocation3] sm:$0xff] %vm1431, %v3634
        %3637 = vrot.lane.b32.xlu0 %v3277, 116
        %v3638 = vpop.permute.xlu0 %3637
        %3639 = vrot.lane.b32.xlu0 %v3275, 116
        %v3640 = vpop.permute.xlu0 %3639
        %v3642 = vsel %vm1073, %v3638, 0
        %v3645 = vsel %vm1073, %v3640, 0
        %3647 = vmatprep.subr.bf16.mxu0 0
        %3648 = vmatpush1.bf16.xpose.msra.mxu0 0
        %3649 = vmatprep.subr.bf16.mxu0 0
        %3650 = vmatpush1.bf16.xpose.msra.mxu0 0
        %3651 = vmatprep.subr.bf16.mxu0 0
        %3652 = vmatpush1.bf16.xpose.msra.mxu0 0
        %3653 = vmatprep.subr.bf16.mxu0 0
        %3654 = vmatpush1.bf16.xpose.msra.mxu0 0
        %3655 = vmatprep.subr.bf16.mxu0 0
        %3656 = vmatpush1.bf16.xpose.msra.mxu0 0
        %3657 = vmatprep.subr.bf16.mxu0 0
        %3658 = vmatpush1.bf16.xpose.msra.mxu0 0
        %3659 = vmatprep.subr.bf16.mxu0 0
        %3660 = vmatpush1.bf16.xpose.msra.mxu0 0
        %3661 = vmatprep.subr.bf16.mxu0 0
        %3662 = vmatpush1.bf16.xpose.msra.mxu0 %v3645
        %3663 = vmatprep.subr.bf16.mxu0 0
        %3664 = vmatpush2.bf16.xpose.msra.mxu0 0
        %3665 = vmatprep.subr.bf16.mxu0 0
        %3666 = vmatpush2.bf16.xpose.msra.mxu0 0
        %3667 = vmatprep.subr.bf16.mxu0 0
        %3668 = vmatpush2.bf16.xpose.msra.mxu0 0
        %3669 = vmatprep.subr.bf16.mxu0 0
        %3670 = vmatpush2.bf16.xpose.msra.mxu0 0
        %3671 = vmatprep.subr.bf16.mxu0 0
        %3672 = vmatpush2.bf16.xpose.msra.mxu0 0
        %3673 = vmatprep.subr.bf16.mxu0 0
        %3674 = vmatpush2.bf16.xpose.msra.mxu0 0
        %3675 = vmatprep.subr.bf16.mxu0 0
        %3676 = vmatpush2.bf16.xpose.msra.mxu0 0
        %3677 = vmatprep.subr.bf16.mxu0 0
        %3678 = vmatpush2.bf16.xpose.msra.mxu0 0
        %3679 = vmatprep.mubr.bf16.mxu0 0
        %3680 = vmatmul.mubr.bf16.gmra.mxu0 %v3642
        %v3681 = vpop.f32.mrf.mxu0
        %v3682 = vadd.f32 %v3283, %v3681
        %v3683 = vpop.f32.mrf.mxu0
        %v3684 = vpop.f32.mrf.mxu0
        %v3685 = vpop.f32.mrf.mxu0
        %3686 = vdwg.mxu0
        %v3687 = vsel %vm3331, %v3682, -inf
        %3688 = vmax.xlane.f32.xlu0 %v3687
        %v3689 = vpop.xlane.xlu0 %3688
        %v3690 = vsub.f32 %v3682, %v3689
        %v3691 = vmul.f32 %v3690, 1.442695
        %v3692 = vpow.pop %v3691
        %v3693 = vsel %vm3331, %v3692, 0.0
        %3694 = vadd.xlane.f32.xlu0 %v3693
        %v3695 = vpop.xlane.xlu0 %3694
        %v3696 = vrcp.pop %v3695
        %v3697 = vmul.f32 %v3692, %v3696
        %v3698 = vpack.c.bf16 %v3697, %v3697
        %v3700 = vunpack.c.l.b16 %v3698
        %v3701 = vpack.c.b16 %v3700, %v3700
        %3702 = vrot.lane.b32.xlu0 %v3701, 48
        %v3703 = vpop.permute.xlu0 %3702
        %vm3705 = vcmask 519552
        %3706 = vst.msk [vmem:[%s949] sm:$0xf] %vm3705, %v3703
        %3707 = vrot.lane.b32.xlu0 %v3275, 84
        %v3708 = vpop.permute.xlu0 %3707
        %v3711 = vsel %vm3331, %v3698, 0
        %3713 = vmatprep.subr.bf16.mxu0 0
        %3714 = vmatpush1.bf16.msra.mxu0 0
        %3715 = vmatprep.subr.bf16.mxu0 0
        %3716 = vmatpush1.bf16.msra.mxu0 0
        %3717 = vmatprep.subr.bf16.mxu0 0
        %3718 = vmatpush1.bf16.msra.mxu0 0
        %3719 = vmatprep.subr.bf16.mxu0 0
        %3720 = vmatpush1.bf16.msra.mxu0 0
        %3721 = vmatprep.subr.bf16.mxu0 0
        %3722 = vmatpush1.bf16.msra.mxu0 0
        %3723 = vmatprep.subr.bf16.mxu0 0
        %3724 = vmatpush1.bf16.msra.mxu0 0
        %3725 = vmatprep.subr.bf16.mxu0 0
        %3726 = vmatpush1.bf16.msra.mxu0 0
        %3727 = vmatprep.subr.bf16.mxu0 0
        %3728 = vmatpush1.bf16.msra.mxu0 %v3708
        %3729 = vmatprep.subr.bf16.mxu0 0
        %3730 = vmatpush2.bf16.msra.mxu0 0
        %3731 = vmatprep.subr.bf16.mxu0 0
        %3732 = vmatpush2.bf16.msra.mxu0 0
        %3733 = vmatprep.subr.bf16.mxu0 0
        %3734 = vmatpush2.bf16.msra.mxu0 0
        %3735 = vmatprep.subr.bf16.mxu0 0
        %3736 = vmatpush2.bf16.msra.mxu0 0
        %3737 = vmatprep.subr.bf16.mxu0 0
        %3738 = vmatpush2.bf16.msra.mxu0 0
        %3739 = vmatprep.subr.bf16.mxu0 0
        %3740 = vmatpush2.bf16.msra.mxu0 0
        %3741 = vmatprep.subr.bf16.mxu0 0
        %3742 = vmatpush2.bf16.msra.mxu0 0
        %3743 = vmatprep.subr.bf16.mxu0 0
        %3744 = vmatpush2.bf16.msra.mxu0 0
        %3745 = vmatprep.mubr.bf16.mxu0 0
        %3746 = vmatmul.mubr.bf16.gmra.mxu0 %v3711
        %v3747 = vpop.f32.mrf.mxu0
        %v3748 = vadd.f32 0.0, %v3747
        %v3749 = vpop.f32.mrf.mxu0
        %v3750 = vpop.f32.mrf.mxu0
        %v3751 = vpop.f32.mrf.mxu0
        %3752 = vdwg.mxu0
        %3754 = vrot.lane.b32.xlu0 %v3748, 12
        %v3755 = vpop.permute.xlu0 %3754
        %3757 = vst.msk [vmem:[#allocation3] sm:$0xff] %vm1555, %v3755
        %3758 = vrot.lane.b32.xlu0 %v3277, 112
        %v3759 = vpop.permute.xlu0 %3758
        %3760 = vrot.lane.b32.xlu0 %v3275, 112
        %v3761 = vpop.permute.xlu0 %3760
        %v3763 = vsel %vm1073, %v3759, 0
        %v3766 = vsel %vm1073, %v3761, 0
        %3768 = vmatprep.subr.bf16.mxu0 0
        %3769 = vmatpush1.bf16.xpose.msra.mxu0 0
        %3770 = vmatprep.subr.bf16.mxu0 0
        %3771 = vmatpush1.bf16.xpose.msra.mxu0 0
        %3772 = vmatprep.subr.bf16.mxu0 0
        %3773 = vmatpush1.bf16.xpose.msra.mxu0 0
        %3774 = vmatprep.subr.bf16.mxu0 0
        %3775 = vmatpush1.bf16.xpose.msra.mxu0 0
        %3776 = vmatprep.subr.bf16.mxu0 0
        %3777 = vmatpush1.bf16.xpose.msra.mxu0 0
        %3778 = vmatprep.subr.bf16.mxu0 0
        %3779 = vmatpush1.bf16.xpose.msra.mxu0 0
        %3780 = vmatprep.subr.bf16.mxu0 0
        %3781 = vmatpush1.bf16.xpose.msra.mxu0 0
        %3782 = vmatprep.subr.bf16.mxu0 0
        %3783 = vmatpush1.bf16.xpose.msra.mxu0 %v3766
        %3784 = vmatprep.subr.bf16.mxu0 0
        %3785 = vmatpush2.bf16.xpose.msra.mxu0 0
        %3786 = vmatprep.subr.bf16.mxu0 0
        %3787 = vmatpush2.bf16.xpose.msra.mxu0 0
        %3788 = vmatprep.subr.bf16.mxu0 0
        %3789 = vmatpush2.bf16.xpose.msra.mxu0 0
        %3790 = vmatprep.subr.bf16.mxu0 0
        %3791 = vmatpush2.bf16.xpose.msra.mxu0 0
        %3792 = vmatprep.subr.bf16.mxu0 0
        %3793 = vmatpush2.bf16.xpose.msra.mxu0 0
        %3794 = vmatprep.subr.bf16.mxu0 0
        %3795 = vmatpush2.bf16.xpose.msra.mxu0 0
        %3796 = vmatprep.subr.bf16.mxu0 0
        %3797 = vmatpush2.bf16.xpose.msra.mxu0 0
        %3798 = vmatprep.subr.bf16.mxu0 0
        %3799 = vmatpush2.bf16.xpose.msra.mxu0 0
        %3800 = vmatprep.mubr.bf16.mxu0 0
        %3801 = vmatmul.mubr.bf16.gmra.mxu0 %v3763
        %v3802 = vpop.f32.mrf.mxu0
        %v3803 = vadd.f32 %v3283, %v3802
        %v3804 = vpop.f32.mrf.mxu0
        %v3805 = vpop.f32.mrf.mxu0
        %v3806 = vpop.f32.mrf.mxu0
        %3807 = vdwg.mxu0
        %v3808 = vsel %vm3331, %v3803, -inf
        %3809 = vmax.xlane.f32.xlu0 %v3808
        %v3810 = vpop.xlane.xlu0 %3809
        %v3811 = vsub.f32 %v3803, %v3810
        %v3812 = vmul.f32 %v3811, 1.442695
        %v3813 = vpow.pop %v3812
        %v3814 = vsel %vm3331, %v3813, 0.0
        %3815 = vadd.xlane.f32.xlu0 %v3814
        %v3816 = vpop.xlane.xlu0 %3815
        %v3817 = vrcp.pop %v3816
        %v3818 = vmul.f32 %v3813, %v3817
        %v3819 = vpack.c.bf16 %v3818, %v3818
        %v3821 = vunpack.c.l.b16 %v3819
        %v3822 = vpack.c.b16 %v3821, %v3821
        %3823 = vrot.lane.b32.xlu0 %v3822, 64
        %v3824 = vpop.permute.xlu0 %3823
        %vm3826 = vcmask 650752
        %3827 = vst.msk [vmem:[%s949] sm:$0xf] %vm3826, %v3824
        %3828 = vrot.lane.b32.xlu0 %v3275, 80
        %v3829 = vpop.permute.xlu0 %3828
        %v3832 = vsel %vm3331, %v3819, 0
        %3834 = vmatprep.subr.bf16.mxu0 0
        %3835 = vmatpush1.bf16.msra.mxu0 0
        %3836 = vmatprep.subr.bf16.mxu0 0
        %3837 = vmatpush1.bf16.msra.mxu0 0
        %3838 = vmatprep.subr.bf16.mxu0 0
        %3839 = vmatpush1.bf16.msra.mxu0 0
        %3840 = vmatprep.subr.bf16.mxu0 0
        %3841 = vmatpush1.bf16.msra.mxu0 0
        %3842 = vmatprep.subr.bf16.mxu0 0
        %3843 = vmatpush1.bf16.msra.mxu0 0
        %3844 = vmatprep.subr.bf16.mxu0 0
        %3845 = vmatpush1.bf16.msra.mxu0 0
        %3846 = vmatprep.subr.bf16.mxu0 0
        %3847 = vmatpush1.bf16.msra.mxu0 0
        %3848 = vmatprep.subr.bf16.mxu0 0
        %3849 = vmatpush1.bf16.msra.mxu0 %v3829
        %3850 = vmatprep.subr.bf16.mxu0 0
        %3851 = vmatpush2.bf16.msra.mxu0 0
        %3852 = vmatprep.subr.bf16.mxu0 0
        %3853 = vmatpush2.bf16.msra.mxu0 0
        %3854 = vmatprep.subr.bf16.mxu0 0
        %3855 = vmatpush2.bf16.msra.mxu0 0
        %3856 = vmatprep.subr.bf16.mxu0 0
        %3857 = vmatpush2.bf16.msra.mxu0 0
        %3858 = vmatprep.subr.bf16.mxu0 0
        %3859 = vmatpush2.bf16.msra.mxu0 0
        %3860 = vmatprep.subr.bf16.mxu0 0
        %3861 = vmatpush2.bf16.msra.mxu0 0
        %3862 = vmatprep.subr.bf16.mxu0 0
        %3863 = vmatpush2.bf16.msra.mxu0 0
        %3864 = vmatprep.subr.bf16.mxu0 0
        %3865 = vmatpush2.bf16.msra.mxu0 0
        %3866 = vmatprep.mubr.bf16.mxu0 0
        %3867 = vmatmul.mubr.bf16.gmra.mxu0 %v3832
        %v3868 = vpop.f32.mrf.mxu0
        %v3869 = vadd.f32 0.0, %v3868
        %v3870 = vpop.f32.mrf.mxu0
        %v3871 = vpop.f32.mrf.mxu0
        %v3872 = vpop.f32.mrf.mxu0
        %3873 = vdwg.mxu0
        %3875 = vrot.lane.b32.xlu0 %v3869, 16
        %v3876 = vpop.permute.xlu0 %3875
        %3878 = vst.msk [vmem:[#allocation3] sm:$0xff] %vm1679, %v3876
        %3879 = vrot.lane.b32.xlu0 %v3277, 108
        %v3880 = vpop.permute.xlu0 %3879
        %3881 = vrot.lane.b32.xlu0 %v3275, 108
        %v3882 = vpop.permute.xlu0 %3881
        %v3884 = vsel %vm1073, %v3880, 0
        %v3887 = vsel %vm1073, %v3882, 0
        %3889 = vmatprep.subr.bf16.mxu0 0
        %3890 = vmatpush1.bf16.xpose.msra.mxu0 0
        %3891 = vmatprep.subr.bf16.mxu0 0
        %3892 = vmatpush1.bf16.xpose.msra.mxu0 0
        %3893 = vmatprep.subr.bf16.mxu0 0
        %3894 = vmatpush1.bf16.xpose.msra.mxu0 0
        %3895 = vmatprep.subr.bf16.mxu0 0
        %3896 = vmatpush1.bf16.xpose.msra.mxu0 0
        %3897 = vmatprep.subr.bf16.mxu0 0
        %3898 = vmatpush1.bf16.xpose.msra.mxu0 0
        %3899 = vmatprep.subr.bf16.mxu0 0
        %3900 = vmatpush1.bf16.xpose.msra.mxu0 0
        %3901 = vmatprep.subr.bf16.mxu0 0
        %3902 = vmatpush1.bf16.xpose.msra.mxu0 0
        %3903 = vmatprep.subr.bf16.mxu0 0
        %3904 = vmatpush1.bf16.xpose.msra.mxu0 %v3887
        %3905 = vmatprep.subr.bf16.mxu0 0
        %3906 = vmatpush2.bf16.xpose.msra.mxu0 0
        %3907 = vmatprep.subr.bf16.mxu0 0
        %3908 = vmatpush2.bf16.xpose.msra.mxu0 0
        %3909 = vmatprep.subr.bf16.mxu0 0
        %3910 = vmatpush2.bf16.xpose.msra.mxu0 0
        %3911 = vmatprep.subr.bf16.mxu0 0
        %3912 = vmatpush2.bf16.xpose.msra.mxu0 0
        %3913 = vmatprep.subr.bf16.mxu0 0
        %3914 = vmatpush2.bf16.xpose.msra.mxu0 0
        %3915 = vmatprep.subr.bf16.mxu0 0
        %3916 = vmatpush2.bf16.xpose.msra.mxu0 0
        %3917 = vmatprep.subr.bf16.mxu0 0
        %3918 = vmatpush2.bf16.xpose.msra.mxu0 0
        %3919 = vmatprep.subr.bf16.mxu0 0
        %3920 = vmatpush2.bf16.xpose.msra.mxu0 0
        %3921 = vmatprep.mubr.bf16.mxu0 0
        %3922 = vmatmul.mubr.bf16.gmra.mxu0 %v3884
        %v3923 = vpop.f32.mrf.mxu0
        %v3924 = vadd.f32 %v3283, %v3923
        %v3925 = vpop.f32.mrf.mxu0
        %v3926 = vpop.f32.mrf.mxu0
        %v3927 = vpop.f32.mrf.mxu0
        %3928 = vdwg.mxu0
        %v3929 = vsel %vm3331, %v3924, -inf
        %3930 = vmax.xlane.f32.xlu0 %v3929
        %v3931 = vpop.xlane.xlu0 %3930
        %v3932 = vsub.f32 %v3924, %v3931
        %v3933 = vmul.f32 %v3932, 1.442695
        %v3934 = vpow.pop %v3933
        %v3935 = vsel %vm3331, %v3934, 0.0
        %3936 = vadd.xlane.f32.xlu0 %v3935
        %v3937 = vpop.xlane.xlu0 %3936
        %v3938 = vrcp.pop %v3937
        %v3939 = vmul.f32 %v3934, %v3938
        %v3940 = vpack.c.bf16 %v3939, %v3939
        %v3942 = vunpack.c.l.b16 %v3940
        %v3943 = vpack.c.b16 %v3942, %v3942
        %3944 = vrot.lane.b32.xlu0 %v3943, 80
        %v3945 = vpop.permute.xlu0 %3944
        %vm3947 = vcmask 781952
        %3948 = vst.msk [vmem:[%s949] sm:$0xf] %vm3947, %v3945
        %3949 = vrot.lane.b32.xlu0 %v3275, 76
        %v3950 = vpop.permute.xlu0 %3949
        %v3953 = vsel %vm3331, %v3940, 0
        %3955 = vmatprep.subr.bf16.mxu0 0
        %3956 = vmatpush1.bf16.msra.mxu0 0
        %3957 = vmatprep.subr.bf16.mxu0 0
        %3958 = vmatpush1.bf16.msra.mxu0 0
        %3959 = vmatprep.subr.bf16.mxu0 0
        %3960 = vmatpush1.bf16.msra.mxu0 0
        %3961 = vmatprep.subr.bf16.mxu0 0
        %3962 = vmatpush1.bf16.msra.mxu0 0
        %3963 = vmatprep.subr.bf16.mxu0 0
        %3964 = vmatpush1.bf16.msra.mxu0 0
        %3965 = vmatprep.subr.bf16.mxu0 0
        %3966 = vmatpush1.bf16.msra.mxu0 0
        %3967 = vmatprep.subr.bf16.mxu0 0
        %3968 = vmatpush1.bf16.msra.mxu0 0
        %3969 = vmatprep.subr.bf16.mxu0 0
        %3970 = vmatpush1.bf16.msra.mxu0 %v3950
        %3971 = vmatprep.subr.bf16.mxu0 0
        %3972 = vmatpush2.bf16.msra.mxu0 0
        %3973 = vmatprep.subr.bf16.mxu0 0
        %3974 = vmatpush2.bf16.msra.mxu0 0
        %3975 = vmatprep.subr.bf16.mxu0 0
        %3976 = vmatpush2.bf16.msra.mxu0 0
        %3977 = vmatprep.subr.bf16.mxu0 0
        %3978 = vmatpush2.bf16.msra.mxu0 0
        %3979 = vmatprep.subr.bf16.mxu0 0
        %3980 = vmatpush2.bf16.msra.mxu0 0
        %3981 = vmatprep.subr.bf16.mxu0 0
        %3982 = vmatpush2.bf16.msra.mxu0 0
        %3983 = vmatprep.subr.bf16.mxu0 0
        %3984 = vmatpush2.bf16.msra.mxu0 0
        %3985 = vmatprep.subr.bf16.mxu0 0
        %3986 = vmatpush2.bf16.msra.mxu0 0
        %3987 = vmatprep.mubr.bf16.mxu0 0
        %3988 = vmatmul.mubr.bf16.gmra.mxu0 %v3953
        %v3989 = vpop.f32.mrf.mxu0
        %v3990 = vadd.f32 0.0, %v3989
        %v3991 = vpop.f32.mrf.mxu0
        %v3992 = vpop.f32.mrf.mxu0
        %v3993 = vpop.f32.mrf.mxu0
        %3994 = vdwg.mxu0
        %3996 = vrot.lane.b32.xlu0 %v3990, 20
        %v3997 = vpop.permute.xlu0 %3996
        %3999 = vst.msk [vmem:[#allocation3] sm:$0xff] %vm1803, %v3997
        %4000 = vrot.lane.b32.xlu0 %v3277, 104
        %v4001 = vpop.permute.xlu0 %4000
        %4002 = vrot.lane.b32.xlu0 %v3275, 104
        %v4003 = vpop.permute.xlu0 %4002
        %v4005 = vsel %vm1073, %v4001, 0
        %v4008 = vsel %vm1073, %v4003, 0
        %4010 = vmatprep.subr.bf16.mxu0 0
        %4011 = vmatpush1.bf16.xpose.msra.mxu0 0
        %4012 = vmatprep.subr.bf16.mxu0 0
        %4013 = vmatpush1.bf16.xpose.msra.mxu0 0
        %4014 = vmatprep.subr.bf16.mxu0 0
        %4015 = vmatpush1.bf16.xpose.msra.mxu0 0
        %4016 = vmatprep.subr.bf16.mxu0 0
        %4017 = vmatpush1.bf16.xpose.msra.mxu0 0
        %4018 = vmatprep.subr.bf16.mxu0 0
        %4019 = vmatpush1.bf16.xpose.msra.mxu0 0
        %4020 = vmatprep.subr.bf16.mxu0 0
        %4021 = vmatpush1.bf16.xpose.msra.mxu0 0
        %4022 = vmatprep.subr.bf16.mxu0 0
        %4023 = vmatpush1.bf16.xpose.msra.mxu0 0
        %4024 = vmatprep.subr.bf16.mxu0 0
        %4025 = vmatpush1.bf16.xpose.msra.mxu0 %v4008
        %4026 = vmatprep.subr.bf16.mxu0 0
        %4027 = vmatpush2.bf16.xpose.msra.mxu0 0
        %4028 = vmatprep.subr.bf16.mxu0 0
        %4029 = vmatpush2.bf16.xpose.msra.mxu0 0
        %4030 = vmatprep.subr.bf16.mxu0 0
        %4031 = vmatpush2.bf16.xpose.msra.mxu0 0
        %4032 = vmatprep.subr.bf16.mxu0 0
        %4033 = vmatpush2.bf16.xpose.msra.mxu0 0
        %4034 = vmatprep.subr.bf16.mxu0 0
        %4035 = vmatpush2.bf16.xpose.msra.mxu0 0
        %4036 = vmatprep.subr.bf16.mxu0 0
        %4037 = vmatpush2.bf16.xpose.msra.mxu0 0
        %4038 = vmatprep.subr.bf16.mxu0 0
        %4039 = vmatpush2.bf16.xpose.msra.mxu0 0
        %4040 = vmatprep.subr.bf16.mxu0 0
        %4041 = vmatpush2.bf16.xpose.msra.mxu0 0
        %4042 = vmatprep.mubr.bf16.mxu0 0
        %4043 = vmatmul.mubr.bf16.gmra.mxu0 %v4005
        %v4044 = vpop.f32.mrf.mxu0
        %v4045 = vadd.f32 %v3283, %v4044
        %v4046 = vpop.f32.mrf.mxu0
        %v4047 = vpop.f32.mrf.mxu0
        %v4048 = vpop.f32.mrf.mxu0
        %4049 = vdwg.mxu0
        %v4050 = vsel %vm3331, %v4045, -inf
        %4051 = vmax.xlane.f32.xlu0 %v4050
        %v4052 = vpop.xlane.xlu0 %4051
        %v4053 = vsub.f32 %v4045, %v4052
        %v4054 = vmul.f32 %v4053, 1.442695
        %v4055 = vpow.pop %v4054
        %v4056 = vsel %vm3331, %v4055, 0.0
        %4057 = vadd.xlane.f32.xlu0 %v4056
        %v4058 = vpop.xlane.xlu0 %4057
        %v4059 = vrcp.pop %v4058
        %v4060 = vmul.f32 %v4055, %v4059
        %v4061 = vpack.c.bf16 %v4060, %v4060
        %v4063 = vunpack.c.l.b16 %v4061
        %v4064 = vpack.c.b16 %v4063, %v4063
        %4065 = vrot.lane.b32.xlu0 %v4064, 96
        %v4066 = vpop.permute.xlu0 %4065
        %vm4068 = vcmask 913152
        %4069 = vst.msk [vmem:[%s949] sm:$0xf] %vm4068, %v4066
        %4070 = vrot.lane.b32.xlu0 %v3275, 72
        %v4071 = vpop.permute.xlu0 %4070
        %v4074 = vsel %vm3331, %v4061, 0
        %4076 = vmatprep.subr.bf16.mxu0 0
        %4077 = vmatpush1.bf16.msra.mxu0 0
        %4078 = vmatprep.subr.bf16.mxu0 0
        %4079 = vmatpush1.bf16.msra.mxu0 0
        %4080 = vmatprep.subr.bf16.mxu0 0
        %4081 = vmatpush1.bf16.msra.mxu0 0
        %4082 = vmatprep.subr.bf16.mxu0 0
        %4083 = vmatpush1.bf16.msra.mxu0 0
        %4084 = vmatprep.subr.bf16.mxu0 0
        %4085 = vmatpush1.bf16.msra.mxu0 0
        %4086 = vmatprep.subr.bf16.mxu0 0
        %4087 = vmatpush1.bf16.msra.mxu0 0
        %4088 = vmatprep.subr.bf16.mxu0 0
        %4089 = vmatpush1.bf16.msra.mxu0 0
        %4090 = vmatprep.subr.bf16.mxu0 0
        %4091 = vmatpush1.bf16.msra.mxu0 %v4071
        %4092 = vmatprep.subr.bf16.mxu0 0
        %4093 = vmatpush2.bf16.msra.mxu0 0
        %4094 = vmatprep.subr.bf16.mxu0 0
        %4095 = vmatpush2.bf16.msra.mxu0 0
        %4096 = vmatprep.subr.bf16.mxu0 0
        %4097 = vmatpush2.bf16.msra.mxu0 0
        %4098 = vmatprep.subr.bf16.mxu0 0
        %4099 = vmatpush2.bf16.msra.mxu0 0
        %4100 = vmatprep.subr.bf16.mxu0 0
        %4101 = vmatpush2.bf16.msra.mxu0 0
        %4102 = vmatprep.subr.bf16.mxu0 0
        %4103 = vmatpush2.bf16.msra.mxu0 0
        %4104 = vmatprep.subr.bf16.mxu0 0
        %4105 = vmatpush2.bf16.msra.mxu0 0
        %4106 = vmatprep.subr.bf16.mxu0 0
        %4107 = vmatpush2.bf16.msra.mxu0 0
        %4108 = vmatprep.mubr.bf16.mxu0 0
        %4109 = vmatmul.mubr.bf16.gmra.mxu0 %v4074
        %v4110 = vpop.f32.mrf.mxu0
        %v4111 = vadd.f32 0.0, %v4110
        %v4112 = vpop.f32.mrf.mxu0
        %v4113 = vpop.f32.mrf.mxu0
        %v4114 = vpop.f32.mrf.mxu0
        %4115 = vdwg.mxu0
        %4117 = vrot.lane.b32.xlu0 %v4111, 24
        %v4118 = vpop.permute.xlu0 %4117
        %4120 = vst.msk [vmem:[#allocation3] sm:$0xff] %vm1927, %v4118
        %4121 = vrot.lane.b32.xlu0 %v3277, 100
        %v4122 = vpop.permute.xlu0 %4121
        %4123 = vrot.lane.b32.xlu0 %v3275, 100
        %v4124 = vpop.permute.xlu0 %4123
        %v4126 = vsel %vm1073, %v4122, 0
        %v4129 = vsel %vm1073, %v4124, 0
        %4131 = vmatprep.subr.bf16.mxu0 0
        %4132 = vmatpush1.bf16.xpose.msra.mxu0 0
        %4133 = vmatprep.subr.bf16.mxu0 0
        %4134 = vmatpush1.bf16.xpose.msra.mxu0 0
        %4135 = vmatprep.subr.bf16.mxu0 0
        %4136 = vmatpush1.bf16.xpose.msra.mxu0 0
        %4137 = vmatprep.subr.bf16.mxu0 0
        %4138 = vmatpush1.bf16.xpose.msra.mxu0 0
        %4139 = vmatprep.subr.bf16.mxu0 0
        %4140 = vmatpush1.bf16.xpose.msra.mxu0 0
        %4141 = vmatprep.subr.bf16.mxu0 0
        %4142 = vmatpush1.bf16.xpose.msra.mxu0 0
        %4143 = vmatprep.subr.bf16.mxu0 0
        %4144 = vmatpush1.bf16.xpose.msra.mxu0 0
        %4145 = vmatprep.subr.bf16.mxu0 0
        %4146 = vmatpush1.bf16.xpose.msra.mxu0 %v4129
        %4147 = vmatprep.subr.bf16.mxu0 0
        %4148 = vmatpush2.bf16.xpose.msra.mxu0 0
        %4149 = vmatprep.subr.bf16.mxu0 0
        %4150 = vmatpush2.bf16.xpose.msra.mxu0 0
        %4151 = vmatprep.subr.bf16.mxu0 0
        %4152 = vmatpush2.bf16.xpose.msra.mxu0 0
        %4153 = vmatprep.subr.bf16.mxu0 0
        %4154 = vmatpush2.bf16.xpose.msra.mxu0 0
        %4155 = vmatprep.subr.bf16.mxu0 0
        %4156 = vmatpush2.bf16.xpose.msra.mxu0 0
        %4157 = vmatprep.subr.bf16.mxu0 0
        %4158 = vmatpush2.bf16.xpose.msra.mxu0 0
        %4159 = vmatprep.subr.bf16.mxu0 0
        %4160 = vmatpush2.bf16.xpose.msra.mxu0 0
        %4161 = vmatprep.subr.bf16.mxu0 0
        %4162 = vmatpush2.bf16.xpose.msra.mxu0 0
        %4163 = vmatprep.mubr.bf16.mxu0 0
        %4164 = vmatmul.mubr.bf16.gmra.mxu0 %v4126
        %v4165 = vpop.f32.mrf.mxu0
        %v4166 = vadd.f32 %v3283, %v4165
        %v4167 = vpop.f32.mrf.mxu0
        %v4168 = vpop.f32.mrf.mxu0
        %v4169 = vpop.f32.mrf.mxu0
        %4170 = vdwg.mxu0
        %v4171 = vsel %vm3331, %v4166, -inf
        %4172 = vmax.xlane.f32.xlu0 %v4171
        %v4173 = vpop.xlane.xlu0 %4172
        %v4174 = vsub.f32 %v4166, %v4173
        %v4175 = vmul.f32 %v4174, 1.442695
        %v4176 = vpow.pop %v4175
        %v4177 = vsel %vm3331, %v4176, 0.0
        %4178 = vadd.xlane.f32.xlu0 %v4177
        %v4179 = vpop.xlane.xlu0 %4178
        %v4180 = vrcp.pop %v4179
        %v4181 = vmul.f32 %v4176, %v4180
        %v4182 = vpack.c.bf16 %v4181, %v4181
        %v4184 = vunpack.c.l.b16 %v4182
        %v4185 = vpack.c.b16 %v4184, %v4184
        %4186 = vrot.lane.b32.xlu0 %v4185, 112
        %v4187 = vpop.permute.xlu0 %4186
        %vm4189 = vcmask 1044352
        %4190 = vst.msk [vmem:[%s949] sm:$0xf] %vm4189, %v4187
        %4191 = vrot.lane.b32.xlu0 %v3275, 68
        %v4192 = vpop.permute.xlu0 %4191
        %v4195 = vsel %vm3331, %v4182, 0
        %4197 = vmatprep.subr.bf16.mxu0 0
        %4198 = vmatpush1.bf16.msra.mxu0 0
        %4199 = vmatprep.subr.bf16.mxu0 0
        %4200 = vmatpush1.bf16.msra.mxu0 0
        %4201 = vmatprep.subr.bf16.mxu0 0
        %4202 = vmatpush1.bf16.msra.mxu0 0
        %4203 = vmatprep.subr.bf16.mxu0 0
        %4204 = vmatpush1.bf16.msra.mxu0 0
        %4205 = vmatprep.subr.bf16.mxu0 0
        %4206 = vmatpush1.bf16.msra.mxu0 0
        %4207 = vmatprep.subr.bf16.mxu0 0
        %4208 = vmatpush1.bf16.msra.mxu0 0
        %4209 = vmatprep.subr.bf16.mxu0 0
        %4210 = vmatpush1.bf16.msra.mxu0 0
        %4211 = vmatprep.subr.bf16.mxu0 0
        %4212 = vmatpush1.bf16.msra.mxu0 %v4192
        %4213 = vmatprep.subr.bf16.mxu0 0
        %4214 = vmatpush2.bf16.msra.mxu0 0
        %4215 = vmatprep.subr.bf16.mxu0 0
        %4216 = vmatpush2.bf16.msra.mxu0 0
        %4217 = vmatprep.subr.bf16.mxu0 0
        %4218 = vmatpush2.bf16.msra.mxu0 0
        %4219 = vmatprep.subr.bf16.mxu0 0
        %4220 = vmatpush2.bf16.msra.mxu0 0
        %4221 = vmatprep.subr.bf16.mxu0 0
        %4222 = vmatpush2.bf16.msra.mxu0 0
        %4223 = vmatprep.subr.bf16.mxu0 0
        %4224 = vmatpush2.bf16.msra.mxu0 0
        %4225 = vmatprep.subr.bf16.mxu0 0
        %4226 = vmatpush2.bf16.msra.mxu0 0
        %4227 = vmatprep.subr.bf16.mxu0 0
        %4228 = vmatpush2.bf16.msra.mxu0 0
        %4229 = vmatprep.mubr.bf16.mxu0 0
        %4230 = vmatmul.mubr.bf16.gmra.mxu0 %v4195
        %v4231 = vpop.f32.mrf.mxu0
        %v4232 = vadd.f32 0.0, %v4231
        %v4233 = vpop.f32.mrf.mxu0
        %v4234 = vpop.f32.mrf.mxu0
        %v4235 = vpop.f32.mrf.mxu0
        %4236 = vdwg.mxu0
        %4238 = vrot.lane.b32.xlu0 %v4232, 28
        %v4239 = vpop.permute.xlu0 %4238
        %4241 = vst.msk [vmem:[#allocation3] sm:$0xff] %vm2051, %v4239
        %s4242 = scalar_lea.vmem %s3, 1
        %v4243 = vld [vmem:[%s4242] sm:$0x1]
        %v4245 = vlaneseq
        %v4246 = vshrl.u32 %v4245, 7
        %v4247 = vsub.s32 0, %v4246
        %v4248 = vrot.slane %v4243, %v4247
        %v4250 = vrot.slane %v3277, 4
        %v4252 = vsel %vm1073, %v4250, 0
        %v4255 = vsel %vm1073, %v3276, 0
        %4257 = vmatprep.subr.bf16.mxu0 0
        %4258 = vmatpush1.bf16.xpose.msra.mxu0 0
        %4259 = vmatprep.subr.bf16.mxu0 0
        %4260 = vmatpush1.bf16.xpose.msra.mxu0 0
        %4261 = vmatprep.subr.bf16.mxu0 0
        %4262 = vmatpush1.bf16.xpose.msra.mxu0 0
        %4263 = vmatprep.subr.bf16.mxu0 0
        %4264 = vmatpush1.bf16.xpose.msra.mxu0 0
        %4265 = vmatprep.subr.bf16.mxu0 0
        %4266 = vmatpush1.bf16.xpose.msra.mxu0 0
        %4267 = vmatprep.subr.bf16.mxu0 0
        %4268 = vmatpush1.bf16.xpose.msra.mxu0 0
        %4269 = vmatprep.subr.bf16.mxu0 0
        %4270 = vmatpush1.bf16.xpose.msra.mxu0 0
        %4271 = vmatprep.subr.bf16.mxu0 0
        %4272 = vmatpush1.bf16.xpose.msra.mxu0 %v4255
        %4273 = vmatprep.subr.bf16.mxu0 0
        %4274 = vmatpush2.bf16.xpose.msra.mxu0 0
        %4275 = vmatprep.subr.bf16.mxu0 0
        %4276 = vmatpush2.bf16.xpose.msra.mxu0 0
        %4277 = vmatprep.subr.bf16.mxu0 0
        %4278 = vmatpush2.bf16.xpose.msra.mxu0 0
        %4279 = vmatprep.subr.bf16.mxu0 0
        %4280 = vmatpush2.bf16.xpose.msra.mxu0 0
        %4281 = vmatprep.subr.bf16.mxu0 0
        %4282 = vmatpush2.bf16.xpose.msra.mxu0 0
        %4283 = vmatprep.subr.bf16.mxu0 0
        %4284 = vmatpush2.bf16.xpose.msra.mxu0 0
        %4285 = vmatprep.subr.bf16.mxu0 0
        %4286 = vmatpush2.bf16.xpose.msra.mxu0 0
        %4287 = vmatprep.subr.bf16.mxu0 0
        %4288 = vmatpush2.bf16.xpose.msra.mxu0 0
        %4289 = vmatprep.mubr.bf16.mxu0 0
        %4290 = vmatmul.mubr.bf16.gmra.mxu0 %v4252
        %v4291 = vpop.f32.mrf.mxu0
        %v4292 = vadd.f32 %v4248, %v4291
        %v4293 = vpop.f32.mrf.mxu0
        %v4294 = vpop.f32.mrf.mxu0
        %v4295 = vpop.f32.mrf.mxu0
        %4296 = vdwg.mxu0
        %v4297 = vsel %vm3331, %v4292, -inf
        %4298 = vmax.xlane.f32.xlu0 %v4297
        %v4299 = vpop.xlane.xlu0 %4298
        %v4300 = vsub.f32 %v4292, %v4299
        %v4301 = vmul.f32 %v4300, 1.442695
        %v4302 = vpow.pop %v4301
        %v4303 = vsel %vm3331, %v4302, 0.0
        %4304 = vadd.xlane.f32.xlu0 %v4303
        %v4305 = vpop.xlane.xlu0 %4304
        %v4306 = vrcp.pop %v4305
        %v4307 = vmul.f32 %v4302, %v4306
        %v4308 = vpack.c.bf16 %v4307, %v4307
        %s4309 = scalar_lea.vmem %s949, 4 [#allocation18]
        %4310 = vst.msk [vmem:[%s4309] sm:$0xf] %vm3344, %v4308
        %4312 = vrot.lane.b32.xlu0 %v3276, 96
        %v4313 = vpop.permute.xlu0 %4312
        %v4316 = vsel %vm3331, %v4308, 0
        %4318 = vmatprep.subr.bf16.mxu0 0
        %4319 = vmatpush1.bf16.msra.mxu0 0
        %4320 = vmatprep.subr.bf16.mxu0 0
        %4321 = vmatpush1.bf16.msra.mxu0 0
        %4322 = vmatprep.subr.bf16.mxu0 0
        %4323 = vmatpush1.bf16.msra.mxu0 0
        %4324 = vmatprep.subr.bf16.mxu0 0
        %4325 = vmatpush1.bf16.msra.mxu0 0
        %4326 = vmatprep.subr.bf16.mxu0 0
        %4327 = vmatpush1.bf16.msra.mxu0 0
        %4328 = vmatprep.subr.bf16.mxu0 0
        %4329 = vmatpush1.bf16.msra.mxu0 0
        %4330 = vmatprep.subr.bf16.mxu0 0
        %4331 = vmatpush1.bf16.msra.mxu0 0
        %4332 = vmatprep.subr.bf16.mxu0 0
        %4333 = vmatpush1.bf16.msra.mxu0 %v4313
        %4334 = vmatprep.subr.bf16.mxu0 0
        %4335 = vmatpush2.bf16.msra.mxu0 0
        %4336 = vmatprep.subr.bf16.mxu0 0
        %4337 = vmatpush2.bf16.msra.mxu0 0
        %4338 = vmatprep.subr.bf16.mxu0 0
        %4339 = vmatpush2.bf16.msra.mxu0 0
        %4340 = vmatprep.subr.bf16.mxu0 0
        %4341 = vmatpush2.bf16.msra.mxu0 0
        %4342 = vmatprep.subr.bf16.mxu0 0
        %4343 = vmatpush2.bf16.msra.mxu0 0
        %4344 = vmatprep.subr.bf16.mxu0 0
        %4345 = vmatpush2.bf16.msra.mxu0 0
        %4346 = vmatprep.subr.bf16.mxu0 0
        %4347 = vmatpush2.bf16.msra.mxu0 0
        %4348 = vmatprep.subr.bf16.mxu0 0
        %4349 = vmatpush2.bf16.msra.mxu0 0
        %4350 = vmatprep.mubr.bf16.mxu0 0
        %4351 = vmatmul.mubr.bf16.gmra.mxu0 %v4316
        %v4352 = vpop.f32.mrf.mxu0
        %v4353 = vadd.f32 0.0, %v4352
        %v4354 = vpop.f32.mrf.mxu0
        %v4355 = vpop.f32.mrf.mxu0
        %v4356 = vpop.f32.mrf.mxu0
        %4357 = vdwg.mxu0
        %4358 = vst.msk [vmem:[#allocation3 + $0x8] sm:$0xff] %vm1073, %v4353
        %4359 = vrot.lane.b32.xlu0 %v4250, 124
        %v4360 = vpop.permute.xlu0 %4359
        %4361 = vrot.lane.b32.xlu0 %v3276, 124
        %v4362 = vpop.permute.xlu0 %4361
        %v4364 = vsel %vm1073, %v4360, 0
        %v4367 = vsel %vm1073, %v4362, 0
        %4369 = vmatprep.subr.bf16.mxu0 0
        %4370 = vmatpush1.bf16.xpose.msra.mxu0 0
        %4371 = vmatprep.subr.bf16.mxu0 0
        %4372 = vmatpush1.bf16.xpose.msra.mxu0 0
        %4373 = vmatprep.subr.bf16.mxu0 0
        %4374 = vmatpush1.bf16.xpose.msra.mxu0 0
        %4375 = vmatprep.subr.bf16.mxu0 0
        %4376 = vmatpush1.bf16.xpose.msra.mxu0 0
        %4377 = vmatprep.subr.bf16.mxu0 0
        %4378 = vmatpush1.bf16.xpose.msra.mxu0 0
        %4379 = vmatprep.subr.bf16.mxu0 0
        %4380 = vmatpush1.bf16.xpose.msra.mxu0 0
        %4381 = vmatprep.subr.bf16.mxu0 0
        %4382 = vmatpush1.bf16.xpose.msra.mxu0 0
        %4383 = vmatprep.subr.bf16.mxu0 0
        %4384 = vmatpush1.bf16.xpose.msra.mxu0 %v4367
        %4385 = vmatprep.subr.bf16.mxu0 0
        %4386 = vmatpush2.bf16.xpose.msra.mxu0 0
        %4387 = vmatprep.subr.bf16.mxu0 0
        %4388 = vmatpush2.bf16.xpose.msra.mxu0 0
        %4389 = vmatprep.subr.bf16.mxu0 0
        %4390 = vmatpush2.bf16.xpose.msra.mxu0 0
        %4391 = vmatprep.subr.bf16.mxu0 0
        %4392 = vmatpush2.bf16.xpose.msra.mxu0 0
        %4393 = vmatprep.subr.bf16.mxu0 0
        %4394 = vmatpush2.bf16.xpose.msra.mxu0 0
        %4395 = vmatprep.subr.bf16.mxu0 0
        %4396 = vmatpush2.bf16.xpose.msra.mxu0 0
        %4397 = vmatprep.subr.bf16.mxu0 0
        %4398 = vmatpush2.bf16.xpose.msra.mxu0 0
        %4399 = vmatprep.subr.bf16.mxu0 0
        %4400 = vmatpush2.bf16.xpose.msra.mxu0 0
        %4401 = vmatprep.mubr.bf16.mxu0 0
        %4402 = vmatmul.mubr.bf16.gmra.mxu0 %v4364
        %v4403 = vpop.f32.mrf.mxu0
        %v4404 = vadd.f32 %v4248, %v4403
        %v4405 = vpop.f32.mrf.mxu0
        %v4406 = vpop.f32.mrf.mxu0
        %v4407 = vpop.f32.mrf.mxu0
        %4408 = vdwg.mxu0
        %v4409 = vsel %vm3331, %v4404, -inf
        %4410 = vmax.xlane.f32.xlu0 %v4409
        %v4411 = vpop.xlane.xlu0 %4410
        %v4412 = vsub.f32 %v4404, %v4411
        %v4413 = vmul.f32 %v4412, 1.442695
        %v4414 = vpow.pop %v4413
        %v4415 = vsel %vm3331, %v4414, 0.0
        %4416 = vadd.xlane.f32.xlu0 %v4415
        %v4417 = vpop.xlane.xlu0 %4416
        %v4418 = vrcp.pop %v4417
        %v4419 = vmul.f32 %v4414, %v4418
        %v4420 = vpack.c.bf16 %v4419, %v4419
        %v4422 = vunpack.c.l.b16 %v4420
        %v4423 = vpack.c.b16 %v4422, %v4422
        %4424 = vrot.lane.b32.xlu0 %v4423, 16
        %v4425 = vpop.permute.xlu0 %4424
        %4427 = vst.msk [vmem:[%s4309] sm:$0xf] %vm3463, %v4425
        %4428 = vrot.lane.b32.xlu0 %v3276, 92
        %v4429 = vpop.permute.xlu0 %4428
        %v4432 = vsel %vm3331, %v4420, 0
        %4434 = vmatprep.subr.bf16.mxu0 0
        %4435 = vmatpush1.bf16.msra.mxu0 0
        %4436 = vmatprep.subr.bf16.mxu0 0
        %4437 = vmatpush1.bf16.msra.mxu0 0
        %4438 = vmatprep.subr.bf16.mxu0 0
        %4439 = vmatpush1.bf16.msra.mxu0 0
        %4440 = vmatprep.subr.bf16.mxu0 0
        %4441 = vmatpush1.bf16.msra.mxu0 0
        %4442 = vmatprep.subr.bf16.mxu0 0
        %4443 = vmatpush1.bf16.msra.mxu0 0
        %4444 = vmatprep.subr.bf16.mxu0 0
        %4445 = vmatpush1.bf16.msra.mxu0 0
        %4446 = vmatprep.subr.bf16.mxu0 0
        %4447 = vmatpush1.bf16.msra.mxu0 0
        %4448 = vmatprep.subr.bf16.mxu0 0
        %4449 = vmatpush1.bf16.msra.mxu0 %v4429
        %4450 = vmatprep.subr.bf16.mxu0 0
        %4451 = vmatpush2.bf16.msra.mxu0 0
        %4452 = vmatprep.subr.bf16.mxu0 0
        %4453 = vmatpush2.bf16.msra.mxu0 0
        %4454 = vmatprep.subr.bf16.mxu0 0
        %4455 = vmatpush2.bf16.msra.mxu0 0
        %4456 = vmatprep.subr.bf16.mxu0 0
        %4457 = vmatpush2.bf16.msra.mxu0 0
        %4458 = vmatprep.subr.bf16.mxu0 0
        %4459 = vmatpush2.bf16.msra.mxu0 0
        %4460 = vmatprep.subr.bf16.mxu0 0
        %4461 = vmatpush2.bf16.msra.mxu0 0
        %4462 = vmatprep.subr.bf16.mxu0 0
        %4463 = vmatpush2.bf16.msra.mxu0 0
        %4464 = vmatprep.subr.bf16.mxu0 0
        %4465 = vmatpush2.bf16.msra.mxu0 0
        %4466 = vmatprep.mubr.bf16.mxu0 0
        %4467 = vmatmul.mubr.bf16.gmra.mxu0 %v4432
        %v4468 = vpop.f32.mrf.mxu0
        %v4469 = vadd.f32 0.0, %v4468
        %v4470 = vpop.f32.mrf.mxu0
        %v4471 = vpop.f32.mrf.mxu0
        %v4472 = vpop.f32.mrf.mxu0
        %4473 = vdwg.mxu0
        %4475 = vrot.lane.b32.xlu0 %v4469, 4
        %v4476 = vpop.permute.xlu0 %4475
        %4478 = vst.msk [vmem:[#allocation3 + $0x8] sm:$0xff] %vm1307, %v4476
        %4479 = vrot.lane.b32.xlu0 %v4250, 120
        %v4480 = vpop.permute.xlu0 %4479
        %4481 = vrot.lane.b32.xlu0 %v3276, 120
        %v4482 = vpop.permute.xlu0 %4481
        %v4484 = vsel %vm1073, %v4480, 0
        %v4487 = vsel %vm1073, %v4482, 0
        %4489 = vmatprep.subr.bf16.mxu0 0
        %4490 = vmatpush1.bf16.xpose.msra.mxu0 0
        %4491 = vmatprep.subr.bf16.mxu0 0
        %4492 = vmatpush1.bf16.xpose.msra.mxu0 0
        %4493 = vmatprep.subr.bf16.mxu0 0
        %4494 = vmatpush1.bf16.xpose.msra.mxu0 0
        %4495 = vmatprep.subr.bf16.mxu0 0
        %4496 = vmatpush1.bf16.xpose.msra.mxu0 0
        %4497 = vmatprep.subr.bf16.mxu0 0
        %4498 = vmatpush1.bf16.xpose.msra.mxu0 0
        %4499 = vmatprep.subr.bf16.mxu0 0
        %4500 = vmatpush1.bf16.xpose.msra.mxu0 0
        %4501 = vmatprep.subr.bf16.mxu0 0
        %4502 = vmatpush1.bf16.xpose.msra.mxu0 0
        %4503 = vmatprep.subr.bf16.mxu0 0
        %4504 = vmatpush1.bf16.xpose.msra.mxu0 %v4487
        %4505 = vmatprep.subr.bf16.mxu0 0
        %4506 = vmatpush2.bf16.xpose.msra.mxu0 0
        %4507 = vmatprep.subr.bf16.mxu0 0
        %4508 = vmatpush2.bf16.xpose.msra.mxu0 0
        %4509 = vmatprep.subr.bf16.mxu0 0
        %4510 = vmatpush2.bf16.xpose.msra.mxu0 0
        %4511 = vmatprep.subr.bf16.mxu0 0
        %4512 = vmatpush2.bf16.xpose.msra.mxu0 0
        %4513 = vmatprep.subr.bf16.mxu0 0
        %4514 = vmatpush2.bf16.xpose.msra.mxu0 0
        %4515 = vmatprep.subr.bf16.mxu0 0
        %4516 = vmatpush2.bf16.xpose.msra.mxu0 0
        %4517 = vmatprep.subr.bf16.mxu0 0
        %4518 = vmatpush2.bf16.xpose.msra.mxu0 0
        %4519 = vmatprep.subr.bf16.mxu0 0
        %4520 = vmatpush2.bf16.xpose.msra.mxu0 0
        %4521 = vmatprep.mubr.bf16.mxu0 0
        %4522 = vmatmul.mubr.bf16.gmra.mxu0 %v4484
        %v4523 = vpop.f32.mrf.mxu0
        %v4524 = vadd.f32 %v4248, %v4523
        %v4525 = vpop.f32.mrf.mxu0
        %v4526 = vpop.f32.mrf.mxu0
        %v4527 = vpop.f32.mrf.mxu0
        %4528 = vdwg.mxu0
        %v4529 = vsel %vm3331, %v4524, -inf
        %4530 = vmax.xlane.f32.xlu0 %v4529
        %v4531 = vpop.xlane.xlu0 %4530
        %v4532 = vsub.f32 %v4524, %v4531
        %v4533 = vmul.f32 %v4532, 1.442695
        %v4534 = vpow.pop %v4533
        %v4535 = vsel %vm3331, %v4534, 0.0
        %4536 = vadd.xlane.f32.xlu0 %v4535
        %v4537 = vpop.xlane.xlu0 %4536
        %v4538 = vrcp.pop %v4537
        %v4539 = vmul.f32 %v4534, %v4538
        %v4540 = vpack.c.bf16 %v4539, %v4539
        %v4542 = vunpack.c.l.b16 %v4540
        %v4543 = vpack.c.b16 %v4542, %v4542
        %4544 = vrot.lane.b32.xlu0 %v4543, 32
        %v4545 = vpop.permute.xlu0 %4544
        %4547 = vst.msk [vmem:[%s4309] sm:$0xf] %vm3584, %v4545
        %4548 = vrot.lane.b32.xlu0 %v3276, 88
        %v4549 = vpop.permute.xlu0 %4548
        %v4552 = vsel %vm3331, %v4540, 0
        %4554 = vmatprep.subr.bf16.mxu0 0
        %4555 = vmatpush1.bf16.msra.mxu0 0
        %4556 = vmatprep.subr.bf16.mxu0 0
        %4557 = vmatpush1.bf16.msra.mxu0 0
        %4558 = vmatprep.subr.bf16.mxu0 0
        %4559 = vmatpush1.bf16.msra.mxu0 0
        %4560 = vmatprep.subr.bf16.mxu0 0
        %4561 = vmatpush1.bf16.msra.mxu0 0
        %4562 = vmatprep.subr.bf16.mxu0 0
        %4563 = vmatpush1.bf16.msra.mxu0 0
        %4564 = vmatprep.subr.bf16.mxu0 0
        %4565 = vmatpush1.bf16.msra.mxu0 0
        %4566 = vmatprep.subr.bf16.mxu0 0
        %4567 = vmatpush1.bf16.msra.mxu0 0
        %4568 = vmatprep.subr.bf16.mxu0 0
        %4569 = vmatpush1.bf16.msra.mxu0 %v4549
        %4570 = vmatprep.subr.bf16.mxu0 0
        %4571 = vmatpush2.bf16.msra.mxu0 0
        %4572 = vmatprep.subr.bf16.mxu0 0
        %4573 = vmatpush2.bf16.msra.mxu0 0
        %4574 = vmatprep.subr.bf16.mxu0 0
        %4575 = vmatpush2.bf16.msra.mxu0 0
        %4576 = vmatprep.subr.bf16.mxu0 0
        %4577 = vmatpush2.bf16.msra.mxu0 0
        %4578 = vmatprep.subr.bf16.mxu0 0
        %4579 = vmatpush2.bf16.msra.mxu0 0
        %4580 = vmatprep.subr.bf16.mxu0 0
        %4581 = vmatpush2.bf16.msra.mxu0 0
        %4582 = vmatprep.subr.bf16.mxu0 0
        %4583 = vmatpush2.bf16.msra.mxu0 0
        %4584 = vmatprep.subr.bf16.mxu0 0
        %4585 = vmatpush2.bf16.msra.mxu0 0
        %4586 = vmatprep.mubr.bf16.mxu0 0
        %4587 = vmatmul.mubr.bf16.gmra.mxu0 %v4552
        %v4588 = vpop.f32.mrf.mxu0
        %v4589 = vadd.f32 0.0, %v4588
        %v4590 = vpop.f32.mrf.mxu0
        %v4591 = vpop.f32.mrf.mxu0
        %v4592 = vpop.f32.mrf.mxu0
        %4593 = vdwg.mxu0
        %4595 = vrot.lane.b32.xlu0 %v4589, 8
        %v4596 = vpop.permute.xlu0 %4595
        %4598 = vst.msk [vmem:[#allocation3 + $0x8] sm:$0xff] %vm1431, %v4596
        %4599 = vrot.lane.b32.xlu0 %v4250, 116
        %v4600 = vpop.permute.xlu0 %4599
        %4601 = vrot.lane.b32.xlu0 %v3276, 116
        %v4602 = vpop.permute.xlu0 %4601
        %v4604 = vsel %vm1073, %v4600, 0
        %v4607 = vsel %vm1073, %v4602, 0
        %4609 = vmatprep.subr.bf16.mxu0 0
        %4610 = vmatpush1.bf16.xpose.msra.mxu0 0
        %4611 = vmatprep.subr.bf16.mxu0 0
        %4612 = vmatpush1.bf16.xpose.msra.mxu0 0
        %4613 = vmatprep.subr.bf16.mxu0 0
        %4614 = vmatpush1.bf16.xpose.msra.mxu0 0
        %4615 = vmatprep.subr.bf16.mxu0 0
        %4616 = vmatpush1.bf16.xpose.msra.mxu0 0
        %4617 = vmatprep.subr.bf16.mxu0 0
        %4618 = vmatpush1.bf16.xpose.msra.mxu0 0
        %4619 = vmatprep.subr.bf16.mxu0 0
        %4620 = vmatpush1.bf16.xpose.msra.mxu0 0
        %4621 = vmatprep.subr.bf16.mxu0 0
        %4622 = vmatpush1.bf16.xpose.msra.mxu0 0
        %4623 = vmatprep.subr.bf16.mxu0 0
        %4624 = vmatpush1.bf16.xpose.msra.mxu0 %v4607
        %4625 = vmatprep.subr.bf16.mxu0 0
        %4626 = vmatpush2.bf16.xpose.msra.mxu0 0
        %4627 = vmatprep.subr.bf16.mxu0 0
        %4628 = vmatpush2.bf16.xpose.msra.mxu0 0
        %4629 = vmatprep.subr.bf16.mxu0 0
        %4630 = vmatpush2.bf16.xpose.msra.mxu0 0
        %4631 = vmatprep.subr.bf16.mxu0 0
        %4632 = vmatpush2.bf16.xpose.msra.mxu0 0
        %4633 = vmatprep.subr.bf16.mxu0 0
        %4634 = vmatpush2.bf16.xpose.msra.mxu0 0
        %4635 = vmatprep.subr.bf16.mxu0 0
        %4636 = vmatpush2.bf16.xpose.msra.mxu0 0
        %4637 = vmatprep.subr.bf16.mxu0 0
        %4638 = vmatpush2.bf16.xpose.msra.mxu0 0
        %4639 = vmatprep.subr.bf16.mxu0 0
        %4640 = vmatpush2.bf16.xpose.msra.mxu0 0
        %4641 = vmatprep.mubr.bf16.mxu0 0
        %4642 = vmatmul.mubr.bf16.gmra.mxu0 %v4604
        %v4643 = vpop.f32.mrf.mxu0
        %v4644 = vadd.f32 %v4248, %v4643
        %v4645 = vpop.f32.mrf.mxu0
        %v4646 = vpop.f32.mrf.mxu0
        %v4647 = vpop.f32.mrf.mxu0
        %4648 = vdwg.mxu0
        %v4649 = vsel %vm3331, %v4644, -inf
        %4650 = vmax.xlane.f32.xlu0 %v4649
        %v4651 = vpop.xlane.xlu0 %4650
        %v4652 = vsub.f32 %v4644, %v4651
        %v4653 = vmul.f32 %v4652, 1.442695
        %v4654 = vpow.pop %v4653
        %v4655 = vsel %vm3331, %v4654, 0.0
        %4656 = vadd.xlane.f32.xlu0 %v4655
        %v4657 = vpop.xlane.xlu0 %4656
        %v4658 = vrcp.pop %v4657
        %v4659 = vmul.f32 %v4654, %v4658
        %v4660 = vpack.c.bf16 %v4659, %v4659
        %v4662 = vunpack.c.l.b16 %v4660
        %v4663 = vpack.c.b16 %v4662, %v4662
        %4664 = vrot.lane.b32.xlu0 %v4663, 48
        %v4665 = vpop.permute.xlu0 %4664
        %4667 = vst.msk [vmem:[%s4309] sm:$0xf] %vm3705, %v4665
        %4668 = vrot.lane.b32.xlu0 %v3276, 84
        %v4669 = vpop.permute.xlu0 %4668
        %v4672 = vsel %vm3331, %v4660, 0
        %4674 = vmatprep.subr.bf16.mxu0 0
        %4675 = vmatpush1.bf16.msra.mxu0 0
        %4676 = vmatprep.subr.bf16.mxu0 0
        %4677 = vmatpush1.bf16.msra.mxu0 0
        %4678 = vmatprep.subr.bf16.mxu0 0
        %4679 = vmatpush1.bf16.msra.mxu0 0
        %4680 = vmatprep.subr.bf16.mxu0 0
        %4681 = vmatpush1.bf16.msra.mxu0 0
        %4682 = vmatprep.subr.bf16.mxu0 0
        %4683 = vmatpush1.bf16.msra.mxu0 0
        %4684 = vmatprep.subr.bf16.mxu0 0
        %4685 = vmatpush1.bf16.msra.mxu0 0
        %4686 = vmatprep.subr.bf16.mxu0 0
        %4687 = vmatpush1.bf16.msra.mxu0 0
        %4688 = vmatprep.subr.bf16.mxu0 0
        %4689 = vmatpush1.bf16.msra.mxu0 %v4669
        %4690 = vmatprep.subr.bf16.mxu0 0
        %4691 = vmatpush2.bf16.msra.mxu0 0
        %4692 = vmatprep.subr.bf16.mxu0 0
        %4693 = vmatpush2.bf16.msra.mxu0 0
        %4694 = vmatprep.subr.bf16.mxu0 0
        %4695 = vmatpush2.bf16.msra.mxu0 0
        %4696 = vmatprep.subr.bf16.mxu0 0
        %4697 = vmatpush2.bf16.msra.mxu0 0
        %4698 = vmatprep.subr.bf16.mxu0 0
        %4699 = vmatpush2.bf16.msra.mxu0 0
        %4700 = vmatprep.subr.bf16.mxu0 0
        %4701 = vmatpush2.bf16.msra.mxu0 0
        %4702 = vmatprep.subr.bf16.mxu0 0
        %4703 = vmatpush2.bf16.msra.mxu0 0
        %4704 = vmatprep.subr.bf16.mxu0 0
        %4705 = vmatpush2.bf16.msra.mxu0 0
        %4706 = vmatprep.mubr.bf16.mxu0 0
        %4707 = vmatmul.mubr.bf16.gmra.mxu0 %v4672
        %v4708 = vpop.f32.mrf.mxu0
        %v4709 = vadd.f32 0.0, %v4708
        %v4710 = vpop.f32.mrf.mxu0
        %v4711 = vpop.f32.mrf.mxu0
        %v4712 = vpop.f32.mrf.mxu0
        %4713 = vdwg.mxu0
        %4715 = vrot.lane.b32.xlu0 %v4709, 12
        %v4716 = vpop.permute.xlu0 %4715
        %4718 = vst.msk [vmem:[#allocation3 + $0x8] sm:$0xff] %vm1555, %v4716
        %4719 = vrot.lane.b32.xlu0 %v4250, 112
        %v4720 = vpop.permute.xlu0 %4719
        %4721 = vrot.lane.b32.xlu0 %v3276, 112
        %v4722 = vpop.permute.xlu0 %4721
        %v4724 = vsel %vm1073, %v4720, 0
        %v4727 = vsel %vm1073, %v4722, 0
        %4729 = vmatprep.subr.bf16.mxu0 0
        %4730 = vmatpush1.bf16.xpose.msra.mxu0 0
        %4731 = vmatprep.subr.bf16.mxu0 0
        %4732 = vmatpush1.bf16.xpose.msra.mxu0 0
        %4733 = vmatprep.subr.bf16.mxu0 0
        %4734 = vmatpush1.bf16.xpose.msra.mxu0 0
        %4735 = vmatprep.subr.bf16.mxu0 0
        %4736 = vmatpush1.bf16.xpose.msra.mxu0 0
        %4737 = vmatprep.subr.bf16.mxu0 0
        %4738 = vmatpush1.bf16.xpose.msra.mxu0 0
        %4739 = vmatprep.subr.bf16.mxu0 0
        %4740 = vmatpush1.bf16.xpose.msra.mxu0 0
        %4741 = vmatprep.subr.bf16.mxu0 0
        %4742 = vmatpush1.bf16.xpose.msra.mxu0 0
        %4743 = vmatprep.subr.bf16.mxu0 0
        %4744 = vmatpush1.bf16.xpose.msra.mxu0 %v4727
        %4745 = vmatprep.subr.bf16.mxu0 0
        %4746 = vmatpush2.bf16.xpose.msra.mxu0 0
        %4747 = vmatprep.subr.bf16.mxu0 0
        %4748 = vmatpush2.bf16.xpose.msra.mxu0 0
        %4749 = vmatprep.subr.bf16.mxu0 0
        %4750 = vmatpush2.bf16.xpose.msra.mxu0 0
        %4751 = vmatprep.subr.bf16.mxu0 0
        %4752 = vmatpush2.bf16.xpose.msra.mxu0 0
        %4753 = vmatprep.subr.bf16.mxu0 0
        %4754 = vmatpush2.bf16.xpose.msra.mxu0 0
        %4755 = vmatprep.subr.bf16.mxu0 0
        %4756 = vmatpush2.bf16.xpose.msra.mxu0 0
        %4757 = vmatprep.subr.bf16.mxu0 0
        %4758 = vmatpush2.bf16.xpose.msra.mxu0 0
        %4759 = vmatprep.subr.bf16.mxu0 0
        %4760 = vmatpush2.bf16.xpose.msra.mxu0 0
        %4761 = vmatprep.mubr.bf16.mxu0 0
        %4762 = vmatmul.mubr.bf16.gmra.mxu0 %v4724
        %v4763 = vpop.f32.mrf.mxu0
        %v4764 = vadd.f32 %v4248, %v4763
        %v4765 = vpop.f32.mrf.mxu0
        %v4766 = vpop.f32.mrf.mxu0
        %v4767 = vpop.f32.mrf.mxu0
        %4768 = vdwg.mxu0
        %v4769 = vsel %vm3331, %v4764, -inf
        %4770 = vmax.xlane.f32.xlu0 %v4769
        %v4771 = vpop.xlane.xlu0 %4770
        %v4772 = vsub.f32 %v4764, %v4771
        %v4773 = vmul.f32 %v4772, 1.442695
        %v4774 = vpow.pop %v4773
        %v4775 = vsel %vm3331, %v4774, 0.0
        %4776 = vadd.xlane.f32.xlu0 %v4775
        %v4777 = vpop.xlane.xlu0 %4776
        %v4778 = vrcp.pop %v4777
        %v4779 = vmul.f32 %v4774, %v4778
        %v4780 = vpack.c.bf16 %v4779, %v4779
        %v4782 = vunpack.c.l.b16 %v4780
        %v4783 = vpack.c.b16 %v4782, %v4782
        %4784 = vrot.lane.b32.xlu0 %v4783, 64
        %v4785 = vpop.permute.xlu0 %4784
        %4787 = vst.msk [vmem:[%s4309] sm:$0xf] %vm3826, %v4785
        %4788 = vrot.lane.b32.xlu0 %v3276, 80
        %v4789 = vpop.permute.xlu0 %4788
        %v4792 = vsel %vm3331, %v4780, 0
        %4794 = vmatprep.subr.bf16.mxu0 0
        %4795 = vmatpush1.bf16.msra.mxu0 0
        %4796 = vmatprep.subr.bf16.mxu0 0
        %4797 = vmatpush1.bf16.msra.mxu0 0
        %4798 = vmatprep.subr.bf16.mxu0 0
        %4799 = vmatpush1.bf16.msra.mxu0 0
        %4800 = vmatprep.subr.bf16.mxu0 0
        %4801 = vmatpush1.bf16.msra.mxu0 0
        %4802 = vmatprep.subr.bf16.mxu0 0
        %4803 = vmatpush1.bf16.msra.mxu0 0
        %4804 = vmatprep.subr.bf16.mxu0 0
        %4805 = vmatpush1.bf16.msra.mxu0 0
        %4806 = vmatprep.subr.bf16.mxu0 0
        %4807 = vmatpush1.bf16.msra.mxu0 0
        %4808 = vmatprep.subr.bf16.mxu0 0
        %4809 = vmatpush1.bf16.msra.mxu0 %v4789
        %4810 = vmatprep.subr.bf16.mxu0 0
        %4811 = vmatpush2.bf16.msra.mxu0 0
        %4812 = vmatprep.subr.bf16.mxu0 0
        %4813 = vmatpush2.bf16.msra.mxu0 0
        %4814 = vmatprep.subr.bf16.mxu0 0
        %4815 = vmatpush2.bf16.msra.mxu0 0
        %4816 = vmatprep.subr.bf16.mxu0 0
        %4817 = vmatpush2.bf16.msra.mxu0 0
        %4818 = vmatprep.subr.bf16.mxu0 0
        %4819 = vmatpush2.bf16.msra.mxu0 0
        %4820 = vmatprep.subr.bf16.mxu0 0
        %4821 = vmatpush2.bf16.msra.mxu0 0
        %4822 = vmatprep.subr.bf16.mxu0 0
        %4823 = vmatpush2.bf16.msra.mxu0 0
        %4824 = vmatprep.subr.bf16.mxu0 0
        %4825 = vmatpush2.bf16.msra.mxu0 0
        %4826 = vmatprep.mubr.bf16.mxu0 0
        %4827 = vmatmul.mubr.bf16.gmra.mxu0 %v4792
        %v4828 = vpop.f32.mrf.mxu0
        %v4829 = vadd.f32 0.0, %v4828
        %v4830 = vpop.f32.mrf.mxu0
        %v4831 = vpop.f32.mrf.mxu0
        %v4832 = vpop.f32.mrf.mxu0
        %4833 = vdwg.mxu0
        %4835 = vrot.lane.b32.xlu0 %v4829, 16
        %v4836 = vpop.permute.xlu0 %4835
        %4838 = vst.msk [vmem:[#allocation3 + $0x8] sm:$0xff] %vm1679, %v4836
        %4839 = vrot.lane.b32.xlu0 %v4250, 108
        %v4840 = vpop.permute.xlu0 %4839
        %4841 = vrot.lane.b32.xlu0 %v3276, 108
        %v4842 = vpop.permute.xlu0 %4841
        %v4844 = vsel %vm1073, %v4840, 0
        %v4847 = vsel %vm1073, %v4842, 0
        %4849 = vmatprep.subr.bf16.mxu0 0
        %4850 = vmatpush1.bf16.xpose.msra.mxu0 0
        %4851 = vmatprep.subr.bf16.mxu0 0
        %4852 = vmatpush1.bf16.xpose.msra.mxu0 0
        %4853 = vmatprep.subr.bf16.mxu0 0
        %4854 = vmatpush1.bf16.xpose.msra.mxu0 0
        %4855 = vmatprep.subr.bf16.mxu0 0
        %4856 = vmatpush1.bf16.xpose.msra.mxu0 0
        %4857 = vmatprep.subr.bf16.mxu0 0
        %4858 = vmatpush1.bf16.xpose.msra.mxu0 0
        %4859 = vmatprep.subr.bf16.mxu0 0
        %4860 = vmatpush1.bf16.xpose.msra.mxu0 0
        %4861 = vmatprep.subr.bf16.mxu0 0
        %4862 = vmatpush1.bf16.xpose.msra.mxu0 0
        %4863 = vmatprep.subr.bf16.mxu0 0
        %4864 = vmatpush1.bf16.xpose.msra.mxu0 %v4847
        %4865 = vmatprep.subr.bf16.mxu0 0
        %4866 = vmatpush2.bf16.xpose.msra.mxu0 0
        %4867 = vmatprep.subr.bf16.mxu0 0
        %4868 = vmatpush2.bf16.xpose.msra.mxu0 0
        %4869 = vmatprep.subr.bf16.mxu0 0
        %4870 = vmatpush2.bf16.xpose.msra.mxu0 0
        %4871 = vmatprep.subr.bf16.mxu0 0
        %4872 = vmatpush2.bf16.xpose.msra.mxu0 0
        %4873 = vmatprep.subr.bf16.mxu0 0
        %4874 = vmatpush2.bf16.xpose.msra.mxu0 0
        %4875 = vmatprep.subr.bf16.mxu0 0
        %4876 = vmatpush2.bf16.xpose.msra.mxu0 0
        %4877 = vmatprep.subr.bf16.mxu0 0
        %4878 = vmatpush2.bf16.xpose.msra.mxu0 0
        %4879 = vmatprep.subr.bf16.mxu0 0
        %4880 = vmatpush2.bf16.xpose.msra.mxu0 0
        %4881 = vmatprep.mubr.bf16.mxu0 0
        %4882 = vmatmul.mubr.bf16.gmra.mxu0 %v4844
        %v4883 = vpop.f32.mrf.mxu0
        %v4884 = vadd.f32 %v4248, %v4883
        %v4885 = vpop.f32.mrf.mxu0
        %v4886 = vpop.f32.mrf.mxu0
        %v4887 = vpop.f32.mrf.mxu0
        %4888 = vdwg.mxu0
        %v4889 = vsel %vm3331, %v4884, -inf
        %4890 = vmax.xlane.f32.xlu0 %v4889
        %v4891 = vpop.xlane.xlu0 %4890
        %v4892 = vsub.f32 %v4884, %v4891
        %v4893 = vmul.f32 %v4892, 1.442695
        %v4894 = vpow.pop %v4893
        %v4895 = vsel %vm3331, %v4894, 0.0
        %4896 = vadd.xlane.f32.xlu0 %v4895
        %v4897 = vpop.xlane.xlu0 %4896
        %v4898 = vrcp.pop %v4897
        %v4899 = vmul.f32 %v4894, %v4898
        %v4900 = vpack.c.bf16 %v4899, %v4899
        %v4902 = vunpack.c.l.b16 %v4900
        %v4903 = vpack.c.b16 %v4902, %v4902
        %4904 = vrot.lane.b32.xlu0 %v4903, 80
        %v4905 = vpop.permute.xlu0 %4904
        %4907 = vst.msk [vmem:[%s4309] sm:$0xf] %vm3947, %v4905
        %4908 = vrot.lane.b32.xlu0 %v3276, 76
        %v4909 = vpop.permute.xlu0 %4908
        %v4912 = vsel %vm3331, %v4900, 0
        %4914 = vmatprep.subr.bf16.mxu0 0
        %4915 = vmatpush1.bf16.msra.mxu0 0
        %4916 = vmatprep.subr.bf16.mxu0 0
        %4917 = vmatpush1.bf16.msra.mxu0 0
        %4918 = vmatprep.subr.bf16.mxu0 0
        %4919 = vmatpush1.bf16.msra.mxu0 0
        %4920 = vmatprep.subr.bf16.mxu0 0
        %4921 = vmatpush1.bf16.msra.mxu0 0
        %4922 = vmatprep.subr.bf16.mxu0 0
        %4923 = vmatpush1.bf16.msra.mxu0 0
        %4924 = vmatprep.subr.bf16.mxu0 0
        %4925 = vmatpush1.bf16.msra.mxu0 0
        %4926 = vmatprep.subr.bf16.mxu0 0
        %4927 = vmatpush1.bf16.msra.mxu0 0
        %4928 = vmatprep.subr.bf16.mxu0 0
        %4929 = vmatpush1.bf16.msra.mxu0 %v4909
        %4930 = vmatprep.subr.bf16.mxu0 0
        %4931 = vmatpush2.bf16.msra.mxu0 0
        %4932 = vmatprep.subr.bf16.mxu0 0
        %4933 = vmatpush2.bf16.msra.mxu0 0
        %4934 = vmatprep.subr.bf16.mxu0 0
        %4935 = vmatpush2.bf16.msra.mxu0 0
        %4936 = vmatprep.subr.bf16.mxu0 0
        %4937 = vmatpush2.bf16.msra.mxu0 0
        %4938 = vmatprep.subr.bf16.mxu0 0
        %4939 = vmatpush2.bf16.msra.mxu0 0
        %4940 = vmatprep.subr.bf16.mxu0 0
        %4941 = vmatpush2.bf16.msra.mxu0 0
        %4942 = vmatprep.subr.bf16.mxu0 0
        %4943 = vmatpush2.bf16.msra.mxu0 0
        %4944 = vmatprep.subr.bf16.mxu0 0
        %4945 = vmatpush2.bf16.msra.mxu0 0
        %4946 = vmatprep.mubr.bf16.mxu0 0
        %4947 = vmatmul.mubr.bf16.gmra.mxu0 %v4912
        %v4948 = vpop.f32.mrf.mxu0
        %v4949 = vadd.f32 0.0, %v4948
        %v4950 = vpop.f32.mrf.mxu0
        %v4951 = vpop.f32.mrf.mxu0
        %v4952 = vpop.f32.mrf.mxu0
        %4953 = vdwg.mxu0
        %4955 = vrot.lane.b32.xlu0 %v4949, 20
        %v4956 = vpop.permute.xlu0 %4955
        %4958 = vst.msk [vmem:[#allocation3 + $0x8] sm:$0xff] %vm1803, %v4956
        %4959 = vrot.lane.b32.xlu0 %v4250, 104
        %v4960 = vpop.permute.xlu0 %4959
        %4961 = vrot.lane.b32.xlu0 %v3276, 104
        %v4962 = vpop.permute.xlu0 %4961
        %v4964 = vsel %vm1073, %v4960, 0
        %v4967 = vsel %vm1073, %v4962, 0
        %4969 = vmatprep.subr.bf16.mxu0 0
        %4970 = vmatpush1.bf16.xpose.msra.mxu0 0
        %4971 = vmatprep.subr.bf16.mxu0 0
        %4972 = vmatpush1.bf16.xpose.msra.mxu0 0
        %4973 = vmatprep.subr.bf16.mxu0 0
        %4974 = vmatpush1.bf16.xpose.msra.mxu0 0
        %4975 = vmatprep.subr.bf16.mxu0 0
        %4976 = vmatpush1.bf16.xpose.msra.mxu0 0
        %4977 = vmatprep.subr.bf16.mxu0 0
        %4978 = vmatpush1.bf16.xpose.msra.mxu0 0
        %4979 = vmatprep.subr.bf16.mxu0 0
        %4980 = vmatpush1.bf16.xpose.msra.mxu0 0
        %4981 = vmatprep.subr.bf16.mxu0 0
        %4982 = vmatpush1.bf16.xpose.msra.mxu0 0
        %4983 = vmatprep.subr.bf16.mxu0 0
        %4984 = vmatpush1.bf16.xpose.msra.mxu0 %v4967
        %4985 = vmatprep.subr.bf16.mxu0 0
        %4986 = vmatpush2.bf16.xpose.msra.mxu0 0
        %4987 = vmatprep.subr.bf16.mxu0 0
        %4988 = vmatpush2.bf16.xpose.msra.mxu0 0
        %4989 = vmatprep.subr.bf16.mxu0 0
        %4990 = vmatpush2.bf16.xpose.msra.mxu0 0
        %4991 = vmatprep.subr.bf16.mxu0 0
        %4992 = vmatpush2.bf16.xpose.msra.mxu0 0
        %4993 = vmatprep.subr.bf16.mxu0 0
        %4994 = vmatpush2.bf16.xpose.msra.mxu0 0
        %4995 = vmatprep.subr.bf16.mxu0 0
        %4996 = vmatpush2.bf16.xpose.msra.mxu0 0
        %4997 = vmatprep.subr.bf16.mxu0 0
        %4998 = vmatpush2.bf16.xpose.msra.mxu0 0
        %4999 = vmatprep.subr.bf16.mxu0 0
        %5000 = vmatpush2.bf16.xpose.msra.mxu0 0
        %5001 = vmatprep.mubr.bf16.mxu0 0
        %5002 = vmatmul.mubr.bf16.gmra.mxu0 %v4964
        %v5003 = vpop.f32.mrf.mxu0
        %v5004 = vadd.f32 %v4248, %v5003
        %v5005 = vpop.f32.mrf.mxu0
        %v5006 = vpop.f32.mrf.mxu0
        %v5007 = vpop.f32.mrf.mxu0
        %5008 = vdwg.mxu0
        %v5009 = vsel %vm3331, %v5004, -inf
        %5010 = vmax.xlane.f32.xlu0 %v5009
        %v5011 = vpop.xlane.xlu0 %5010
        %v5012 = vsub.f32 %v5004, %v5011
        %v5013 = vmul.f32 %v5012, 1.442695
        %v5014 = vpow.pop %v5013
        %v5015 = vsel %vm3331, %v5014, 0.0
        %5016 = vadd.xlane.f32.xlu0 %v5015
        %v5017 = vpop.xlane.xlu0 %5016
        %v5018 = vrcp.pop %v5017
        %v5019 = vmul.f32 %v5014, %v5018
        %v5020 = vpack.c.bf16 %v5019, %v5019
        %v5022 = vunpack.c.l.b16 %v5020
        %v5023 = vpack.c.b16 %v5022, %v5022
        %5024 = vrot.lane.b32.xlu0 %v5023, 96
        %v5025 = vpop.permute.xlu0 %5024
        %5027 = vst.msk [vmem:[%s4309] sm:$0xf] %vm4068, %v5025
        %5028 = vrot.lane.b32.xlu0 %v3276, 72
        %v5029 = vpop.permute.xlu0 %5028
        %v5032 = vsel %vm3331, %v5020, 0
        %5034 = vmatprep.subr.bf16.mxu0 0
        %5035 = vmatpush1.bf16.msra.mxu0 0
        %5036 = vmatprep.subr.bf16.mxu0 0
        %5037 = vmatpush1.bf16.msra.mxu0 0
        %5038 = vmatprep.subr.bf16.mxu0 0
        %5039 = vmatpush1.bf16.msra.mxu0 0
        %5040 = vmatprep.subr.bf16.mxu0 0
        %5041 = vmatpush1.bf16.msra.mxu0 0
        %5042 = vmatprep.subr.bf16.mxu0 0
        %5043 = vmatpush1.bf16.msra.mxu0 0
        %5044 = vmatprep.subr.bf16.mxu0 0
        %5045 = vmatpush1.bf16.msra.mxu0 0
        %5046 = vmatprep.subr.bf16.mxu0 0
        %5047 = vmatpush1.bf16.msra.mxu0 0
        %5048 = vmatprep.subr.bf16.mxu0 0
        %5049 = vmatpush1.bf16.msra.mxu0 %v5029
        %5050 = vmatprep.subr.bf16.mxu0 0
        %5051 = vmatpush2.bf16.msra.mxu0 0
        %5052 = vmatprep.subr.bf16.mxu0 0
        %5053 = vmatpush2.bf16.msra.mxu0 0
        %5054 = vmatprep.subr.bf16.mxu0 0
        %5055 = vmatpush2.bf16.msra.mxu0 0
        %5056 = vmatprep.subr.bf16.mxu0 0
        %5057 = vmatpush2.bf16.msra.mxu0 0
        %5058 = vmatprep.subr.bf16.mxu0 0
        %5059 = vmatpush2.bf16.msra.mxu0 0
        %5060 = vmatprep.subr.bf16.mxu0 0
        %5061 = vmatpush2.bf16.msra.mxu0 0
        %5062 = vmatprep.subr.bf16.mxu0 0
        %5063 = vmatpush2.bf16.msra.mxu0 0
        %5064 = vmatprep.subr.bf16.mxu0 0
        %5065 = vmatpush2.bf16.msra.mxu0 0
        %5066 = vmatprep.mubr.bf16.mxu0 0
        %5067 = vmatmul.mubr.bf16.gmra.mxu0 %v5032
        %v5068 = vpop.f32.mrf.mxu0
        %v5069 = vadd.f32 0.0, %v5068
        %v5070 = vpop.f32.mrf.mxu0
        %v5071 = vpop.f32.mrf.mxu0
        %v5072 = vpop.f32.mrf.mxu0
        %5073 = vdwg.mxu0
        %5075 = vrot.lane.b32.xlu0 %v5069, 24
        %v5076 = vpop.permute.xlu0 %5075
        %5078 = vst.msk [vmem:[#allocation3 + $0x8] sm:$0xff] %vm1927, %v5076
        %5079 = vrot.lane.b32.xlu0 %v4250, 100
        %v5080 = vpop.permute.xlu0 %5079
        %5081 = vrot.lane.b32.xlu0 %v3276, 100
        %v5082 = vpop.permute.xlu0 %5081
        %v5084 = vsel %vm1073, %v5080, 0
        %v5087 = vsel %vm1073, %v5082, 0
        %5089 = vmatprep.subr.bf16.mxu0 0
        %5090 = vmatpush1.bf16.xpose.msra.mxu0 0
        %5091 = vmatprep.subr.bf16.mxu0 0
        %5092 = vmatpush1.bf16.xpose.msra.mxu0 0
        %5093 = vmatprep.subr.bf16.mxu0 0
        %5094 = vmatpush1.bf16.xpose.msra.mxu0 0
        %5095 = vmatprep.subr.bf16.mxu0 0
        %5096 = vmatpush1.bf16.xpose.msra.mxu0 0
        %5097 = vmatprep.subr.bf16.mxu0 0
        %5098 = vmatpush1.bf16.xpose.msra.mxu0 0
        %5099 = vmatprep.subr.bf16.mxu0 0
        %5100 = vmatpush1.bf16.xpose.msra.mxu0 0
        %5101 = vmatprep.subr.bf16.mxu0 0
        %5102 = vmatpush1.bf16.xpose.msra.mxu0 0
        %5103 = vmatprep.subr.bf16.mxu0 0
        %5104 = vmatpush1.bf16.xpose.msra.mxu0 %v5087
        %5105 = vmatprep.subr.bf16.mxu0 0
        %5106 = vmatpush2.bf16.xpose.msra.mxu0 0
        %5107 = vmatprep.subr.bf16.mxu0 0
        %5108 = vmatpush2.bf16.xpose.msra.mxu0 0
        %5109 = vmatprep.subr.bf16.mxu0 0
        %5110 = vmatpush2.bf16.xpose.msra.mxu0 0
        %5111 = vmatprep.subr.bf16.mxu0 0
        %5112 = vmatpush2.bf16.xpose.msra.mxu0 0
        %5113 = vmatprep.subr.bf16.mxu0 0
        %5114 = vmatpush2.bf16.xpose.msra.mxu0 0
        %5115 = vmatprep.subr.bf16.mxu0 0
        %5116 = vmatpush2.bf16.xpose.msra.mxu0 0
        %5117 = vmatprep.subr.bf16.mxu0 0
        %5118 = vmatpush2.bf16.xpose.msra.mxu0 0
        %5119 = vmatprep.subr.bf16.mxu0 0
        %5120 = vmatpush2.bf16.xpose.msra.mxu0 0
        %5121 = vmatprep.mubr.bf16.mxu0 0
        %5122 = vmatmul.mubr.bf16.gmra.mxu0 %v5084
        %v5123 = vpop.f32.mrf.mxu0
        %v5124 = vadd.f32 %v4248, %v5123
        %v5125 = vpop.f32.mrf.mxu0
        %v5126 = vpop.f32.mrf.mxu0
        %v5127 = vpop.f32.mrf.mxu0
        %5128 = vdwg.mxu0
        %v5129 = vsel %vm3331, %v5124, -inf
        %5130 = vmax.xlane.f32.xlu0 %v5129
        %v5131 = vpop.xlane.xlu0 %5130
        %v5132 = vsub.f32 %v5124, %v5131
        %v5133 = vmul.f32 %v5132, 1.442695
        %v5134 = vpow.pop %v5133
        %v5135 = vsel %vm3331, %v5134, 0.0
        %5136 = vadd.xlane.f32.xlu0 %v5135
        %v5137 = vpop.xlane.xlu0 %5136
        %v5138 = vrcp.pop %v5137
        %v5139 = vmul.f32 %v5134, %v5138
        %v5140 = vpack.c.bf16 %v5139, %v5139
        %v5142 = vunpack.c.l.b16 %v5140
        %v5143 = vpack.c.b16 %v5142, %v5142
        %5144 = vrot.lane.b32.xlu0 %v5143, 112
        %v5145 = vpop.permute.xlu0 %5144
        %5147 = vst.msk [vmem:[%s4309] sm:$0xf] %vm4189, %v5145
        %5148 = vrot.lane.b32.xlu0 %v3276, 68
        %v5149 = vpop.permute.xlu0 %5148
        %v5152 = vsel %vm3331, %v5140, 0
        %5154 = vmatprep.subr.bf16.mxu0 0
        %5155 = vmatpush1.bf16.msra.mxu0 0
        %5156 = vmatprep.subr.bf16.mxu0 0
        %5157 = vmatpush1.bf16.msra.mxu0 0
        %5158 = vmatprep.subr.bf16.mxu0 0
        %5159 = vmatpush1.bf16.msra.mxu0 0
        %5160 = vmatprep.subr.bf16.mxu0 0
        %5161 = vmatpush1.bf16.msra.mxu0 0
        %5162 = vmatprep.subr.bf16.mxu0 0
        %5163 = vmatpush1.bf16.msra.mxu0 0
        %5164 = vmatprep.subr.bf16.mxu0 0
        %5165 = vmatpush1.bf16.msra.mxu0 0
        %5166 = vmatprep.subr.bf16.mxu0 0
        %5167 = vmatpush1.bf16.msra.mxu0 0
        %5168 = vmatprep.subr.bf16.mxu0 0
        %5169 = vmatpush1.bf16.msra.mxu0 %v5149
        %5170 = vmatprep.subr.bf16.mxu0 0
        %5171 = vmatpush2.bf16.msra.mxu0 0
        %5172 = vmatprep.subr.bf16.mxu0 0
        %5173 = vmatpush2.bf16.msra.mxu0 0
        %5174 = vmatprep.subr.bf16.mxu0 0
        %5175 = vmatpush2.bf16.msra.mxu0 0
        %5176 = vmatprep.subr.bf16.mxu0 0
        %5177 = vmatpush2.bf16.msra.mxu0 0
        %5178 = vmatprep.subr.bf16.mxu0 0
        %5179 = vmatpush2.bf16.msra.mxu0 0
        %5180 = vmatprep.subr.bf16.mxu0 0
        %5181 = vmatpush2.bf16.msra.mxu0 0
        %5182 = vmatprep.subr.bf16.mxu0 0
        %5183 = vmatpush2.bf16.msra.mxu0 0
        %5184 = vmatprep.subr.bf16.mxu0 0
        %5185 = vmatpush2.bf16.msra.mxu0 0
        %5186 = vmatprep.mubr.bf16.mxu0 0
        %5187 = vmatmul.mubr.bf16.gmra.mxu0 %v5152
        %v5188 = vpop.f32.mrf.mxu0
        %v5189 = vadd.f32 0.0, %v5188
        %v5190 = vpop.f32.mrf.mxu0
        %v5191 = vpop.f32.mrf.mxu0
        %v5192 = vpop.f32.mrf.mxu0
        %5193 = vdwg.mxu0
        %5195 = vrot.lane.b32.xlu0 %v5189, 28
        %v5196 = vpop.permute.xlu0 %5195
        %5198 = vst.msk [vmem:[#allocation3 + $0x8] sm:$0xff] %vm2051, %v5196
        %v5199 = vld [vmem:[#allocation3] sm:$0xff]
        %v5200 = vld [vmem:[#allocation3 + $0x8] sm:$0xff]
        %v5201 = vpack.c.bf16 %v5200, %v5199
        %v5202 = vld [vmem:[%s823] sm:$0xf]
        %v5203 = vld [vmem:[%s823 + $0x4] sm:$0xf]
        %v5204 = vld [vmem:[%s823 + $0x8] sm:$0xf]
        %v5205 = vld [vmem:[%s823 + $0xc] sm:$0xf]
        %v5210 = vunpack.c.l.b16 %v5202
        %v5211 = vunpack.c.l.b16 %v5203
        %v5212 = vunpack.c.l.b16 %v5204
        %v5213 = vunpack.c.l.b16 %v5205
        %v5214 = vpack.c.b16 %v5211, %v5210
        %v5215 = vpack.c.b16 %v5213, %v5212
        %v5219 = vsel %vm1023, %v5201, 0
        %5221 = vmatprep.subr.bf16.mxu0 0
        %5222 = vmatpush1.bf16.msra.mxu0 0
        %5223 = vmatprep.subr.bf16.mxu0 0
        %5224 = vmatpush1.bf16.msra.mxu0 0
        %5225 = vmatprep.subr.bf16.mxu0 0
        %5226 = vmatpush1.bf16.msra.mxu0 0
        %5227 = vmatprep.subr.bf16.mxu0 0
        %5228 = vmatpush1.bf16.msra.mxu0 0
        %5229 = vmatprep.subr.bf16.mxu0 0
        %5230 = vmatpush1.bf16.msra.mxu0 0
        %5231 = vmatprep.subr.bf16.mxu0 0
        %5232 = vmatpush1.bf16.msra.mxu0 0
        %5233 = vmatprep.subr.bf16.mxu0 0
        %5234 = vmatpush1.bf16.msra.mxu0 %v5215
        %5235 = vmatprep.subr.bf16.mxu0 0
        %5236 = vmatpush1.bf16.msra.mxu0 %v5214
        %5237 = vmatprep.subr.bf16.mxu0 0
        %5238 = vmatpush2.bf16.msra.mxu0 0
        %5239 = vmatprep.subr.bf16.mxu0 0
        %5240 = vmatpush2.bf16.msra.mxu0 0
        %5241 = vmatprep.subr.bf16.mxu0 0
        %5242 = vmatpush2.bf16.msra.mxu0 0
        %5243 = vmatprep.subr.bf16.mxu0 0
        %5244 = vmatpush2.bf16.msra.mxu0 0
        %5245 = vmatprep.subr.bf16.mxu0 0
        %5246 = vmatpush2.bf16.msra.mxu0 0
        %5247 = vmatprep.subr.bf16.mxu0 0
        %5248 = vmatpush2.bf16.msra.mxu0 0
        %5249 = vmatprep.subr.bf16.mxu0 0
        %5250 = vmatpush2.bf16.msra.mxu0 0
        %5251 = vmatprep.subr.bf16.mxu0 0
        %5252 = vmatpush2.bf16.msra.mxu0 0
        %5253 = vmatprep.mubr.bf16.mxu0 0
        %5254 = vmatmul.mubr.bf16.gmra.mxu0 %v5219
        %v5255 = vpop.f32.mrf.mxu0
        %v5256 = vadd.f32 %v3127, %v5255
        %v5257 = vpop.f32.mrf.mxu0
        %v5258 = vpop.f32.mrf.mxu0
        %v5259 = vadd.f32 %v3128, %v5258
        %v5260 = vpop.f32.mrf.mxu0
        %5261 = vdwg.mxu0
        %v5262 = vld [vmem:[%s973] sm:$0x1]
        %v5263 = vld [vmem:[%s976] sm:$0x1]
        %v5264 = vsel %vm1023, %v5256, 0.0
        %5265 = vadd.xlane.f32.xlu0 %v5264
        %v5266 = vpop.xlane.xlu0 %5265
        %v5267 = vsel %vm1023, %v5259, 0.0
        %5268 = vadd.xlane.f32.xlu0 %v5267
        %v5269 = vpop.xlane.xlu0 %5268
        %v5270 = vmul.f32 %v5266, %v3092
        %v5271 = vmul.f32 %v5269, %v3092
        %v5272 = vsub.f32 %v5256, %v5270
        %v5273 = vsub.f32 %v5259, %v5271
        %v5274 = vmul.f32 %v5272, %v5272
        %v5275 = vmul.f32 %v5273, %v5273
        %v5276 = vsel %vm1023, %v5274, 0.0
        %5277 = vadd.xlane.f32.xlu0 %v5276
        %v5278 = vpop.xlane.xlu0 %5277
        %v5279 = vsel %vm1023, %v5275, 0.0
        %5280 = vadd.xlane.f32.xlu0 %v5279
        %v5281 = vpop.xlane.xlu0 %5280
        %v5282 = vmul.f32 %v5278, %v3092
        %v5283 = vmul.f32 %v5281, %v3092
        %v5284 = vadd.f32 %v5282, 1e-06
        %v5285 = vadd.f32 %v5283, 1e-06
        %v5286 = vrsqrt.pop %v5284
        %v5287 = vrsqrt.pop %v5285
        %v5288 = vmul.f32 %v5272, %v5286
        %v5289 = vmul.f32 %v5273, %v5287
        %v5291 = vlaneseq
        %v5292 = vshrl.u32 %v5291, 7
        %v5293 = vsub.s32 0, %v5292
        %v5294 = vrot.slane %v5262, %v5293
        %v5296 = vmul.f32 %v5288, %v5294
        %v5297 = vmul.f32 %v5289, %v5294
        %v5299 = vlaneseq
        %v5300 = vshrl.u32 %v5299, 7
        %v5301 = vsub.s32 0, %v5300
        %v5302 = vrot.slane %v5263, %v5301
        %v5304 = vadd.f32 %v5296, %v5302
        %v5305 = vadd.f32 %v5297, %v5302
        %v5306 = vpack.c.bf16 %v5305, %v5304
        %v5307 = vld [vmem:[%s832] sm:$0xf]
        %v5308 = vld [vmem:[%s832 + $0x4] sm:$0xf]
        %v5309 = vld [vmem:[%s832 + $0x8] sm:$0xf]
        %v5310 = vld [vmem:[%s832 + $0xc] sm:$0xf]
        %v5311 = vld [vmem:[%s979] sm:$0x1]
        %v5313 = vlaneseq
        %v5314 = vshrl.u32 %v5313, 7
        %v5315 = vsub.s32 0, %v5314
        %v5316 = vrot.slane %v5311, %v5315
        %v5322 = vunpack.c.l.b16 %v5307
        %v5323 = vunpack.c.l.b16 %v5308
        %v5324 = vunpack.c.l.b16 %v5309
        %v5325 = vunpack.c.l.b16 %v5310
        %v5326 = vpack.c.b16 %v5323, %v5322
        %v5327 = vpack.c.b16 %v5325, %v5324
        %v5331 = vsel %vm1023, %v5306, 0
        %5333 = vmatprep.subr.bf16.mxu0 0
        %5334 = vmatpush1.bf16.msra.mxu0 0
        %5335 = vmatprep.subr.bf16.mxu0 0
        %5336 = vmatpush1.bf16.msra.mxu0 0
        %5337 = vmatprep.subr.bf16.mxu0 0
        %5338 = vmatpush1.bf16.msra.mxu0 0
        %5339 = vmatprep.subr.bf16.mxu0 0
        %5340 = vmatpush1.bf16.msra.mxu0 0
        %5341 = vmatprep.subr.bf16.mxu0 0
        %5342 = vmatpush1.bf16.msra.mxu0 0
        %5343 = vmatprep.subr.bf16.mxu0 0
        %5344 = vmatpush1.bf16.msra.mxu0 0
        %5345 = vmatprep.subr.bf16.mxu0 0
        %5346 = vmatpush1.bf16.msra.mxu0 %v5327
        %5347 = vmatprep.subr.bf16.mxu0 0
        %5348 = vmatpush1.bf16.msra.mxu0 %v5326
        %5349 = vmatprep.subr.bf16.mxu0 0
        %5350 = vmatpush2.bf16.msra.mxu0 0
        %5351 = vmatprep.subr.bf16.mxu0 0
        %5352 = vmatpush2.bf16.msra.mxu0 0
        %5353 = vmatprep.subr.bf16.mxu0 0
        %5354 = vmatpush2.bf16.msra.mxu0 0
        %5355 = vmatprep.subr.bf16.mxu0 0
        %5356 = vmatpush2.bf16.msra.mxu0 0
        %5357 = vmatprep.subr.bf16.mxu0 0
        %5358 = vmatpush2.bf16.msra.mxu0 0
        %5359 = vmatprep.subr.bf16.mxu0 0
        %5360 = vmatpush2.bf16.msra.mxu0 0
        %5361 = vmatprep.subr.bf16.mxu0 0
        %5362 = vmatpush2.bf16.msra.mxu0 0
        %5363 = vmatprep.subr.bf16.mxu0 0
        %5364 = vmatpush2.bf16.msra.mxu0 0
        %5365 = vmatprep.mubr.bf16.mxu0 0
        %5366 = vmatmul.mubr.bf16.gmra.mxu0 %v5331
        %v5367 = vpop.f32.mrf.mxu0
        %v5368 = vadd.f32 %v5316, %v5367
        %v5369 = vpop.f32.mrf.mxu0
        %v5370 = vpop.f32.mrf.mxu0
        %v5371 = vadd.f32 %v5316, %v5370
        %v5372 = vpop.f32.mrf.mxu0
        %5373 = vdwg.mxu0
        %v5374 = vmax.f32 %v5368, 0.0
        %v5375 = vmax.f32 %v5371, 0.0
        %v5376 = vpack.c.bf16 %v5375, %v5374
        %v5377 = vld [vmem:[%s984] sm:$0xf]
        %v5378 = vld [vmem:[%s984 + $0x4] sm:$0xf]
        %v5379 = vld [vmem:[%s984 + $0x8] sm:$0xf]
        %v5380 = vld [vmem:[%s984 + $0xc] sm:$0xf]
        %v5381 = vld [vmem:[%s984 + $0x10] sm:$0xf]
        %v5382 = vld [vmem:[%s984 + $0x14] sm:$0xf]
        %v5383 = vld [vmem:[%s984 + $0x18] sm:$0xf]
        %v5384 = vld [vmem:[%s984 + $0x1c] sm:$0xf]
        %v5385 = vld [vmem:[%s987] sm:$0x1]
        %v5387 = vlaneseq
        %v5388 = vshrl.u32 %v5387, 7
        %v5389 = vsub.s32 0, %v5388
        %v5390 = vrot.slane %v5385, %v5389
        %v5400 = vunpack.c.l.b16 %v5377
        %v5401 = vunpack.c.l.b16 %v5378
        %v5402 = vunpack.c.l.b16 %v5379
        %v5403 = vunpack.c.l.b16 %v5380
        %v5404 = vunpack.c.l.b16 %v5381
        %v5405 = vunpack.c.l.b16 %v5382
        %v5406 = vunpack.c.l.b16 %v5383
        %v5407 = vunpack.c.l.b16 %v5384
        %v5408 = vpack.c.b16 %v5401, %v5400
        %v5409 = vpack.c.b16 %v5403, %v5402
        %v5410 = vpack.c.b16 %v5405, %v5404
        %v5411 = vpack.c.b16 %v5407, %v5406
        %vm5416 = vcmask 523264
        %v5418 = vsel %vm5416, %v5376, 0
        %5420 = vmatprep.subr.bf16.mxu0 0
        %5421 = vmatpush1.bf16.msra.mxu0 0
        %5422 = vmatprep.subr.bf16.mxu0 0
        %5423 = vmatpush1.bf16.msra.mxu0 0
        %5424 = vmatprep.subr.bf16.mxu0 0
        %5425 = vmatpush1.bf16.msra.mxu0 0
        %5426 = vmatprep.subr.bf16.mxu0 0
        %5427 = vmatpush1.bf16.msra.mxu0 0
        %5428 = vmatprep.subr.bf16.mxu0 0
        %5429 = vmatpush1.bf16.msra.mxu0 %v5411
        %5430 = vmatprep.subr.bf16.mxu0 0
        %5431 = vmatpush1.bf16.msra.mxu0 %v5410
        %5432 = vmatprep.subr.bf16.mxu0 0
        %5433 = vmatpush1.bf16.msra.mxu0 %v5409
        %5434 = vmatprep.subr.bf16.mxu0 0
        %5435 = vmatpush1.bf16.msra.mxu0 %v5408
        %5436 = vmatprep.subr.bf16.mxu0 0
        %5437 = vmatpush2.bf16.msra.mxu0 0
        %5438 = vmatprep.subr.bf16.mxu0 0
        %5439 = vmatpush2.bf16.msra.mxu0 0
        %5440 = vmatprep.subr.bf16.mxu0 0
        %5441 = vmatpush2.bf16.msra.mxu0 0
        %5442 = vmatprep.subr.bf16.mxu0 0
        %5443 = vmatpush2.bf16.msra.mxu0 0
        %5444 = vmatprep.subr.bf16.mxu0 0
        %5445 = vmatpush2.bf16.msra.mxu0 0
        %5446 = vmatprep.subr.bf16.mxu0 0
        %5447 = vmatpush2.bf16.msra.mxu0 0
        %5448 = vmatprep.subr.bf16.mxu0 0
        %5449 = vmatpush2.bf16.msra.mxu0 0
        %5450 = vmatprep.subr.bf16.mxu0 0
        %5451 = vmatpush2.bf16.msra.mxu0 0
        %5452 = vmatprep.mubr.bf16.mxu0 0
        %5453 = vmatmul.mubr.bf16.gmra.mxu0 %v5418
        %v5454 = vpop.f32.mrf.mxu0
        %v5455 = vadd.f32 %v5390, %v5454
        %v5456 = vpop.f32.mrf.mxu0
        %v5457 = vpop.f32.mrf.mxu0
        %v5458 = vadd.f32 %v5390, %v5457
        %v5459 = vpop.f32.mrf.mxu0
        %5460 = vdwg.mxu0
        %v5461 = vadd.f32 %v5455, %v5304
        %v5462 = vadd.f32 %v5458, %v5305
        %v5463 = vld [vmem:[%s990] sm:$0x1]
        %v5464 = vld [vmem:[%s993] sm:$0x1]
        %v5465 = vsel %vm1023, %v5461, 0.0
        %5466 = vadd.xlane.f32.xlu0 %v5465
        %v5467 = vpop.xlane.xlu0 %5466
        %v5468 = vsel %vm1023, %v5462, 0.0
        %5469 = vadd.xlane.f32.xlu0 %v5468
        %v5470 = vpop.xlane.xlu0 %5469
        %v5471 = vmul.f32 %v5467, %v3092
        %v5472 = vmul.f32 %v5470, %v3092
        %v5473 = vsub.f32 %v5461, %v5471
        %v5474 = vsub.f32 %v5462, %v5472
        %v5475 = vmul.f32 %v5473, %v5473
        %v5476 = vmul.f32 %v5474, %v5474
        %v5477 = vsel %vm1023, %v5475, 0.0
        %5478 = vadd.xlane.f32.xlu0 %v5477
        %v5479 = vpop.xlane.xlu0 %5478
        %v5480 = vsel %vm1023, %v5476, 0.0
        %5481 = vadd.xlane.f32.xlu0 %v5480
        %v5482 = vpop.xlane.xlu0 %5481
        %v5483 = vmul.f32 %v5479, %v3092
        %v5484 = vmul.f32 %v5482, %v3092
        %v5485 = vadd.f32 %v5483, 1e-06
        %v5486 = vadd.f32 %v5484, 1e-06
        %v5487 = vrsqrt.pop %v5485
        %v5488 = vrsqrt.pop %v5486
        %v5489 = vmul.f32 %v5473, %v5487
        %v5490 = vmul.f32 %v5474, %v5488
        %v5492 = vlaneseq
        %v5493 = vshrl.u32 %v5492, 7
        %v5494 = vsub.s32 0, %v5493
        %v5495 = vrot.slane %v5463, %v5494
        %v5497 = vmul.f32 %v5489, %v5495
        %v5498 = vmul.f32 %v5490, %v5495
        %v5500 = vlaneseq
        %v5501 = vshrl.u32 %v5500, 7
        %v5502 = vsub.s32 0, %v5501
        %v5503 = vrot.slane %v5464, %v5502
        %v5505 = vadd.f32 %v5497, %v5503
        %v5506 = vadd.f32 %v5498, %v5503
        %5507 = vst.msk [vmem:[#allocation2] sm:$0xff] %vm1023, %v5505
        %5508 = vst.msk [vmem:[#allocation2 + $0x8] sm:$0xff] %vm1023, %v5506
        %p5509 = scmp.eq.s32.totalorder %s45, 1
        // Predicated region
        $region125: #{tpu_custom_call.1} parent=95 // pred_check
          %p5510 = pneg %p5509
        $region126: #{tpu_custom_call.1} parent=95 // pred_check_branch
          %5512 = sbr.rel (%p5510) target = $region128
        $region127: #{tpu_custom_call.1} parent=95 // pred_region
          %5513 = vst.msk [vmem:[#allocation15] sm:$0xff] %vm1023, %v5505
          %5514 = vst.msk [vmem:[#allocation15 + $0x8] sm:$0xff] %vm1023, %v5506
        $region128: #{tpu_custom_call.1} parent=95 // pred_fallthru
          _
        %s5515 = sand.u32 %s45, 1
        %s5516 = scalar_lea.sflag [#allocation17], %s5515
        %s5517 = sand.u32 %s548, 1
        %s5518 = smul.addr %s5517, 8
        %s5519 = scalar_lea.vmem [#allocation16], %s5518
        %s5520 = sand.u32 %s45, 1
        %s5521 = scalar_lea.sflag [#allocation17], %s5520
        %s5522 = sand.u32 %s574, 1
        %s5523 = smul.addr %s5522, 8
        %s5524 = scalar_lea.vmem [#allocation18], %s5523
        // Predicated region
        $region129: #{tpu_custom_call.1} parent=95 // pred_check
          %p5525 = pneg %p532
        $region130: #{tpu_custom_call.1} parent=95 // pred_check_branch
          %5527 = sbr.rel (%p5525) target = $region132
        $region131: #{tpu_custom_call.1} parent=95 // pred_region
          %s5529 = ssub.s32 256, 256
          %5530 = vsyncadd [#allocation6], %s5529
          %s5531 = sshll.u32 [#allocation15], 4
          %s5532 = int_to_ptr.vmem [resolvable:$true] %s5531
          %5537 = dma.vmem_to_hbm [thread:$0]  %s5532, 256, %s19, [#allocation6], 128, 128, 8
        $region132: #{tpu_custom_call.1} parent=95 // pred_fallthru
          _
        // Predicated region
        $region133: #{tpu_custom_call.1} parent=95 // pred_check
          %p5538 = pneg %p558
        $region134: #{tpu_custom_call.1} parent=95 // pred_check_branch
          %5540 = sbr.rel (%p5538) target = $region136
        $region135: #{tpu_custom_call.1} parent=95 // pred_region
          %s5542 = ssub.s32 128, 128
          %5543 = vsyncadd %s5516, %s5542
          %s5544 = smul.addr %s45, 2
          %s5545 = smul.addr %s5544, 64
          %s5546 = scalar_lea.hbm %s20, %s5545
          %s5547 = sshll.u32 %s5519, 4
          %s5548 = int_to_ptr.vmem [resolvable:$true] %s5547
          %5553 = dma.vmem_to_hbm [thread:$0]  %s5548, 128, %s5546, %s5516, 64, 64, 4
        $region136: #{tpu_custom_call.1} parent=95 // pred_fallthru
          _
        // Predicated region
        $region137: #{tpu_custom_call.1} parent=95 // pred_check
          %p5554 = pneg %p584
        $region138: #{tpu_custom_call.1} parent=95 // pred_check_branch
          %5556 = sbr.rel (%p5554) target = $region140
        $region139: #{tpu_custom_call.1} parent=95 // pred_region
          %s5558 = ssub.s32 128, 128
          %5559 = vsyncadd %s5521, %s5558
          %s5560 = smul.addr %s45, 2
          %s5561 = smul.addr %s5560, 64
          %s5562 = scalar_lea.hbm %s21, %s5561
          %s5563 = sshll.u32 %s5524, 4
          %s5564 = int_to_ptr.vmem [resolvable:$true] %s5563
          %5569 = dma.vmem_to_hbm [thread:$0]  %s5564, 128, %s5562, %s5521, 64, 64, 4
        $region140: #{tpu_custom_call.1} parent=95 // pred_fallthru
          _
        // Predicated region
        $region141: #{tpu_custom_call.1} parent=95 // pred_check
          %p5570 = pneg %p532
        $region142: #{tpu_custom_call.1} parent=95 // pred_check_branch
          %5572 = sbr.rel (%p5570) target = $region144
        $region143: #{tpu_custom_call.1} parent=95 // pred_region
          %5573 = dma.done [#allocation6], 256
        $region144: #{tpu_custom_call.1} parent=95 // pred_fallthru
          _
      $region96: #{tpu_custom_call.1} parent=5 // pred_fallthru
        _
      %p5574 = scmp.le.s32.totalorder 2, %s40
      // Predicated region
      $region145: #{tpu_custom_call.1} parent=5 // pred_check
        %p5575 = pneg %p5574
      $region146: #{tpu_custom_call.1} parent=5 // pred_check_branch
        %5577 = sbr.rel (%p5575) target = $region148
      $region147: #{tpu_custom_call.1} parent=5 // pred_region
        %s5578 = ssub.s32 %s40, 2
        // Predicated region
        $region149: #{tpu_custom_call.1} parent=147 // pred_check
          %p5579 = pneg %p564
        $region150: #{tpu_custom_call.1} parent=147 // pred_check_branch
          %5581 = sbr.rel (%p5579) target = $region152
        $region151: #{tpu_custom_call.1} parent=147 // pred_region
          %s5582 = sand.u32 %s46, 1
          %s5583 = scalar_lea.sflag [#allocation17], %s5582
          %s5584 = sand.u32 %s549, 1
          %s5585 = smul.addr %s5584, 8
          %s5586 = scalar_lea.vmem [#allocation16], %s5585
          %5587 = dma.done %s5583, 128
        $region152: #{tpu_custom_call.1} parent=147 // pred_fallthru
          _
        // Predicated region
        $region153: #{tpu_custom_call.1} parent=147 // pred_check
          %p5588 = pneg %p590
        $region154: #{tpu_custom_call.1} parent=147 // pred_check_branch
          %5590 = sbr.rel (%p5588) target = $region156
        $region155: #{tpu_custom_call.1} parent=147 // pred_region
          %s5591 = sand.u32 %s46, 1
          %s5592 = scalar_lea.sflag [#allocation17], %s5591
          %s5593 = sand.u32 %s575, 1
          %s5594 = smul.addr %s5593, 8
          %s5595 = scalar_lea.vmem [#allocation18], %s5594
          %5596 = dma.done %s5592, 128
        $region156: #{tpu_custom_call.1} parent=147 // pred_fallthru
          _
      $region148: #{tpu_custom_call.1} parent=5 // pred_fallthru
        _
    $region6: #{tpu_custom_call.1} parent=1 // loop_footer
      %s44 = sadd.s32 1, %s40
    $region7: #{tpu_custom_call.1} parent=1 // loop_footer_branch
      %39 = sbr.rel target = $region3
    $region8: #{tpu_custom_call.1} parent=1 // loop_exit
      _
    %5597 = vsyncpa [#allocation5], 1
    %s5598 = scalar_lea.sflag [#allocation5], 1
    %5599 = vsyncpa %s5598, 1
    %5600 = vsyncpa [#allocation8], 1
    %5601 = vsyncpa [#allocation11], 1
    %s5602 = scalar_lea.sflag [#allocation11], 1
    %5603 = vsyncpa %s5602, 1
    %5604 = vsyncpa [#allocation14], 1
    %s5605 = scalar_lea.sflag [#allocation14], 1
    %5606 = vsyncpa %s5605, 1
    %5607 = vsyncpa [#allocation6], 1
    %s5608 = scalar_lea.sflag [#allocation6], 1
    %5609 = vsyncpa %s5608, 1
    %5610 = vsyncpa [#allocation17], 1
    %s5611 = scalar_lea.sflag [#allocation17], 1
    %5612 = vsyncpa %s5611, 1

</llo_original>
